<compile_context>
chip_gen: v5e
topology: v5e:2x2
jax: 0.10.0
libtpu: 0.0.40
codegen_flags: <defaults>
</compile_context>

<pallas_src>
import functools
import math

import jax
import jax.numpy as jnp
from jax import lax
from jax.experimental import pallas as pl
from jax.experimental.pallas import tpu as pltpu

_TIME_TILE = 512          # lane tile (multiple of 128) used once T_out > 512
_VMEM_LIMIT = 32 * 1024 * 1024


# ----------------------------------------------------------------------------
# Fused multi-tap conv kernel (channel-major)
# ----------------------------------------------------------------------------
def _x_window(ref, n_tiles, t_tile, off, width):
    """Window of `width` time columns starting at (tile_start + off)."""
    if n_tiles == 1:
        return ref[:, off:off + width]
    # Production path (long sequences): dynamic, tile-aligned window + static
    # tap offset.  Not exercised at the toy sizes in __main__.
    t0 = pl.multiple_of(pl.program_id(1) * t_tile, t_tile)
    return ref[:, pl.ds(t0 + off, width)]


def _conv_kernel(offsets, t_tile, n_tiles, fuse_col, has_res, *refs):
    """out = W_packed @ im2col(x) (+ W_res @ residual) + bias, per batch row.

    Refs (batch dim squeezed):
      x_ref : (Cin, L)            input window (full time extent resident)
      w_ref : (Cout, K*Cin)       packed taps, bf16
      b_ref : (Cout, 1)           f32
      [r_ref: (Cres, Lr), wr_ref: (Cout, Cres)]   fused 1x1 shortcut
      o_ref : (Cout, T_tile)
      [col_ref: (K*Cin, T_tile) f32 scratch]      im2col staging
    """
    if fuse_col and has_res:
        x_ref, w_ref, b_ref, r_ref, wr_ref, o_ref, col_ref = refs
    elif fuse_col:
        x_ref, w_ref, b_ref, o_ref, col_ref = refs
        r_ref = wr_ref = None
    elif has_res:
        x_ref, w_ref, b_ref, r_ref, wr_ref, o_ref = refs
        col_ref = None
    else:
        x_ref, w_ref, b_ref, o_ref = refs
        r_ref = wr_ref = col_ref = None

    cout, tt = o_ref.shape
    cin = x_ref.shape[0]

    if fuse_col:
        # Build the (K*Cin, TT) im2col block in VMEM scratch (K shifted copies
        # of the input window), then issue ONE MXU matmul with K*Cin
        # contraction depth.
        for k, off in enumerate(offsets):
            col_ref[k * cin:(k + 1) * cin, :] = _x_window(
                x_ref, n_tiles, t_tile, off, tt).astype(jnp.float32)
        acc = jnp.dot(w_ref[...], col_ref[...].astype(jnp.bfloat16),
                      preferred_element_type=jnp.float32)
    else:
        # Fallback for Cin not a multiple of 8 (tiny layers only).
        acc = jnp.zeros((cout, tt), jnp.float32)
        for k, off in enumerate(offsets):
            xk = _x_window(x_ref, n_tiles, t_tile, off, tt).astype(jnp.bfloat16)
            acc = acc + jnp.dot(w_ref[:, k * cin:(k + 1) * cin], xk,
                                preferred_element_type=jnp.float32)

    if has_res:
        rwin = _x_window(r_ref, n_tiles, t_tile, 0, tt).astype(jnp.bfloat16)
        acc = acc + jnp.dot(wr_ref[...], rwin, preferred_element_type=jnp.float32)

    o_ref[...] = (acc + b_ref[...]).astype(o_ref.dtype)


def pallas_conv(x, w_packed, bias, offsets, t_out, *, out_dtype=jnp.bfloat16,
                residual=None, res_weight=None):
    """Batched fused multi-tap conv, channel-major.

    x        : (B, Cin, L) float (any), L >= t_out + max(offsets)
    w_packed : (Cout, K*Cin), column order k*Cin + cin
    bias     : (Cout,)
    residual : optional (B, Cres, >=t_out) fused through res_weight (Cout, Cres)
    Returns (B, Cout, t_out) in out_dtype.
    """
    B, cin, L = x.shape
    cout, kc = w_packed.shape
    offsets = tuple(int(o) for o in offsets)
    max_off = max(offsets)
    assert L >= t_out + max_off

    # Time tiling (production-length sequences); single tile at toy sizes.
    if t_out > _TIME_TILE:
        tt = _TIME_TILE
        nt = -(-t_out // tt)
        t_pad = nt * tt
        need = t_pad + max_off
        if L < need:
            x = jnp.pad(x, ((0, 0), (0, 0), (0, need - L)))
            L = need
        if residual is not None and residual.shape[-1] < t_pad:
            residual = jnp.pad(
                residual, ((0, 0), (0, 0), (0, t_pad - residual.shape[-1])))
    else:
        tt, nt, t_pad = t_out, 1, t_out

    fuse_col = (cin % 8 == 0)
    has_res = residual is not None
    kernel = functools.partial(_conv_kernel, offsets, tt, nt, fuse_col, has_res)

    in_specs = [
        pl.BlockSpec((None, cin, L), lambda b, j: (b, 0, 0)),
        pl.BlockSpec((cout, kc), lambda b, j: (0, 0)),          # weights resident
        pl.BlockSpec((cout, 1), lambda b, j: (0, 0)),
    ]
    args = [x, w_packed.astype(jnp.bfloat16),
            bias.astype(jnp.float32).reshape(cout, 1)]
    if has_res:
        cres, lr = residual.shape[1], residual.shape[2]
        in_specs += [pl.BlockSpec((None, cres, lr), lambda b, j: (b, 0, 0)),
                     pl.BlockSpec((cout, cres), lambda b, j: (0, 0))]
        args += [residual, res_weight.astype(jnp.bfloat16)]

    scratch = [pltpu.VMEM((kc, tt), jnp.float32)] if fuse_col else []

    out = pl.pallas_call(
        kernel,
        out_shape=jax.ShapeDtypeStruct((B, cout, t_pad), out_dtype),
        grid=(B, nt),
        in_specs=in_specs,
        out_specs=pl.BlockSpec((None, cout, tt), lambda b, j: (b, 0, j)),
        scratch_shapes=scratch,
        compiler_params=pltpu.CompilerParams(
            dimension_semantics=("parallel", "arbitrary"),
            vmem_limit_bytes=_VMEM_LIMIT),
    )(*args)
    return out if t_pad == t_out else out[:, :, :t_out]


# ----------------------------------------------------------------------------
# Blocked LSTM recurrence kernel
# ----------------------------------------------------------------------------
def _lstm_kernel(t_block, xg_ref, whh_ref, o_ref, h_ref, c_ref):
    """Processes t_block timesteps per grid step; h/c carried in VMEM scratch.

    xg_ref : (TB, B, 4H) f32  precomputed input gates (x @ W_ih^T + b_ih + b_hh)
    whh_ref: (H, 4H)     f32  recurrent weights (resident)
    o_ref  : (TB, B, H)  f32
    """
    @pl.when(pl.program_id(0) == 0)
    def _():
        h_ref[...] = jnp.zeros_like(h_ref)
        c_ref[...] = jnp.zeros_like(c_ref)

    H = h_ref.shape[-1]
    whh = whh_ref[...]

    def step(t, carry):
        h, c = carry
        gates = xg_ref[t] + jnp.dot(h, whh, preferred_element_type=jnp.float32)
        i_g = jax.nn.sigmoid(gates[:, 0:H])
        f_g = jax.nn.sigmoid(gates[:, H:2 * H])
        g_g = jnp.tanh(gates[:, 2 * H:3 * H])
        o_g = jax.nn.sigmoid(gates[:, 3 * H:4 * H])
        c = f_g * c + i_g * g_g
        h = o_g * jnp.tanh(c)
        o_ref[t] = h
        return h, c

    h_fin, c_fin = lax.fori_loop(0, t_block, step,
                                 (h_ref[...], c_ref[...]), unroll=True)
    h_ref[...] = h_fin
    c_ref[...] = c_fin


def pallas_lstm(xg_tm, w_hh, t_block=32):
    """xg_tm: (T, Btot, 4H) precomputed input gates; w_hh: (4H, H) torch layout.

    Returns hidden states (T, Btot, H) f32.
    """
    T, btot, G = xg_tm.shape
    H = G // 4
    tb = min(t_block, T)
    nt = -(-T // tb)
    tp = nt * tb
    if tp > T:
        xg_tm = jnp.pad(xg_tm, ((0, tp - T), (0, 0), (0, 0)))
    whh_t = jnp.transpose(w_hh).astype(jnp.float32)          # (H, 4H), resident

    # NOTE: a "parallel" batch grid axis (v7x two-TC split) would need batch
    # blocks that are multiples of 8 sublanes; skipped at these batch sizes.
    out = pl.pallas_call(
        functools.partial(_lstm_kernel, tb),
        out_shape=jax.ShapeDtypeStruct((tp, btot, H), jnp.float32),
        grid=(nt,),
        in_specs=[pl.BlockSpec((tb, btot, G), lambda j: (j, 0, 0)),
                  pl.BlockSpec((H, G), lambda j: (0, 0))],
        out_specs=pl.BlockSpec((tb, btot, H), lambda j: (j, 0, 0)),
        scratch_shapes=[pltpu.VMEM((btot, H), jnp.float32),
                        pltpu.VMEM((btot, H), jnp.float32)],
        compiler_params=pltpu.CompilerParams(
            dimension_semantics=("arbitrary",),
            vmem_limit_bytes=_VMEM_LIMIT),
    )(xg_tm.astype(jnp.float32), whh_t)
    return out[:T] if tp > T else out


# ----------------------------------------------------------------------------
# Band reconstruction kernel
# ----------------------------------------------------------------------------
def _band_sum_kernel(x_ref, o_ref):
    o_ref[...] = jnp.sum(x_ref[...], axis=1)


def pallas_band_sum(stacked, t_tile=2048):
    """reconstruct_audio_bands: (B, NB, T) -> (B, T), time-tiled, lane-dense."""
    B, nb, T = stacked.shape
    if T > t_tile:
        nt = -(-T // t_tile)
        tp = nt * t_tile
        x = jnp.pad(stacked, ((0, 0), (0, 0), (0, tp - T)))
        tt = t_tile
    else:
        nt, tp, tt, x = 1, T, T, stacked
    out = pl.pallas_call(
        _band_sum_kernel,
        out_shape=jax.ShapeDtypeStruct((B, tp), jnp.float32),
        grid=(nt,),
        in_specs=[pl.BlockSpec((B, nb, tt), lambda j: (0, 0, j))],
        out_specs=pl.BlockSpec((B, tt), lambda j: (0, j)),
        compiler_params=pltpu.CompilerParams(
            dimension_semantics=("parallel",),
            vmem_limit_bytes=_VMEM_LIMIT),
    )(x.astype(jnp.float32))
    return out[:, :T] if tp > T else out


# ----------------------------------------------------------------------------
# Weight packing helpers (host side, tiny, traced once under jit)
# ----------------------------------------------------------------------------
def _pack_conv_weight(w):
    """(Cout, Cin, K) torch layout -> (Cout, K*Cin), column order k*Cin + cin."""
    cout, cin, K = w.shape
    return jnp.transpose(w, (0, 2, 1)).reshape(cout, K * cin)


def _pack_strided_weight(w, stride):
    """Strided conv -> polyphase stride-1 taps: (Cout, jmax * stride * Cin)."""
    cout, cin, K = w.shape
    jmax = -(-K // stride)
    w_pad = jnp.pad(w, ((0, 0), (0, 0), (0, jmax * stride - K)))
    w_r = w_pad.reshape(cout, cin, jmax, stride)          # k = j*stride + p
    w_r = jnp.transpose(w_r, (0, 2, 3, 1))                # (cout, jmax, s, cin)
    return w_r.reshape(cout, jmax * stride * cin)


def _polyphase_time(x, stride):
    """(B, Cin, L) with L % stride == 0 -> (B, stride*Cin, L//stride)."""
    B, cin, L = x.shape
    U = L // stride
    xr = x.reshape(B, cin, U, stride)
    xr = jnp.transpose(xr, (0, 3, 1, 2))                  # (B, s, cin, U)
    return xr.reshape(B, stride * cin, U)


def _pack_convtr_weight(w, stride):
    """ConvTranspose1d (Cin, Cout, K) -> (stride*Cout, jmax*Cin) polyphase taps."""
    cin, cout, K = w.shape
    jmax = -(-K // stride)
    w_pad = jnp.pad(w, ((0, 0), (0, 0), (0, jmax * stride - K)))
    w_r = w_pad.reshape(cin, cout, jmax, stride)          # k = j*stride + r
    w_r = w_r[:, :, ::-1, :]                              # tap offset o = jmax-1-j
    w_r = jnp.transpose(w_r, (3, 1, 2, 0))                # (s, cout, jmax, cin)
    return w_r.reshape(stride * cout, jmax * cin)


# ----------------------------------------------------------------------------
# SEANet building blocks (channel-major (B, C, T) everywhere)
# ----------------------------------------------------------------------------
def snake(x, alpha):
    """Snake1d: x + sin(alpha*x)^2 / (alpha + eps); alpha per channel."""
    a = alpha[None, :, None]
    xf = x.astype(jnp.float32)
    return (xf + jnp.sin(a * xf) ** 2 / (a + 1e-9)).astype(jnp.bfloat16)


def sconv1d(x, w, b, stride=1, dilation=1, pad_mode="reflect",
            out_dtype=jnp.bfloat16, residual=None, res_weight=None):
    """SConv1d (non-causal): reflect pad + fused multi-tap Pallas conv.

    x: (B, Cin, T), w: (Cout, Cin, K) torch layout, b: (Cout,)
    """
    B, cin, T = x.shape
    cout, _, K = w.shape
    keff = (K - 1) * dilation + 1
    pad_total = keff - stride
    n_frames = (T - keff + pad_total) / stride + 1
    ideal_length = (int(math.ceil(n_frames)) - 1) * stride + (keff - pad_total)
    extra = max(ideal_length - T, 0)
    pad_right = pad_total // 2
    pad_left = pad_total - pad_right
    if pad_mode == "reflect":
        assert max(pad_left, pad_right + extra) < T, "reflect pad exceeds input"
    xp = jnp.pad(x, ((0, 0), (0, 0), (pad_left, pad_right + extra)), mode=pad_mode)
    Tp = xp.shape[-1]
    T_out = (Tp - keff) // stride + 1

    if stride == 1:
        offsets = [k * dilation for k in range(K)]
        w_packed = _pack_conv_weight(w)
        x_in = xp
    else:
        assert dilation == 1, "strided conv with dilation>1 not used by this model"
        jmax = -(-K // stride)
        l_target = stride * (T_out + jmax - 1)
        if l_target > Tp:
            xp = jnp.pad(xp, ((0, 0), (0, 0), (0, l_target - Tp)))
        elif l_target < Tp:
            xp = xp[:, :, :l_target]
        x_in = _polyphase_time(xp, stride)
        offsets = list(range(jmax))
        w_packed = _pack_strided_weight(w, stride)

    rw = None
    if residual is not None:
        rw = res_weight[:, :, 0] if res_weight.ndim == 3 else res_weight
    return pallas_conv(x_in, w_packed, b, offsets, T_out, out_dtype=out_dtype,
                       residual=residual, res_weight=rw)


def sconvtr1d(x, w, b, stride, trim_right_ratio=1.0, causal=False,
              out_dtype=jnp.bfloat16):
    """SConvTranspose1d via polyphase decomposition into the same conv kernel.

    x: (B, Cin, T), w: (Cin, Cout, K) torch ConvTranspose1d layout.
    """
    B, cin, T = x.shape
    _, cout, K = w.shape
    s = stride
    jmax = -(-K // s)
    full_len = (T - 1) * s + K
    xl = jnp.pad(x, ((0, 0), (0, 0), (jmax - 1, jmax - 1)))
    Q = T + jmax - 1
    w_packed = _pack_convtr_weight(w, s)                  # (s*Cout, jmax*Cin)
    bias_ph = jnp.tile(b.astype(jnp.float32), s)          # bias per output phase
    out = pallas_conv(xl, w_packed, bias_ph, list(range(jmax)), Q,
                      out_dtype=out_dtype)                # (B, s*Cout, Q)
    y = out.reshape(B, s, cout, Q)
    y = jnp.transpose(y, (0, 2, 3, 1)).reshape(B, cout, Q * s)
    y = y[:, :, :full_len]

    pad_total = K - s
    if causal:
        pad_right = int(math.ceil(pad_total * trim_right_ratio))
    else:
        pad_right = pad_total // 2
    pad_left = pad_total - pad_right
    return y[:, :, pad_left:full_len - pad_right]


def slstm(lstm_layers, x):
    """SLSTM with skip connection: (B, C, T) -> (B, C, T)."""
    B, C, T = x.shape
    cur = x
    for lp in lstm_layers:
        # Input projection via the fused conv kernel (K=1); biases folded.
        xg = pallas_conv(cur, lp["W_ih"], lp["b_ih"] + lp["b_hh"], [0], T,
                         out_dtype=jnp.float32)            # (B, 4H, T)
        xg_tm = jnp.transpose(xg, (2, 0, 1))               # (T, B, 4H)
        h_tm = pallas_lstm(xg_tm, lp["W_hh"])              # (T, B, H) f32
        cur = jnp.transpose(h_tm, (1, 2, 0))               # (B, H, T)
    return (cur + x.astype(jnp.float32)).astype(jnp.bfloat16)


def seanet_apply(layers, x):
    for lyr in layers:
        t = lyr["type"]
        if t == "conv":
            x = sconv1d(x, lyr["w"], lyr["b"], stride=lyr["stride"],
                        dilation=lyr["dilation"])
        elif t == "convtr":
            x = sconvtr1d(x, lyr["w"], lyr["b"], stride=lyr["stride"],
                          trim_right_ratio=lyr["trim_right_ratio"])
        elif t == "snake":
            x = snake(x, lyr["alpha"])
        elif t == "resblock":
            h = snake(x, lyr["alpha1"])
            h = sconv1d(h, lyr["conv1"]["w"], lyr["conv1"]["b"], stride=1,
                        dilation=lyr["conv1"]["dilation"])
            h = snake(h, lyr["alpha2"])
            # conv2 + 1x1 shortcut + residual add fused into one kernel
            # (true_skip=False -> shortcut is a 1x1 conv on the block input).
            x = sconv1d(h, lyr["conv2"]["w"],
                        lyr["conv2"]["b"] + lyr["shortcut"]["b"],
                        stride=1, dilation=1,
                        residual=x, res_weight=lyr["shortcut"]["w"])
        elif t == "slstm":
            x = slstm(lyr["layers"], x)
        else:
            raise ValueError(t)
    return x


# ----------------------------------------------------------------------------
# Band split (FFT brick-wall approximation of the espnet band filter)
# ----------------------------------------------------------------------------
def split_audio_bands(y, sample_rate, bands):
    B, T = y.shape
    Y = jnp.fft.rfft(y, axis=-1)
    freqs = jnp.fft.rfftfreq(T, d=1.0 / sample_rate)
    subbands = []
    for bi, (lo, hi) in enumerate(bands):
        if bi == len(bands) - 1:
            mask = (freqs >= lo) & (freqs <= hi)
        else:
            mask = (freqs >= lo) & (freqs < hi)
        subbands.append(jnp.fft.irfft(jnp.where(mask, Y, 0.0 + 0.0j), n=T, axis=-1))
    return jnp.stack(subbands, axis=1).astype(jnp.float32)


# ----------------------------------------------------------------------------
# Deterministic parameter initialization (PyTorch-like uniform fan-in init)
# ----------------------------------------------------------------------------
def _uniform(key, shape, scale):
    return jax.random.uniform(key, shape, jnp.float32, -scale, scale)


def init_conv(key, c_in, c_out, k):
    k1, k2 = jax.random.split(key)
    s = 1.0 / math.sqrt(c_in * k)
    return {"type": "conv", "w": _uniform(k1, (c_out, c_in, k), s),
            "b": _uniform(k2, (c_out,), s)}


def init_convtr(key, c_in, c_out, k):
    k1, k2 = jax.random.split(key)
    s = 1.0 / math.sqrt(c_in * k)
    return {"type": "convtr", "w": _uniform(k1, (c_in, c_out, k), s),
            "b": _uniform(k2, (c_out,), s)}


def init_lstm(key, dim, num_layers):
    layers = []
    s = 1.0 / math.sqrt(dim)
    for _ in range(num_layers):
        key, k1, k2, k3, k4 = jax.random.split(key, 5)
        layers.append({"W_ih": _uniform(k1, (4 * dim, dim), s),
                       "W_hh": _uniform(k2, (4 * dim, dim), s),
                       "b_ih": _uniform(k3, (4 * dim,), s),
                       "b_hh": _uniform(k4, (4 * dim,), s)})
    return {"type": "slstm", "layers": layers}


def init_resblock(key, dim, kernel, dilation, compress):
    hidden = dim // compress
    k1, k2, k3 = jax.random.split(key, 3)
    conv1 = init_conv(k1, dim, hidden, kernel)
    conv1.update(stride=1, dilation=dilation)
    conv2 = init_conv(k2, hidden, dim, 1)
    conv2.update(stride=1, dilation=1)
    shortcut = init_conv(k3, dim, dim, 1)
    shortcut.update(stride=1, dilation=1)
    return {"type": "resblock",
            "alpha1": jnp.ones((dim,), jnp.float32), "conv1": conv1,
            "alpha2": jnp.ones((hidden,), jnp.float32), "conv2": conv2,
            "shortcut": shortcut}


def build_encoder(key, channels, dimension, n_filters, n_res, ratios, kernel_size,
                  res_kernel, last_kernel, dil_base, compress, lstm):
    layers = []
    mult = 1
    key, k = jax.random.split(key)
    c = init_conv(k, channels, mult * n_filters, kernel_size)
    c.update(stride=1, dilation=1)
    layers.append(c)
    for ratio in reversed(ratios):
        dim = mult * n_filters
        for j in range(n_res):
            key, k = jax.random.split(key)
            layers.append(init_resblock(k, dim, res_kernel, dil_base ** j, compress))
        layers.append({"type": "snake", "alpha": jnp.ones((dim,), jnp.float32)})
        key, k = jax.random.split(key)
        c = init_conv(k, dim, dim * 2, ratio * 2)
        c.update(stride=ratio, dilation=1)
        layers.append(c)
        mult *= 2
    dim = mult * n_filters
    if lstm:
        key, k = jax.random.split(key)
        layers.append(init_lstm(k, dim, lstm))
    layers.append({"type": "snake", "alpha": jnp.ones((dim,), jnp.float32)})
    key, k = jax.random.split(key)
    c = init_conv(k, dim, dimension, last_kernel)
    c.update(stride=1, dilation=1)
    layers.append(c)
    return layers


def build_decoder(key, channels, dimension, n_filters, n_res, ratios, kernel_size,
                  res_kernel, last_kernel, dil_base, compress, lstm, trim_right_ratio):
    layers = []
    mult = int(2 ** len(ratios))
    dim = mult * n_filters
    key, k = jax.random.split(key)
    c = init_conv(k, dimension, dim, kernel_size)
    c.update(stride=1, dilation=1)
    layers.append(c)
    if lstm:
        key, k = jax.random.split(key)
        layers.append(init_lstm(k, dim, lstm))
    for ratio in ratios:
        dim = mult * n_filters
        out_dim = dim // 2
        layers.append({"type": "snake", "alpha": jnp.ones((dim,), jnp.float32)})
        key, k = jax.random.split(key)
        ct = init_convtr(k, dim, out_dim, ratio * 2)
        ct.update(stride=ratio, trim_right_ratio=trim_right_ratio)
        layers.append(ct)
        for j in range(n_res):
            key, k = jax.random.split(key)
            layers.append(init_resblock(k, out_dim, res_kernel, dil_base ** j, compress))
        mult //= 2
    layers.append({"type": "snake", "alpha": jnp.ones((n_filters,), jnp.float32)})
    key, k = jax.random.split(key)
    c = init_conv(k, n_filters, channels, last_kernel)
    c.update(stride=1, dilation=1)
    layers.append(c)
    return layers


# ----------------------------------------------------------------------------
# Generator forward (matches Bandcodec_oneencdecGenerator.forward)
# ----------------------------------------------------------------------------
def generator_forward(enc_layers, dec_layers, x, sample_rate, bands):
    """x: (B, 1, T) -> (y_rec (B,1,T), subbands (B,NB,T), stacked (B,NB,T))."""
    B = x.shape[0]
    nb = len(bands)
    y = x[:, 0, :]                                       # squeeze(1)
    subbands = split_audio_bands(y, sample_rate, bands)  # (B, NB, T) f32
    T = subbands.shape[-1]
    # Shared enc/dec across bands -> fold bands into batch (one pass, no loop).
    xf = subbands.reshape(B * nb, 1, T)
    hf = seanet_apply(enc_layers, xf)                    # (B*NB, hidden_dim, T_enc)
    yf = seanet_apply(dec_layers, hf)                    # (B*NB, 1, T)
    stacked = yf[:, 0, :].reshape(B, nb, yf.shape[-1]).astype(jnp.float32)
    y_rec = pallas_band_sum(stacked)                     # (B, T)
    return y_rec[:, None, :], subbands, stacked


if __name__ == "__main__":
    # Small, shape-consistent configuration of the module.
    sample_rate = 16000
    bands = [(0, 4000), (4000, 8000)]
    hidden_dim = 32
    encdec_channels = 1
    encdec_n_filters = 8
    encdec_n_residual_layers = 1
    encdec_ratios = [4, 2]
    encdec_kernel_size = 7
    encdec_residual_kernel_size = 7
    encdec_last_kernel_size = 7
    encdec_dilation_base = 2
    encdec_compress = 2
    encdec_lstm = 1
    decoder_trim_right_ratio = 1.0

    pkey = jax.random.PRNGKey(42)
    ek, dk = jax.random.split(pkey)
    enc_layers = build_encoder(ek, encdec_channels, hidden_dim, encdec_n_filters,
                               encdec_n_residual_layers, encdec_ratios,
                               encdec_kernel_size, encdec_residual_kernel_size,
                               encdec_last_kernel_size, encdec_dilation_base,
                               encdec_compress, encdec_lstm)
    dec_layers = build_decoder(dk, encdec_channels, hidden_dim, encdec_n_filters,
                               encdec_n_residual_layers, encdec_ratios,
                               encdec_kernel_size, encdec_residual_kernel_size,
                               encdec_last_kernel_size, encdec_dilation_base,
                               encdec_compress, encdec_lstm,
                               decoder_trim_right_ratio)

    B, T = 2, 64
    x = jax.random.normal(jax.random.PRNGKey(0), (B, 1, T), jnp.float32)

    @jax.jit
    def forward(inp):
        return generator_forward(enc_layers, dec_layers, inp, sample_rate, bands)

    y_rec, subbands, stacked = forward(x)
    jax.block_until_ready((y_rec, subbands, stacked))

    assert y_rec.shape == (B, 1, T), y_rec.shape
    assert subbands.shape == (B, len(bands), T), subbands.shape
    assert stacked.shape == (B, len(bands), T), stacked.shape
    assert bool(jnp.all(jnp.isfinite(y_rec)))
    print("KERNEL_OK")
</pallas_src>

<mosaic_0001>
module attributes {stable_mosaic.version = 11 : i64} {
  func.func @_conv_kernel(%arg0: i32, %arg1: i32, %arg2: memref<1x1x70xf32, #tpu.memory_space<vmem>>, %arg3: memref<8x7xbf16, #tpu.memory_space<vmem>>, %arg4: memref<8x1xf32, #tpu.memory_space<vmem>>, %arg5: memref<1x8x64xbf16, #tpu.memory_space<vmem>>) attributes {dimension_semantics = [#tpu.dimension_semantics<parallel>, #tpu.dimension_semantics<arbitrary>], iteration_bounds = array<i64: 4, 1>, scalar_prefetch = 0 : i64, scratch_operands = 0 : i64, tpu.core_type = #tpu.core_type<tc>, window_params = [{transform_indices = @transform_0, window_bounds = array<i64: 1, 1, 70>}, {pipeline_mode = #tpu.pipeline_mode<synchronous>, transform_indices = @transform_1, window_bounds = array<i64: 8, 7>}, {pipeline_mode = #tpu.pipeline_mode<synchronous>, transform_indices = @transform_2, window_bounds = array<i64: 8, 1>}, {transform_indices = @transform_3, window_bounds = array<i64: 1, 8, 64>}]} {
    %cst = arith.constant 0.000000e+00 : f32
    %0 = vector.broadcast %cst : f32 to vector<8x64xf32>
    %c0 = arith.constant 0 : index
    %c0_0 = arith.constant 0 : index
    %c0_1 = arith.constant 0 : index
    %1 = vector.load %arg2[%c0, %c0_0, %c0_1] : memref<1x1x70xf32, #tpu.memory_space<vmem>>, vector<1x1x64xf32>
    %2 = vector.shape_cast %1 : vector<1x1x64xf32> to vector<1x64xf32>
    %3 = arith.truncf %2 : vector<1x64xf32> to vector<1x64xbf16>
    %c0_2 = arith.constant 0 : index
    %c0_3 = arith.constant 0 : index
    %4 = vector.load %arg3[%c0_2, %c0_3] : memref<8x7xbf16, #tpu.memory_space<vmem>>, vector<8x1xbf16>
    %cst_4 = arith.constant dense<0.000000e+00> : vector<8x64xf32>
    %5 = tpu.matmul %4, %3, %cst_4 {dimension_numbers = #tpu.dot_dimension_numbers<[1], [0], [0], [1], [0, 0, 1, 1], [], []>} : vector<8x1xbf16>, vector<1x64xbf16>, vector<8x64xf32> -> vector<8x64xf32>
    %6 = arith.addf %0, %5 : vector<8x64xf32>
    %c0_5 = arith.constant 0 : index
    %c0_6 = arith.constant 0 : index
    %c1 = arith.constant 1 : index
    %7 = vector.load %arg2[%c0_5, %c0_6, %c1] : memref<1x1x70xf32, #tpu.memory_space<vmem>>, vector<1x1x64xf32>
    %8 = vector.shape_cast %7 : vector<1x1x64xf32> to vector<1x64xf32>
    %9 = arith.truncf %8 : vector<1x64xf32> to vector<1x64xbf16>
    %c0_7 = arith.constant 0 : index
    %c1_8 = arith.constant 1 : index
    %10 = vector.load %arg3[%c0_7, %c1_8] : memref<8x7xbf16, #tpu.memory_space<vmem>>, vector<8x1xbf16>
    %cst_9 = arith.constant dense<0.000000e+00> : vector<8x64xf32>
    %11 = tpu.matmul %10, %9, %cst_9 {dimension_numbers = #tpu.dot_dimension_numbers<[1], [0], [0], [1], [0, 0, 1, 1], [], []>} : vector<8x1xbf16>, vector<1x64xbf16>, vector<8x64xf32> -> vector<8x64xf32>
    %12 = arith.addf %6, %11 : vector<8x64xf32>
    %c0_10 = arith.constant 0 : index
    %c0_11 = arith.constant 0 : index
    %c2 = arith.constant 2 : index
    %13 = vector.load %arg2[%c0_10, %c0_11, %c2] : memref<1x1x70xf32, #tpu.memory_space<vmem>>, vector<1x1x64xf32>
    %14 = vector.shape_cast %13 : vector<1x1x64xf32> to vector<1x64xf32>
    %15 = arith.truncf %14 : vector<1x64xf32> to vector<1x64xbf16>
    %c0_12 = arith.constant 0 : index
    %c2_13 = arith.constant 2 : index
    %16 = vector.load %arg3[%c0_12, %c2_13] : memref<8x7xbf16, #tpu.memory_space<vmem>>, vector<8x1xbf16>
    %cst_14 = arith.constant dense<0.000000e+00> : vector<8x64xf32>
    %17 = tpu.matmul %16, %15, %cst_14 {dimension_numbers = #tpu.dot_dimension_numbers<[1], [0], [0], [1], [0, 0, 1, 1], [], []>} : vector<8x1xbf16>, vector<1x64xbf16>, vector<8x64xf32> -> vector<8x64xf32>
    %18 = arith.addf %12, %17 : vector<8x64xf32>
    %c0_15 = arith.constant 0 : index
    %c0_16 = arith.constant 0 : index
    %c3 = arith.constant 3 : index
    %19 = vector.load %arg2[%c0_15, %c0_16, %c3] : memref<1x1x70xf32, #tpu.memory_space<vmem>>, vector<1x1x64xf32>
    %20 = vector.shape_cast %19 : vector<1x1x64xf32> to vector<1x64xf32>
    %21 = arith.truncf %20 : vector<1x64xf32> to vector<1x64xbf16>
    %c0_17 = arith.constant 0 : index
    %c3_18 = arith.constant 3 : index
    %22 = vector.load %arg3[%c0_17, %c3_18] : memref<8x7xbf16, #tpu.memory_space<vmem>>, vector<8x1xbf16>
    %cst_19 = arith.constant dense<0.000000e+00> : vector<8x64xf32>
    %23 = tpu.matmul %22, %21, %cst_19 {dimension_numbers = #tpu.dot_dimension_numbers<[1], [0], [0], [1], [0, 0, 1, 1], [], []>} : vector<8x1xbf16>, vector<1x64xbf16>, vector<8x64xf32> -> vector<8x64xf32>
    %24 = arith.addf %18, %23 : vector<8x64xf32>
    %c0_20 = arith.constant 0 : index
    %c0_21 = arith.constant 0 : index
    %c4 = arith.constant 4 : index
    %25 = vector.load %arg2[%c0_20, %c0_21, %c4] : memref<1x1x70xf32, #tpu.memory_space<vmem>>, vector<1x1x64xf32>
    %26 = vector.shape_cast %25 : vector<1x1x64xf32> to vector<1x64xf32>
    %27 = arith.truncf %26 : vector<1x64xf32> to vector<1x64xbf16>
    %c0_22 = arith.constant 0 : index
    %c4_23 = arith.constant 4 : index
    %28 = vector.load %arg3[%c0_22, %c4_23] : memref<8x7xbf16, #tpu.memory_space<vmem>>, vector<8x1xbf16>
    %cst_24 = arith.constant dense<0.000000e+00> : vector<8x64xf32>
    %29 = tpu.matmul %28, %27, %cst_24 {dimension_numbers = #tpu.dot_dimension_numbers<[1], [0], [0], [1], [0, 0, 1, 1], [], []>} : vector<8x1xbf16>, vector<1x64xbf16>, vector<8x64xf32> -> vector<8x64xf32>
    %30 = arith.addf %24, %29 : vector<8x64xf32>
    %c0_25 = arith.constant 0 : index
    %c0_26 = arith.constant 0 : index
    %c5 = arith.constant 5 : index
    %31 = vector.load %arg2[%c0_25, %c0_26, %c5] : memref<1x1x70xf32, #tpu.memory_space<vmem>>, vector<1x1x64xf32>
    %32 = vector.shape_cast %31 : vector<1x1x64xf32> to vector<1x64xf32>
    %33 = arith.truncf %32 : vector<1x64xf32> to vector<1x64xbf16>
    %c0_27 = arith.constant 0 : index
    %c5_28 = arith.constant 5 : index
    %34 = vector.load %arg3[%c0_27, %c5_28] : memref<8x7xbf16, #tpu.memory_space<vmem>>, vector<8x1xbf16>
    %cst_29 = arith.constant dense<0.000000e+00> : vector<8x64xf32>
    %35 = tpu.matmul %34, %33, %cst_29 {dimension_numbers = #tpu.dot_dimension_numbers<[1], [0], [0], [1], [0, 0, 1, 1], [], []>} : vector<8x1xbf16>, vector<1x64xbf16>, vector<8x64xf32> -> vector<8x64xf32>
    %36 = arith.addf %30, %35 : vector<8x64xf32>
    %c0_30 = arith.constant 0 : index
    %c0_31 = arith.constant 0 : index
    %c6 = arith.constant 6 : index
    %37 = vector.load %arg2[%c0_30, %c0_31, %c6] : memref<1x1x70xf32, #tpu.memory_space<vmem>>, vector<1x1x64xf32>
    %38 = vector.shape_cast %37 : vector<1x1x64xf32> to vector<1x64xf32>
    %39 = arith.truncf %38 : vector<1x64xf32> to vector<1x64xbf16>
    %c0_32 = arith.constant 0 : index
    %c6_33 = arith.constant 6 : index
    %40 = vector.load %arg3[%c0_32, %c6_33] : memref<8x7xbf16, #tpu.memory_space<vmem>>, vector<8x1xbf16>
    %cst_34 = arith.constant dense<0.000000e+00> : vector<8x64xf32>
    %41 = tpu.matmul %40, %39, %cst_34 {dimension_numbers = #tpu.dot_dimension_numbers<[1], [0], [0], [1], [0, 0, 1, 1], [], []>} : vector<8x1xbf16>, vector<1x64xbf16>, vector<8x64xf32> -> vector<8x64xf32>
    %42 = arith.addf %36, %41 : vector<8x64xf32>
    %c0_35 = arith.constant 0 : index
    %c0_36 = arith.constant 0 : index
    %43 = vector.load %arg4[%c0_35, %c0_36] : memref<8x1xf32, #tpu.memory_space<vmem>>, vector<8x1xf32>
    %44 = vector.broadcast %43 : vector<8x1xf32> to vector<8x64xf32>
    %45 = arith.addf %42, %44 : vector<8x64xf32>
    %46 = arith.truncf %45 : vector<8x64xf32> to vector<8x64xbf16>
    %c0_37 = arith.constant 0 : index
    %c0_38 = arith.constant 0 : index
    %c0_39 = arith.constant 0 : index
    %47 = vector.load %arg5[%c0_37, %c0_38, %c0_39] : memref<1x8x64xbf16, #tpu.memory_space<vmem>>, vector<1x8x64xbf16>
    %48 = vector.shape_cast %47 : vector<1x8x64xbf16> to vector<8x64xbf16>
    %49 = vector.shape_cast %46 : vector<8x64xbf16> to vector<1x8x64xbf16>
    tpu.vector_store %arg5[%c0_37, %c0_38, %c0_39], %49 {strides = array<i32>} : memref<1x8x64xbf16, #tpu.memory_space<vmem>>, vector<1x8x64xbf16>,
    return
  }
  func.func @transform_0(%arg0: i32, %arg1: i32) -> (i32, i32, i32) {
    %c0_i32 = arith.constant 0 : i32
    %c0_i32_0 = arith.constant 0 : i32
    %c0_i32_1 = arith.constant 0 : i32
    return %arg0, %c0_i32, %c0_i32_0 : i32, i32, i32
  }
  func.func @transform_1(%arg0: i32, %arg1: i32) -> (i32, i32) {
    %c0_i32 = arith.constant 0 : i32
    %c0_i32_0 = arith.constant 0 : i32
    %c0_i32_1 = arith.constant 0 : i32
    return %c0_i32, %c0_i32_0 : i32, i32
  }
  func.func @transform_2(%arg0: i32, %arg1: i32) -> (i32, i32) {
    %c0_i32 = arith.constant 0 : i32
    %c0_i32_0 = arith.constant 0 : i32
    %c0_i32_1 = arith.constant 0 : i32
    return %c0_i32, %c0_i32_0 : i32, i32
  }
  func.func @transform_3(%arg0: i32, %arg1: i32) -> (i32, i32, i32) {
    %c0_i32 = arith.constant 0 : i32
    %c0_i32_0 = arith.constant 0 : i32
    return %arg0, %c0_i32, %arg1 : i32, i32, i32
  }
}

module attributes {stable_mosaic.version = 11 : i64} {
  func.func @_conv_kernel(%arg0: i32, %arg1: i32, %arg2: memref<1x8x70xbf16, #tpu.memory_space<vmem>>, %arg3: memref<4x56xbf16, #tpu.memory_space<vmem>>, %arg4: memref<4x1xf32, #tpu.memory_space<vmem>>, %arg5: memref<1x4x64xbf16, #tpu.memory_space<vmem>>, %arg6: memref<56x64xf32, #tpu.memory_space<vmem>>) attributes {dimension_semantics = [#tpu.dimension_semantics<parallel>, #tpu.dimension_semantics<arbitrary>], iteration_bounds = array<i64: 4, 1>, scalar_prefetch = 0 : i64, scratch_operands = 1 : i64, tpu.core_type = #tpu.core_type<tc>, window_params = [{transform_indices = @transform_0, window_bounds = array<i64: 1, 8, 70>}, {pipeline_mode = #tpu.pipeline_mode<synchronous>, transform_indices = @transform_1, window_bounds = array<i64: 4, 56>}, {pipeline_mode = #tpu.pipeline_mode<synchronous>, transform_indices = @transform_2, window_bounds = array<i64: 4, 1>}, {transform_indices = @transform_3, window_bounds = array<i64: 1, 4, 64>}]} {
    %c0 = arith.constant 0 : index
    %c0_0 = arith.constant 0 : index
    %c0_1 = arith.constant 0 : index
    %0 = vector.load %arg2[%c0, %c0_0, %c0_1] : memref<1x8x70xbf16, #tpu.memory_space<vmem>>, vector<1x8x64xbf16>
    %1 = vector.shape_cast %0 : vector<1x8x64xbf16> to vector<8x64xbf16>
    %2 = arith.extf %1 : vector<8x64xbf16> to vector<8x64xf32>
    %c0_2 = arith.constant 0 : index
    %c0_3 = arith.constant 0 : index
    %3 = vector.load %arg6[%c0_2, %c0_3] : memref<56x64xf32, #tpu.memory_space<vmem>>, vector<8x64xf32>
    tpu.vector_store %arg6[%c0_2, %c0_3], %2 {strides = array<i32>} : memref<56x64xf32, #tpu.memory_space<vmem>>, vector<8x64xf32>,
    %c0_4 = arith.constant 0 : index
    %c0_5 = arith.constant 0 : index
    %c1 = arith.constant 1 : index
    %4 = vector.load %arg2[%c0_4, %c0_5, %c1] : memref<1x8x70xbf16, #tpu.memory_space<vmem>>, vector<1x8x64xbf16>
    %5 = vector.shape_cast %4 : vector<1x8x64xbf16> to vector<8x64xbf16>
    %6 = arith.extf %5 : vector<8x64xbf16> to vector<8x64xf32>
    %c8 = arith.constant 8 : index
    %c0_6 = arith.constant 0 : index
    %7 = vector.load %arg6[%c8, %c0_6] : memref<56x64xf32, #tpu.memory_space<vmem>>, vector<8x64xf32>
    tpu.vector_store %arg6[%c8, %c0_6], %6 {strides = array<i32>} : memref<56x64xf32, #tpu.memory_space<vmem>>, vector<8x64xf32>,
    %c0_7 = arith.constant 0 : index
    %c0_8 = arith.constant 0 : index
    %c2 = arith.constant 2 : index
    %8 = vector.load %arg2[%c0_7, %c0_8, %c2] : memref<1x8x70xbf16, #tpu.memory_space<vmem>>, vector<1x8x64xbf16>
    %9 = vector.shape_cast %8 : vector<1x8x64xbf16> to vector<8x64xbf16>
    %10 = arith.extf %9 : vector<8x64xbf16> to vector<8x64xf32>
    %c16 = arith.constant 16 : index
    %c0_9 = arith.constant 0 : index
    %11 = vector.load %arg6[%c16, %c0_9] : memref<56x64xf32, #tpu.memory_space<vmem>>, vector<8x64xf32>
    tpu.vector_store %arg6[%c16, %c0_9], %10 {strides = array<i32>} : memref<56x64xf32, #tpu.memory_space<vmem>>, vector<8x64xf32>,
    %c0_10 = arith.constant 0 : index
    %c0_11 = arith.constant 0 : index
    %c3 = arith.constant 3 : index
    %12 = vector.load %arg2[%c0_10, %c0_11, %c3] : memref<1x8x70xbf16, #tpu.memory_space<vmem>>, vector<1x8x64xbf16>
    %13 = vector.shape_cast %12 : vector<1x8x64xbf16> to vector<8x64xbf16>
    %14 = arith.extf %13 : vector<8x64xbf16> to vector<8x64xf32>
    %c24 = arith.constant 24 : index
    %c0_12 = arith.constant 0 : index
    %15 = vector.load %arg6[%c24, %c0_12] : memref<56x64xf32, #tpu.memory_space<vmem>>, vector<8x64xf32>
    tpu.vector_store %arg6[%c24, %c0_12], %14 {strides = array<i32>} : memref<56x64xf32, #tpu.memory_space<vmem>>, vector<8x64xf32>,
    %c0_13 = arith.constant 0 : index
    %c0_14 = arith.constant 0 : index
    %c4 = arith.constant 4 : index
    %16 = vector.load %arg2[%c0_13, %c0_14, %c4] : memref<1x8x70xbf16, #tpu.memory_space<vmem>>, vector<1x8x64xbf16>
    %17 = vector.shape_cast %16 : vector<1x8x64xbf16> to vector<8x64xbf16>
    %18 = arith.extf %17 : vector<8x64xbf16> to vector<8x64xf32>
    %c32 = arith.constant 32 : index
    %c0_15 = arith.constant 0 : index
    %19 = vector.load %arg6[%c32, %c0_15] : memref<56x64xf32, #tpu.memory_space<vmem>>, vector<8x64xf32>
    tpu.vector_store %arg6[%c32, %c0_15], %18 {strides = array<i32>} : memref<56x64xf32, #tpu.memory_space<vmem>>, vector<8x64xf32>,
    %c0_16 = arith.constant 0 : index
    %c0_17 = arith.constant 0 : index
    %c5 = arith.constant 5 : index
    %20 = vector.load %arg2[%c0_16, %c0_17, %c5] : memref<1x8x70xbf16, #tpu.memory_space<vmem>>, vector<1x8x64xbf16>
    %21 = vector.shape_cast %20 : vector<1x8x64xbf16> to vector<8x64xbf16>
    %22 = arith.extf %21 : vector<8x64xbf16> to vector<8x64xf32>
    %c40 = arith.constant 40 : index
    %c0_18 = arith.constant 0 : index
    %23 = vector.load %arg6[%c40, %c0_18] : memref<56x64xf32, #tpu.memory_space<vmem>>, vector<8x64xf32>
    tpu.vector_store %arg6[%c40, %c0_18], %22 {strides = array<i32>} : memref<56x64xf32, #tpu.memory_space<vmem>>, vector<8x64xf32>,
    %c0_19 = arith.constant 0 : index
    %c0_20 = arith.constant 0 : index
    %c6 = arith.constant 6 : index
    %24 = vector.load %arg2[%c0_19, %c0_20, %c6] : memref<1x8x70xbf16, #tpu.memory_space<vmem>>, vector<1x8x64xbf16>
    %25 = vector.shape_cast %24 : vector<1x8x64xbf16> to vector<8x64xbf16>
    %26 = arith.extf %25 : vector<8x64xbf16> to vector<8x64xf32>
    %c48 = arith.constant 48 : index
    %c0_21 = arith.constant 0 : index
    %27 = vector.load %arg6[%c48, %c0_21] : memref<56x64xf32, #tpu.memory_space<vmem>>, vector<8x64xf32>
    tpu.vector_store %arg6[%c48, %c0_21], %26 {strides = array<i32>} : memref<56x64xf32, #tpu.memory_space<vmem>>, vector<8x64xf32>,
    %c0_22 = arith.constant 0 : index
    %c0_23 = arith.constant 0 : index
    %28 = vector.load %arg3[%c0_22, %c0_23] : memref<4x56xbf16, #tpu.memory_space<vmem>>, vector<4x56xbf16>
    %c0_24 = arith.constant 0 : index
    %c0_25 = arith.constant 0 : index
    %29 = vector.load %arg6[%c0_24, %c0_25] : memref<56x64xf32, #tpu.memory_space<vmem>>, vector<56x64xf32>
    %30 = arith.truncf %29 : vector<56x64xf32> to vector<56x64xbf16>
    %cst = arith.constant dense<0.000000e+00> : vector<4x64xf32>
    %31 = tpu.matmul %28, %30, %cst {dimension_numbers = #tpu.dot_dimension_numbers<[1], [0], [0], [1], [0, 0, 1, 1], [], []>} : vector<4x56xbf16>, vector<56x64xbf16>, vector<4x64xf32> -> vector<4x64xf32>
    %c0_26 = arith.constant 0 : index
    %c0_27 = arith.constant 0 : index
    %32 = vector.load %arg4[%c0_26, %c0_27] : memref<4x1xf32, #tpu.memory_space<vmem>>, vector<4x1xf32>
    %33 = vector.broadcast %32 : vector<4x1xf32> to vector<4x64xf32>
    %34 = arith.addf %31, %33 : vector<4x64xf32>
    %35 = arith.truncf %34 : vector<4x64xf32> to vector<4x64xbf16>
    %c0_28 = arith.constant 0 : index
    %c0_29 = arith.constant 0 : index
    %c0_30 = arith.constant 0 : index
    %36 = vector.load %arg5[%c0_28, %c0_29, %c0_30] : memref<1x4x64xbf16, #tpu.memory_space<vmem>>, vector<1x4x64xbf16>
    %37 = vector.shape_cast %36 : vector<1x4x64xbf16> to vector<4x64xbf16>
    %38 = vector.shape_cast %35 : vector<4x64xbf16> to vector<1x4x64xbf16>
    tpu.vector_store %arg5[%c0_28, %c0_29, %c0_30], %38 {strides = array<i32>} : memref<1x4x64xbf16, #tpu.memory_space<vmem>>, vector<1x4x64xbf16>,
    return
  }
  func.func @transform_0(%arg0: i32, %arg1: i32) -> (i32, i32, i32) {
    %c0_i32 = arith.constant 0 : i32
    %c0_i32_0 = arith.constant 0 : i32
    %c0_i32_1 = arith.constant 0 : i32
    return %arg0, %c0_i32, %c0_i32_0 : i32, i32, i32
  }
  func.func @transform_1(%arg0: i32, %arg1: i32) -> (i32, i32) {
    %c0_i32 = arith.constant 0 : i32
    %c0_i32_0 = arith.constant 0 : i32
    %c0_i32_1 = arith.constant 0 : i32
    return %c0_i32, %c0_i32_0 : i32, i32
  }
  func.func @transform_2(%arg0: i32, %arg1: i32) -> (i32, i32) {
    %c0_i32 = arith.constant 0 : i32
    %c0_i32_0 = arith.constant 0 : i32
    %c0_i32_1 = arith.constant 0 : i32
    return %c0_i32, %c0_i32_0 : i32, i32
  }
  func.func @transform_3(%arg0: i32, %arg1: i32) -> (i32, i32, i32) {
    %c0_i32 = arith.constant 0 : i32
    %c0_i32_0 = arith.constant 0 : i32
    return %arg0, %c0_i32, %arg1 : i32, i32, i32
  }
}

module attributes {stable_mosaic.version = 11 : i64} {
  func.func @_conv_kernel(%arg0: i32, %arg1: i32, %arg2: memref<1x4x64xbf16, #tpu.memory_space<vmem>>, %arg3: memref<8x4xbf16, #tpu.memory_space<vmem>>, %arg4: memref<8x1xf32, #tpu.memory_space<vmem>>, %arg5: memref<1x8x64xbf16, #tpu.memory_space<vmem>>, %arg6: memref<8x8xbf16, #tpu.memory_space<vmem>>, %arg7: memref<1x8x64xbf16, #tpu.memory_space<vmem>>) attributes {dimension_semantics = [#tpu.dimension_semantics<parallel>, #tpu.dimension_semantics<arbitrary>], iteration_bounds = array<i64: 4, 1>, scalar_prefetch = 0 : i64, scratch_operands = 0 : i64, tpu.core_type = #tpu.core_type<tc>, window_params = [{transform_indices = @transform_0, window_bounds = array<i64: 1, 4, 64>}, {pipeline_mode = #tpu.pipeline_mode<synchronous>, transform_indices = @transform_1, window_bounds = array<i64: 8, 4>}, {pipeline_mode = #tpu.pipeline_mode<synchronous>, transform_indices = @transform_2, window_bounds = array<i64: 8, 1>}, {transform_indices = @transform_3, window_bounds = array<i64: 1, 8, 64>}, {pipeline_mode = #tpu.pipeline_mode<synchronous>, transform_indices = @transform_4, window_bounds = array<i64: 8, 8>}, {transform_indices = @transform_5, window_bounds = array<i64: 1, 8, 64>}]} {
    %cst = arith.constant 0.000000e+00 : f32
    %0 = vector.broadcast %cst : f32 to vector<8x64xf32>
    %c0 = arith.constant 0 : index
    %c0_0 = arith.constant 0 : index
    %c0_1 = arith.constant 0 : index
    %1 = vector.load %arg2[%c0, %c0_0, %c0_1] : memref<1x4x64xbf16, #tpu.memory_space<vmem>>, vector<1x4x64xbf16>
    %2 = vector.shape_cast %1 : vector<1x4x64xbf16> to vector<4x64xbf16>
    %c0_2 = arith.constant 0 : index
    %c0_3 = arith.constant 0 : index
    %3 = vector.load %arg3[%c0_2, %c0_3] : memref<8x4xbf16, #tpu.memory_space<vmem>>, vector<8x4xbf16>
    %cst_4 = arith.constant dense<0.000000e+00> : vector<8x64xf32>
    %4 = tpu.matmul %3, %2, %cst_4 {dimension_numbers = #tpu.dot_dimension_numbers<[1], [0], [0], [1], [0, 0, 1, 1], [], []>} : vector<8x4xbf16>, vector<4x64xbf16>, vector<8x64xf32> -> vector<8x64xf32>
    %5 = arith.addf %0, %4 : vector<8x64xf32>
    %c0_5 = arith.constant 0 : index
    %c0_6 = arith.constant 0 : index
    %c0_7 = arith.constant 0 : index
    %6 = vector.load %arg5[%c0_5, %c0_6, %c0_7] : memref<1x8x64xbf16, #tpu.memory_space<vmem>>, vector<1x8x64xbf16>
    %7 = vector.shape_cast %6 : vector<1x8x64xbf16> to vector<8x64xbf16>
    %c0_8 = arith.constant 0 : index
    %c0_9 = arith.constant 0 : index
    %8 = vector.load %arg6[%c0_8, %c0_9] : memref<8x8xbf16, #tpu.memory_space<vmem>>, vector<8x8xbf16>
    %cst_10 = arith.constant dense<0.000000e+00> : vector<8x64xf32>
    %9 = tpu.matmul %8, %7, %cst_10 {dimension_numbers = #tpu.dot_dimension_numbers<[1], [0], [0], [1], [0, 0, 1, 1], [], []>} : vector<8x8xbf16>, vector<8x64xbf16>, vector<8x64xf32> -> vector<8x64xf32>
    %10 = arith.addf %5, %9 : vector<8x64xf32>
    %c0_11 = arith.constant 0 : index
    %c0_12 = arith.constant 0 : index
    %11 = vector.load %arg4[%c0_11, %c0_12] : memref<8x1xf32, #tpu.memory_space<vmem>>, vector<8x1xf32>
    %12 = vector.broadcast %11 : vector<8x1xf32> to vector<8x64xf32>
    %13 = arith.addf %10, %12 : vector<8x64xf32>
    %14 = arith.truncf %13 : vector<8x64xf32> to vector<8x64xbf16>
    %c0_13 = arith.constant 0 : index
    %c0_14 = arith.constant 0 : index
    %c0_15 = arith.constant 0 : index
    %15 = vector.load %arg7[%c0_13, %c0_14, %c0_15] : memref<1x8x64xbf16, #tpu.memory_space<vmem>>, vector<1x8x64xbf16>
    %16 = vector.shape_cast %15 : vector<1x8x64xbf16> to vector<8x64xbf16>
    %17 = vector.shape_cast %14 : vector<8x64xbf16> to vector<1x8x64xbf16>
    tpu.vector_store %arg7[%c0_13, %c0_14, %c0_15], %17 {strides = array<i32>} : memref<1x8x64xbf16, #tpu.memory_space<vmem>>, vector<1x8x64xbf16>,
    return
  }
  func.func @transform_0(%arg0: i32, %arg1: i32) -> (i32, i32, i32) {
    %c0_i32 = arith.constant 0 : i32
    %c0_i32_0 = arith.constant 0 : i32
    %c0_i32_1 = arith.constant 0 : i32
    return %arg0, %c0_i32, %c0_i32_0 : i32, i32, i32
  }
  func.func @transform_1(%arg0: i32, %arg1: i32) -> (i32, i32) {
    %c0_i32 = arith.constant 0 : i32
    %c0_i32_0 = arith.constant 0 : i32
    %c0_i32_1 = arith.constant 0 : i32
    return %c0_i32, %c0_i32_0 : i32, i32
  }
  func.func @transform_2(%arg0: i32, %arg1: i32) -> (i32, i32) {
    %c0_i32 = arith.constant 0 : i32
    %c0_i32_0 = arith.constant 0 : i32
    %c0_i32_1 = arith.constant 0 : i32
    return %c0_i32, %c0_i32_0 : i32, i32
  }
  func.func @transform_3(%arg0: i32, %arg1: i32) -> (i32, i32, i32) {
    %c0_i32 = arith.constant 0 : i32
    %c0_i32_0 = arith.constant 0 : i32
    %c0_i32_1 = arith.constant 0 : i32
    return %arg0, %c0_i32, %c0_i32_0 : i32, i32, i32
  }
  func.func @transform_4(%arg0: i32, %arg1: i32) -> (i32, i32) {
    %c0_i32 = arith.constant 0 : i32
    %c0_i32_0 = arith.constant 0 : i32
    %c0_i32_1 = arith.constant 0 : i32
    return %c0_i32, %c0_i32_0 : i32, i32
  }
  func.func @transform_5(%arg0: i32, %arg1: i32) -> (i32, i32, i32) {
    %c0_i32 = arith.constant 0 : i32
    %c0_i32_0 = arith.constant 0 : i32
    return %arg0, %c0_i32, %arg1 : i32, i32, i32
  }
}

module attributes {stable_mosaic.version = 11 : i64} {
  func.func @_conv_kernel(%arg0: i32, %arg1: i32, %arg2: memref<1x16x33xbf16, #tpu.memory_space<vmem>>, %arg3: memref<16x32xbf16, #tpu.memory_space<vmem>>, %arg4: memref<16x1xf32, #tpu.memory_space<vmem>>, %arg5: memref<1x16x32xbf16, #tpu.memory_space<vmem>>, %arg6: memref<32x32xf32, #tpu.memory_space<vmem>>) attributes {dimension_semantics = [#tpu.dimension_semantics<parallel>, #tpu.dimension_semantics<arbitrary>], iteration_bounds = array<i64: 4, 1>, scalar_prefetch = 0 : i64, scratch_operands = 1 : i64, tpu.core_type = #tpu.core_type<tc>, window_params = [{transform_indices = @transform_0, window_bounds = array<i64: 1, 16, 33>}, {pipeline_mode = #tpu.pipeline_mode<synchronous>, transform_indices = @transform_1, window_bounds = array<i64: 16, 32>}, {pipeline_mode = #tpu.pipeline_mode<synchronous>, transform_indices = @transform_2, window_bounds = array<i64: 16, 1>}, {transform_indices = @transform_3, window_bounds = array<i64: 1, 16, 32>}]} {
    %c0 = arith.constant 0 : index
    %c0_0 = arith.constant 0 : index
    %c0_1 = arith.constant 0 : index
    %0 = vector.load %arg2[%c0, %c0_0, %c0_1] : memref<1x16x33xbf16, #tpu.memory_space<vmem>>, vector<1x16x32xbf16>
    %1 = vector.shape_cast %0 : vector<1x16x32xbf16> to vector<16x32xbf16>
    %2 = arith.extf %1 : vector<16x32xbf16> to vector<16x32xf32>
    %c0_2 = arith.constant 0 : index
    %c0_3 = arith.constant 0 : index
    %3 = vector.load %arg6[%c0_2, %c0_3] : memref<32x32xf32, #tpu.memory_space<vmem>>, vector<16x32xf32>
    tpu.vector_store %arg6[%c0_2, %c0_3], %2 {strides = array<i32>} : memref<32x32xf32, #tpu.memory_space<vmem>>, vector<16x32xf32>,
    %c0_4 = arith.constant 0 : index
    %c0_5 = arith.constant 0 : index
    %c1 = arith.constant 1 : index
    %4 = vector.load %arg2[%c0_4, %c0_5, %c1] : memref<1x16x33xbf16, #tpu.memory_space<vmem>>, vector<1x16x32xbf16>
    %5 = vector.shape_cast %4 : vector<1x16x32xbf16> to vector<16x32xbf16>
    %6 = arith.extf %5 : vector<16x32xbf16> to vector<16x32xf32>
    %c16 = arith.constant 16 : index
    %c0_6 = arith.constant 0 : index
    %7 = vector.load %arg6[%c16, %c0_6] : memref<32x32xf32, #tpu.memory_space<vmem>>, vector<16x32xf32>
    tpu.vector_store %arg6[%c16, %c0_6], %6 {strides = array<i32>} : memref<32x32xf32, #tpu.memory_space<vmem>>, vector<16x32xf32>,
    %c0_7 = arith.constant 0 : index
    %c0_8 = arith.constant 0 : index
    %8 = vector.load %arg3[%c0_7, %c0_8] : memref<16x32xbf16, #tpu.memory_space<vmem>>, vector<16x32xbf16>
    %c0_9 = arith.constant 0 : index
    %c0_10 = arith.constant 0 : index
    %9 = vector.load %arg6[%c0_9, %c0_10] : memref<32x32xf32, #tpu.memory_space<vmem>>, vector<32x32xf32>
    %10 = arith.truncf %9 : vector<32x32xf32> to vector<32x32xbf16>
    %cst = arith.constant dense<0.000000e+00> : vector<16x32xf32>
    %11 = tpu.matmul %8, %10, %cst {dimension_numbers = #tpu.dot_dimension_numbers<[1], [0], [0], [1], [0, 0, 1, 1], [], []>} : vector<16x32xbf16>, vector<32x32xbf16>, vector<16x32xf32> -> vector<16x32xf32>
    %c0_11 = arith.constant 0 : index
    %c0_12 = arith.constant 0 : index
    %12 = vector.load %arg4[%c0_11, %c0_12] : memref<16x1xf32, #tpu.memory_space<vmem>>, vector<16x1xf32>
    %13 = vector.broadcast %12 : vector<16x1xf32> to vector<16x32xf32>
    %14 = arith.addf %11, %13 : vector<16x32xf32>
    %15 = arith.truncf %14 : vector<16x32xf32> to vector<16x32xbf16>
    %c0_13 = arith.constant 0 : index
    %c0_14 = arith.constant 0 : index
    %c0_15 = arith.constant 0 : index
    %16 = vector.load %arg5[%c0_13, %c0_14, %c0_15] : memref<1x16x32xbf16, #tpu.memory_space<vmem>>, vector<1x16x32xbf16>
    %17 = vector.shape_cast %16 : vector<1x16x32xbf16> to vector<16x32xbf16>
    %18 = vector.shape_cast %15 : vector<16x32xbf16> to vector<1x16x32xbf16>
    tpu.vector_store %arg5[%c0_13, %c0_14, %c0_15], %18 {strides = array<i32>} : memref<1x16x32xbf16, #tpu.memory_space<vmem>>, vector<1x16x32xbf16>,
    return
  }
  func.func @transform_0(%arg0: i32, %arg1: i32) -> (i32, i32, i32) {
    %c0_i32 = arith.constant 0 : i32
    %c0_i32_0 = arith.constant 0 : i32
    %c0_i32_1 = arith.constant 0 : i32
    return %arg0, %c0_i32, %c0_i32_0 : i32, i32, i32
  }
  func.func @transform_1(%arg0: i32, %arg1: i32) -> (i32, i32) {
    %c0_i32 = arith.constant 0 : i32
    %c0_i32_0 = arith.constant 0 : i32
    %c0_i32_1 = arith.constant 0 : i32
    return %c0_i32, %c0_i32_0 : i32, i32
  }
  func.func @transform_2(%arg0: i32, %arg1: i32) -> (i32, i32) {
    %c0_i32 = arith.constant 0 : i32
    %c0_i32_0 = arith.constant 0 : i32
    %c0_i32_1 = arith.constant 0 : i32
    return %c0_i32, %c0_i32_0 : i32, i32
  }
  func.func @transform_3(%arg0: i32, %arg1: i32) -> (i32, i32, i32) {
    %c0_i32 = arith.constant 0 : i32
    %c0_i32_0 = arith.constant 0 : i32
    return %arg0, %c0_i32, %arg1 : i32, i32, i32
  }
}

module attributes {stable_mosaic.version = 11 : i64} {
  func.func @_conv_kernel(%arg0: i32, %arg1: i32, %arg2: memref<1x16x38xbf16, #tpu.memory_space<vmem>>, %arg3: memref<8x112xbf16, #tpu.memory_space<vmem>>, %arg4: memref<8x1xf32, #tpu.memory_space<vmem>>, %arg5: memref<1x8x32xbf16, #tpu.memory_space<vmem>>, %arg6: memref<112x32xf32, #tpu.memory_space<vmem>>) attributes {dimension_semantics = [#tpu.dimension_semantics<parallel>, #tpu.dimension_semantics<arbitrary>], iteration_bounds = array<i64: 4, 1>, scalar_prefetch = 0 : i64, scratch_operands = 1 : i64, tpu.core_type = #tpu.core_type<tc>, window_params = [{transform_indices = @transform_0, window_bounds = array<i64: 1, 16, 38>}, {pipeline_mode = #tpu.pipeline_mode<synchronous>, transform_indices = @transform_1, window_bounds = array<i64: 8, 112>}, {pipeline_mode = #tpu.pipeline_mode<synchronous>, transform_indices = @transform_2, window_bounds = array<i64: 8, 1>}, {transform_indices = @transform_3, window_bounds = array<i64: 1, 8, 32>}]} {
    %c0 = arith.constant 0 : index
    %c0_0 = arith.constant 0 : index
    %c0_1 = arith.constant 0 : index
    %0 = vector.load %arg2[%c0, %c0_0, %c0_1] : memref<1x16x38xbf16, #tpu.memory_space<vmem>>, vector<1x16x32xbf16>
    %1 = vector.shape_cast %0 : vector<1x16x32xbf16> to vector<16x32xbf16>
    %2 = arith.extf %1 : vector<16x32xbf16> to vector<16x32xf32>
    %c0_2 = arith.constant 0 : index
    %c0_3 = arith.constant 0 : index
    %3 = vector.load %arg6[%c0_2, %c0_3] : memref<112x32xf32, #tpu.memory_space<vmem>>, vector<16x32xf32>
    tpu.vector_store %arg6[%c0_2, %c0_3], %2 {strides = array<i32>} : memref<112x32xf32, #tpu.memory_space<vmem>>, vector<16x32xf32>,
    %c0_4 = arith.constant 0 : index
    %c0_5 = arith.constant 0 : index
    %c1 = arith.constant 1 : index
    %4 = vector.load %arg2[%c0_4, %c0_5, %c1] : memref<1x16x38xbf16, #tpu.memory_space<vmem>>, vector<1x16x32xbf16>
    %5 = vector.shape_cast %4 : vector<1x16x32xbf16> to vector<16x32xbf16>
    %6 = arith.extf %5 : vector<16x32xbf16> to vector<16x32xf32>
    %c16 = arith.constant 16 : index
    %c0_6 = arith.constant 0 : index
    %7 = vector.load %arg6[%c16, %c0_6] : memref<112x32xf32, #tpu.memory_space<vmem>>, vector<16x32xf32>
    tpu.vector_store %arg6[%c16, %c0_6], %6 {strides = array<i32>} : memref<112x32xf32, #tpu.memory_space<vmem>>, vector<16x32xf32>,
    %c0_7 = arith.constant 0 : index
    %c0_8 = arith.constant 0 : index
    %c2 = arith.constant 2 : index
    %8 = vector.load %arg2[%c0_7, %c0_8, %c2] : memref<1x16x38xbf16, #tpu.memory_space<vmem>>, vector<1x16x32xbf16>
    %9 = vector.shape_cast %8 : vector<1x16x32xbf16> to vector<16x32xbf16>
    %10 = arith.extf %9 : vector<16x32xbf16> to vector<16x32xf32>
    %c32 = arith.constant 32 : index
    %c0_9 = arith.constant 0 : index
    %11 = vector.load %arg6[%c32, %c0_9] : memref<112x32xf32, #tpu.memory_space<vmem>>, vector<16x32xf32>
    tpu.vector_store %arg6[%c32, %c0_9], %10 {strides = array<i32>} : memref<112x32xf32, #tpu.memory_space<vmem>>, vector<16x32xf32>,
    %c0_10 = arith.constant 0 : index
    %c0_11 = arith.constant 0 : index
    %c3 = arith.constant 3 : index
    %12 = vector.load %arg2[%c0_10, %c0_11, %c3] : memref<1x16x38xbf16, #tpu.memory_space<vmem>>, vector<1x16x32xbf16>
    %13 = vector.shape_cast %12 : vector<1x16x32xbf16> to vector<16x32xbf16>
    %14 = arith.extf %13 : vector<16x32xbf16> to vector<16x32xf32>
    %c48 = arith.constant 48 : index
    %c0_12 = arith.constant 0 : index
    %15 = vector.load %arg6[%c48, %c0_12] : memref<112x32xf32, #tpu.memory_space<vmem>>, vector<16x32xf32>
    tpu.vector_store %arg6[%c48, %c0_12], %14 {strides = array<i32>} : memref<112x32xf32, #tpu.memory_space<vmem>>, vector<16x32xf32>,
    %c0_13 = arith.constant 0 : index
    %c0_14 = arith.constant 0 : index
    %c4 = arith.constant 4 : index
    %16 = vector.load %arg2[%c0_13, %c0_14, %c4] : memref<1x16x38xbf16, #tpu.memory_space<vmem>>, vector<1x16x32xbf16>
    %17 = vector.shape_cast %16 : vector<1x16x32xbf16> to vector<16x32xbf16>
    %18 = arith.extf %17 : vector<16x32xbf16> to vector<16x32xf32>
    %c64 = arith.constant 64 : index
    %c0_15 = arith.constant 0 : index
    %19 = vector.load %arg6[%c64, %c0_15] : memref<112x32xf32, #tpu.memory_space<vmem>>, vector<16x32xf32>
    tpu.vector_store %arg6[%c64, %c0_15], %18 {strides = array<i32>} : memref<112x32xf32, #tpu.memory_space<vmem>>, vector<16x32xf32>,
    %c0_16 = arith.constant 0 : index
    %c0_17 = arith.constant 0 : index
    %c5 = arith.constant 5 : index
    %20 = vector.load %arg2[%c0_16, %c0_17, %c5] : memref<1x16x38xbf16, #tpu.memory_space<vmem>>, vector<1x16x32xbf16>
    %21 = vector.shape_cast %20 : vector<1x16x32xbf16> to vector<16x32xbf16>
    %22 = arith.extf %21 : vector<16x32xbf16> to vector<16x32xf32>
    %c80 = arith.constant 80 : index
    %c0_18 = arith.constant 0 : index
    %23 = vector.load %arg6[%c80, %c0_18] : memref<112x32xf32, #tpu.memory_space<vmem>>, vector<16x32xf32>
    tpu.vector_store %arg6[%c80, %c0_18], %22 {strides = array<i32>} : memref<112x32xf32, #tpu.memory_space<vmem>>, vector<16x32xf32>,
    %c0_19 = arith.constant 0 : index
    %c0_20 = arith.constant 0 : index
    %c6 = arith.constant 6 : index
    %24 = vector.load %arg2[%c0_19, %c0_20, %c6] : memref<1x16x38xbf16, #tpu.memory_space<vmem>>, vector<1x16x32xbf16>
    %25 = vector.shape_cast %24 : vector<1x16x32xbf16> to vector<16x32xbf16>
    %26 = arith.extf %25 : vector<16x32xbf16> to vector<16x32xf32>
    %c96 = arith.constant 96 : index
    %c0_21 = arith.constant 0 : index
    %27 = vector.load %arg6[%c96, %c0_21] : memref<112x32xf32, #tpu.memory_space<vmem>>, vector<16x32xf32>
    tpu.vector_store %arg6[%c96, %c0_21], %26 {strides = array<i32>} : memref<112x32xf32, #tpu.memory_space<vmem>>, vector<16x32xf32>,
    %c0_22 = arith.constant 0 : index
    %c0_23 = arith.constant 0 : index
    %28 = vector.load %arg3[%c0_22, %c0_23] : memref<8x112xbf16, #tpu.memory_space<vmem>>, vector<8x112xbf16>
    %c0_24 = arith.constant 0 : index
    %c0_25 = arith.constant 0 : index
    %29 = vector.load %arg6[%c0_24, %c0_25] : memref<112x32xf32, #tpu.memory_space<vmem>>, vector<112x32xf32>
    %30 = arith.truncf %29 : vector<112x32xf32> to vector<112x32xbf16>
    %cst = arith.constant dense<0.000000e+00> : vector<8x32xf32>
    %31 = tpu.matmul %28, %30, %cst {dimension_numbers = #tpu.dot_dimension_numbers<[1], [0], [0], [1], [0, 0, 1, 1], [], []>} : vector<8x112xbf16>, vector<112x32xbf16>, vector<8x32xf32> -> vector<8x32xf32>
    %c0_26 = arith.constant 0 : index
    %c0_27 = arith.constant 0 : index
    %32 = vector.load %arg4[%c0_26, %c0_27] : memref<8x1xf32, #tpu.memory_space<vmem>>, vector<8x1xf32>
    %33 = vector.broadcast %32 : vector<8x1xf32> to vector<8x32xf32>
    %34 = arith.addf %31, %33 : vector<8x32xf32>
    %35 = arith.truncf %34 : vector<8x32xf32> to vector<8x32xbf16>
    %c0_28 = arith.constant 0 : index
    %c0_29 = arith.constant 0 : index
    %c0_30 = arith.constant 0 : index
    %36 = vector.load %arg5[%c0_28, %c0_29, %c0_30] : memref<1x8x32xbf16, #tpu.memory_space<vmem>>, vector<1x8x32xbf16>
    %37 = vector.shape_cast %36 : vector<1x8x32xbf16> to vector<8x32xbf16>
    %38 = vector.shape_cast %35 : vector<8x32xbf16> to vector<1x8x32xbf16>
    tpu.vector_store %arg5[%c0_28, %c0_29, %c0_30], %38 {strides = array<i32>} : memref<1x8x32xbf16, #tpu.memory_space<vmem>>, vector<1x8x32xbf16>,
    return
  }
  func.func @transform_0(%arg0: i32, %arg1: i32) -> (i32, i32, i32) {
    %c0_i32 = arith.constant 0 : i32
    %c0_i32_0 = arith.constant 0 : i32
    %c0_i32_1 = arith.constant 0 : i32
    return %arg0, %c0_i32, %c0_i32_0 : i32, i32, i32
  }
  func.func @transform_1(%arg0: i32, %arg1: i32) -> (i32, i32) {
    %c0_i32 = arith.constant 0 : i32
    %c0_i32_0 = arith.constant 0 : i32
    %c0_i32_1 = arith.constant 0 : i32
    return %c0_i32, %c0_i32_0 : i32, i32
  }
  func.func @transform_2(%arg0: i32, %arg1: i32) -> (i32, i32) {
    %c0_i32 = arith.constant 0 : i32
    %c0_i32_0 = arith.constant 0 : i32
    %c0_i32_1 = arith.constant 0 : i32
    return %c0_i32, %c0_i32_0 : i32, i32
  }
  func.func @transform_3(%arg0: i32, %arg1: i32) -> (i32, i32, i32) {
    %c0_i32 = arith.constant 0 : i32
    %c0_i32_0 = arith.constant 0 : i32
    return %arg0, %c0_i32, %arg1 : i32, i32, i32
  }
}

module attributes {stable_mosaic.version = 11 : i64} {
  func.func @_conv_kernel(%arg0: i32, %arg1: i32, %arg2: memref<1x8x32xbf16, #tpu.memory_space<vmem>>, %arg3: memref<16x8xbf16, #tpu.memory_space<vmem>>, %arg4: memref<16x1xf32, #tpu.memory_space<vmem>>, %arg5: memref<1x16x32xbf16, #tpu.memory_space<vmem>>, %arg6: memref<16x16xbf16, #tpu.memory_space<vmem>>, %arg7: memref<1x16x32xbf16, #tpu.memory_space<vmem>>, %arg8: memref<8x32xf32, #tpu.memory_space<vmem>>) attributes {dimension_semantics = [#tpu.dimension_semantics<parallel>, #tpu.dimension_semantics<arbitrary>], iteration_bounds = array<i64: 4, 1>, scalar_prefetch = 0 : i64, scratch_operands = 1 : i64, tpu.core_type = #tpu.core_type<tc>, window_params = [{transform_indices = @transform_0, window_bounds = array<i64: 1, 8, 32>}, {pipeline_mode = #tpu.pipeline_mode<synchronous>, transform_indices = @transform_1, window_bounds = array<i64: 16, 8>}, {pipeline_mode = #tpu.pipeline_mode<synchronous>, transform_indices = @transform_2, window_bounds = array<i64: 16, 1>}, {transform_indices = @transform_3, window_bounds = array<i64: 1, 16, 32>}, {pipeline_mode = #tpu.pipeline_mode<synchronous>, transform_indices = @transform_4, window_bounds = array<i64: 16, 16>}, {transform_indices = @transform_5, window_bounds = array<i64: 1, 16, 32>}]} {
    %c0 = arith.constant 0 : index
    %c0_0 = arith.constant 0 : index
    %c0_1 = arith.constant 0 : index
    %0 = vector.load %arg2[%c0, %c0_0, %c0_1] : memref<1x8x32xbf16, #tpu.memory_space<vmem>>, vector<1x8x32xbf16>
    %1 = vector.shape_cast %0 : vector<1x8x32xbf16> to vector<8x32xbf16>
    %2 = arith.extf %1 : vector<8x32xbf16> to vector<8x32xf32>
    %c0_2 = arith.constant 0 : index
    %c0_3 = arith.constant 0 : index
    %3 = vector.load %arg8[%c0_2, %c0_3] : memref<8x32xf32, #tpu.memory_space<vmem>>, vector<8x32xf32>
    tpu.vector_store %arg8[%c0_2, %c0_3], %2 {strides = array<i32>} : memref<8x32xf32, #tpu.memory_space<vmem>>, vector<8x32xf32>,
    %c0_4 = arith.constant 0 : index
    %c0_5 = arith.constant 0 : index
    %4 = vector.load %arg3[%c0_4, %c0_5] : memref<16x8xbf16, #tpu.memory_space<vmem>>, vector<16x8xbf16>
    %c0_6 = arith.constant 0 : index
    %c0_7 = arith.constant 0 : index
    %5 = vector.load %arg8[%c0_6, %c0_7] : memref<8x32xf32, #tpu.memory_space<vmem>>, vector<8x32xf32>
    %6 = arith.truncf %5 : vector<8x32xf32> to vector<8x32xbf16>
    %cst = arith.constant dense<0.000000e+00> : vector<16x32xf32>
    %7 = tpu.matmul %4, %6, %cst {dimension_numbers = #tpu.dot_dimension_numbers<[1], [0], [0], [1], [0, 0, 1, 1], [], []>} : vector<16x8xbf16>, vector<8x32xbf16>, vector<16x32xf32> -> vector<16x32xf32>
    %c0_8 = arith.constant 0 : index
    %c0_9 = arith.constant 0 : index
    %c0_10 = arith.constant 0 : index
    %8 = vector.load %arg5[%c0_8, %c0_9, %c0_10] : memref<1x16x32xbf16, #tpu.memory_space<vmem>>, vector<1x16x32xbf16>
    %9 = vector.shape_cast %8 : vector<1x16x32xbf16> to vector<16x32xbf16>
    %c0_11 = arith.constant 0 : index
    %c0_12 = arith.constant 0 : index
    %10 = vector.load %arg6[%c0_11, %c0_12] : memref<16x16xbf16, #tpu.memory_space<vmem>>, vector<16x16xbf16>
    %cst_13 = arith.constant dense<0.000000e+00> : vector<16x32xf32>
    %11 = tpu.matmul %10, %9, %cst_13 {dimension_numbers = #tpu.dot_dimension_numbers<[1], [0], [0], [1], [0, 0, 1, 1], [], []>} : vector<16x16xbf16>, vector<16x32xbf16>, vector<16x32xf32> -> vector<16x32xf32>
    %12 = arith.addf %7, %11 : vector<16x32xf32>
    %c0_14 = arith.constant 0 : index
    %c0_15 = arith.constant 0 : index
    %13 = vector.load %arg4[%c0_14, %c0_15] : memref<16x1xf32, #tpu.memory_space<vmem>>, vector<16x1xf32>
    %14 = vector.broadcast %13 : vector<16x1xf32> to vector<16x32xf32>
    %15 = arith.addf %12, %14 : vector<16x32xf32>
    %16 = arith.truncf %15 : vector<16x32xf32> to vector<16x32xbf16>
    %c0_16 = arith.constant 0 : index
    %c0_17 = arith.constant 0 : index
    %c0_18 = arith.constant 0 : index
    %17 = vector.load %arg7[%c0_16, %c0_17, %c0_18] : memref<1x16x32xbf16, #tpu.memory_space<vmem>>, vector<1x16x32xbf16>
    %18 = vector.shape_cast %17 : vector<1x16x32xbf16> to vector<16x32xbf16>
    %19 = vector.shape_cast %16 : vector<16x32xbf16> to vector<1x16x32xbf16>
    tpu.vector_store %arg7[%c0_16, %c0_17, %c0_18], %19 {strides = array<i32>} : memref<1x16x32xbf16, #tpu.memory_space<vmem>>, vector<1x16x32xbf16>,
    return
  }
  func.func @transform_0(%arg0: i32, %arg1: i32) -> (i32, i32, i32) {
    %c0_i32 = arith.constant 0 : i32
    %c0_i32_0 = arith.constant 0 : i32
    %c0_i32_1 = arith.constant 0 : i32
    return %arg0, %c0_i32, %c0_i32_0 : i32, i32, i32
  }
  func.func @transform_1(%arg0: i32, %arg1: i32) -> (i32, i32) {
    %c0_i32 = arith.constant 0 : i32
    %c0_i32_0 = arith.constant 0 : i32
    %c0_i32_1 = arith.constant 0 : i32
    return %c0_i32, %c0_i32_0 : i32, i32
  }
  func.func @transform_2(%arg0: i32, %arg1: i32) -> (i32, i32) {
    %c0_i32 = arith.constant 0 : i32
    %c0_i32_0 = arith.constant 0 : i32
    %c0_i32_1 = arith.constant 0 : i32
    return %c0_i32, %c0_i32_0 : i32, i32
  }
  func.func @transform_3(%arg0: i32, %arg1: i32) -> (i32, i32, i32) {
    %c0_i32 = arith.constant 0 : i32
    %c0_i32_0 = arith.constant 0 : i32
    %c0_i32_1 = arith.constant 0 : i32
    return %arg0, %c0_i32, %c0_i32_0 : i32, i32, i32
  }
  func.func @transform_4(%arg0: i32, %arg1: i32) -> (i32, i32) {
    %c0_i32 = arith.constant 0 : i32
    %c0_i32_0 = arith.constant 0 : i32
    %c0_i32_1 = arith.constant 0 : i32
    return %c0_i32, %c0_i32_0 : i32, i32
  }
  func.func @transform_5(%arg0: i32, %arg1: i32) -> (i32, i32, i32) {
    %c0_i32 = arith.constant 0 : i32
    %c0_i32_0 = arith.constant 0 : i32
    return %arg0, %c0_i32, %arg1 : i32, i32, i32
  }
}

module attributes {stable_mosaic.version = 11 : i64} {
  func.func @_conv_kernel(%arg0: i32, %arg1: i32, %arg2: memref<1x64x9xbf16, #tpu.memory_space<vmem>>, %arg3: memref<32x128xbf16, #tpu.memory_space<vmem>>, %arg4: memref<32x1xf32, #tpu.memory_space<vmem>>, %arg5: memref<1x32x8xbf16, #tpu.memory_space<vmem>>, %arg6: memref<128x8xf32, #tpu.memory_space<vmem>>) attributes {dimension_semantics = [#tpu.dimension_semantics<parallel>, #tpu.dimension_semantics<arbitrary>], iteration_bounds = array<i64: 4, 1>, scalar_prefetch = 0 : i64, scratch_operands = 1 : i64, tpu.core_type = #tpu.core_type<tc>, window_params = [{transform_indices = @transform_0, window_bounds = array<i64: 1, 64, 9>}, {pipeline_mode = #tpu.pipeline_mode<synchronous>, transform_indices = @transform_1, window_bounds = array<i64: 32, 128>}, {pipeline_mode = #tpu.pipeline_mode<synchronous>, transform_indices = @transform_2, window_bounds = array<i64: 32, 1>}, {transform_indices = @transform_3, window_bounds = array<i64: 1, 32, 8>}]} {
    %c0 = arith.constant 0 : index
    %c0_0 = arith.constant 0 : index
    %c0_1 = arith.constant 0 : index
    %0 = vector.load %arg2[%c0, %c0_0, %c0_1] : memref<1x64x9xbf16, #tpu.memory_space<vmem>>, vector<1x64x8xbf16>
    %1 = vector.shape_cast %0 : vector<1x64x8xbf16> to vector<64x8xbf16>
    %2 = arith.extf %1 : vector<64x8xbf16> to vector<64x8xf32>
    %c0_2 = arith.constant 0 : index
    %c0_3 = arith.constant 0 : index
    %3 = vector.load %arg6[%c0_2, %c0_3] : memref<128x8xf32, #tpu.memory_space<vmem>>, vector<64x8xf32>
    tpu.vector_store %arg6[%c0_2, %c0_3], %2 {strides = array<i32>} : memref<128x8xf32, #tpu.memory_space<vmem>>, vector<64x8xf32>,
    %c0_4 = arith.constant 0 : index
    %c0_5 = arith.constant 0 : index
    %c1 = arith.constant 1 : index
    %4 = vector.load %arg2[%c0_4, %c0_5, %c1] : memref<1x64x9xbf16, #tpu.memory_space<vmem>>, vector<1x64x8xbf16>
    %5 = vector.shape_cast %4 : vector<1x64x8xbf16> to vector<64x8xbf16>
    %6 = arith.extf %5 : vector<64x8xbf16> to vector<64x8xf32>
    %c64 = arith.constant 64 : index
    %c0_6 = arith.constant 0 : index
    %7 = vector.load %arg6[%c64, %c0_6] : memref<128x8xf32, #tpu.memory_space<vmem>>, vector<64x8xf32>
    tpu.vector_store %arg6[%c64, %c0_6], %6 {strides = array<i32>} : memref<128x8xf32, #tpu.memory_space<vmem>>, vector<64x8xf32>,
    %c0_7 = arith.constant 0 : index
    %c0_8 = arith.constant 0 : index
    %8 = vector.load %arg3[%c0_7, %c0_8] : memref<32x128xbf16, #tpu.memory_space<vmem>>, vector<32x128xbf16>
    %c0_9 = arith.constant 0 : index
    %c0_10 = arith.constant 0 : index
    %9 = vector.load %arg6[%c0_9, %c0_10] : memref<128x8xf32, #tpu.memory_space<vmem>>, vector<128x8xf32>
    %10 = arith.truncf %9 : vector<128x8xf32> to vector<128x8xbf16>
    %cst = arith.constant dense<0.000000e+00> : vector<32x8xf32>
    %11 = tpu.matmul %8, %10, %cst {dimension_numbers = #tpu.dot_dimension_numbers<[1], [0], [0], [1], [0, 0, 1, 1], [], []>} : vector<32x128xbf16>, vector<128x8xbf16>, vector<32x8xf32> -> vector<32x8xf32>
    %c0_11 = arith.constant 0 : index
    %c0_12 = arith.constant 0 : index
    %12 = vector.load %arg4[%c0_11, %c0_12] : memref<32x1xf32, #tpu.memory_space<vmem>>, vector<32x1xf32>
    %13 = vector.broadcast %12 : vector<32x1xf32> to vector<32x8xf32>
    %14 = arith.addf %11, %13 : vector<32x8xf32>
    %15 = arith.truncf %14 : vector<32x8xf32> to vector<32x8xbf16>
    %c0_13 = arith.constant 0 : index
    %c0_14 = arith.constant 0 : index
    %c0_15 = arith.constant 0 : index
    %16 = vector.load %arg5[%c0_13, %c0_14, %c0_15] : memref<1x32x8xbf16, #tpu.memory_space<vmem>>, vector<1x32x8xbf16>
    %17 = vector.shape_cast %16 : vector<1x32x8xbf16> to vector<32x8xbf16>
    %18 = vector.shape_cast %15 : vector<32x8xbf16> to vector<1x32x8xbf16>
    tpu.vector_store %arg5[%c0_13, %c0_14, %c0_15], %18 {strides = array<i32>} : memref<1x32x8xbf16, #tpu.memory_space<vmem>>, vector<1x32x8xbf16>,
    return
  }
  func.func @transform_0(%arg0: i32, %arg1: i32) -> (i32, i32, i32) {
    %c0_i32 = arith.constant 0 : i32
    %c0_i32_0 = arith.constant 0 : i32
    %c0_i32_1 = arith.constant 0 : i32
    return %arg0, %c0_i32, %c0_i32_0 : i32, i32, i32
  }
  func.func @transform_1(%arg0: i32, %arg1: i32) -> (i32, i32) {
    %c0_i32 = arith.constant 0 : i32
    %c0_i32_0 = arith.constant 0 : i32
    %c0_i32_1 = arith.constant 0 : i32
    return %c0_i32, %c0_i32_0 : i32, i32
  }
  func.func @transform_2(%arg0: i32, %arg1: i32) -> (i32, i32) {
    %c0_i32 = arith.constant 0 : i32
    %c0_i32_0 = arith.constant 0 : i32
    %c0_i32_1 = arith.constant 0 : i32
    return %c0_i32, %c0_i32_0 : i32, i32
  }
  func.func @transform_3(%arg0: i32, %arg1: i32) -> (i32, i32, i32) {
    %c0_i32 = arith.constant 0 : i32
    %c0_i32_0 = arith.constant 0 : i32
    return %arg0, %c0_i32, %arg1 : i32, i32, i32
  }
}

module attributes {stable_mosaic.version = 11 : i64} {
  func.func @_conv_kernel(%arg0: i32, %arg1: i32, %arg2: memref<1x32x8xbf16, #tpu.memory_space<vmem>>, %arg3: memref<128x32xbf16, #tpu.memory_space<vmem>>, %arg4: memref<128x1xf32, #tpu.memory_space<vmem>>, %arg5: memref<1x128x8xf32, #tpu.memory_space<vmem>>, %arg6: memref<32x8xf32, #tpu.memory_space<vmem>>) attributes {dimension_semantics = [#tpu.dimension_semantics<parallel>, #tpu.dimension_semantics<arbitrary>], iteration_bounds = array<i64: 4, 1>, scalar_prefetch = 0 : i64, scratch_operands = 1 : i64, tpu.core_type = #tpu.core_type<tc>, window_params = [{transform_indices = @transform_0, window_bounds = array<i64: 1, 32, 8>}, {pipeline_mode = #tpu.pipeline_mode<synchronous>, transform_indices = @transform_1, window_bounds = array<i64: 128, 32>}, {pipeline_mode = #tpu.pipeline_mode<synchronous>, transform_indices = @transform_2, window_bounds = array<i64: 128, 1>}, {transform_indices = @transform_3, window_bounds = array<i64: 1, 128, 8>}]} {
    %c0 = arith.constant 0 : index
    %c0_0 = arith.constant 0 : index
    %c0_1 = arith.constant 0 : index
    %0 = vector.load %arg2[%c0, %c0_0, %c0_1] : memref<1x32x8xbf16, #tpu.memory_space<vmem>>, vector<1x32x8xbf16>
    %1 = vector.shape_cast %0 : vector<1x32x8xbf16> to vector<32x8xbf16>
    %2 = arith.extf %1 : vector<32x8xbf16> to vector<32x8xf32>
    %c0_2 = arith.constant 0 : index
    %c0_3 = arith.constant 0 : index
    %3 = vector.load %arg6[%c0_2, %c0_3] : memref<32x8xf32, #tpu.memory_space<vmem>>, vector<32x8xf32>
    tpu.vector_store %arg6[%c0_2, %c0_3], %2 {strides = array<i32>} : memref<32x8xf32, #tpu.memory_space<vmem>>, vector<32x8xf32>,
    %c0_4 = arith.constant 0 : index
    %c0_5 = arith.constant 0 : index
    %4 = vector.load %arg3[%c0_4, %c0_5] : memref<128x32xbf16, #tpu.memory_space<vmem>>, vector<128x32xbf16>
    %c0_6 = arith.constant 0 : index
    %c0_7 = arith.constant 0 : index
    %5 = vector.load %arg6[%c0_6, %c0_7] : memref<32x8xf32, #tpu.memory_space<vmem>>, vector<32x8xf32>
    %6 = arith.truncf %5 : vector<32x8xf32> to vector<32x8xbf16>
    %cst = arith.constant dense<0.000000e+00> : vector<128x8xf32>
    %7 = tpu.matmul %4, %6, %cst {dimension_numbers = #tpu.dot_dimension_numbers<[1], [0], [0], [1], [0, 0, 1, 1], [], []>} : vector<128x32xbf16>, vector<32x8xbf16>, vector<128x8xf32> -> vector<128x8xf32>
    %c0_8 = arith.constant 0 : index
    %c0_9 = arith.constant 0 : index
    %8 = vector.load %arg4[%c0_8, %c0_9] : memref<128x1xf32, #tpu.memory_space<vmem>>, vector<128x1xf32>
    %9 = vector.broadcast %8 : vector<128x1xf32> to vector<128x8xf32>
    %10 = arith.addf %7, %9 : vector<128x8xf32>
    %c0_10 = arith.constant 0 : index
    %c0_11 = arith.constant 0 : index
    %c0_12 = arith.constant 0 : index
    %11 = vector.load %arg5[%c0_10, %c0_11, %c0_12] : memref<1x128x8xf32, #tpu.memory_space<vmem>>, vector<1x128x8xf32>
    %12 = vector.shape_cast %11 : vector<1x128x8xf32> to vector<128x8xf32>
    %13 = vector.shape_cast %10 : vector<128x8xf32> to vector<1x128x8xf32>
    tpu.vector_store %arg5[%c0_10, %c0_11, %c0_12], %13 {strides = array<i32>} : memref<1x128x8xf32, #tpu.memory_space<vmem>>, vector<1x128x8xf32>,
    return
  }
  func.func @transform_0(%arg0: i32, %arg1: i32) -> (i32, i32, i32) {
    %c0_i32 = arith.constant 0 : i32
    %c0_i32_0 = arith.constant 0 : i32
    %c0_i32_1 = arith.constant 0 : i32
    return %arg0, %c0_i32, %c0_i32_0 : i32, i32, i32
  }
  func.func @transform_1(%arg0: i32, %arg1: i32) -> (i32, i32) {
    %c0_i32 = arith.constant 0 : i32
    %c0_i32_0 = arith.constant 0 : i32
    %c0_i32_1 = arith.constant 0 : i32
    return %c0_i32, %c0_i32_0 : i32, i32
  }
  func.func @transform_2(%arg0: i32, %arg1: i32) -> (i32, i32) {
    %c0_i32 = arith.constant 0 : i32
    %c0_i32_0 = arith.constant 0 : i32
    %c0_i32_1 = arith.constant 0 : i32
    return %c0_i32, %c0_i32_0 : i32, i32
  }
  func.func @transform_3(%arg0: i32, %arg1: i32) -> (i32, i32, i32) {
    %c0_i32 = arith.constant 0 : i32
    %c0_i32_0 = arith.constant 0 : i32
    return %arg0, %c0_i32, %arg1 : i32, i32, i32
  }
}

module attributes {stable_mosaic.version = 11 : i64} {
  func.func @_lstm_kernel(%arg0: i32, %arg1: memref<8x4x128xf32, #tpu.memory_space<vmem>>, %arg2: memref<32x128xf32, #tpu.memory_space<vmem>>, %arg3: memref<8x4x32xf32, #tpu.memory_space<vmem>>, %arg4: memref<4x32xf32, #tpu.memory_space<vmem>>, %arg5: memref<4x32xf32, #tpu.memory_space<vmem>>) attributes {dimension_semantics = [#tpu.dimension_semantics<arbitrary>], iteration_bounds = array<i64: 1>, scalar_prefetch = 0 : i64, scratch_operands = 2 : i64, tpu.core_type = #tpu.core_type<tc>, window_params = [{transform_indices = @transform_0, window_bounds = array<i64: 8, 4, 128>}, {pipeline_mode = #tpu.pipeline_mode<synchronous>, transform_indices = @transform_1, window_bounds = array<i64: 32, 128>}, {transform_indices = @transform_2, window_bounds = array<i64: 8, 4, 32>}]} {
    %c0_i32 = arith.constant 0 : i32
    %0 = arith.cmpi eq, %arg0, %c0_i32 : i32
    %1 = arith.extui %0 : i1 to i32
    %c0_i32_0 = arith.constant 0 : i32
    %2 = arith.cmpi ne, %1, %c0_i32_0 : i32
    scf.if %2 {
      %cst_74 = arith.constant 0.000000e+00 : f32
      %280 = vector.broadcast %cst_74 : f32 to vector<4x32xf32>
      %c0_75 = arith.constant 0 : index
      %c0_76 = arith.constant 0 : index
      %281 = vector.load %arg4[%c0_75, %c0_76] : memref<4x32xf32, #tpu.memory_space<vmem>>, vector<4x32xf32>
      tpu.vector_store %arg4[%c0_75, %c0_76], %280 {strides = array<i32>} : memref<4x32xf32, #tpu.memory_space<vmem>>, vector<4x32xf32>,
      %cst_77 = arith.constant 0.000000e+00 : f32
      %282 = vector.broadcast %cst_77 : f32 to vector<4x32xf32>
      %c0_78 = arith.constant 0 : index
      %c0_79 = arith.constant 0 : index
      %283 = vector.load %arg5[%c0_78, %c0_79] : memref<4x32xf32, #tpu.memory_space<vmem>>, vector<4x32xf32>
      tpu.vector_store %arg5[%c0_78, %c0_79], %282 {strides = array<i32>} : memref<4x32xf32, #tpu.memory_space<vmem>>, vector<4x32xf32>,
    } else {
    }
    %c0 = arith.constant 0 : index
    %c0_1 = arith.constant 0 : index
    %3 = vector.load %arg2[%c0, %c0_1] : memref<32x128xf32, #tpu.memory_space<vmem>>, vector<32x128xf32>
    %c0_2 = arith.constant 0 : index
    %c0_3 = arith.constant 0 : index
    %4 = vector.load %arg4[%c0_2, %c0_3] : memref<4x32xf32, #tpu.memory_space<vmem>>, vector<4x32xf32>
    %c0_4 = arith.constant 0 : index
    %c0_5 = arith.constant 0 : index
    %5 = vector.load %arg5[%c0_4, %c0_5] : memref<4x32xf32, #tpu.memory_space<vmem>>, vector<4x32xf32>
    %c0_i32_6 = arith.constant 0 : i32
    %6 = arith.index_cast %c0_i32_6 : i32 to index
    %c0_7 = arith.constant 0 : index
    %c0_8 = arith.constant 0 : index
    %7 = vector.load %arg1[%6, %c0_7, %c0_8] : memref<8x4x128xf32, #tpu.memory_space<vmem>>, vector<1x4x128xf32>
    %8 = vector.shape_cast %7 : vector<1x4x128xf32> to vector<4x128xf32>
    %cst = arith.constant dense<0.000000e+00> : vector<4x128xf32>
    %9 = tpu.matmul %4, %3, %cst {dimension_numbers = #tpu.dot_dimension_numbers<[1], [0], [0], [1], [0, 0, 1, 1], [], []>} : vector<4x32xf32>, vector<32x128xf32>, vector<4x128xf32> -> vector<4x128xf32>
    %10 = arith.addf %8, %9 : vector<4x128xf32>
    %11 = vector.extract_strided_slice %10 {offsets = [0, 0], sizes = [4, 32], strides = [1, 1]} : vector<4x128xf32> to vector<4x32xf32>
    %12 = arith.negf %11 : vector<4x32xf32>
    %13 = math.exp %12 : vector<4x32xf32>
    %cst_9 = arith.constant 1.000000e+00 : f32
    %14 = vector.broadcast %cst_9 : f32 to vector<4x32xf32>
    %15 = arith.addf %14, %13 : vector<4x32xf32>
    %16 = arith.divf %14, %15 : vector<4x32xf32>
    %17 = vector.extract_strided_slice %10 {offsets = [0, 32], sizes = [4, 32], strides = [1, 1]} : vector<4x128xf32> to vector<4x32xf32>
    %18 = arith.negf %17 : vector<4x32xf32>
    %19 = math.exp %18 : vector<4x32xf32>
    %cst_10 = arith.constant 1.000000e+00 : f32
    %20 = vector.broadcast %cst_10 : f32 to vector<4x32xf32>
    %21 = arith.addf %20, %19 : vector<4x32xf32>
    %22 = arith.divf %20, %21 : vector<4x32xf32>
    %23 = vector.extract_strided_slice %10 {offsets = [0, 64], sizes = [4, 32], strides = [1, 1]} : vector<4x128xf32> to vector<4x32xf32>
    %24 = math.tanh %23 : vector<4x32xf32>
    %25 = vector.extract_strided_slice %10 {offsets = [0, 96], sizes = [4, 32], strides = [1, 1]} : vector<4x128xf32> to vector<4x32xf32>
    %26 = arith.negf %25 : vector<4x32xf32>
    %27 = math.exp %26 : vector<4x32xf32>
    %cst_11 = arith.constant 1.000000e+00 : f32
    %28 = vector.broadcast %cst_11 : f32 to vector<4x32xf32>
    %29 = arith.addf %28, %27 : vector<4x32xf32>
    %30 = arith.divf %28, %29 : vector<4x32xf32>
    %31 = arith.mulf %22, %5 : vector<4x32xf32>
    %32 = arith.mulf %16, %24 : vector<4x32xf32>
    %33 = arith.addf %31, %32 : vector<4x32xf32>
    %34 = math.tanh %33 : vector<4x32xf32>
    %35 = arith.mulf %30, %34 : vector<4x32xf32>
    %36 = arith.index_cast %c0_i32_6 : i32 to index
    %c0_12 = arith.constant 0 : index
    %c0_13 = arith.constant 0 : index
    %37 = vector.load %arg3[%36, %c0_12, %c0_13] : memref<8x4x32xf32, #tpu.memory_space<vmem>>, vector<1x4x32xf32>
    %38 = vector.shape_cast %37 : vector<1x4x32xf32> to vector<4x32xf32>
    %39 = vector.shape_cast %35 : vector<4x32xf32> to vector<1x4x32xf32>
    tpu.vector_store %arg3[%36, %c0_12, %c0_13], %39 {strides = array<i32>} : memref<8x4x32xf32, #tpu.memory_space<vmem>>, vector<1x4x32xf32>,
    %c1_i32 = arith.constant 1 : i32
    %40 = arith.index_cast %c1_i32 : i32 to index
    %c0_14 = arith.constant 0 : index
    %c0_15 = arith.constant 0 : index
    %41 = vector.load %arg1[%40, %c0_14, %c0_15] : memref<8x4x128xf32, #tpu.memory_space<vmem>>, vector<1x4x128xf32>
    %42 = vector.shape_cast %41 : vector<1x4x128xf32> to vector<4x128xf32>
    %cst_16 = arith.constant dense<0.000000e+00> : vector<4x128xf32>
    %43 = tpu.matmul %35, %3, %cst_16 {dimension_numbers = #tpu.dot_dimension_numbers<[1], [0], [0], [1], [0, 0, 1, 1], [], []>} : vector<4x32xf32>, vector<32x128xf32>, vector<4x128xf32> -> vector<4x128xf32>
    %44 = arith.addf %42, %43 : vector<4x128xf32>
    %45 = vector.extract_strided_slice %44 {offsets = [0, 0], sizes = [4, 32], strides = [1, 1]} : vector<4x128xf32> to vector<4x32xf32>
    %46 = arith.negf %45 : vector<4x32xf32>
    %47 = math.exp %46 : vector<4x32xf32>
    %cst_17 = arith.constant 1.000000e+00 : f32
    %48 = vector.broadcast %cst_17 : f32 to vector<4x32xf32>
    %49 = arith.addf %48, %47 : vector<4x32xf32>
    %50 = arith.divf %48, %49 : vector<4x32xf32>
    %51 = vector.extract_strided_slice %44 {offsets = [0, 32], sizes = [4, 32], strides = [1, 1]} : vector<4x128xf32> to vector<4x32xf32>
    %52 = arith.negf %51 : vector<4x32xf32>
    %53 = math.exp %52 : vector<4x32xf32>
    %cst_18 = arith.constant 1.000000e+00 : f32
    %54 = vector.broadcast %cst_18 : f32 to vector<4x32xf32>
    %55 = arith.addf %54, %53 : vector<4x32xf32>
    %56 = arith.divf %54, %55 : vector<4x32xf32>
    %57 = vector.extract_strided_slice %44 {offsets = [0, 64], sizes = [4, 32], strides = [1, 1]} : vector<4x128xf32> to vector<4x32xf32>
    %58 = math.tanh %57 : vector<4x32xf32>
    %59 = vector.extract_strided_slice %44 {offsets = [0, 96], sizes = [4, 32], strides = [1, 1]} : vector<4x128xf32> to vector<4x32xf32>
    %60 = arith.negf %59 : vector<4x32xf32>
    %61 = math.exp %60 : vector<4x32xf32>
    %cst_19 = arith.constant 1.000000e+00 : f32
    %62 = vector.broadcast %cst_19 : f32 to vector<4x32xf32>
    %63 = arith.addf %62, %61 : vector<4x32xf32>
    %64 = arith.divf %62, %63 : vector<4x32xf32>
    %65 = arith.mulf %56, %33 : vector<4x32xf32>
    %66 = arith.mulf %50, %58 : vector<4x32xf32>
    %67 = arith.addf %65, %66 : vector<4x32xf32>
    %68 = math.tanh %67 : vector<4x32xf32>
    %69 = arith.mulf %64, %68 : vector<4x32xf32>
    %70 = arith.index_cast %c1_i32 : i32 to index
    %c0_20 = arith.constant 0 : index
    %c0_21 = arith.constant 0 : index
    %71 = vector.load %arg3[%70, %c0_20, %c0_21] : memref<8x4x32xf32, #tpu.memory_space<vmem>>, vector<1x4x32xf32>
    %72 = vector.shape_cast %71 : vector<1x4x32xf32> to vector<4x32xf32>
    %73 = vector.shape_cast %69 : vector<4x32xf32> to vector<1x4x32xf32>
    tpu.vector_store %arg3[%70, %c0_20, %c0_21], %73 {strides = array<i32>} : memref<8x4x32xf32, #tpu.memory_space<vmem>>, vector<1x4x32xf32>,
    %c2_i32 = arith.constant 2 : i32
    %74 = arith.index_cast %c2_i32 : i32 to index
    %c0_22 = arith.constant 0 : index
    %c0_23 = arith.constant 0 : index
    %75 = vector.load %arg1[%74, %c0_22, %c0_23] : memref<8x4x128xf32, #tpu.memory_space<vmem>>, vector<1x4x128xf32>
    %76 = vector.shape_cast %75 : vector<1x4x128xf32> to vector<4x128xf32>
    %cst_24 = arith.constant dense<0.000000e+00> : vector<4x128xf32>
    %77 = tpu.matmul %69, %3, %cst_24 {dimension_numbers = #tpu.dot_dimension_numbers<[1], [0], [0], [1], [0, 0, 1, 1], [], []>} : vector<4x32xf32>, vector<32x128xf32>, vector<4x128xf32> -> vector<4x128xf32>
    %78 = arith.addf %76, %77 : vector<4x128xf32>
    %79 = vector.extract_strided_slice %78 {offsets = [0, 0], sizes = [4, 32], strides = [1, 1]} : vector<4x128xf32> to vector<4x32xf32>
    %80 = arith.negf %79 : vector<4x32xf32>
    %81 = math.exp %80 : vector<4x32xf32>
    %cst_25 = arith.constant 1.000000e+00 : f32
    %82 = vector.broadcast %cst_25 : f32 to vector<4x32xf32>
    %83 = arith.addf %82, %81 : vector<4x32xf32>
    %84 = arith.divf %82, %83 : vector<4x32xf32>
    %85 = vector.extract_strided_slice %78 {offsets = [0, 32], sizes = [4, 32], strides = [1, 1]} : vector<4x128xf32> to vector<4x32xf32>
    %86 = arith.negf %85 : vector<4x32xf32>
    %87 = math.exp %86 : vector<4x32xf32>
    %cst_26 = arith.constant 1.000000e+00 : f32
    %88 = vector.broadcast %cst_26 : f32 to vector<4x32xf32>
    %89 = arith.addf %88, %87 : vector<4x32xf32>
    %90 = arith.divf %88, %89 : vector<4x32xf32>
    %91 = vector.extract_strided_slice %78 {offsets = [0, 64], sizes = [4, 32], strides = [1, 1]} : vector<4x128xf32> to vector<4x32xf32>
    %92 = math.tanh %91 : vector<4x32xf32>
    %93 = vector.extract_strided_slice %78 {offsets = [0, 96], sizes = [4, 32], strides = [1, 1]} : vector<4x128xf32> to vector<4x32xf32>
    %94 = arith.negf %93 : vector<4x32xf32>
    %95 = math.exp %94 : vector<4x32xf32>
    %cst_27 = arith.constant 1.000000e+00 : f32
    %96 = vector.broadcast %cst_27 : f32 to vector<4x32xf32>
    %97 = arith.addf %96, %95 : vector<4x32xf32>
    %98 = arith.divf %96, %97 : vector<4x32xf32>
    %99 = arith.mulf %90, %67 : vector<4x32xf32>
    %100 = arith.mulf %84, %92 : vector<4x32xf32>
    %101 = arith.addf %99, %100 : vector<4x32xf32>
    %102 = math.tanh %101 : vector<4x32xf32>
    %103 = arith.mulf %98, %102 : vector<4x32xf32>
    %104 = arith.index_cast %c2_i32 : i32 to index
    %c0_28 = arith.constant 0 : index
    %c0_29 = arith.constant 0 : index
    %105 = vector.load %arg3[%104, %c0_28, %c0_29] : memref<8x4x32xf32, #tpu.memory_space<vmem>>, vector<1x4x32xf32>
    %106 = vector.shape_cast %105 : vector<1x4x32xf32> to vector<4x32xf32>
    %107 = vector.shape_cast %103 : vector<4x32xf32> to vector<1x4x32xf32>
    tpu.vector_store %arg3[%104, %c0_28, %c0_29], %107 {strides = array<i32>} : memref<8x4x32xf32, #tpu.memory_space<vmem>>, vector<1x4x32xf32>,
    %c3_i32 = arith.constant 3 : i32
    %108 = arith.index_cast %c3_i32 : i32 to index
    %c0_30 = arith.constant 0 : index
    %c0_31 = arith.constant 0 : index
    %109 = vector.load %arg1[%108, %c0_30, %c0_31] : memref<8x4x128xf32, #tpu.memory_space<vmem>>, vector<1x4x128xf32>
    %110 = vector.shape_cast %109 : vector<1x4x128xf32> to vector<4x128xf32>
    %cst_32 = arith.constant dense<0.000000e+00> : vector<4x128xf32>
    %111 = tpu.matmul %103, %3, %cst_32 {dimension_numbers = #tpu.dot_dimension_numbers<[1], [0], [0], [1], [0, 0, 1, 1], [], []>} : vector<4x32xf32>, vector<32x128xf32>, vector<4x128xf32> -> vector<4x128xf32>
    %112 = arith.addf %110, %111 : vector<4x128xf32>
    %113 = vector.extract_strided_slice %112 {offsets = [0, 0], sizes = [4, 32], strides = [1, 1]} : vector<4x128xf32> to vector<4x32xf32>
    %114 = arith.negf %113 : vector<4x32xf32>
    %115 = math.exp %114 : vector<4x32xf32>
    %cst_33 = arith.constant 1.000000e+00 : f32
    %116 = vector.broadcast %cst_33 : f32 to vector<4x32xf32>
    %117 = arith.addf %116, %115 : vector<4x32xf32>
    %118 = arith.divf %116, %117 : vector<4x32xf32>
    %119 = vector.extract_strided_slice %112 {offsets = [0, 32], sizes = [4, 32], strides = [1, 1]} : vector<4x128xf32> to vector<4x32xf32>
    %120 = arith.negf %119 : vector<4x32xf32>
    %121 = math.exp %120 : vector<4x32xf32>
    %cst_34 = arith.constant 1.000000e+00 : f32
    %122 = vector.broadcast %cst_34 : f32 to vector<4x32xf32>
    %123 = arith.addf %122, %121 : vector<4x32xf32>
    %124 = arith.divf %122, %123 : vector<4x32xf32>
    %125 = vector.extract_strided_slice %112 {offsets = [0, 64], sizes = [4, 32], strides = [1, 1]} : vector<4x128xf32> to vector<4x32xf32>
    %126 = math.tanh %125 : vector<4x32xf32>
    %127 = vector.extract_strided_slice %112 {offsets = [0, 96], sizes = [4, 32], strides = [1, 1]} : vector<4x128xf32> to vector<4x32xf32>
    %128 = arith.negf %127 : vector<4x32xf32>
    %129 = math.exp %128 : vector<4x32xf32>
    %cst_35 = arith.constant 1.000000e+00 : f32
    %130 = vector.broadcast %cst_35 : f32 to vector<4x32xf32>
    %131 = arith.addf %130, %129 : vector<4x32xf32>
    %132 = arith.divf %130, %131 : vector<4x32xf32>
    %133 = arith.mulf %124, %101 : vector<4x32xf32>
    %134 = arith.mulf %118, %126 : vector<4x32xf32>
    %135 = arith.addf %133, %134 : vector<4x32xf32>
    %136 = math.tanh %135 : vector<4x32xf32>
    %137 = arith.mulf %132, %136 : vector<4x32xf32>
    %138 = arith.index_cast %c3_i32 : i32 to index
    %c0_36 = arith.constant 0 : index
    %c0_37 = arith.constant 0 : index
    %139 = vector.load %arg3[%138, %c0_36, %c0_37] : memref<8x4x32xf32, #tpu.memory_space<vmem>>, vector<1x4x32xf32>
    %140 = vector.shape_cast %139 : vector<1x4x32xf32> to vector<4x32xf32>
    %141 = vector.shape_cast %137 : vector<4x32xf32> to vector<1x4x32xf32>
    tpu.vector_store %arg3[%138, %c0_36, %c0_37], %141 {strides = array<i32>} : memref<8x4x32xf32, #tpu.memory_space<vmem>>, vector<1x4x32xf32>,
    %c4_i32 = arith.constant 4 : i32
    %142 = arith.index_cast %c4_i32 : i32 to index
    %c0_38 = arith.constant 0 : index
    %c0_39 = arith.constant 0 : index
    %143 = vector.load %arg1[%142, %c0_38, %c0_39] : memref<8x4x128xf32, #tpu.memory_space<vmem>>, vector<1x4x128xf32>
    %144 = vector.shape_cast %143 : vector<1x4x128xf32> to vector<4x128xf32>
    %cst_40 = arith.constant dense<0.000000e+00> : vector<4x128xf32>
    %145 = tpu.matmul %137, %3, %cst_40 {dimension_numbers = #tpu.dot_dimension_numbers<[1], [0], [0], [1], [0, 0, 1, 1], [], []>} : vector<4x32xf32>, vector<32x128xf32>, vector<4x128xf32> -> vector<4x128xf32>
    %146 = arith.addf %144, %145 : vector<4x128xf32>
    %147 = vector.extract_strided_slice %146 {offsets = [0, 0], sizes = [4, 32], strides = [1, 1]} : vector<4x128xf32> to vector<4x32xf32>
    %148 = arith.negf %147 : vector<4x32xf32>
    %149 = math.exp %148 : vector<4x32xf32>
    %cst_41 = arith.constant 1.000000e+00 : f32
    %150 = vector.broadcast %cst_41 : f32 to vector<4x32xf32>
    %151 = arith.addf %150, %149 : vector<4x32xf32>
    %152 = arith.divf %150, %151 : vector<4x32xf32>
    %153 = vector.extract_strided_slice %146 {offsets = [0, 32], sizes = [4, 32], strides = [1, 1]} : vector<4x128xf32> to vector<4x32xf32>
    %154 = arith.negf %153 : vector<4x32xf32>
    %155 = math.exp %154 : vector<4x32xf32>
    %cst_42 = arith.constant 1.000000e+00 : f32
    %156 = vector.broadcast %cst_42 : f32 to vector<4x32xf32>
    %157 = arith.addf %156, %155 : vector<4x32xf32>
    %158 = arith.divf %156, %157 : vector<4x32xf32>
    %159 = vector.extract_strided_slice %146 {offsets = [0, 64], sizes = [4, 32], strides = [1, 1]} : vector<4x128xf32> to vector<4x32xf32>
    %160 = math.tanh %159 : vector<4x32xf32>
    %161 = vector.extract_strided_slice %146 {offsets = [0, 96], sizes = [4, 32], strides = [1, 1]} : vector<4x128xf32> to vector<4x32xf32>
    %162 = arith.negf %161 : vector<4x32xf32>
    %163 = math.exp %162 : vector<4x32xf32>
    %cst_43 = arith.constant 1.000000e+00 : f32
    %164 = vector.broadcast %cst_43 : f32 to vector<4x32xf32>
    %165 = arith.addf %164, %163 : vector<4x32xf32>
    %166 = arith.divf %164, %165 : vector<4x32xf32>
    %167 = arith.mulf %158, %135 : vector<4x32xf32>
    %168 = arith.mulf %152, %160 : vector<4x32xf32>
    %169 = arith.addf %167, %168 : vector<4x32xf32>
    %170 = math.tanh %169 : vector<4x32xf32>
    %171 = arith.mulf %166, %170 : vector<4x32xf32>
    %172 = arith.index_cast %c4_i32 : i32 to index
    %c0_44 = arith.constant 0 : index
    %c0_45 = arith.constant 0 : index
    %173 = vector.load %arg3[%172, %c0_44, %c0_45] : memref<8x4x32xf32, #tpu.memory_space<vmem>>, vector<1x4x32xf32>
    %174 = vector.shape_cast %173 : vector<1x4x32xf32> to vector<4x32xf32>
    %175 = vector.shape_cast %171 : vector<4x32xf32> to vector<1x4x32xf32>
    tpu.vector_store %arg3[%172, %c0_44, %c0_45], %175 {strides = array<i32>} : memref<8x4x32xf32, #tpu.memory_space<vmem>>, vector<1x4x32xf32>,
    %c5_i32 = arith.constant 5 : i32
    %176 = arith.index_cast %c5_i32 : i32 to index
    %c0_46 = arith.constant 0 : index
    %c0_47 = arith.constant 0 : index
    %177 = vector.load %arg1[%176, %c0_46, %c0_47] : memref<8x4x128xf32, #tpu.memory_space<vmem>>, vector<1x4x128xf32>
    %178 = vector.shape_cast %177 : vector<1x4x128xf32> to vector<4x128xf32>
    %cst_48 = arith.constant dense<0.000000e+00> : vector<4x128xf32>
    %179 = tpu.matmul %171, %3, %cst_48 {dimension_numbers = #tpu.dot_dimension_numbers<[1], [0], [0], [1], [0, 0, 1, 1], [], []>} : vector<4x32xf32>, vector<32x128xf32>, vector<4x128xf32> -> vector<4x128xf32>
    %180 = arith.addf %178, %179 : vector<4x128xf32>
    %181 = vector.extract_strided_slice %180 {offsets = [0, 0], sizes = [4, 32], strides = [1, 1]} : vector<4x128xf32> to vector<4x32xf32>
    %182 = arith.negf %181 : vector<4x32xf32>
    %183 = math.exp %182 : vector<4x32xf32>
    %cst_49 = arith.constant 1.000000e+00 : f32
    %184 = vector.broadcast %cst_49 : f32 to vector<4x32xf32>
    %185 = arith.addf %184, %183 : vector<4x32xf32>
    %186 = arith.divf %184, %185 : vector<4x32xf32>
    %187 = vector.extract_strided_slice %180 {offsets = [0, 32], sizes = [4, 32], strides = [1, 1]} : vector<4x128xf32> to vector<4x32xf32>
    %188 = arith.negf %187 : vector<4x32xf32>
    %189 = math.exp %188 : vector<4x32xf32>
    %cst_50 = arith.constant 1.000000e+00 : f32
    %190 = vector.broadcast %cst_50 : f32 to vector<4x32xf32>
    %191 = arith.addf %190, %189 : vector<4x32xf32>
    %192 = arith.divf %190, %191 : vector<4x32xf32>
    %193 = vector.extract_strided_slice %180 {offsets = [0, 64], sizes = [4, 32], strides = [1, 1]} : vector<4x128xf32> to vector<4x32xf32>
    %194 = math.tanh %193 : vector<4x32xf32>
    %195 = vector.extract_strided_slice %180 {offsets = [0, 96], sizes = [4, 32], strides = [1, 1]} : vector<4x128xf32> to vector<4x32xf32>
    %196 = arith.negf %195 : vector<4x32xf32>
    %197 = math.exp %196 : vector<4x32xf32>
    %cst_51 = arith.constant 1.000000e+00 : f32
    %198 = vector.broadcast %cst_51 : f32 to vector<4x32xf32>
    %199 = arith.addf %198, %197 : vector<4x32xf32>
    %200 = arith.divf %198, %199 : vector<4x32xf32>
    %201 = arith.mulf %192, %169 : vector<4x32xf32>
    %202 = arith.mulf %186, %194 : vector<4x32xf32>
    %203 = arith.addf %201, %202 : vector<4x32xf32>
    %204 = math.tanh %203 : vector<4x32xf32>
    %205 = arith.mulf %200, %204 : vector<4x32xf32>
    %206 = arith.index_cast %c5_i32 : i32 to index
    %c0_52 = arith.constant 0 : index
    %c0_53 = arith.constant 0 : index
    %207 = vector.load %arg3[%206, %c0_52, %c0_53] : memref<8x4x32xf32, #tpu.memory_space<vmem>>, vector<1x4x32xf32>
    %208 = vector.shape_cast %207 : vector<1x4x32xf32> to vector<4x32xf32>
    %209 = vector.shape_cast %205 : vector<4x32xf32> to vector<1x4x32xf32>
    tpu.vector_store %arg3[%206, %c0_52, %c0_53], %209 {strides = array<i32>} : memref<8x4x32xf32, #tpu.memory_space<vmem>>, vector<1x4x32xf32>,
    %c6_i32 = arith.constant 6 : i32
    %210 = arith.index_cast %c6_i32 : i32 to index
    %c0_54 = arith.constant 0 : index
    %c0_55 = arith.constant 0 : index
    %211 = vector.load %arg1[%210, %c0_54, %c0_55] : memref<8x4x128xf32, #tpu.memory_space<vmem>>, vector<1x4x128xf32>
    %212 = vector.shape_cast %211 : vector<1x4x128xf32> to vector<4x128xf32>
    %cst_56 = arith.constant dense<0.000000e+00> : vector<4x128xf32>
    %213 = tpu.matmul %205, %3, %cst_56 {dimension_numbers = #tpu.dot_dimension_numbers<[1], [0], [0], [1], [0, 0, 1, 1], [], []>} : vector<4x32xf32>, vector<32x128xf32>, vector<4x128xf32> -> vector<4x128xf32>
    %214 = arith.addf %212, %213 : vector<4x128xf32>
    %215 = vector.extract_strided_slice %214 {offsets = [0, 0], sizes = [4, 32], strides = [1, 1]} : vector<4x128xf32> to vector<4x32xf32>
    %216 = arith.negf %215 : vector<4x32xf32>
    %217 = math.exp %216 : vector<4x32xf32>
    %cst_57 = arith.constant 1.000000e+00 : f32
    %218 = vector.broadcast %cst_57 : f32 to vector<4x32xf32>
    %219 = arith.addf %218, %217 : vector<4x32xf32>
    %220 = arith.divf %218, %219 : vector<4x32xf32>
    %221 = vector.extract_strided_slice %214 {offsets = [0, 32], sizes = [4, 32], strides = [1, 1]} : vector<4x128xf32> to vector<4x32xf32>
    %222 = arith.negf %221 : vector<4x32xf32>
    %223 = math.exp %222 : vector<4x32xf32>
    %cst_58 = arith.constant 1.000000e+00 : f32
    %224 = vector.broadcast %cst_58 : f32 to vector<4x32xf32>
    %225 = arith.addf %224, %223 : vector<4x32xf32>
    %226 = arith.divf %224, %225 : vector<4x32xf32>
    %227 = vector.extract_strided_slice %214 {offsets = [0, 64], sizes = [4, 32], strides = [1, 1]} : vector<4x128xf32> to vector<4x32xf32>
    %228 = math.tanh %227 : vector<4x32xf32>
    %229 = vector.extract_strided_slice %214 {offsets = [0, 96], sizes = [4, 32], strides = [1, 1]} : vector<4x128xf32> to vector<4x32xf32>
    %230 = arith.negf %229 : vector<4x32xf32>
    %231 = math.exp %230 : vector<4x32xf32>
    %cst_59 = arith.constant 1.000000e+00 : f32
    %232 = vector.broadcast %cst_59 : f32 to vector<4x32xf32>
    %233 = arith.addf %232, %231 : vector<4x32xf32>
    %234 = arith.divf %232, %233 : vector<4x32xf32>
    %235 = arith.mulf %226, %203 : vector<4x32xf32>
    %236 = arith.mulf %220, %228 : vector<4x32xf32>
    %237 = arith.addf %235, %236 : vector<4x32xf32>
    %238 = math.tanh %237 : vector<4x32xf32>
    %239 = arith.mulf %234, %238 : vector<4x32xf32>
    %240 = arith.index_cast %c6_i32 : i32 to index
    %c0_60 = arith.constant 0 : index
    %c0_61 = arith.constant 0 : index
    %241 = vector.load %arg3[%240, %c0_60, %c0_61] : memref<8x4x32xf32, #tpu.memory_space<vmem>>, vector<1x4x32xf32>
    %242 = vector.shape_cast %241 : vector<1x4x32xf32> to vector<4x32xf32>
    %243 = vector.shape_cast %239 : vector<4x32xf32> to vector<1x4x32xf32>
    tpu.vector_store %arg3[%240, %c0_60, %c0_61], %243 {strides = array<i32>} : memref<8x4x32xf32, #tpu.memory_space<vmem>>, vector<1x4x32xf32>,
    %c7_i32 = arith.constant 7 : i32
    %244 = arith.index_cast %c7_i32 : i32 to index
    %c0_62 = arith.constant 0 : index
    %c0_63 = arith.constant 0 : index
    %245 = vector.load %arg1[%244, %c0_62, %c0_63] : memref<8x4x128xf32, #tpu.memory_space<vmem>>, vector<1x4x128xf32>
    %246 = vector.shape_cast %245 : vector<1x4x128xf32> to vector<4x128xf32>
    %cst_64 = arith.constant dense<0.000000e+00> : vector<4x128xf32>
    %247 = tpu.matmul %239, %3, %cst_64 {dimension_numbers = #tpu.dot_dimension_numbers<[1], [0], [0], [1], [0, 0, 1, 1], [], []>} : vector<4x32xf32>, vector<32x128xf32>, vector<4x128xf32> -> vector<4x128xf32>
    %248 = arith.addf %246, %247 : vector<4x128xf32>
    %249 = vector.extract_strided_slice %248 {offsets = [0, 0], sizes = [4, 32], strides = [1, 1]} : vector<4x128xf32> to vector<4x32xf32>
    %250 = arith.negf %249 : vector<4x32xf32>
    %251 = math.exp %250 : vector<4x32xf32>
    %cst_65 = arith.constant 1.000000e+00 : f32
    %252 = vector.broadcast %cst_65 : f32 to vector<4x32xf32>
    %253 = arith.addf %252, %251 : vector<4x32xf32>
    %254 = arith.divf %252, %253 : vector<4x32xf32>
    %255 = vector.extract_strided_slice %248 {offsets = [0, 32], sizes = [4, 32], strides = [1, 1]} : vector<4x128xf32> to vector<4x32xf32>
    %256 = arith.negf %255 : vector<4x32xf32>
    %257 = math.exp %256 : vector<4x32xf32>
    %cst_66 = arith.constant 1.000000e+00 : f32
    %258 = vector.broadcast %cst_66 : f32 to vector<4x32xf32>
    %259 = arith.addf %258, %257 : vector<4x32xf32>
    %260 = arith.divf %258, %259 : vector<4x32xf32>
    %261 = vector.extract_strided_slice %248 {offsets = [0, 64], sizes = [4, 32], strides = [1, 1]} : vector<4x128xf32> to vector<4x32xf32>
    %262 = math.tanh %261 : vector<4x32xf32>
    %263 = vector.extract_strided_slice %248 {offsets = [0, 96], sizes = [4, 32], strides = [1, 1]} : vector<4x128xf32> to vector<4x32xf32>
    %264 = arith.negf %263 : vector<4x32xf32>
    %265 = math.exp %264 : vector<4x32xf32>
    %cst_67 = arith.constant 1.000000e+00 : f32
    %266 = vector.broadcast %cst_67 : f32 to vector<4x32xf32>
    %267 = arith.addf %266, %265 : vector<4x32xf32>
    %268 = arith.divf %266, %267 : vector<4x32xf32>
    %269 = arith.mulf %260, %237 : vector<4x32xf32>
    %270 = arith.mulf %254, %262 : vector<4x32xf32>
    %271 = arith.addf %269, %270 : vector<4x32xf32>
    %272 = math.tanh %271 : vector<4x32xf32>
    %273 = arith.mulf %268, %272 : vector<4x32xf32>
    %274 = arith.index_cast %c7_i32 : i32 to index
    %c0_68 = arith.constant 0 : index
    %c0_69 = arith.constant 0 : index
    %275 = vector.load %arg3[%274, %c0_68, %c0_69] : memref<8x4x32xf32, #tpu.memory_space<vmem>>, vector<1x4x32xf32>
    %276 = vector.shape_cast %275 : vector<1x4x32xf32> to vector<4x32xf32>
    %277 = vector.shape_cast %273 : vector<4x32xf32> to vector<1x4x32xf32>
    tpu.vector_store %arg3[%274, %c0_68, %c0_69], %277 {strides = array<i32>} : memref<8x4x32xf32, #tpu.memory_space<vmem>>, vector<1x4x32xf32>,
    %c8_i32 = arith.constant 8 : i32
    %c0_70 = arith.constant 0 : index
    %c0_71 = arith.constant 0 : index
    %278 = vector.load %arg4[%c0_70, %c0_71] : memref<4x32xf32, #tpu.memory_space<vmem>>, vector<4x32xf32>
    tpu.vector_store %arg4[%c0_70, %c0_71], %273 {strides = array<i32>} : memref<4x32xf32, #tpu.memory_space<vmem>>, vector<4x32xf32>,
    %c0_72 = arith.constant 0 : index
    %c0_73 = arith.constant 0 : index
    %279 = vector.load %arg5[%c0_72, %c0_73] : memref<4x32xf32, #tpu.memory_space<vmem>>, vector<4x32xf32>
    tpu.vector_store %arg5[%c0_72, %c0_73], %271 {strides = array<i32>} : memref<4x32xf32, #tpu.memory_space<vmem>>, vector<4x32xf32>,
    return
  }
  func.func @transform_0(%arg0: i32) -> (i32, i32, i32) {
    %c0_i32 = arith.constant 0 : i32
    %c0_i32_0 = arith.constant 0 : i32
    %c0_i32_1 = arith.constant 0 : i32
    return %arg0, %c0_i32, %c0_i32_0 : i32, i32, i32
  }
  func.func @transform_1(%arg0: i32) -> (i32, i32) {
    %c0_i32 = arith.constant 0 : i32
    %c0_i32_0 = arith.constant 0 : i32
    %c0_i32_1 = arith.constant 0 : i32
    return %c0_i32, %c0_i32_0 : i32, i32
  }
  func.func @transform_2(%arg0: i32) -> (i32, i32, i32) {
    %c0_i32 = arith.constant 0 : i32
    %c0_i32_0 = arith.constant 0 : i32
    %c0_i32_1 = arith.constant 0 : i32
    return %arg0, %c0_i32, %c0_i32_0 : i32, i32, i32
  }
}

module attributes {stable_mosaic.version = 11 : i64} {
  func.func @_conv_kernel(%arg0: i32, %arg1: i32, %arg2: memref<1x32x14xbf16, #tpu.memory_space<vmem>>, %arg3: memref<32x224xbf16, #tpu.memory_space<vmem>>, %arg4: memref<32x1xf32, #tpu.memory_space<vmem>>, %arg5: memref<1x32x8xbf16, #tpu.memory_space<vmem>>, %arg6: memref<224x8xf32, #tpu.memory_space<vmem>>) attributes {dimension_semantics = [#tpu.dimension_semantics<parallel>, #tpu.dimension_semantics<arbitrary>], iteration_bounds = array<i64: 4, 1>, scalar_prefetch = 0 : i64, scratch_operands = 1 : i64, tpu.core_type = #tpu.core_type<tc>, window_params = [{transform_indices = @transform_0, window_bounds = array<i64: 1, 32, 14>}, {pipeline_mode = #tpu.pipeline_mode<synchronous>, transform_indices = @transform_1, window_bounds = array<i64: 32, 224>}, {pipeline_mode = #tpu.pipeline_mode<synchronous>, transform_indices = @transform_2, window_bounds = array<i64: 32, 1>}, {transform_indices = @transform_3, window_bounds = array<i64: 1, 32, 8>}]} {
    %c0 = arith.constant 0 : index
    %c0_0 = arith.constant 0 : index
    %c0_1 = arith.constant 0 : index
    %0 = vector.load %arg2[%c0, %c0_0, %c0_1] : memref<1x32x14xbf16, #tpu.memory_space<vmem>>, vector<1x32x8xbf16>
    %1 = vector.shape_cast %0 : vector<1x32x8xbf16> to vector<32x8xbf16>
    %2 = arith.extf %1 : vector<32x8xbf16> to vector<32x8xf32>
    %c0_2 = arith.constant 0 : index
    %c0_3 = arith.constant 0 : index
    %3 = vector.load %arg6[%c0_2, %c0_3] : memref<224x8xf32, #tpu.memory_space<vmem>>, vector<32x8xf32>
    tpu.vector_store %arg6[%c0_2, %c0_3], %2 {strides = array<i32>} : memref<224x8xf32, #tpu.memory_space<vmem>>, vector<32x8xf32>,
    %c0_4 = arith.constant 0 : index
    %c0_5 = arith.constant 0 : index
    %c1 = arith.constant 1 : index
    %4 = vector.load %arg2[%c0_4, %c0_5, %c1] : memref<1x32x14xbf16, #tpu.memory_space<vmem>>, vector<1x32x8xbf16>
    %5 = vector.shape_cast %4 : vector<1x32x8xbf16> to vector<32x8xbf16>
    %6 = arith.extf %5 : vector<32x8xbf16> to vector<32x8xf32>
    %c32 = arith.constant 32 : index
    %c0_6 = arith.constant 0 : index
    %7 = vector.load %arg6[%c32, %c0_6] : memref<224x8xf32, #tpu.memory_space<vmem>>, vector<32x8xf32>
    tpu.vector_store %arg6[%c32, %c0_6], %6 {strides = array<i32>} : memref<224x8xf32, #tpu.memory_space<vmem>>, vector<32x8xf32>,
    %c0_7 = arith.constant 0 : index
    %c0_8 = arith.constant 0 : index
    %c2 = arith.constant 2 : index
    %8 = vector.load %arg2[%c0_7, %c0_8, %c2] : memref<1x32x14xbf16, #tpu.memory_space<vmem>>, vector<1x32x8xbf16>
    %9 = vector.shape_cast %8 : vector<1x32x8xbf16> to vector<32x8xbf16>
    %10 = arith.extf %9 : vector<32x8xbf16> to vector<32x8xf32>
    %c64 = arith.constant 64 : index
    %c0_9 = arith.constant 0 : index
    %11 = vector.load %arg6[%c64, %c0_9] : memref<224x8xf32, #tpu.memory_space<vmem>>, vector<32x8xf32>
    tpu.vector_store %arg6[%c64, %c0_9], %10 {strides = array<i32>} : memref<224x8xf32, #tpu.memory_space<vmem>>, vector<32x8xf32>,
    %c0_10 = arith.constant 0 : index
    %c0_11 = arith.constant 0 : index
    %c3 = arith.constant 3 : index
    %12 = vector.load %arg2[%c0_10, %c0_11, %c3] : memref<1x32x14xbf16, #tpu.memory_space<vmem>>, vector<1x32x8xbf16>
    %13 = vector.shape_cast %12 : vector<1x32x8xbf16> to vector<32x8xbf16>
    %14 = arith.extf %13 : vector<32x8xbf16> to vector<32x8xf32>
    %c96 = arith.constant 96 : index
    %c0_12 = arith.constant 0 : index
    %15 = vector.load %arg6[%c96, %c0_12] : memref<224x8xf32, #tpu.memory_space<vmem>>, vector<32x8xf32>
    tpu.vector_store %arg6[%c96, %c0_12], %14 {strides = array<i32>} : memref<224x8xf32, #tpu.memory_space<vmem>>, vector<32x8xf32>,
    %c0_13 = arith.constant 0 : index
    %c0_14 = arith.constant 0 : index
    %c4 = arith.constant 4 : index
    %16 = vector.load %arg2[%c0_13, %c0_14, %c4] : memref<1x32x14xbf16, #tpu.memory_space<vmem>>, vector<1x32x8xbf16>
    %17 = vector.shape_cast %16 : vector<1x32x8xbf16> to vector<32x8xbf16>
    %18 = arith.extf %17 : vector<32x8xbf16> to vector<32x8xf32>
    %c128 = arith.constant 128 : index
    %c0_15 = arith.constant 0 : index
    %19 = vector.load %arg6[%c128, %c0_15] : memref<224x8xf32, #tpu.memory_space<vmem>>, vector<32x8xf32>
    tpu.vector_store %arg6[%c128, %c0_15], %18 {strides = array<i32>} : memref<224x8xf32, #tpu.memory_space<vmem>>, vector<32x8xf32>,
    %c0_16 = arith.constant 0 : index
    %c0_17 = arith.constant 0 : index
    %c5 = arith.constant 5 : index
    %20 = vector.load %arg2[%c0_16, %c0_17, %c5] : memref<1x32x14xbf16, #tpu.memory_space<vmem>>, vector<1x32x8xbf16>
    %21 = vector.shape_cast %20 : vector<1x32x8xbf16> to vector<32x8xbf16>
    %22 = arith.extf %21 : vector<32x8xbf16> to vector<32x8xf32>
    %c160 = arith.constant 160 : index
    %c0_18 = arith.constant 0 : index
    %23 = vector.load %arg6[%c160, %c0_18] : memref<224x8xf32, #tpu.memory_space<vmem>>, vector<32x8xf32>
    tpu.vector_store %arg6[%c160, %c0_18], %22 {strides = array<i32>} : memref<224x8xf32, #tpu.memory_space<vmem>>, vector<32x8xf32>,
    %c0_19 = arith.constant 0 : index
    %c0_20 = arith.constant 0 : index
    %c6 = arith.constant 6 : index
    %24 = vector.load %arg2[%c0_19, %c0_20, %c6] : memref<1x32x14xbf16, #tpu.memory_space<vmem>>, vector<1x32x8xbf16>
    %25 = vector.shape_cast %24 : vector<1x32x8xbf16> to vector<32x8xbf16>
    %26 = arith.extf %25 : vector<32x8xbf16> to vector<32x8xf32>
    %c192 = arith.constant 192 : index
    %c0_21 = arith.constant 0 : index
    %27 = vector.load %arg6[%c192, %c0_21] : memref<224x8xf32, #tpu.memory_space<vmem>>, vector<32x8xf32>
    tpu.vector_store %arg6[%c192, %c0_21], %26 {strides = array<i32>} : memref<224x8xf32, #tpu.memory_space<vmem>>, vector<32x8xf32>,
    %c0_22 = arith.constant 0 : index
    %c0_23 = arith.constant 0 : index
    %28 = vector.load %arg3[%c0_22, %c0_23] : memref<32x224xbf16, #tpu.memory_space<vmem>>, vector<32x224xbf16>
    %c0_24 = arith.constant 0 : index
    %c0_25 = arith.constant 0 : index
    %29 = vector.load %arg6[%c0_24, %c0_25] : memref<224x8xf32, #tpu.memory_space<vmem>>, vector<224x8xf32>
    %30 = arith.truncf %29 : vector<224x8xf32> to vector<224x8xbf16>
    %cst = arith.constant dense<0.000000e+00> : vector<32x8xf32>
    %31 = tpu.matmul %28, %30, %cst {dimension_numbers = #tpu.dot_dimension_numbers<[1], [0], [0], [1], [0, 0, 1, 1], [], []>} : vector<32x224xbf16>, vector<224x8xbf16>, vector<32x8xf32> -> vector<32x8xf32>
    %c0_26 = arith.constant 0 : index
    %c0_27 = arith.constant 0 : index
    %32 = vector.load %arg4[%c0_26, %c0_27] : memref<32x1xf32, #tpu.memory_space<vmem>>, vector<32x1xf32>
    %33 = vector.broadcast %32 : vector<32x1xf32> to vector<32x8xf32>
    %34 = arith.addf %31, %33 : vector<32x8xf32>
    %35 = arith.truncf %34 : vector<32x8xf32> to vector<32x8xbf16>
    %c0_28 = arith.constant 0 : index
    %c0_29 = arith.constant 0 : index
    %c0_30 = arith.constant 0 : index
    %36 = vector.load %arg5[%c0_28, %c0_29, %c0_30] : memref<1x32x8xbf16, #tpu.memory_space<vmem>>, vector<1x32x8xbf16>
    %37 = vector.shape_cast %36 : vector<1x32x8xbf16> to vector<32x8xbf16>
    %38 = vector.shape_cast %35 : vector<32x8xbf16> to vector<1x32x8xbf16>
    tpu.vector_store %arg5[%c0_28, %c0_29, %c0_30], %38 {strides = array<i32>} : memref<1x32x8xbf16, #tpu.memory_space<vmem>>, vector<1x32x8xbf16>,
    return
  }
  func.func @transform_0(%arg0: i32, %arg1: i32) -> (i32, i32, i32) {
    %c0_i32 = arith.constant 0 : i32
    %c0_i32_0 = arith.constant 0 : i32
    %c0_i32_1 = arith.constant 0 : i32
    return %arg0, %c0_i32, %c0_i32_0 : i32, i32, i32
  }
  func.func @transform_1(%arg0: i32, %arg1: i32) -> (i32, i32) {
    %c0_i32 = arith.constant 0 : i32
    %c0_i32_0 = arith.constant 0 : i32
    %c0_i32_1 = arith.constant 0 : i32
    return %c0_i32, %c0_i32_0 : i32, i32
  }
  func.func @transform_2(%arg0: i32, %arg1: i32) -> (i32, i32) {
    %c0_i32 = arith.constant 0 : i32
    %c0_i32_0 = arith.constant 0 : i32
    %c0_i32_1 = arith.constant 0 : i32
    return %c0_i32, %c0_i32_0 : i32, i32
  }
  func.func @transform_3(%arg0: i32, %arg1: i32) -> (i32, i32, i32) {
    %c0_i32 = arith.constant 0 : i32
    %c0_i32_0 = arith.constant 0 : i32
    return %arg0, %c0_i32, %arg1 : i32, i32, i32
  }
}

module attributes {stable_mosaic.version = 11 : i64} {
  func.func @_conv_kernel(%arg0: i32, %arg1: i32, %arg2: memref<1x32x10xbf16, #tpu.memory_space<vmem>>, %arg3: memref<64x64xbf16, #tpu.memory_space<vmem>>, %arg4: memref<64x1xf32, #tpu.memory_space<vmem>>, %arg5: memref<1x64x9xbf16, #tpu.memory_space<vmem>>, %arg6: memref<64x9xf32, #tpu.memory_space<vmem>>) attributes {dimension_semantics = [#tpu.dimension_semantics<parallel>, #tpu.dimension_semantics<arbitrary>], iteration_bounds = array<i64: 4, 1>, scalar_prefetch = 0 : i64, scratch_operands = 1 : i64, tpu.core_type = #tpu.core_type<tc>, window_params = [{transform_indices = @transform_0, window_bounds = array<i64: 1, 32, 10>}, {pipeline_mode = #tpu.pipeline_mode<synchronous>, transform_indices = @transform_1, window_bounds = array<i64: 64, 64>}, {pipeline_mode = #tpu.pipeline_mode<synchronous>, transform_indices = @transform_2, window_bounds = array<i64: 64, 1>}, {transform_indices = @transform_3, window_bounds = array<i64: 1, 64, 9>}]} {
    %c0 = arith.constant 0 : index
    %c0_0 = arith.constant 0 : index
    %c0_1 = arith.constant 0 : index
    %0 = vector.load %arg2[%c0, %c0_0, %c0_1] : memref<1x32x10xbf16, #tpu.memory_space<vmem>>, vector<1x32x9xbf16>
    %1 = vector.shape_cast %0 : vector<1x32x9xbf16> to vector<32x9xbf16>
    %2 = arith.extf %1 : vector<32x9xbf16> to vector<32x9xf32>
    %c0_2 = arith.constant 0 : index
    %c0_3 = arith.constant 0 : index
    %3 = vector.load %arg6[%c0_2, %c0_3] : memref<64x9xf32, #tpu.memory_space<vmem>>, vector<32x9xf32>
    tpu.vector_store %arg6[%c0_2, %c0_3], %2 {strides = array<i32>} : memref<64x9xf32, #tpu.memory_space<vmem>>, vector<32x9xf32>,
    %c0_4 = arith.constant 0 : index
    %c0_5 = arith.constant 0 : index
    %c1 = arith.constant 1 : index
    %4 = vector.load %arg2[%c0_4, %c0_5, %c1] : memref<1x32x10xbf16, #tpu.memory_space<vmem>>, vector<1x32x9xbf16>
    %5 = vector.shape_cast %4 : vector<1x32x9xbf16> to vector<32x9xbf16>
    %6 = arith.extf %5 : vector<32x9xbf16> to vector<32x9xf32>
    %c32 = arith.constant 32 : index
    %c0_6 = arith.constant 0 : index
    %7 = vector.load %arg6[%c32, %c0_6] : memref<64x9xf32, #tpu.memory_space<vmem>>, vector<32x9xf32>
    tpu.vector_store %arg6[%c32, %c0_6], %6 {strides = array<i32>} : memref<64x9xf32, #tpu.memory_space<vmem>>, vector<32x9xf32>,
    %c0_7 = arith.constant 0 : index
    %c0_8 = arith.constant 0 : index
    %8 = vector.load %arg3[%c0_7, %c0_8] : memref<64x64xbf16, #tpu.memory_space<vmem>>, vector<64x64xbf16>
    %c0_9 = arith.constant 0 : index
    %c0_10 = arith.constant 0 : index
    %9 = vector.load %arg6[%c0_9, %c0_10] : memref<64x9xf32, #tpu.memory_space<vmem>>, vector<64x9xf32>
    %10 = arith.truncf %9 : vector<64x9xf32> to vector<64x9xbf16>
    %cst = arith.constant dense<0.000000e+00> : vector<64x9xf32>
    %11 = tpu.matmul %8, %10, %cst {dimension_numbers = #tpu.dot_dimension_numbers<[1], [0], [0], [1], [0, 0, 1, 1], [], []>} : vector<64x64xbf16>, vector<64x9xbf16>, vector<64x9xf32> -> vector<64x9xf32>
    %c0_11 = arith.constant 0 : index
    %c0_12 = arith.constant 0 : index
    %12 = vector.load %arg4[%c0_11, %c0_12] : memref<64x1xf32, #tpu.memory_space<vmem>>, vector<64x1xf32>
    %13 = vector.broadcast %12 : vector<64x1xf32> to vector<64x9xf32>
    %14 = arith.addf %11, %13 : vector<64x9xf32>
    %15 = arith.truncf %14 : vector<64x9xf32> to vector<64x9xbf16>
    %c0_13 = arith.constant 0 : index
    %c0_14 = arith.constant 0 : index
    %c0_15 = arith.constant 0 : index
    %16 = vector.load %arg5[%c0_13, %c0_14, %c0_15] : memref<1x64x9xbf16, #tpu.memory_space<vmem>>, vector<1x64x9xbf16>
    %17 = vector.shape_cast %16 : vector<1x64x9xbf16> to vector<64x9xbf16>
    %18 = vector.shape_cast %15 : vector<64x9xbf16> to vector<1x64x9xbf16>
    tpu.vector_store %arg5[%c0_13, %c0_14, %c0_15], %18 {strides = array<i32>} : memref<1x64x9xbf16, #tpu.memory_space<vmem>>, vector<1x64x9xbf16>,
    return
  }
  func.func @transform_0(%arg0: i32, %arg1: i32) -> (i32, i32, i32) {
    %c0_i32 = arith.constant 0 : i32
    %c0_i32_0 = arith.constant 0 : i32
    %c0_i32_1 = arith.constant 0 : i32
    return %arg0, %c0_i32, %c0_i32_0 : i32, i32, i32
  }
  func.func @transform_1(%arg0: i32, %arg1: i32) -> (i32, i32) {
    %c0_i32 = arith.constant 0 : i32
    %c0_i32_0 = arith.constant 0 : i32
    %c0_i32_1 = arith.constant 0 : i32
    return %c0_i32, %c0_i32_0 : i32, i32
  }
  func.func @transform_2(%arg0: i32, %arg1: i32) -> (i32, i32) {
    %c0_i32 = arith.constant 0 : i32
    %c0_i32_0 = arith.constant 0 : i32
    %c0_i32_1 = arith.constant 0 : i32
    return %c0_i32, %c0_i32_0 : i32, i32
  }
  func.func @transform_3(%arg0: i32, %arg1: i32) -> (i32, i32, i32) {
    %c0_i32 = arith.constant 0 : i32
    %c0_i32_0 = arith.constant 0 : i32
    return %arg0, %c0_i32, %arg1 : i32, i32, i32
  }
}

module attributes {stable_mosaic.version = 11 : i64} {
  func.func @_conv_kernel(%arg0: i32, %arg1: i32, %arg2: memref<1x16x34xbf16, #tpu.memory_space<vmem>>, %arg3: memref<16x32xbf16, #tpu.memory_space<vmem>>, %arg4: memref<16x1xf32, #tpu.memory_space<vmem>>, %arg5: memref<1x16x33xbf16, #tpu.memory_space<vmem>>, %arg6: memref<32x33xf32, #tpu.memory_space<vmem>>) attributes {dimension_semantics = [#tpu.dimension_semantics<parallel>, #tpu.dimension_semantics<arbitrary>], iteration_bounds = array<i64: 4, 1>, scalar_prefetch = 0 : i64, scratch_operands = 1 : i64, tpu.core_type = #tpu.core_type<tc>, window_params = [{transform_indices = @transform_0, window_bounds = array<i64: 1, 16, 34>}, {pipeline_mode = #tpu.pipeline_mode<synchronous>, transform_indices = @transform_1, window_bounds = array<i64: 16, 32>}, {pipeline_mode = #tpu.pipeline_mode<synchronous>, transform_indices = @transform_2, window_bounds = array<i64: 16, 1>}, {transform_indices = @transform_3, window_bounds = array<i64: 1, 16, 33>}]} {
    %c0 = arith.constant 0 : index
    %c0_0 = arith.constant 0 : index
    %c0_1 = arith.constant 0 : index
    %0 = vector.load %arg2[%c0, %c0_0, %c0_1] : memref<1x16x34xbf16, #tpu.memory_space<vmem>>, vector<1x16x33xbf16>
    %1 = vector.shape_cast %0 : vector<1x16x33xbf16> to vector<16x33xbf16>
    %2 = arith.extf %1 : vector<16x33xbf16> to vector<16x33xf32>
    %c0_2 = arith.constant 0 : index
    %c0_3 = arith.constant 0 : index
    %3 = vector.load %arg6[%c0_2, %c0_3] : memref<32x33xf32, #tpu.memory_space<vmem>>, vector<16x33xf32>
    tpu.vector_store %arg6[%c0_2, %c0_3], %2 {strides = array<i32>} : memref<32x33xf32, #tpu.memory_space<vmem>>, vector<16x33xf32>,
    %c0_4 = arith.constant 0 : index
    %c0_5 = arith.constant 0 : index
    %c1 = arith.constant 1 : index
    %4 = vector.load %arg2[%c0_4, %c0_5, %c1] : memref<1x16x34xbf16, #tpu.memory_space<vmem>>, vector<1x16x33xbf16>
    %5 = vector.shape_cast %4 : vector<1x16x33xbf16> to vector<16x33xbf16>
    %6 = arith.extf %5 : vector<16x33xbf16> to vector<16x33xf32>
    %c16 = arith.constant 16 : index
    %c0_6 = arith.constant 0 : index
    %7 = vector.load %arg6[%c16, %c0_6] : memref<32x33xf32, #tpu.memory_space<vmem>>, vector<16x33xf32>
    tpu.vector_store %arg6[%c16, %c0_6], %6 {strides = array<i32>} : memref<32x33xf32, #tpu.memory_space<vmem>>, vector<16x33xf32>,
    %c0_7 = arith.constant 0 : index
    %c0_8 = arith.constant 0 : index
    %8 = vector.load %arg3[%c0_7, %c0_8] : memref<16x32xbf16, #tpu.memory_space<vmem>>, vector<16x32xbf16>
    %c0_9 = arith.constant 0 : index
    %c0_10 = arith.constant 0 : index
    %9 = vector.load %arg6[%c0_9, %c0_10] : memref<32x33xf32, #tpu.memory_space<vmem>>, vector<32x33xf32>
    %10 = arith.truncf %9 : vector<32x33xf32> to vector<32x33xbf16>
    %cst = arith.constant dense<0.000000e+00> : vector<16x33xf32>
    %11 = tpu.matmul %8, %10, %cst {dimension_numbers = #tpu.dot_dimension_numbers<[1], [0], [0], [1], [0, 0, 1, 1], [], []>} : vector<16x32xbf16>, vector<32x33xbf16>, vector<16x33xf32> -> vector<16x33xf32>
    %c0_11 = arith.constant 0 : index
    %c0_12 = arith.constant 0 : index
    %12 = vector.load %arg4[%c0_11, %c0_12] : memref<16x1xf32, #tpu.memory_space<vmem>>, vector<16x1xf32>
    %13 = vector.broadcast %12 : vector<16x1xf32> to vector<16x33xf32>
    %14 = arith.addf %11, %13 : vector<16x33xf32>
    %15 = arith.truncf %14 : vector<16x33xf32> to vector<16x33xbf16>
    %c0_13 = arith.constant 0 : index
    %c0_14 = arith.constant 0 : index
    %c0_15 = arith.constant 0 : index
    %16 = vector.load %arg5[%c0_13, %c0_14, %c0_15] : memref<1x16x33xbf16, #tpu.memory_space<vmem>>, vector<1x16x33xbf16>
    %17 = vector.shape_cast %16 : vector<1x16x33xbf16> to vector<16x33xbf16>
    %18 = vector.shape_cast %15 : vector<16x33xbf16> to vector<1x16x33xbf16>
    tpu.vector_store %arg5[%c0_13, %c0_14, %c0_15], %18 {strides = array<i32>} : memref<1x16x33xbf16, #tpu.memory_space<vmem>>, vector<1x16x33xbf16>,
    return
  }
  func.func @transform_0(%arg0: i32, %arg1: i32) -> (i32, i32, i32) {
    %c0_i32 = arith.constant 0 : i32
    %c0_i32_0 = arith.constant 0 : i32
    %c0_i32_1 = arith.constant 0 : i32
    return %arg0, %c0_i32, %c0_i32_0 : i32, i32, i32
  }
  func.func @transform_1(%arg0: i32, %arg1: i32) -> (i32, i32) {
    %c0_i32 = arith.constant 0 : i32
    %c0_i32_0 = arith.constant 0 : i32
    %c0_i32_1 = arith.constant 0 : i32
    return %c0_i32, %c0_i32_0 : i32, i32
  }
  func.func @transform_2(%arg0: i32, %arg1: i32) -> (i32, i32) {
    %c0_i32 = arith.constant 0 : i32
    %c0_i32_0 = arith.constant 0 : i32
    %c0_i32_1 = arith.constant 0 : i32
    return %c0_i32, %c0_i32_0 : i32, i32
  }
  func.func @transform_3(%arg0: i32, %arg1: i32) -> (i32, i32, i32) {
    %c0_i32 = arith.constant 0 : i32
    %c0_i32_0 = arith.constant 0 : i32
    return %arg0, %c0_i32, %arg1 : i32, i32, i32
  }
}

module attributes {stable_mosaic.version = 11 : i64} {
  func.func @_conv_kernel(%arg0: i32, %arg1: i32, %arg2: memref<1x8x70xbf16, #tpu.memory_space<vmem>>, %arg3: memref<1x56xbf16, #tpu.memory_space<vmem>>, %arg4: memref<1x1xf32, #tpu.memory_space<vmem>>, %arg5: memref<1x1x64xbf16, #tpu.memory_space<vmem>>, %arg6: memref<56x64xf32, #tpu.memory_space<vmem>>) attributes {dimension_semantics = [#tpu.dimension_semantics<parallel>, #tpu.dimension_semantics<arbitrary>], iteration_bounds = array<i64: 4, 1>, scalar_prefetch = 0 : i64, scratch_operands = 1 : i64, tpu.core_type = #tpu.core_type<tc>, window_params = [{transform_indices = @transform_0, window_bounds = array<i64: 1, 8, 70>}, {pipeline_mode = #tpu.pipeline_mode<synchronous>, transform_indices = @transform_1, window_bounds = array<i64: 1, 56>}, {pipeline_mode = #tpu.pipeline_mode<synchronous>, transform_indices = @transform_2, window_bounds = array<i64: 1, 1>}, {transform_indices = @transform_3, window_bounds = array<i64: 1, 1, 64>}]} {
    %c0 = arith.constant 0 : index
    %c0_0 = arith.constant 0 : index
    %c0_1 = arith.constant 0 : index
    %0 = vector.load %arg2[%c0, %c0_0, %c0_1] : memref<1x8x70xbf16, #tpu.memory_space<vmem>>, vector<1x8x64xbf16>
    %1 = vector.shape_cast %0 : vector<1x8x64xbf16> to vector<8x64xbf16>
    %2 = arith.extf %1 : vector<8x64xbf16> to vector<8x64xf32>
    %c0_2 = arith.constant 0 : index
    %c0_3 = arith.constant 0 : index
    %3 = vector.load %arg6[%c0_2, %c0_3] : memref<56x64xf32, #tpu.memory_space<vmem>>, vector<8x64xf32>
    tpu.vector_store %arg6[%c0_2, %c0_3], %2 {strides = array<i32>} : memref<56x64xf32, #tpu.memory_space<vmem>>, vector<8x64xf32>,
    %c0_4 = arith.constant 0 : index
    %c0_5 = arith.constant 0 : index
    %c1 = arith.constant 1 : index
    %4 = vector.load %arg2[%c0_4, %c0_5, %c1] : memref<1x8x70xbf16, #tpu.memory_space<vmem>>, vector<1x8x64xbf16>
    %5 = vector.shape_cast %4 : vector<1x8x64xbf16> to vector<8x64xbf16>
    %6 = arith.extf %5 : vector<8x64xbf16> to vector<8x64xf32>
    %c8 = arith.constant 8 : index
    %c0_6 = arith.constant 0 : index
    %7 = vector.load %arg6[%c8, %c0_6] : memref<56x64xf32, #tpu.memory_space<vmem>>, vector<8x64xf32>
    tpu.vector_store %arg6[%c8, %c0_6], %6 {strides = array<i32>} : memref<56x64xf32, #tpu.memory_space<vmem>>, vector<8x64xf32>,
    %c0_7 = arith.constant 0 : index
    %c0_8 = arith.constant 0 : index
    %c2 = arith.constant 2 : index
    %8 = vector.load %arg2[%c0_7, %c0_8, %c2] : memref<1x8x70xbf16, #tpu.memory_space<vmem>>, vector<1x8x64xbf16>
    %9 = vector.shape_cast %8 : vector<1x8x64xbf16> to vector<8x64xbf16>
    %10 = arith.extf %9 : vector<8x64xbf16> to vector<8x64xf32>
    %c16 = arith.constant 16 : index
    %c0_9 = arith.constant 0 : index
    %11 = vector.load %arg6[%c16, %c0_9] : memref<56x64xf32, #tpu.memory_space<vmem>>, vector<8x64xf32>
    tpu.vector_store %arg6[%c16, %c0_9], %10 {strides = array<i32>} : memref<56x64xf32, #tpu.memory_space<vmem>>, vector<8x64xf32>,
    %c0_10 = arith.constant 0 : index
    %c0_11 = arith.constant 0 : index
    %c3 = arith.constant 3 : index
    %12 = vector.load %arg2[%c0_10, %c0_11, %c3] : memref<1x8x70xbf16, #tpu.memory_space<vmem>>, vector<1x8x64xbf16>
    %13 = vector.shape_cast %12 : vector<1x8x64xbf16> to vector<8x64xbf16>
    %14 = arith.extf %13 : vector<8x64xbf16> to vector<8x64xf32>
    %c24 = arith.constant 24 : index
    %c0_12 = arith.constant 0 : index
    %15 = vector.load %arg6[%c24, %c0_12] : memref<56x64xf32, #tpu.memory_space<vmem>>, vector<8x64xf32>
    tpu.vector_store %arg6[%c24, %c0_12], %14 {strides = array<i32>} : memref<56x64xf32, #tpu.memory_space<vmem>>, vector<8x64xf32>,
    %c0_13 = arith.constant 0 : index
    %c0_14 = arith.constant 0 : index
    %c4 = arith.constant 4 : index
    %16 = vector.load %arg2[%c0_13, %c0_14, %c4] : memref<1x8x70xbf16, #tpu.memory_space<vmem>>, vector<1x8x64xbf16>
    %17 = vector.shape_cast %16 : vector<1x8x64xbf16> to vector<8x64xbf16>
    %18 = arith.extf %17 : vector<8x64xbf16> to vector<8x64xf32>
    %c32 = arith.constant 32 : index
    %c0_15 = arith.constant 0 : index
    %19 = vector.load %arg6[%c32, %c0_15] : memref<56x64xf32, #tpu.memory_space<vmem>>, vector<8x64xf32>
    tpu.vector_store %arg6[%c32, %c0_15], %18 {strides = array<i32>} : memref<56x64xf32, #tpu.memory_space<vmem>>, vector<8x64xf32>,
    %c0_16 = arith.constant 0 : index
    %c0_17 = arith.constant 0 : index
    %c5 = arith.constant 5 : index
    %20 = vector.load %arg2[%c0_16, %c0_17, %c5] : memref<1x8x70xbf16, #tpu.memory_space<vmem>>, vector<1x8x64xbf16>
    %21 = vector.shape_cast %20 : vector<1x8x64xbf16> to vector<8x64xbf16>
    %22 = arith.extf %21 : vector<8x64xbf16> to vector<8x64xf32>
    %c40 = arith.constant 40 : index
    %c0_18 = arith.constant 0 : index
    %23 = vector.load %arg6[%c40, %c0_18] : memref<56x64xf32, #tpu.memory_space<vmem>>, vector<8x64xf32>
    tpu.vector_store %arg6[%c40, %c0_18], %22 {strides = array<i32>} : memref<56x64xf32, #tpu.memory_space<vmem>>, vector<8x64xf32>,
    %c0_19 = arith.constant 0 : index
    %c0_20 = arith.constant 0 : index
    %c6 = arith.constant 6 : index
    %24 = vector.load %arg2[%c0_19, %c0_20, %c6] : memref<1x8x70xbf16, #tpu.memory_space<vmem>>, vector<1x8x64xbf16>
    %25 = vector.shape_cast %24 : vector<1x8x64xbf16> to vector<8x64xbf16>
    %26 = arith.extf %25 : vector<8x64xbf16> to vector<8x64xf32>
    %c48 = arith.constant 48 : index
    %c0_21 = arith.constant 0 : index
    %27 = vector.load %arg6[%c48, %c0_21] : memref<56x64xf32, #tpu.memory_space<vmem>>, vector<8x64xf32>
    tpu.vector_store %arg6[%c48, %c0_21], %26 {strides = array<i32>} : memref<56x64xf32, #tpu.memory_space<vmem>>, vector<8x64xf32>,
    %c0_22 = arith.constant 0 : index
    %c0_23 = arith.constant 0 : index
    %28 = vector.load %arg3[%c0_22, %c0_23] : memref<1x56xbf16, #tpu.memory_space<vmem>>, vector<1x56xbf16>
    %c0_24 = arith.constant 0 : index
    %c0_25 = arith.constant 0 : index
    %29 = vector.load %arg6[%c0_24, %c0_25] : memref<56x64xf32, #tpu.memory_space<vmem>>, vector<56x64xf32>
    %30 = arith.truncf %29 : vector<56x64xf32> to vector<56x64xbf16>
    %cst = arith.constant dense<0.000000e+00> : vector<1x64xf32>
    %31 = tpu.matmul %28, %30, %cst {dimension_numbers = #tpu.dot_dimension_numbers<[1], [0], [0], [1], [0, 0, 1, 1], [], []>} : vector<1x56xbf16>, vector<56x64xbf16>, vector<1x64xf32> -> vector<1x64xf32>
    %c0_26 = arith.constant 0 : index
    %c0_27 = arith.constant 0 : index
    %32 = vector.load %arg4[%c0_26, %c0_27] : memref<1x1xf32, #tpu.memory_space<vmem>>, vector<1x1xf32>
    %33 = vector.broadcast %32 : vector<1x1xf32> to vector<1x64xf32>
    %34 = arith.addf %31, %33 : vector<1x64xf32>
    %35 = arith.truncf %34 : vector<1x64xf32> to vector<1x64xbf16>
    %c0_28 = arith.constant 0 : index
    %c0_29 = arith.constant 0 : index
    %c0_30 = arith.constant 0 : index
    %36 = vector.load %arg5[%c0_28, %c0_29, %c0_30] : memref<1x1x64xbf16, #tpu.memory_space<vmem>>, vector<1x1x64xbf16>
    %37 = vector.shape_cast %36 : vector<1x1x64xbf16> to vector<1x64xbf16>
    %38 = vector.shape_cast %35 : vector<1x64xbf16> to vector<1x1x64xbf16>
    tpu.vector_store %arg5[%c0_28, %c0_29, %c0_30], %38 {strides = array<i32>} : memref<1x1x64xbf16, #tpu.memory_space<vmem>>, vector<1x1x64xbf16>,
    return
  }
  func.func @transform_0(%arg0: i32, %arg1: i32) -> (i32, i32, i32) {
    %c0_i32 = arith.constant 0 : i32
    %c0_i32_0 = arith.constant 0 : i32
    %c0_i32_1 = arith.constant 0 : i32
    return %arg0, %c0_i32, %c0_i32_0 : i32, i32, i32
  }
  func.func @transform_1(%arg0: i32, %arg1: i32) -> (i32, i32) {
    %c0_i32 = arith.constant 0 : i32
    %c0_i32_0 = arith.constant 0 : i32
    %c0_i32_1 = arith.constant 0 : i32
    return %c0_i32, %c0_i32_0 : i32, i32
  }
  func.func @transform_2(%arg0: i32, %arg1: i32) -> (i32, i32) {
    %c0_i32 = arith.constant 0 : i32
    %c0_i32_0 = arith.constant 0 : i32
    %c0_i32_1 = arith.constant 0 : i32
    return %c0_i32, %c0_i32_0 : i32, i32
  }
  func.func @transform_3(%arg0: i32, %arg1: i32) -> (i32, i32, i32) {
    %c0_i32 = arith.constant 0 : i32
    %c0_i32_0 = arith.constant 0 : i32
    return %arg0, %c0_i32, %arg1 : i32, i32, i32
  }
}

module attributes {stable_mosaic.version = 11 : i64} {
  func.func @_band_sum_kernel(%arg0: i32, %arg1: memref<2x2x64xf32, #tpu.memory_space<vmem>>, %arg2: memref<2x64xf32, #tpu.memory_space<vmem>>) attributes {dimension_semantics = [#tpu.dimension_semantics<parallel>], iteration_bounds = array<i64: 1>, scalar_prefetch = 0 : i64, scratch_operands = 0 : i64, tpu.core_type = #tpu.core_type<tc>, window_params = [{transform_indices = @transform_0, window_bounds = array<i64: 2, 2, 64>}, {transform_indices = @transform_1, window_bounds = array<i64: 2, 64>}]} {
    %c0 = arith.constant 0 : index
    %c0_0 = arith.constant 0 : index
    %c0_1 = arith.constant 0 : index
    %0 = vector.load %arg1[%c0, %c0_0, %c0_1] : memref<2x2x64xf32, #tpu.memory_space<vmem>>, vector<2x2x64xf32>
    %cst = arith.constant dense<0.000000e+00> : vector<2x64xf32>
    %1 = vector.multi_reduction <add>, %0, %cst [1] : vector<2x2x64xf32> to vector<2x64xf32>
    %c0_2 = arith.constant 0 : index
    %c0_3 = arith.constant 0 : index
    %2 = vector.load %arg2[%c0_2, %c0_3] : memref<2x64xf32, #tpu.memory_space<vmem>>, vector<2x64xf32>
    tpu.vector_store %arg2[%c0_2, %c0_3], %1 {strides = array<i32>} : memref<2x64xf32, #tpu.memory_space<vmem>>, vector<2x64xf32>,
    return
  }
  func.func @transform_0(%arg0: i32) -> (i32, i32, i32) {
    %c0_i32 = arith.constant 0 : i32
    %c0_i32_0 = arith.constant 0 : i32
    %c0_i32_1 = arith.constant 0 : i32
    return %c0_i32, %c0_i32_0, %arg0 : i32, i32, i32
  }
  func.func @transform_1(%arg0: i32) -> (i32, i32) {
    %c0_i32 = arith.constant 0 : i32
    %c0_i32_0 = arith.constant 0 : i32
    return %c0_i32, %arg0 : i32, i32
  }
}

</mosaic_0001>

<llo_original>
// kernel: reverse.5
$region0: #{reverse.5}
  %s0 = inlined_call_operand.vmem [shape: f32[2,31], index: 0, kind: input, shape index: {}]
  %s1 = inlined_call_operand.vmem [shape: f32[2,31], index: 1, kind: output, shape index: {}]
  %v2 = vlaneseq
  %v3 = vsub.s32 30, %v2
  %4 = vset.pattern.permute.xlu0 %v3
  $region1: #{reverse.5} parent=0
    #allocation0 [shape = 'u8[4096]{0}', space=vmem, size = 0x1000, scoped, tag = 'operand span for operand 0']
    #allocation1 [shape = 'u8[1024]{0}', space=vmem, size = 0x400, scoped, tag = 'packed  for operand 0']
    #allocation2 [shape = 'u8[4096]{0}', space=vmem, size = 0x1000, scoped, tag = 'operand span for operand 1']
    #allocation3 [shape = 'u8[1024]{0}', space=vmem, size = 0x400, scoped, tag = 'packed  for operand 1']
    // Predicated region
    $region2: #{reverse.5} parent=1 // pred_check
      _
    $region3: #{reverse.5} parent=1 // pred_check_branch
      %6 = sbr.rel (0) target = $region5
    $region4: #{reverse.5} parent=1 // pred_region
      // Predicated region
      $region6: #{reverse.5} parent=4 // pred_check
        _
      $region7: #{reverse.5} parent=4 // pred_check_branch
        %8 = sbr.rel target = $region9
      $region8: #{reverse.5} parent=4 // pred_region
        // Predicated region
        $region21: #{reverse.5} parent=8 // pred_check
          _
        $region22: #{reverse.5} parent=8 // pred_check_branch
          %24 = sbr.rel (0) target = $region24
        $region23: #{reverse.5} parent=8 // pred_region
          %s26 = ssub.s32 4, 1
          loop: start=0, step=1, limit=1
          $region25: #{reverse.5} parent=23 // loop_pre_header
            _
          $region26: #{reverse.5} parent=23 // loop_header
            %s28 = sphi 0, %s32
            %p29 = scmp.ge.s32.totalorder %s28, 1
            %s33 = sphi %s0, %s0
            %s34 = sphi [#allocation1], [#allocation1]
          $region27: #{reverse.5} parent=23 // loop_header_branch
            %31 = sbr.rel (%p29) target = $region31
          $region28: #{reverse.5} parent=23 // loop_body
            %v35 = vld [vmem:[%s33] sm:%s26]
            %36 = vst [vmem:[%s34] sm:%s26] %v35
          $region29: #{reverse.5} parent=23 // loop_footer
            %s32 = sadd.s32 1, %s28
          $region30: #{reverse.5} parent=23 // loop_footer_branch
            %27 = sbr.rel target = $region26
          $region31: #{reverse.5} parent=23 // loop_exit
            _
        $region24: #{reverse.5} parent=8 // pred_fallthru
          _
      $region9: #{reverse.5} parent=4 // pred_fallthru
        _
      // Predicated region
      $region10: #{reverse.5} parent=4 // pred_check
        _
      $region11: #{reverse.5} parent=4 // pred_check_branch
        %10 = sbr.rel (0) target = $region13
      $region12: #{reverse.5} parent=4 // pred_region
        %s12 = ssub.s32 4, 1
        loop: start=0, step=1, limit=1
        $region14: #{reverse.5} parent=12 // loop_pre_header
          _
        $region15: #{reverse.5} parent=12 // loop_header
          %s14 = sphi 0, %s18
          %p15 = scmp.ge.s32.totalorder %s14, 1
          %s19 = sphi %s0, %s0
          %s20 = sphi [#allocation1], [#allocation1]
        $region16: #{reverse.5} parent=12 // loop_header_branch
          %17 = sbr.rel (%p15) target = $region20
        $region17: #{reverse.5} parent=12 // loop_body
          %v21 = vld [vmem:[%s19] sm:%s12]
          %22 = vst [vmem:[%s20] sm:%s12] %v21
        $region18: #{reverse.5} parent=12 // loop_footer
          %s18 = sadd.s32 1, %s14
        $region19: #{reverse.5} parent=12 // loop_footer_branch
          %13 = sbr.rel target = $region15
        $region20: #{reverse.5} parent=12 // loop_exit
          _
      $region13: #{reverse.5} parent=4 // pred_fallthru
        _
    $region5: #{reverse.5} parent=1 // pred_fallthru
      _
    %37 = vnop
    %s39 = ssub.s32 4, 1
    %v40 = vld [vmem:[#allocation1] sm:%s39]
    %41 = vst [vmem:[#allocation0] sm:%s39] %v40
    %v42 = vld [vmem:[#allocation0] sm:$0xff]
    %43 = vperm.xlu0 %4, %v42
    %v44 = vpop.permute.xlu0 %43
    %45 = vst [vmem:[#allocation2] sm:$0xff] %v44
    %s47 = ssub.s32 4, 1
    %v48 = vld [vmem:[#allocation2] sm:%s47]
    %s50 = ssub.s32 4, 1
    %51 = vst [vmem:[#allocation3] sm:%s50] %v48
    // Predicated region
    $region32: #{reverse.5} parent=1 // pred_check
      _
    $region33: #{reverse.5} parent=1 // pred_check_branch
      %53 = sbr.rel (0) target = $region35
    $region34: #{reverse.5} parent=1 // pred_region
      // Predicated region
      $region36: #{reverse.5} parent=34 // pred_check
        _
      $region37: #{reverse.5} parent=34 // pred_check_branch
        %55 = sbr.rel target = $region39
      $region38: #{reverse.5} parent=34 // pred_region
        // Predicated region
        $region51: #{reverse.5} parent=38 // pred_check
          _
        $region52: #{reverse.5} parent=38 // pred_check_branch
          %71 = sbr.rel (0) target = $region54
        $region53: #{reverse.5} parent=38 // pred_region
          %s73 = ssub.s32 4, 1
          loop: start=0, step=1, limit=1
          $region55: #{reverse.5} parent=53 // loop_pre_header
            _
          $region56: #{reverse.5} parent=53 // loop_header
            %s75 = sphi 0, %s79
            %p76 = scmp.ge.s32.totalorder %s75, 1
            %s80 = sphi [#allocation3], [#allocation3]
            %s81 = sphi %s1, %s1
          $region57: #{reverse.5} parent=53 // loop_header_branch
            %78 = sbr.rel (%p76) target = $region61
          $region58: #{reverse.5} parent=53 // loop_body
            %v82 = vld [vmem:[%s80] sm:%s73]
            %83 = vst [vmem:[%s81] sm:%s73] %v82
          $region59: #{reverse.5} parent=53 // loop_footer
            %s79 = sadd.s32 1, %s75
          $region60: #{reverse.5} parent=53 // loop_footer_branch
            %74 = sbr.rel target = $region56
          $region61: #{reverse.5} parent=53 // loop_exit
            _
        $region54: #{reverse.5} parent=38 // pred_fallthru
          _
      $region39: #{reverse.5} parent=34 // pred_fallthru
        _
      // Predicated region
      $region40: #{reverse.5} parent=34 // pred_check
        _
      $region41: #{reverse.5} parent=34 // pred_check_branch
        %57 = sbr.rel (0) target = $region43
      $region42: #{reverse.5} parent=34 // pred_region
        %s59 = ssub.s32 4, 1
        loop: start=0, step=1, limit=1
        $region44: #{reverse.5} parent=42 // loop_pre_header
          _
        $region45: #{reverse.5} parent=42 // loop_header
          %s61 = sphi 0, %s65
          %p62 = scmp.ge.s32.totalorder %s61, 1
          %s66 = sphi [#allocation3], [#allocation3]
          %s67 = sphi %s1, %s1
        $region46: #{reverse.5} parent=42 // loop_header_branch
          %64 = sbr.rel (%p62) target = $region50
        $region47: #{reverse.5} parent=42 // loop_body
          %v68 = vld [vmem:[%s66] sm:%s59]
          %69 = vst [vmem:[%s67] sm:%s59] %v68
        $region48: #{reverse.5} parent=42 // loop_footer
          %s65 = sadd.s32 1, %s61
        $region49: #{reverse.5} parent=42 // loop_footer_branch
          %60 = sbr.rel target = $region45
        $region50: #{reverse.5} parent=42 // loop_exit
          _
      $region43: #{reverse.5} parent=34 // pred_fallthru
        _
    $region35: #{reverse.5} parent=1 // pred_fallthru
      _
    %84 = vnop

// kernel: forward.21
$region0: #{forward.21}
  #allocation0 [shape = 'u32[]', space=smem, size = 0x4, offset = 0x4, fixed_abs, tag = 'smem constant byte address 0x4 - core index']
  #allocation1 [shape = 'u32[72,128]{1,0:T(1,128)}', space=vmem, size = 0x9000, scoped, tag = 'internal scratch']
  %s0 = inlined_call_operand.vmem [shape: f32[4,1,70], index: 0, kind: input, shape index: {}]
  %s1 = inlined_call_operand.vmem [shape: bf16[8,7], index: 1, kind: input, shape index: {}]
  %s2 = inlined_call_operand.vmem [shape: f32[8,1], index: 2, kind: input, shape index: {}]
  %s3 = inlined_call_operand.vmem [shape: bf16[4,8,64], index: 3, kind: output, shape index: {}]
  %s4 = sld [smem:[#allocation0]]
  $region45: #{forward.21} parent=0
    _
  %s6 = ssub.s32 1, %s4
  %s7 = scalar_select 0, %s6, %s4
  loop: start=0, step=1, limit=6
  $region2: #{forward.21} parent=0 // loop_pre_header
    _
  $region3: #{forward.21} parent=0 // loop_header
    %s9 = sphi 0, %s13
    %p10 = scmp.ge.s32.totalorder %s9, 6
    %s16 = sphi 0, %s28
    %s17 = sphi 0, %s24
    %s18 = sphi 0, %s16
    %s19 = sphi 0, %s17
    %s20 = sphi 0, %s18
    %s21 = sphi 0, %s19
    %s31 = sphi 0, %s33
    %s34 = sphi 0, %s31
    %s35 = sphi 0, %s34
    %s51 = sphi 0, %s35
    %s55 = sphi 0, %s55
    %s57 = sphi 0, %s55
    %s58 = sphi 0, %s57
    %s72 = sphi 0, %s58
    %s76 = sphi 0, %s76
    %s78 = sphi 0, %s76
    %s79 = sphi 0, %s78
    %s93 = sphi 0, %s79
    %s101 = sphi 0, %s103
    %s104 = sphi 0, %s101
    %s105 = sphi 0, %s104
    %s121 = sphi 0, %s105
  $region4: #{forward.21} parent=0 // loop_header_branch
    %12 = sbr.rel (%p10) target = $region8
  $region5: #{forward.21} parent=0 // loop_body
    %s14 = ssub.s32 %s9, 1
    %s15 = ssub.s32 %s9, 2
    %s22 = sadd.s32 1, %s17
    %p23 = scmp.ge.s32.totalorder %s22, 1
    %s24 = scalar_select %p23, 0, %s22
    %s25 = sadd.s32 1, %s16
    %s26 = scalar_select %p23, %s25, %s16
    %p27 = scmp.ge.s32.totalorder %s26, 4
    %s28 = scalar_select %p27, 0, %s26
    %s29 = ssub.s32 %s16, %s28
    %p30 = scmp.eq.s32.totalorder %s29, 0
    %s32 = sadd.s32 %s31, 1
    %s33 = scalar_select %p30, %s31, %s32
    %p36 = pneg %p30
    %p37 = scmp.eq.s32.totalorder %s9, 3
    %p38 = por %p36, %p37
    %p39 = scmp.ne.s32.totalorder %s31, %s34
    %p40 = scmp.eq.s32.totalorder %s9, 0
    %p41 = por %p39, %p40
    %p42 = scmp.ne.s32.totalorder %s31, %s34
    %p43 = scmp.eq.s32.totalorder %s14, 3
    %p44 = por %p42, %p43
    %p45 = scmp.ne.s32.totalorder %s34, %s35
    %p46 = scmp.eq.s32.totalorder %s14, 0
    %p47 = por %p45, %p46
    %p48 = scmp.ne.s32.totalorder %s34, %s35
    %p49 = scmp.eq.s32.totalorder %s15, 3
    %p50 = por %p48, %p49
    %p52 = scmp.ne.s32.totalorder %s35, %s51
    %p53 = scmp.eq.s32.totalorder %s15, 0
    %p54 = por %p52, %p53
    %s56 = sadd.s32 %s55, 1
    %p59 = scmp.eq.s32.totalorder %s9, 3
    %p60 = scmp.ne.s32.totalorder %s55, %s57
    %p61 = scmp.eq.s32.totalorder %s9, 0
    %p62 = por %p60, %p61
    %p63 = scmp.ne.s32.totalorder %s55, %s57
    %p64 = scmp.eq.s32.totalorder %s14, 3
    %p65 = por %p63, %p64
    %p66 = scmp.ne.s32.totalorder %s57, %s58
    %p67 = scmp.eq.s32.totalorder %s14, 0
    %p68 = por %p66, %p67
    %p69 = scmp.ne.s32.totalorder %s57, %s58
    %p70 = scmp.eq.s32.totalorder %s15, 3
    %p71 = por %p69, %p70
    %p73 = scmp.ne.s32.totalorder %s58, %s72
    %p74 = scmp.eq.s32.totalorder %s15, 0
    %p75 = por %p73, %p74
    %s77 = sadd.s32 %s76, 1
    %p80 = scmp.eq.s32.totalorder %s9, 3
    %p81 = scmp.ne.s32.totalorder %s76, %s78
    %p82 = scmp.eq.s32.totalorder %s9, 0
    %p83 = por %p81, %p82
    %p84 = scmp.ne.s32.totalorder %s76, %s78
    %p85 = scmp.eq.s32.totalorder %s14, 3
    %p86 = por %p84, %p85
    %p87 = scmp.ne.s32.totalorder %s78, %s79
    %p88 = scmp.eq.s32.totalorder %s14, 0
    %p89 = por %p87, %p88
    %p90 = scmp.ne.s32.totalorder %s78, %s79
    %p91 = scmp.eq.s32.totalorder %s15, 3
    %p92 = por %p90, %p91
    %p94 = scmp.ne.s32.totalorder %s79, %s93
    %p95 = scmp.eq.s32.totalorder %s15, 0
    %p96 = por %p94, %p95
    %s97 = ssub.s32 %s16, %s28
    %s98 = ssub.s32 %s17, %s24
    %s99 = sor.u32 %s97, %s98
    %p100 = scmp.eq.s32.totalorder %s99, 0
    %s102 = sadd.s32 %s101, 1
    %s103 = scalar_select %p100, %s101, %s102
    %p106 = pneg %p100
    %p107 = scmp.eq.s32.totalorder %s9, 3
    %p108 = por %p106, %p107
    %p109 = scmp.ne.s32.totalorder %s101, %s104
    %p110 = scmp.eq.s32.totalorder %s9, 0
    %p111 = por %p109, %p110
    %p112 = scmp.ne.s32.totalorder %s101, %s104
    %p113 = scmp.eq.s32.totalorder %s14, 3
    %p114 = por %p112, %p113
    %p115 = scmp.ne.s32.totalorder %s104, %s105
    %p116 = scmp.eq.s32.totalorder %s14, 0
    %p117 = por %p115, %p116
    %p118 = scmp.ne.s32.totalorder %s104, %s105
    %p119 = scmp.eq.s32.totalorder %s15, 3
    %p120 = por %p118, %p119
    %p122 = scmp.ne.s32.totalorder %s105, %s121
    %p123 = scmp.eq.s32.totalorder %s15, 0
    %p124 = por %p122, %p123
    %p125 = scmp.le.s32.totalorder 1, %s9
    %p126 = scmp.lt.s32.totalorder %s9, 5
    %p127 = pnand %p125, %p126
    %p128 = pneg %p127
    // Predicated region
    $region9: #{forward.21} parent=5 // pred_check
      _
    $region10: #{forward.21} parent=5 // pred_check_branch
      %130 = sbr.rel (%p127) target = $region12
    $region11: #{forward.21} parent=5 // pred_region
      %s131 = ssub.s32 %s9, 1
      // Predicated region
      $region13: #{forward.21} parent=11 // pred_check
        %p132 = pneg %p68
      $region14: #{forward.21} parent=11 // pred_check_branch
        %134 = sbr.rel (%p132) target = $region16
      $region15: #{forward.21} parent=11 // pred_region
        _
      $region16: #{forward.21} parent=11 // pred_fallthru
        _
      // Predicated region
      $region17: #{forward.21} parent=11 // pred_check
        %p135 = pneg %p89
      $region18: #{forward.21} parent=11 // pred_check_branch
        %137 = sbr.rel (%p135) target = $region20
      $region19: #{forward.21} parent=11 // pred_region
        _
      $region20: #{forward.21} parent=11 // pred_fallthru
        _
    $region12: #{forward.21} parent=5 // pred_fallthru
      _
    %p138 = scmp.lt.s32.totalorder %s9, 4
    // Predicated region
    $region21: #{forward.21} parent=5 // pred_check
      %p139 = pneg %p138
    $region22: #{forward.21} parent=5 // pred_check_branch
      %141 = sbr.rel (%p139) target = $region24
    $region23: #{forward.21} parent=5 // pred_region
      // Predicated region
      $region25: #{forward.21} parent=23 // pred_check
        %p142 = pneg %p41
      $region26: #{forward.21} parent=23 // pred_check_branch
        %144 = sbr.rel (%p142) target = $region28
      $region27: #{forward.21} parent=23 // pred_region
        %p145 = scmp.lt.s32.totalorder %s16, 3
        %s146 = scalar_select %p145, %s16, 3
        %s147 = scalar_lea.vmem %s0, %s146
      $region28: #{forward.21} parent=23 // pred_fallthru
        _
    $region24: #{forward.21} parent=5 // pred_fallthru
      _
    %p148 = scmp.le.s32.totalorder 1, %s9
    %p149 = scmp.lt.s32.totalorder %s9, 5
    %p150 = pnand %p148, %p149
    %p151 = pneg %p150
    // Predicated region
    $region29: #{forward.21} parent=5 // pred_check
      _
    $region30: #{forward.21} parent=5 // pred_check_branch
      %153 = sbr.rel (%p150) target = $region32
    $region31: #{forward.21} parent=5 // pred_region
      %s154 = ssub.s32 %s9, 1
      %p155 = scmp.lt.s32.totalorder %s18, 3
      %s156 = scalar_select %p155, %s18, 3
      %s157 = scalar_lea.vmem %s0, %s156
      %p158 = pneg %p47
      %p159 = pneg %p44
      %p160 = pneg %p68
      %p161 = pneg %p65
      %p162 = pneg %p89
      %p163 = pneg %p86
      %p164 = pneg %p117
      %p165 = pneg %p114
      %p166 = scmp.lt.s32.totalorder %s18, 3
      %s167 = scalar_select %p166, %s18, 3
      %p168 = scmp.lt.s32.totalorder %s19, 0
      %s169 = scalar_select %p168, %s19, 0
      %s170 = sadd.s32 %s169, %s167
      %s171 = smul.addr %s170, 4
      %s172 = scalar_lea.vmem %s3, %s171
      %p173 = scmp.lt.s32.totalorder %s18, 3
      %s174 = scalar_select %p173, %s18, 3
      %s175 = scalar_lea.vmem %s0, %s174
      %p176 = scmp.lt.s32.totalorder %s18, 3
      %s177 = scalar_select %p176, %s18, 3
      %p178 = scmp.lt.s32.totalorder %s19, 0
      %s179 = scalar_select %p178, %s19, 0
      %s180 = sadd.s32 %s179, %s177
      %s181 = smul.addr %s180, 4
      %s182 = scalar_lea.vmem %s3, %s181
      %v184 = vld [vmem:[%s175] sm:$0x1]
      %v185 = vpack.c.bf16 %v184, %v184
      %v186 = vld [vmem:[%s1] sm:$0xf]
      %v188 = vunpack.c.l.b16 %v186
      %v189 = vpack.c.b16 %v188, %v188
      %190 = vrot.lane.b32.xlu0 %v189, 127
      %v191 = vpop.permute.xlu0 %190
      %193 = vrot.lane.b32.xlu0 %v185, 127
      %v194 = vpop.permute.xlu0 %193
      %vm195 = vcmask 7168
      %v197 = vsel %vm195, %v191, 0
      %vm199 = vcmask 1040384
      %v200 = vsel 0, 4294967295, 65535
      %v201 = vsel %vm199, %v200, 0
      %v203 = vand.u32 %v194, %v201
      %205 = vmatpush.bf16.msra.mxu0 0
      %206 = vmatpush.bf16.msra.mxu0 0
      %207 = vmatpush.bf16.msra.mxu0 0
      %208 = vmatpush.bf16.msra.mxu0 0
      %209 = vmatpush.bf16.msra.mxu0 0
      %210 = vmatpush.bf16.msra.mxu0 0
      %211 = vmatpush.bf16.msra.mxu0 0
      %212 = vmatpush.bf16.msra.mxu0 %v203
      %213 = vmatmul.bf16.gmra.mxu0 %v197
      %v214 = vpop.f32.mrf.mxu0
      %v215 = vadd.f32 0.0, %v214
      %v216 = vpop.f32.mrf.mxu0
      %217 = vdwg.mxu0
      %v219 = vsel %vm195, %v186, 0
      %v222 = vand.u32 %v185, %v201
      %224 = vmatpush.bf16.msra.mxu0 0
      %225 = vmatpush.bf16.msra.mxu0 0
      %226 = vmatpush.bf16.msra.mxu0 0
      %227 = vmatpush.bf16.msra.mxu0 0
      %228 = vmatpush.bf16.msra.mxu0 0
      %229 = vmatpush.bf16.msra.mxu0 0
      %230 = vmatpush.bf16.msra.mxu0 0
      %231 = vmatpush.bf16.msra.mxu0 %v222
      %232 = vmatmul.bf16.gmra.mxu0 %v219
      %v233 = vpop.f32.mrf.mxu0
      %v234 = vadd.f32 %v215, %v233
      %v235 = vpop.f32.mrf.mxu0
      %236 = vdwg.mxu0
      %237 = vrot.lane.b32.xlu0 %v189, 126
      %v238 = vpop.permute.xlu0 %237
      %239 = vrot.lane.b32.xlu0 %v185, 126
      %v240 = vpop.permute.xlu0 %239
      %v242 = vsel %vm195, %v238, 0
      %v245 = vand.u32 %v240, %v201
      %247 = vmatpush.bf16.msra.mxu0 0
      %248 = vmatpush.bf16.msra.mxu0 0
      %249 = vmatpush.bf16.msra.mxu0 0
      %250 = vmatpush.bf16.msra.mxu0 0
      %251 = vmatpush.bf16.msra.mxu0 0
      %252 = vmatpush.bf16.msra.mxu0 0
      %253 = vmatpush.bf16.msra.mxu0 0
      %254 = vmatpush.bf16.msra.mxu0 %v245
      %255 = vmatmul.bf16.gmra.mxu0 %v242
      %v256 = vpop.f32.mrf.mxu0
      %v257 = vadd.f32 0.0, %v256
      %v258 = vpop.f32.mrf.mxu0
      %259 = vdwg.mxu0
      %v260 = vadd.f32 %v234, %v257
      %261 = vrot.lane.b32.xlu0 %v189, 125
      %v262 = vpop.permute.xlu0 %261
      %263 = vrot.lane.b32.xlu0 %v185, 125
      %v264 = vpop.permute.xlu0 %263
      %v266 = vsel %vm195, %v262, 0
      %v269 = vand.u32 %v264, %v201
      %271 = vmatpush.bf16.msra.mxu0 0
      %272 = vmatpush.bf16.msra.mxu0 0
      %273 = vmatpush.bf16.msra.mxu0 0
      %274 = vmatpush.bf16.msra.mxu0 0
      %275 = vmatpush.bf16.msra.mxu0 0
      %276 = vmatpush.bf16.msra.mxu0 0
      %277 = vmatpush.bf16.msra.mxu0 0
      %278 = vmatpush.bf16.msra.mxu0 %v269
      %279 = vmatmul.bf16.gmra.mxu0 %v266
      %v280 = vpop.f32.mrf.mxu0
      %v281 = vadd.f32 0.0, %v280
      %v282 = vpop.f32.mrf.mxu0
      %283 = vdwg.mxu0
      %v284 = vadd.f32 %v260, %v281
      %285 = vrot.lane.b32.xlu0 %v189, 124
      %v286 = vpop.permute.xlu0 %285
      %287 = vrot.lane.b32.xlu0 %v185, 124
      %v288 = vpop.permute.xlu0 %287
      %v290 = vsel %vm195, %v286, 0
      %v293 = vand.u32 %v288, %v201
      %295 = vmatpush.bf16.msra.mxu0 0
      %296 = vmatpush.bf16.msra.mxu0 0
      %297 = vmatpush.bf16.msra.mxu0 0
      %298 = vmatpush.bf16.msra.mxu0 0
      %299 = vmatpush.bf16.msra.mxu0 0
      %300 = vmatpush.bf16.msra.mxu0 0
      %301 = vmatpush.bf16.msra.mxu0 0
      %302 = vmatpush.bf16.msra.mxu0 %v293
      %303 = vmatmul.bf16.gmra.mxu0 %v290
      %v304 = vpop.f32.mrf.mxu0
      %v305 = vadd.f32 0.0, %v304
      %v306 = vpop.f32.mrf.mxu0
      %307 = vdwg.mxu0
      %v308 = vadd.f32 %v284, %v305
      %309 = vrot.lane.b32.xlu0 %v189, 123
      %v310 = vpop.permute.xlu0 %309
      %311 = vrot.lane.b32.xlu0 %v185, 123
      %v312 = vpop.permute.xlu0 %311
      %v314 = vsel %vm195, %v310, 0
      %v317 = vand.u32 %v312, %v201
      %319 = vmatpush.bf16.msra.mxu0 0
      %320 = vmatpush.bf16.msra.mxu0 0
      %321 = vmatpush.bf16.msra.mxu0 0
      %322 = vmatpush.bf16.msra.mxu0 0
      %323 = vmatpush.bf16.msra.mxu0 0
      %324 = vmatpush.bf16.msra.mxu0 0
      %325 = vmatpush.bf16.msra.mxu0 0
      %326 = vmatpush.bf16.msra.mxu0 %v317
      %327 = vmatmul.bf16.gmra.mxu0 %v314
      %v328 = vpop.f32.mrf.mxu0
      %v329 = vadd.f32 0.0, %v328
      %v330 = vpop.f32.mrf.mxu0
      %331 = vdwg.mxu0
      %v332 = vadd.f32 %v308, %v329
      %333 = vrot.lane.b32.xlu0 %v189, 122
      %v334 = vpop.permute.xlu0 %333
      %335 = vrot.lane.b32.xlu0 %v185, 122
      %v336 = vpop.permute.xlu0 %335
      %v338 = vsel %vm195, %v334, 0
      %v341 = vand.u32 %v336, %v201
      %343 = vmatpush.bf16.msra.mxu0 0
      %344 = vmatpush.bf16.msra.mxu0 0
      %345 = vmatpush.bf16.msra.mxu0 0
      %346 = vmatpush.bf16.msra.mxu0 0
      %347 = vmatpush.bf16.msra.mxu0 0
      %348 = vmatpush.bf16.msra.mxu0 0
      %349 = vmatpush.bf16.msra.mxu0 0
      %350 = vmatpush.bf16.msra.mxu0 %v341
      %351 = vmatmul.bf16.gmra.mxu0 %v338
      %v352 = vpop.f32.mrf.mxu0
      %v353 = vadd.f32 0.0, %v352
      %v354 = vpop.f32.mrf.mxu0
      %355 = vdwg.mxu0
      %v356 = vadd.f32 %v332, %v353
      %v357 = vld [vmem:[%s2] sm:$0xff]
      %359 = vset.pattern.permute.xlu0 0
      %360 = vperm.xlu0 %359, %v357
      %v361 = vpop.permute.xlu0 %360
      %v363 = vadd.f32 %v356, %v361
      %v364 = vpack.c.bf16 %v363, %v363
      %vm365 = vcmask 519168
      %366 = vst.msk [vmem:[%s182] sm:$0xf] %vm365, %v364
      %p367 = scmp.lt.s32.totalorder %s18, 3
      %s368 = scalar_select %p367, %s18, 3
      %p369 = scmp.lt.s32.totalorder %s19, 0
      %s370 = scalar_select %p369, %s19, 0
      %s371 = sadd.s32 %s370, %s368
      %s372 = smul.addr %s371, 4
      %s373 = scalar_lea.vmem %s3, %s372
      // Predicated region
      $region33: #{forward.21} parent=31 // pred_check
        %p374 = pneg %p114
      $region34: #{forward.21} parent=31 // pred_check_branch
        %376 = sbr.rel (%p374) target = $region36
      $region35: #{forward.21} parent=31 // pred_region
        _
      $region36: #{forward.21} parent=31 // pred_fallthru
        _
    $region32: #{forward.21} parent=5 // pred_fallthru
      _
    %p377 = scmp.le.s32.totalorder 2, %s9
    // Predicated region
    $region37: #{forward.21} parent=5 // pred_check
      %p378 = pneg %p377
    $region38: #{forward.21} parent=5 // pred_check_branch
      %380 = sbr.rel (%p378) target = $region40
    $region39: #{forward.21} parent=5 // pred_region
      %s381 = ssub.s32 %s9, 2
      // Predicated region
      $region41: #{forward.21} parent=39 // pred_check
        %p382 = pneg %p120
      $region42: #{forward.21} parent=39 // pred_check_branch
        %384 = sbr.rel (%p382) target = $region44
      $region43: #{forward.21} parent=39 // pred_region
        %p385 = scmp.lt.s32.totalorder %s20, 3
        %s386 = scalar_select %p385, %s20, 3
        %p387 = scmp.lt.s32.totalorder %s21, 0
        %s388 = scalar_select %p387, %s21, 0
        %s389 = sadd.s32 %s388, %s386
        %s390 = smul.addr %s389, 4
        %s391 = scalar_lea.vmem %s3, %s390
      $region44: #{forward.21} parent=39 // pred_fallthru
        _
    $region40: #{forward.21} parent=5 // pred_fallthru
      _
  $region6: #{forward.21} parent=0 // loop_footer
    %s13 = sadd.s32 1, %s9
  $region7: #{forward.21} parent=0 // loop_footer_branch
    %8 = sbr.rel target = $region3
  $region8: #{forward.21} parent=0 // loop_exit
    _

// kernel: forward.22
$region0: #{forward.22}
  #allocation0 [shape = 'u32[]', space=smem, size = 0x4, offset = 0x4, fixed_abs, tag = 'smem constant byte address 0x4 - core index']
  #allocation1 [shape = 'u32[72,128]{1,0:T(1,128)}', space=vmem, size = 0x9000, scoped, tag = 'internal scratch']
  #allocation2 [shape = 'f32[56,64]{1,0:T(8,128)}', space=vmem, size = 0x7000, scoped, tag = 'scratch operand']
  %s0 = inlined_call_operand.vmem [shape: bf16[4,8,70], index: 0, kind: input, shape index: {}]
  %s1 = inlined_call_operand.vmem [shape: bf16[4,56], index: 1, kind: input, shape index: {}]
  %s2 = inlined_call_operand.vmem [shape: f32[4,1], index: 2, kind: input, shape index: {}]
  %s3 = inlined_call_operand.vmem [shape: bf16[4,4,64], index: 3, kind: output, shape index: {}]
  %s4 = sld [smem:[#allocation0]]
  $region45: #{forward.22} parent=0
    _
  %s6 = ssub.s32 1, %s4
  %s7 = scalar_select 0, %s6, %s4
  loop: start=0, step=1, limit=6
  $region2: #{forward.22} parent=0 // loop_pre_header
    _
  $region3: #{forward.22} parent=0 // loop_header
    %s9 = sphi 0, %s13
    %p10 = scmp.ge.s32.totalorder %s9, 6
    %s16 = sphi 0, %s28
    %s17 = sphi 0, %s24
    %s18 = sphi 0, %s16
    %s19 = sphi 0, %s17
    %s20 = sphi 0, %s18
    %s21 = sphi 0, %s19
    %s31 = sphi 0, %s33
    %s34 = sphi 0, %s31
    %s35 = sphi 0, %s34
    %s51 = sphi 0, %s35
    %s55 = sphi 0, %s55
    %s57 = sphi 0, %s55
    %s58 = sphi 0, %s57
    %s72 = sphi 0, %s58
    %s76 = sphi 0, %s76
    %s78 = sphi 0, %s76
    %s79 = sphi 0, %s78
    %s93 = sphi 0, %s79
    %s101 = sphi 0, %s103
    %s104 = sphi 0, %s101
    %s105 = sphi 0, %s104
    %s121 = sphi 0, %s105
  $region4: #{forward.22} parent=0 // loop_header_branch
    %12 = sbr.rel (%p10) target = $region8
  $region5: #{forward.22} parent=0 // loop_body
    %s14 = ssub.s32 %s9, 1
    %s15 = ssub.s32 %s9, 2
    %s22 = sadd.s32 1, %s17
    %p23 = scmp.ge.s32.totalorder %s22, 1
    %s24 = scalar_select %p23, 0, %s22
    %s25 = sadd.s32 1, %s16
    %s26 = scalar_select %p23, %s25, %s16
    %p27 = scmp.ge.s32.totalorder %s26, 4
    %s28 = scalar_select %p27, 0, %s26
    %s29 = ssub.s32 %s16, %s28
    %p30 = scmp.eq.s32.totalorder %s29, 0
    %s32 = sadd.s32 %s31, 1
    %s33 = scalar_select %p30, %s31, %s32
    %p36 = pneg %p30
    %p37 = scmp.eq.s32.totalorder %s9, 3
    %p38 = por %p36, %p37
    %p39 = scmp.ne.s32.totalorder %s31, %s34
    %p40 = scmp.eq.s32.totalorder %s9, 0
    %p41 = por %p39, %p40
    %p42 = scmp.ne.s32.totalorder %s31, %s34
    %p43 = scmp.eq.s32.totalorder %s14, 3
    %p44 = por %p42, %p43
    %p45 = scmp.ne.s32.totalorder %s34, %s35
    %p46 = scmp.eq.s32.totalorder %s14, 0
    %p47 = por %p45, %p46
    %p48 = scmp.ne.s32.totalorder %s34, %s35
    %p49 = scmp.eq.s32.totalorder %s15, 3
    %p50 = por %p48, %p49
    %p52 = scmp.ne.s32.totalorder %s35, %s51
    %p53 = scmp.eq.s32.totalorder %s15, 0
    %p54 = por %p52, %p53
    %s56 = sadd.s32 %s55, 1
    %p59 = scmp.eq.s32.totalorder %s9, 3
    %p60 = scmp.ne.s32.totalorder %s55, %s57
    %p61 = scmp.eq.s32.totalorder %s9, 0
    %p62 = por %p60, %p61
    %p63 = scmp.ne.s32.totalorder %s55, %s57
    %p64 = scmp.eq.s32.totalorder %s14, 3
    %p65 = por %p63, %p64
    %p66 = scmp.ne.s32.totalorder %s57, %s58
    %p67 = scmp.eq.s32.totalorder %s14, 0
    %p68 = por %p66, %p67
    %p69 = scmp.ne.s32.totalorder %s57, %s58
    %p70 = scmp.eq.s32.totalorder %s15, 3
    %p71 = por %p69, %p70
    %p73 = scmp.ne.s32.totalorder %s58, %s72
    %p74 = scmp.eq.s32.totalorder %s15, 0
    %p75 = por %p73, %p74
    %s77 = sadd.s32 %s76, 1
    %p80 = scmp.eq.s32.totalorder %s9, 3
    %p81 = scmp.ne.s32.totalorder %s76, %s78
    %p82 = scmp.eq.s32.totalorder %s9, 0
    %p83 = por %p81, %p82
    %p84 = scmp.ne.s32.totalorder %s76, %s78
    %p85 = scmp.eq.s32.totalorder %s14, 3
    %p86 = por %p84, %p85
    %p87 = scmp.ne.s32.totalorder %s78, %s79
    %p88 = scmp.eq.s32.totalorder %s14, 0
    %p89 = por %p87, %p88
    %p90 = scmp.ne.s32.totalorder %s78, %s79
    %p91 = scmp.eq.s32.totalorder %s15, 3
    %p92 = por %p90, %p91
    %p94 = scmp.ne.s32.totalorder %s79, %s93
    %p95 = scmp.eq.s32.totalorder %s15, 0
    %p96 = por %p94, %p95
    %s97 = ssub.s32 %s16, %s28
    %s98 = ssub.s32 %s17, %s24
    %s99 = sor.u32 %s97, %s98
    %p100 = scmp.eq.s32.totalorder %s99, 0
    %s102 = sadd.s32 %s101, 1
    %s103 = scalar_select %p100, %s101, %s102
    %p106 = pneg %p100
    %p107 = scmp.eq.s32.totalorder %s9, 3
    %p108 = por %p106, %p107
    %p109 = scmp.ne.s32.totalorder %s101, %s104
    %p110 = scmp.eq.s32.totalorder %s9, 0
    %p111 = por %p109, %p110
    %p112 = scmp.ne.s32.totalorder %s101, %s104
    %p113 = scmp.eq.s32.totalorder %s14, 3
    %p114 = por %p112, %p113
    %p115 = scmp.ne.s32.totalorder %s104, %s105
    %p116 = scmp.eq.s32.totalorder %s14, 0
    %p117 = por %p115, %p116
    %p118 = scmp.ne.s32.totalorder %s104, %s105
    %p119 = scmp.eq.s32.totalorder %s15, 3
    %p120 = por %p118, %p119
    %p122 = scmp.ne.s32.totalorder %s105, %s121
    %p123 = scmp.eq.s32.totalorder %s15, 0
    %p124 = por %p122, %p123
    %p125 = scmp.le.s32.totalorder 1, %s9
    %p126 = scmp.lt.s32.totalorder %s9, 5
    %p127 = pnand %p125, %p126
    %p128 = pneg %p127
    // Predicated region
    $region9: #{forward.22} parent=5 // pred_check
      _
    $region10: #{forward.22} parent=5 // pred_check_branch
      %130 = sbr.rel (%p127) target = $region12
    $region11: #{forward.22} parent=5 // pred_region
      %s131 = ssub.s32 %s9, 1
      // Predicated region
      $region13: #{forward.22} parent=11 // pred_check
        %p132 = pneg %p68
      $region14: #{forward.22} parent=11 // pred_check_branch
        %134 = sbr.rel (%p132) target = $region16
      $region15: #{forward.22} parent=11 // pred_region
        _
      $region16: #{forward.22} parent=11 // pred_fallthru
        _
      // Predicated region
      $region17: #{forward.22} parent=11 // pred_check
        %p135 = pneg %p89
      $region18: #{forward.22} parent=11 // pred_check_branch
        %137 = sbr.rel (%p135) target = $region20
      $region19: #{forward.22} parent=11 // pred_region
        _
      $region20: #{forward.22} parent=11 // pred_fallthru
        _
    $region12: #{forward.22} parent=5 // pred_fallthru
      _
    %p138 = scmp.lt.s32.totalorder %s9, 4
    // Predicated region
    $region21: #{forward.22} parent=5 // pred_check
      %p139 = pneg %p138
    $region22: #{forward.22} parent=5 // pred_check_branch
      %141 = sbr.rel (%p139) target = $region24
    $region23: #{forward.22} parent=5 // pred_region
      // Predicated region
      $region25: #{forward.22} parent=23 // pred_check
        %p142 = pneg %p41
      $region26: #{forward.22} parent=23 // pred_check_branch
        %144 = sbr.rel (%p142) target = $region28
      $region27: #{forward.22} parent=23 // pred_region
        %p145 = scmp.lt.s32.totalorder %s16, 3
        %s146 = scalar_select %p145, %s16, 3
        %s147 = smul.addr %s146, 4
        %s148 = scalar_lea.vmem %s0, %s147
      $region28: #{forward.22} parent=23 // pred_fallthru
        _
    $region24: #{forward.22} parent=5 // pred_fallthru
      _
    %p149 = scmp.le.s32.totalorder 1, %s9
    %p150 = scmp.lt.s32.totalorder %s9, 5
    %p151 = pnand %p149, %p150
    %p152 = pneg %p151
    // Predicated region
    $region29: #{forward.22} parent=5 // pred_check
      _
    $region30: #{forward.22} parent=5 // pred_check_branch
      %154 = sbr.rel (%p151) target = $region32
    $region31: #{forward.22} parent=5 // pred_region
      %s155 = ssub.s32 %s9, 1
      %p156 = scmp.lt.s32.totalorder %s18, 3
      %s157 = scalar_select %p156, %s18, 3
      %s158 = smul.addr %s157, 4
      %s159 = scalar_lea.vmem %s0, %s158
      %p160 = pneg %p47
      %p161 = pneg %p44
      %p162 = pneg %p68
      %p163 = pneg %p65
      %p164 = pneg %p89
      %p165 = pneg %p86
      %p166 = pneg %p117
      %p167 = pneg %p114
      %p168 = scmp.lt.s32.totalorder %s18, 3
      %s169 = scalar_select %p168, %s18, 3
      %p170 = scmp.lt.s32.totalorder %s19, 0
      %s171 = scalar_select %p170, %s19, 0
      %s172 = sadd.s32 %s171, %s169
      %s173 = smul.addr %s172, 2
      %s174 = scalar_lea.vmem %s3, %s173
      %p175 = scmp.lt.s32.totalorder %s18, 3
      %s176 = scalar_select %p175, %s18, 3
      %s177 = smul.addr %s176, 4
      %s178 = scalar_lea.vmem %s0, %s177
      %p179 = scmp.lt.s32.totalorder %s18, 3
      %s180 = scalar_select %p179, %s18, 3
      %p181 = scmp.lt.s32.totalorder %s19, 0
      %s182 = scalar_select %p181, %s19, 0
      %s183 = sadd.s32 %s182, %s180
      %s184 = smul.addr %s183, 2
      %s185 = scalar_lea.vmem %s3, %s184
      %v187 = vld [vmem:[%s178] sm:$0xf]
      %v188 = vunpack.c.l.bf16 %v187
      %vm189 = vcmask 523264
      %190 = vst.msk [vmem:[#allocation2] sm:$0xff] %vm189, %v188
      %v191 = vld [vmem:[%s178] sm:$0xf]
      %v192 = vunpack.c.l.bf16 %v191
      %194 = vrot.lane.b32.xlu0 %v192, 127
      %v195 = vpop.permute.xlu0 %194
      %197 = vst.msk [vmem:[#allocation2 + $0x8] sm:$0xff] %vm189, %v195
      %v198 = vld [vmem:[%s178] sm:$0xf]
      %v199 = vunpack.c.l.bf16 %v198
      %201 = vrot.lane.b32.xlu0 %v199, 126
      %v202 = vpop.permute.xlu0 %201
      %204 = vst.msk [vmem:[#allocation2 + $0x10] sm:$0xff] %vm189, %v202
      %v205 = vld [vmem:[%s178] sm:$0xf]
      %v206 = vunpack.c.l.bf16 %v205
      %208 = vrot.lane.b32.xlu0 %v206, 125
      %v209 = vpop.permute.xlu0 %208
      %211 = vst.msk [vmem:[#allocation2 + $0x18] sm:$0xff] %vm189, %v209
      %v212 = vld [vmem:[%s178] sm:$0xf]
      %v213 = vunpack.c.l.bf16 %v212
      %215 = vrot.lane.b32.xlu0 %v213, 124
      %v216 = vpop.permute.xlu0 %215
      %218 = vst.msk [vmem:[#allocation2 + $0x20] sm:$0xff] %vm189, %v216
      %v219 = vld [vmem:[%s178] sm:$0xf]
      %v220 = vunpack.c.l.bf16 %v219
      %222 = vrot.lane.b32.xlu0 %v220, 123
      %v223 = vpop.permute.xlu0 %222
      %225 = vst.msk [vmem:[#allocation2 + $0x28] sm:$0xff] %vm189, %v223
      %v226 = vld [vmem:[%s178] sm:$0xf]
      %v227 = vunpack.c.l.bf16 %v226
      %229 = vrot.lane.b32.xlu0 %v227, 122
      %v230 = vpop.permute.xlu0 %229
      %232 = vst.msk [vmem:[#allocation2 + $0x30] sm:$0xff] %vm189, %v230
      %v233 = vld [vmem:[%s1] sm:$0x3]
      %v234 = vld [vmem:[#allocation2] sm:$0xff]
      %v235 = vld [vmem:[#allocation2 + $0x8] sm:$0xff]
      %v236 = vld [vmem:[#allocation2 + $0x10] sm:$0xff]
      %v237 = vld [vmem:[#allocation2 + $0x18] sm:$0xff]
      %v238 = vld [vmem:[#allocation2 + $0x20] sm:$0xff]
      %v239 = vld [vmem:[#allocation2 + $0x28] sm:$0xff]
      %v240 = vld [vmem:[#allocation2 + $0x30] sm:$0xff]
      %v241 = vpack.c.bf16 %v235, %v234
      %v242 = vpack.c.bf16 %v237, %v236
      %v243 = vpack.c.bf16 %v239, %v238
      %v244 = vpack.c.bf16 %v240, %v240
      %v245 = vld [vmem:[%s2] sm:$0xf]
      %247 = vset.pattern.permute.xlu0 0
      %248 = vperm.xlu0 %247, %v245
      %v249 = vpop.permute.xlu0 %248
      %vm251 = vcmask 457728
      %v253 = vsel %vm251, %v233, 0
      %vm255 = vcmask 1043456
      %v257 = vsel %vm255, %v244, 0
      %259 = vmatpush.bf16.msra.mxu0 0
      %260 = vmatpush.bf16.msra.mxu0 0
      %261 = vmatpush.bf16.msra.mxu0 0
      %262 = vmatpush.bf16.msra.mxu0 0
      %263 = vmatpush.bf16.msra.mxu0 %v257
      %264 = vmatpush.bf16.msra.mxu0 %v243
      %265 = vmatpush.bf16.msra.mxu0 %v242
      %266 = vmatpush.bf16.msra.mxu0 %v241
      %267 = vmatmul.bf16.gmra.mxu0 %v253
      %v268 = vpop.f32.mrf.mxu0
      %v269 = vadd.f32 %v249, %v268
      %v270 = vpop.f32.mrf.mxu0
      %271 = vdwg.mxu0
      %v272 = vpack.c.bf16 %v269, %v269
      %vm273 = vcmask 517120
      %274 = vst.msk [vmem:[%s185] sm:$0x3] %vm273, %v272
      %p275 = scmp.lt.s32.totalorder %s18, 3
      %s276 = scalar_select %p275, %s18, 3
      %p277 = scmp.lt.s32.totalorder %s19, 0
      %s278 = scalar_select %p277, %s19, 0
      %s279 = sadd.s32 %s278, %s276
      %s280 = smul.addr %s279, 2
      %s281 = scalar_lea.vmem %s3, %s280
      // Predicated region
      $region33: #{forward.22} parent=31 // pred_check
        %p282 = pneg %p114
      $region34: #{forward.22} parent=31 // pred_check_branch
        %284 = sbr.rel (%p282) target = $region36
      $region35: #{forward.22} parent=31 // pred_region
        _
      $region36: #{forward.22} parent=31 // pred_fallthru
        _
    $region32: #{forward.22} parent=5 // pred_fallthru
      _
    %p285 = scmp.le.s32.totalorder 2, %s9
    // Predicated region
    $region37: #{forward.22} parent=5 // pred_check
      %p286 = pneg %p285
    $region38: #{forward.22} parent=5 // pred_check_branch
      %288 = sbr.rel (%p286) target = $region40
    $region39: #{forward.22} parent=5 // pred_region
      %s289 = ssub.s32 %s9, 2
      // Predicated region
      $region41: #{forward.22} parent=39 // pred_check
        %p290 = pneg %p120
      $region42: #{forward.22} parent=39 // pred_check_branch
        %292 = sbr.rel (%p290) target = $region44
      $region43: #{forward.22} parent=39 // pred_region
        %p293 = scmp.lt.s32.totalorder %s20, 3
        %s294 = scalar_select %p293, %s20, 3
        %p295 = scmp.lt.s32.totalorder %s21, 0
        %s296 = scalar_select %p295, %s21, 0
        %s297 = sadd.s32 %s296, %s294
        %s298 = smul.addr %s297, 2
        %s299 = scalar_lea.vmem %s3, %s298
      $region44: #{forward.22} parent=39 // pred_fallthru
        _
    $region40: #{forward.22} parent=5 // pred_fallthru
      _
  $region6: #{forward.22} parent=0 // loop_footer
    %s13 = sadd.s32 1, %s9
  $region7: #{forward.22} parent=0 // loop_footer_branch
    %8 = sbr.rel target = $region3
  $region8: #{forward.22} parent=0 // loop_exit
    _

// kernel: forward.23
$region0: #{forward.23}
  #allocation0 [shape = 'u32[]', space=smem, size = 0x4, offset = 0x4, fixed_abs, tag = 'smem constant byte address 0x4 - core index']
  #allocation1 [shape = 'u32[72,128]{1,0:T(1,128)}', space=vmem, size = 0x9000, scoped, tag = 'internal scratch']
  %s0 = inlined_call_operand.vmem [shape: bf16[4,4,64], index: 0, kind: input, shape index: {}]
  %s1 = inlined_call_operand.vmem [shape: bf16[8,4], index: 1, kind: input, shape index: {}]
  %s2 = inlined_call_operand.vmem [shape: f32[8,1], index: 2, kind: input, shape index: {}]
  %s3 = inlined_call_operand.vmem [shape: bf16[4,8,64], index: 3, kind: input, shape index: {}]
  %s4 = inlined_call_operand.vmem [shape: bf16[8,8], index: 4, kind: input, shape index: {}]
  %s5 = inlined_call_operand.vmem [shape: bf16[4,8,64], index: 5, kind: output, shape index: {}]
  %s6 = sld [smem:[#allocation0]]
  $region53: #{forward.23} parent=0
    _
  %s8 = ssub.s32 1, %s6
  %s9 = scalar_select 0, %s8, %s6
  loop: start=0, step=1, limit=6
  $region2: #{forward.23} parent=0 // loop_pre_header
    _
  $region3: #{forward.23} parent=0 // loop_header
    %s11 = sphi 0, %s15
    %p12 = scmp.ge.s32.totalorder %s11, 6
    %s18 = sphi 0, %s30
    %s19 = sphi 0, %s26
    %s20 = sphi 0, %s18
    %s21 = sphi 0, %s19
    %s22 = sphi 0, %s20
    %s23 = sphi 0, %s21
    %s33 = sphi 0, %s35
    %s36 = sphi 0, %s33
    %s37 = sphi 0, %s36
    %s53 = sphi 0, %s37
    %s57 = sphi 0, %s57
    %s59 = sphi 0, %s57
    %s60 = sphi 0, %s59
    %s74 = sphi 0, %s60
    %s78 = sphi 0, %s78
    %s80 = sphi 0, %s78
    %s81 = sphi 0, %s80
    %s95 = sphi 0, %s81
    %s101 = sphi 0, %s103
    %s104 = sphi 0, %s101
    %s105 = sphi 0, %s104
    %s121 = sphi 0, %s105
    %s125 = sphi 0, %s125
    %s127 = sphi 0, %s125
    %s128 = sphi 0, %s127
    %s142 = sphi 0, %s128
    %s150 = sphi 0, %s152
    %s153 = sphi 0, %s150
    %s154 = sphi 0, %s153
    %s170 = sphi 0, %s154
  $region4: #{forward.23} parent=0 // loop_header_branch
    %14 = sbr.rel (%p12) target = $region8
  $region5: #{forward.23} parent=0 // loop_body
    %s16 = ssub.s32 %s11, 1
    %s17 = ssub.s32 %s11, 2
    %s24 = sadd.s32 1, %s19
    %p25 = scmp.ge.s32.totalorder %s24, 1
    %s26 = scalar_select %p25, 0, %s24
    %s27 = sadd.s32 1, %s18
    %s28 = scalar_select %p25, %s27, %s18
    %p29 = scmp.ge.s32.totalorder %s28, 4
    %s30 = scalar_select %p29, 0, %s28
    %s31 = ssub.s32 %s18, %s30
    %p32 = scmp.eq.s32.totalorder %s31, 0
    %s34 = sadd.s32 %s33, 1
    %s35 = scalar_select %p32, %s33, %s34
    %p38 = pneg %p32
    %p39 = scmp.eq.s32.totalorder %s11, 3
    %p40 = por %p38, %p39
    %p41 = scmp.ne.s32.totalorder %s33, %s36
    %p42 = scmp.eq.s32.totalorder %s11, 0
    %p43 = por %p41, %p42
    %p44 = scmp.ne.s32.totalorder %s33, %s36
    %p45 = scmp.eq.s32.totalorder %s16, 3
    %p46 = por %p44, %p45
    %p47 = scmp.ne.s32.totalorder %s36, %s37
    %p48 = scmp.eq.s32.totalorder %s16, 0
    %p49 = por %p47, %p48
    %p50 = scmp.ne.s32.totalorder %s36, %s37
    %p51 = scmp.eq.s32.totalorder %s17, 3
    %p52 = por %p50, %p51
    %p54 = scmp.ne.s32.totalorder %s37, %s53
    %p55 = scmp.eq.s32.totalorder %s17, 0
    %p56 = por %p54, %p55
    %s58 = sadd.s32 %s57, 1
    %p61 = scmp.eq.s32.totalorder %s11, 3
    %p62 = scmp.ne.s32.totalorder %s57, %s59
    %p63 = scmp.eq.s32.totalorder %s11, 0
    %p64 = por %p62, %p63
    %p65 = scmp.ne.s32.totalorder %s57, %s59
    %p66 = scmp.eq.s32.totalorder %s16, 3
    %p67 = por %p65, %p66
    %p68 = scmp.ne.s32.totalorder %s59, %s60
    %p69 = scmp.eq.s32.totalorder %s16, 0
    %p70 = por %p68, %p69
    %p71 = scmp.ne.s32.totalorder %s59, %s60
    %p72 = scmp.eq.s32.totalorder %s17, 3
    %p73 = por %p71, %p72
    %p75 = scmp.ne.s32.totalorder %s60, %s74
    %p76 = scmp.eq.s32.totalorder %s17, 0
    %p77 = por %p75, %p76
    %s79 = sadd.s32 %s78, 1
    %p82 = scmp.eq.s32.totalorder %s11, 3
    %p83 = scmp.ne.s32.totalorder %s78, %s80
    %p84 = scmp.eq.s32.totalorder %s11, 0
    %p85 = por %p83, %p84
    %p86 = scmp.ne.s32.totalorder %s78, %s80
    %p87 = scmp.eq.s32.totalorder %s16, 3
    %p88 = por %p86, %p87
    %p89 = scmp.ne.s32.totalorder %s80, %s81
    %p90 = scmp.eq.s32.totalorder %s16, 0
    %p91 = por %p89, %p90
    %p92 = scmp.ne.s32.totalorder %s80, %s81
    %p93 = scmp.eq.s32.totalorder %s17, 3
    %p94 = por %p92, %p93
    %p96 = scmp.ne.s32.totalorder %s81, %s95
    %p97 = scmp.eq.s32.totalorder %s17, 0
    %p98 = por %p96, %p97
    %s99 = ssub.s32 %s18, %s30
    %p100 = scmp.eq.s32.totalorder %s99, 0
    %s102 = sadd.s32 %s101, 1
    %s103 = scalar_select %p100, %s101, %s102
    %p106 = pneg %p100
    %p107 = scmp.eq.s32.totalorder %s11, 3
    %p108 = por %p106, %p107
    %p109 = scmp.ne.s32.totalorder %s101, %s104
    %p110 = scmp.eq.s32.totalorder %s11, 0
    %p111 = por %p109, %p110
    %p112 = scmp.ne.s32.totalorder %s101, %s104
    %p113 = scmp.eq.s32.totalorder %s16, 3
    %p114 = por %p112, %p113
    %p115 = scmp.ne.s32.totalorder %s104, %s105
    %p116 = scmp.eq.s32.totalorder %s16, 0
    %p117 = por %p115, %p116
    %p118 = scmp.ne.s32.totalorder %s104, %s105
    %p119 = scmp.eq.s32.totalorder %s17, 3
    %p120 = por %p118, %p119
    %p122 = scmp.ne.s32.totalorder %s105, %s121
    %p123 = scmp.eq.s32.totalorder %s17, 0
    %p124 = por %p122, %p123
    %s126 = sadd.s32 %s125, 1
    %p129 = scmp.eq.s32.totalorder %s11, 3
    %p130 = scmp.ne.s32.totalorder %s125, %s127
    %p131 = scmp.eq.s32.totalorder %s11, 0
    %p132 = por %p130, %p131
    %p133 = scmp.ne.s32.totalorder %s125, %s127
    %p134 = scmp.eq.s32.totalorder %s16, 3
    %p135 = por %p133, %p134
    %p136 = scmp.ne.s32.totalorder %s127, %s128
    %p137 = scmp.eq.s32.totalorder %s16, 0
    %p138 = por %p136, %p137
    %p139 = scmp.ne.s32.totalorder %s127, %s128
    %p140 = scmp.eq.s32.totalorder %s17, 3
    %p141 = por %p139, %p140
    %p143 = scmp.ne.s32.totalorder %s128, %s142
    %p144 = scmp.eq.s32.totalorder %s17, 0
    %p145 = por %p143, %p144
    %s146 = ssub.s32 %s18, %s30
    %s147 = ssub.s32 %s19, %s26
    %s148 = sor.u32 %s146, %s147
    %p149 = scmp.eq.s32.totalorder %s148, 0
    %s151 = sadd.s32 %s150, 1
    %s152 = scalar_select %p149, %s150, %s151
    %p155 = pneg %p149
    %p156 = scmp.eq.s32.totalorder %s11, 3
    %p157 = por %p155, %p156
    %p158 = scmp.ne.s32.totalorder %s150, %s153
    %p159 = scmp.eq.s32.totalorder %s11, 0
    %p160 = por %p158, %p159
    %p161 = scmp.ne.s32.totalorder %s150, %s153
    %p162 = scmp.eq.s32.totalorder %s16, 3
    %p163 = por %p161, %p162
    %p164 = scmp.ne.s32.totalorder %s153, %s154
    %p165 = scmp.eq.s32.totalorder %s16, 0
    %p166 = por %p164, %p165
    %p167 = scmp.ne.s32.totalorder %s153, %s154
    %p168 = scmp.eq.s32.totalorder %s17, 3
    %p169 = por %p167, %p168
    %p171 = scmp.ne.s32.totalorder %s154, %s170
    %p172 = scmp.eq.s32.totalorder %s17, 0
    %p173 = por %p171, %p172
    %p174 = scmp.le.s32.totalorder 1, %s11
    %p175 = scmp.lt.s32.totalorder %s11, 5
    %p176 = pnand %p174, %p175
    %p177 = pneg %p176
    // Predicated region
    $region9: #{forward.23} parent=5 // pred_check
      _
    $region10: #{forward.23} parent=5 // pred_check_branch
      %179 = sbr.rel (%p176) target = $region12
    $region11: #{forward.23} parent=5 // pred_region
      %s180 = ssub.s32 %s11, 1
      // Predicated region
      $region13: #{forward.23} parent=11 // pred_check
        %p181 = pneg %p70
      $region14: #{forward.23} parent=11 // pred_check_branch
        %183 = sbr.rel (%p181) target = $region16
      $region15: #{forward.23} parent=11 // pred_region
        _
      $region16: #{forward.23} parent=11 // pred_fallthru
        _
      // Predicated region
      $region17: #{forward.23} parent=11 // pred_check
        %p184 = pneg %p91
      $region18: #{forward.23} parent=11 // pred_check_branch
        %186 = sbr.rel (%p184) target = $region20
      $region19: #{forward.23} parent=11 // pred_region
        _
      $region20: #{forward.23} parent=11 // pred_fallthru
        _
      // Predicated region
      $region21: #{forward.23} parent=11 // pred_check
        %p187 = pneg %p138
      $region22: #{forward.23} parent=11 // pred_check_branch
        %189 = sbr.rel (%p187) target = $region24
      $region23: #{forward.23} parent=11 // pred_region
        _
      $region24: #{forward.23} parent=11 // pred_fallthru
        _
    $region12: #{forward.23} parent=5 // pred_fallthru
      _
    %p190 = scmp.lt.s32.totalorder %s11, 4
    // Predicated region
    $region25: #{forward.23} parent=5 // pred_check
      %p191 = pneg %p190
    $region26: #{forward.23} parent=5 // pred_check_branch
      %193 = sbr.rel (%p191) target = $region28
    $region27: #{forward.23} parent=5 // pred_region
      // Predicated region
      $region29: #{forward.23} parent=27 // pred_check
        %p194 = pneg %p43
      $region30: #{forward.23} parent=27 // pred_check_branch
        %196 = sbr.rel (%p194) target = $region32
      $region31: #{forward.23} parent=27 // pred_region
        %p197 = scmp.lt.s32.totalorder %s18, 3
        %s198 = scalar_select %p197, %s18, 3
        %s199 = smul.addr %s198, 2
        %s200 = scalar_lea.vmem %s0, %s199
      $region32: #{forward.23} parent=27 // pred_fallthru
        _
      // Predicated region
      $region33: #{forward.23} parent=27 // pred_check
        %p201 = pneg %p111
      $region34: #{forward.23} parent=27 // pred_check_branch
        %203 = sbr.rel (%p201) target = $region36
      $region35: #{forward.23} parent=27 // pred_region
        %p204 = scmp.lt.s32.totalorder %s18, 3
        %s205 = scalar_select %p204, %s18, 3
        %s206 = smul.addr %s205, 4
        %s207 = scalar_lea.vmem %s3, %s206
      $region36: #{forward.23} parent=27 // pred_fallthru
        _
    $region28: #{forward.23} parent=5 // pred_fallthru
      _
    %p208 = scmp.le.s32.totalorder 1, %s11
    %p209 = scmp.lt.s32.totalorder %s11, 5
    %p210 = pnand %p208, %p209
    %p211 = pneg %p210
    // Predicated region
    $region37: #{forward.23} parent=5 // pred_check
      _
    $region38: #{forward.23} parent=5 // pred_check_branch
      %213 = sbr.rel (%p210) target = $region40
    $region39: #{forward.23} parent=5 // pred_region
      %s214 = ssub.s32 %s11, 1
      %p215 = scmp.lt.s32.totalorder %s20, 3
      %s216 = scalar_select %p215, %s20, 3
      %s217 = smul.addr %s216, 2
      %s218 = scalar_lea.vmem %s0, %s217
      %p219 = pneg %p49
      %p220 = pneg %p46
      %p221 = pneg %p70
      %p222 = pneg %p67
      %p223 = pneg %p91
      %p224 = pneg %p88
      %p225 = scmp.lt.s32.totalorder %s20, 3
      %s226 = scalar_select %p225, %s20, 3
      %s227 = smul.addr %s226, 4
      %s228 = scalar_lea.vmem %s3, %s227
      %p229 = pneg %p117
      %p230 = pneg %p114
      %p231 = pneg %p138
      %p232 = pneg %p135
      %p233 = pneg %p166
      %p234 = pneg %p163
      %p235 = scmp.lt.s32.totalorder %s20, 3
      %s236 = scalar_select %p235, %s20, 3
      %p237 = scmp.lt.s32.totalorder %s21, 0
      %s238 = scalar_select %p237, %s21, 0
      %s239 = sadd.s32 %s238, %s236
      %s240 = smul.addr %s239, 4
      %s241 = scalar_lea.vmem %s5, %s240
      %p242 = scmp.lt.s32.totalorder %s20, 3
      %s243 = scalar_select %p242, %s20, 3
      %s244 = smul.addr %s243, 2
      %s245 = scalar_lea.vmem %s0, %s244
      %p246 = scmp.lt.s32.totalorder %s20, 3
      %s247 = scalar_select %p246, %s20, 3
      %s248 = smul.addr %s247, 4
      %s249 = scalar_lea.vmem %s3, %s248
      %p250 = scmp.lt.s32.totalorder %s20, 3
      %s251 = scalar_select %p250, %s20, 3
      %p252 = scmp.lt.s32.totalorder %s21, 0
      %s253 = scalar_select %p252, %s21, 0
      %s254 = sadd.s32 %s253, %s251
      %s255 = smul.addr %s254, 4
      %s256 = scalar_lea.vmem %s5, %s255
      %v258 = vld [vmem:[%s245] sm:$0x3]
      %v259 = vld [vmem:[%s1] sm:$0xf]
      %v260 = vld [vmem:[%s249] sm:$0xf]
      %v261 = vld [vmem:[%s4] sm:$0xf]
      %vm262 = vcmask 64512
      %v264 = vsel %vm262, %v261, 0
      %vm266 = vcmask 1043456
      %v268 = vsel %vm266, %v260, 0
      %270 = vmatpush.bf16.msra.mxu0 0
      %271 = vmatpush.bf16.msra.mxu0 0
      %272 = vmatpush.bf16.msra.mxu0 0
      %273 = vmatpush.bf16.msra.mxu0 0
      %274 = vmatpush.bf16.msra.mxu0 0
      %275 = vmatpush.bf16.msra.mxu0 0
      %276 = vmatpush.bf16.msra.mxu0 0
      %277 = vmatpush.bf16.msra.mxu0 %v268
      %278 = vmatmul.bf16.gmra.mxu0 %v264
      %v279 = vpop.f32.mrf.mxu0
      %v280 = vadd.f32 0.0, %v279
      %v281 = vpop.f32.mrf.mxu0
      %282 = vdwg.mxu0
      %vm283 = vcmask 31744
      %v285 = vsel %vm283, %v259, 0
      %vm287 = vcmask 1041408
      %v289 = vsel %vm287, %v258, 0
      %291 = vmatpush.bf16.msra.mxu0 0
      %292 = vmatpush.bf16.msra.mxu0 0
      %293 = vmatpush.bf16.msra.mxu0 0
      %294 = vmatpush.bf16.msra.mxu0 0
      %295 = vmatpush.bf16.msra.mxu0 0
      %296 = vmatpush.bf16.msra.mxu0 0
      %297 = vmatpush.bf16.msra.mxu0 0
      %298 = vmatpush.bf16.msra.mxu0 %v289
      %299 = vmatmul.bf16.gmra.mxu0 %v285
      %v300 = vpop.f32.mrf.mxu0
      %v301 = vadd.f32 %v280, %v300
      %v302 = vpop.f32.mrf.mxu0
      %303 = vdwg.mxu0
      %v304 = vld [vmem:[%s2] sm:$0xff]
      %306 = vset.pattern.permute.xlu0 0
      %307 = vperm.xlu0 %306, %v304
      %v308 = vpop.permute.xlu0 %307
      %v310 = vadd.f32 %v301, %v308
      %v311 = vpack.c.bf16 %v310, %v310
      %vm312 = vcmask 519168
      %313 = vst.msk [vmem:[%s256] sm:$0xf] %vm312, %v311
      %p314 = scmp.lt.s32.totalorder %s20, 3
      %s315 = scalar_select %p314, %s20, 3
      %p316 = scmp.lt.s32.totalorder %s21, 0
      %s317 = scalar_select %p316, %s21, 0
      %s318 = sadd.s32 %s317, %s315
      %s319 = smul.addr %s318, 4
      %s320 = scalar_lea.vmem %s5, %s319
      // Predicated region
      $region41: #{forward.23} parent=39 // pred_check
        %p321 = pneg %p163
      $region42: #{forward.23} parent=39 // pred_check_branch
        %323 = sbr.rel (%p321) target = $region44
      $region43: #{forward.23} parent=39 // pred_region
        _
      $region44: #{forward.23} parent=39 // pred_fallthru
        _
    $region40: #{forward.23} parent=5 // pred_fallthru
      _
    %p324 = scmp.le.s32.totalorder 2, %s11
    // Predicated region
    $region45: #{forward.23} parent=5 // pred_check
      %p325 = pneg %p324
    $region46: #{forward.23} parent=5 // pred_check_branch
      %327 = sbr.rel (%p325) target = $region48
    $region47: #{forward.23} parent=5 // pred_region
      %s328 = ssub.s32 %s11, 2
      // Predicated region
      $region49: #{forward.23} parent=47 // pred_check
        %p329 = pneg %p169
      $region50: #{forward.23} parent=47 // pred_check_branch
        %331 = sbr.rel (%p329) target = $region52
      $region51: #{forward.23} parent=47 // pred_region
        %p332 = scmp.lt.s32.totalorder %s22, 3
        %s333 = scalar_select %p332, %s22, 3
        %p334 = scmp.lt.s32.totalorder %s23, 0
        %s335 = scalar_select %p334, %s23, 0
        %s336 = sadd.s32 %s335, %s333
        %s337 = smul.addr %s336, 4
        %s338 = scalar_lea.vmem %s5, %s337
      $region52: #{forward.23} parent=47 // pred_fallthru
        _
    $region48: #{forward.23} parent=5 // pred_fallthru
      _
  $region6: #{forward.23} parent=0 // loop_footer
    %s15 = sadd.s32 1, %s11
  $region7: #{forward.23} parent=0 // loop_footer_branch
    %10 = sbr.rel target = $region3
  $region8: #{forward.23} parent=0 // loop_exit
    _

// kernel: forward.24
$region0: #{forward.24}
  #allocation0 [shape = 'u32[]', space=smem, size = 0x4, offset = 0x4, fixed_abs, tag = 'smem constant byte address 0x4 - core index']
  #allocation1 [shape = 'u32[72,128]{1,0:T(1,128)}', space=vmem, size = 0x9000, scoped, tag = 'internal scratch']
  #allocation2 [shape = 'f32[32,32]{1,0:T(8,128)}', space=vmem, size = 0x4000, scoped, tag = 'scratch operand']
  %s0 = inlined_call_operand.vmem [shape: bf16[4,16,33], index: 0, kind: input, shape index: {}]
  %s1 = inlined_call_operand.vmem [shape: bf16[16,32], index: 1, kind: input, shape index: {}]
  %s2 = inlined_call_operand.vmem [shape: f32[16,1], index: 2, kind: input, shape index: {}]
  %s3 = inlined_call_operand.vmem [shape: bf16[4,16,32], index: 3, kind: output, shape index: {}]
  %s4 = sld [smem:[#allocation0]]
  $region45: #{forward.24} parent=0
    _
  %s6 = ssub.s32 1, %s4
  %s7 = scalar_select 0, %s6, %s4
  loop: start=0, step=1, limit=6
  $region2: #{forward.24} parent=0 // loop_pre_header
    _
  $region3: #{forward.24} parent=0 // loop_header
    %s9 = sphi 0, %s13
    %p10 = scmp.ge.s32.totalorder %s9, 6
    %s16 = sphi 0, %s28
    %s17 = sphi 0, %s24
    %s18 = sphi 0, %s16
    %s19 = sphi 0, %s17
    %s20 = sphi 0, %s18
    %s21 = sphi 0, %s19
    %s31 = sphi 0, %s33
    %s34 = sphi 0, %s31
    %s35 = sphi 0, %s34
    %s51 = sphi 0, %s35
    %s55 = sphi 0, %s55
    %s57 = sphi 0, %s55
    %s58 = sphi 0, %s57
    %s72 = sphi 0, %s58
    %s76 = sphi 0, %s76
    %s78 = sphi 0, %s76
    %s79 = sphi 0, %s78
    %s93 = sphi 0, %s79
    %s101 = sphi 0, %s103
    %s104 = sphi 0, %s101
    %s105 = sphi 0, %s104
    %s121 = sphi 0, %s105
  $region4: #{forward.24} parent=0 // loop_header_branch
    %12 = sbr.rel (%p10) target = $region8
  $region5: #{forward.24} parent=0 // loop_body
    %s14 = ssub.s32 %s9, 1
    %s15 = ssub.s32 %s9, 2
    %s22 = sadd.s32 1, %s17
    %p23 = scmp.ge.s32.totalorder %s22, 1
    %s24 = scalar_select %p23, 0, %s22
    %s25 = sadd.s32 1, %s16
    %s26 = scalar_select %p23, %s25, %s16
    %p27 = scmp.ge.s32.totalorder %s26, 4
    %s28 = scalar_select %p27, 0, %s26
    %s29 = ssub.s32 %s16, %s28
    %p30 = scmp.eq.s32.totalorder %s29, 0
    %s32 = sadd.s32 %s31, 1
    %s33 = scalar_select %p30, %s31, %s32
    %p36 = pneg %p30
    %p37 = scmp.eq.s32.totalorder %s9, 3
    %p38 = por %p36, %p37
    %p39 = scmp.ne.s32.totalorder %s31, %s34
    %p40 = scmp.eq.s32.totalorder %s9, 0
    %p41 = por %p39, %p40
    %p42 = scmp.ne.s32.totalorder %s31, %s34
    %p43 = scmp.eq.s32.totalorder %s14, 3
    %p44 = por %p42, %p43
    %p45 = scmp.ne.s32.totalorder %s34, %s35
    %p46 = scmp.eq.s32.totalorder %s14, 0
    %p47 = por %p45, %p46
    %p48 = scmp.ne.s32.totalorder %s34, %s35
    %p49 = scmp.eq.s32.totalorder %s15, 3
    %p50 = por %p48, %p49
    %p52 = scmp.ne.s32.totalorder %s35, %s51
    %p53 = scmp.eq.s32.totalorder %s15, 0
    %p54 = por %p52, %p53
    %s56 = sadd.s32 %s55, 1
    %p59 = scmp.eq.s32.totalorder %s9, 3
    %p60 = scmp.ne.s32.totalorder %s55, %s57
    %p61 = scmp.eq.s32.totalorder %s9, 0
    %p62 = por %p60, %p61
    %p63 = scmp.ne.s32.totalorder %s55, %s57
    %p64 = scmp.eq.s32.totalorder %s14, 3
    %p65 = por %p63, %p64
    %p66 = scmp.ne.s32.totalorder %s57, %s58
    %p67 = scmp.eq.s32.totalorder %s14, 0
    %p68 = por %p66, %p67
    %p69 = scmp.ne.s32.totalorder %s57, %s58
    %p70 = scmp.eq.s32.totalorder %s15, 3
    %p71 = por %p69, %p70
    %p73 = scmp.ne.s32.totalorder %s58, %s72
    %p74 = scmp.eq.s32.totalorder %s15, 0
    %p75 = por %p73, %p74
    %s77 = sadd.s32 %s76, 1
    %p80 = scmp.eq.s32.totalorder %s9, 3
    %p81 = scmp.ne.s32.totalorder %s76, %s78
    %p82 = scmp.eq.s32.totalorder %s9, 0
    %p83 = por %p81, %p82
    %p84 = scmp.ne.s32.totalorder %s76, %s78
    %p85 = scmp.eq.s32.totalorder %s14, 3
    %p86 = por %p84, %p85
    %p87 = scmp.ne.s32.totalorder %s78, %s79
    %p88 = scmp.eq.s32.totalorder %s14, 0
    %p89 = por %p87, %p88
    %p90 = scmp.ne.s32.totalorder %s78, %s79
    %p91 = scmp.eq.s32.totalorder %s15, 3
    %p92 = por %p90, %p91
    %p94 = scmp.ne.s32.totalorder %s79, %s93
    %p95 = scmp.eq.s32.totalorder %s15, 0
    %p96 = por %p94, %p95
    %s97 = ssub.s32 %s16, %s28
    %s98 = ssub.s32 %s17, %s24
    %s99 = sor.u32 %s97, %s98
    %p100 = scmp.eq.s32.totalorder %s99, 0
    %s102 = sadd.s32 %s101, 1
    %s103 = scalar_select %p100, %s101, %s102
    %p106 = pneg %p100
    %p107 = scmp.eq.s32.totalorder %s9, 3
    %p108 = por %p106, %p107
    %p109 = scmp.ne.s32.totalorder %s101, %s104
    %p110 = scmp.eq.s32.totalorder %s9, 0
    %p111 = por %p109, %p110
    %p112 = scmp.ne.s32.totalorder %s101, %s104
    %p113 = scmp.eq.s32.totalorder %s14, 3
    %p114 = por %p112, %p113
    %p115 = scmp.ne.s32.totalorder %s104, %s105
    %p116 = scmp.eq.s32.totalorder %s14, 0
    %p117 = por %p115, %p116
    %p118 = scmp.ne.s32.totalorder %s104, %s105
    %p119 = scmp.eq.s32.totalorder %s15, 3
    %p120 = por %p118, %p119
    %p122 = scmp.ne.s32.totalorder %s105, %s121
    %p123 = scmp.eq.s32.totalorder %s15, 0
    %p124 = por %p122, %p123
    %p125 = scmp.le.s32.totalorder 1, %s9
    %p126 = scmp.lt.s32.totalorder %s9, 5
    %p127 = pnand %p125, %p126
    %p128 = pneg %p127
    // Predicated region
    $region9: #{forward.24} parent=5 // pred_check
      _
    $region10: #{forward.24} parent=5 // pred_check_branch
      %130 = sbr.rel (%p127) target = $region12
    $region11: #{forward.24} parent=5 // pred_region
      %s131 = ssub.s32 %s9, 1
      // Predicated region
      $region13: #{forward.24} parent=11 // pred_check
        %p132 = pneg %p68
      $region14: #{forward.24} parent=11 // pred_check_branch
        %134 = sbr.rel (%p132) target = $region16
      $region15: #{forward.24} parent=11 // pred_region
        _
      $region16: #{forward.24} parent=11 // pred_fallthru
        _
      // Predicated region
      $region17: #{forward.24} parent=11 // pred_check
        %p135 = pneg %p89
      $region18: #{forward.24} parent=11 // pred_check_branch
        %137 = sbr.rel (%p135) target = $region20
      $region19: #{forward.24} parent=11 // pred_region
        _
      $region20: #{forward.24} parent=11 // pred_fallthru
        _
    $region12: #{forward.24} parent=5 // pred_fallthru
      _
    %p138 = scmp.lt.s32.totalorder %s9, 4
    // Predicated region
    $region21: #{forward.24} parent=5 // pred_check
      %p139 = pneg %p138
    $region22: #{forward.24} parent=5 // pred_check_branch
      %141 = sbr.rel (%p139) target = $region24
    $region23: #{forward.24} parent=5 // pred_region
      // Predicated region
      $region25: #{forward.24} parent=23 // pred_check
        %p142 = pneg %p41
      $region26: #{forward.24} parent=23 // pred_check_branch
        %144 = sbr.rel (%p142) target = $region28
      $region27: #{forward.24} parent=23 // pred_region
        %p145 = scmp.lt.s32.totalorder %s16, 3
        %s146 = scalar_select %p145, %s16, 3
        %s147 = smul.addr %s146, 2
        %s148 = smul.addr %s147, 4
        %s149 = scalar_lea.vmem %s0, %s148
      $region28: #{forward.24} parent=23 // pred_fallthru
        _
    $region24: #{forward.24} parent=5 // pred_fallthru
      _
    %p150 = scmp.le.s32.totalorder 1, %s9
    %p151 = scmp.lt.s32.totalorder %s9, 5
    %p152 = pnand %p150, %p151
    %p153 = pneg %p152
    // Predicated region
    $region29: #{forward.24} parent=5 // pred_check
      _
    $region30: #{forward.24} parent=5 // pred_check_branch
      %155 = sbr.rel (%p152) target = $region32
    $region31: #{forward.24} parent=5 // pred_region
      %s156 = ssub.s32 %s9, 1
      %p157 = scmp.lt.s32.totalorder %s18, 3
      %s158 = scalar_select %p157, %s18, 3
      %s159 = smul.addr %s158, 2
      %s160 = smul.addr %s159, 4
      %s161 = scalar_lea.vmem %s0, %s160
      %p162 = pneg %p47
      %p163 = pneg %p44
      %p164 = pneg %p68
      %p165 = pneg %p65
      %p166 = pneg %p89
      %p167 = pneg %p86
      %p168 = pneg %p117
      %p169 = pneg %p114
      %p170 = scmp.lt.s32.totalorder %s18, 3
      %s171 = scalar_select %p170, %s18, 3
      %p172 = scmp.lt.s32.totalorder %s19, 0
      %s173 = scalar_select %p172, %s19, 0
      %s174 = smul.addr %s171, 2
      %s175 = sadd.s32 %s173, %s174
      %s176 = smul.addr %s175, 4
      %s177 = scalar_lea.vmem %s3, %s176
      %p178 = scmp.lt.s32.totalorder %s18, 3
      %s179 = scalar_select %p178, %s18, 3
      %s180 = smul.addr %s179, 2
      %s181 = smul.addr %s180, 4
      %s182 = scalar_lea.vmem %s0, %s181
      %p183 = scmp.lt.s32.totalorder %s18, 3
      %s184 = scalar_select %p183, %s18, 3
      %p185 = scmp.lt.s32.totalorder %s19, 0
      %s186 = scalar_select %p185, %s19, 0
      %s187 = smul.addr %s184, 2
      %s188 = sadd.s32 %s186, %s187
      %s189 = smul.addr %s188, 4
      %s190 = scalar_lea.vmem %s3, %s189
      %v192 = vld [vmem:[%s182] sm:$0xf]
      %v193 = vld [vmem:[%s182 + $0x4] sm:$0xf]
      %v194 = vunpack.c.l.bf16 %v192
      %v195 = vunpack.c.l.bf16 %v193
      %vm196 = vcmask 261120
      %197 = vst.msk [vmem:[#allocation2] sm:$0xff] %vm196, %v194
      %198 = vst.msk [vmem:[#allocation2 + $0x8] sm:$0xff] %vm196, %v195
      %v199 = vld [vmem:[%s182] sm:$0xf]
      %v200 = vld [vmem:[%s182 + $0x4] sm:$0xf]
      %v201 = vunpack.c.l.bf16 %v199
      %v202 = vunpack.c.l.bf16 %v200
      %205 = vrot.lane.b32.xlu0 %v201, 127
      %v206 = vpop.permute.xlu0 %205
      %207 = vrot.lane.b32.xlu0 %v202, 127
      %v208 = vpop.permute.xlu0 %207
      %211 = vst.msk [vmem:[#allocation2 + $0x10] sm:$0xff] %vm196, %v206
      %212 = vst.msk [vmem:[#allocation2 + $0x18] sm:$0xff] %vm196, %v208
      %v213 = vld [vmem:[%s1] sm:$0xf]
      %v214 = vld [vmem:[%s1 + $0x4] sm:$0xf]
      %v215 = vld [vmem:[#allocation2] sm:$0xff]
      %v216 = vld [vmem:[#allocation2 + $0x8] sm:$0xff]
      %v217 = vld [vmem:[#allocation2 + $0x10] sm:$0xff]
      %v218 = vld [vmem:[#allocation2 + $0x18] sm:$0xff]
      %v219 = vpack.c.bf16 %v216, %v215
      %v220 = vpack.c.bf16 %v218, %v217
      %v221 = vld [vmem:[%s2] sm:$0xff]
      %v222 = vld [vmem:[%s2 + $0x8] sm:$0xff]
      %224 = vset.pattern.permute.xlu0 0
      %225 = vperm.xlu0 %224, %v221
      %v226 = vpop.permute.xlu0 %225
      %229 = vset.pattern.permute.xlu0 0
      %230 = vperm.xlu0 %229, %v222
      %v231 = vpop.permute.xlu0 %230
      %v235 = vunpack.c.l.b16 %v213
      %v236 = vunpack.c.l.b16 %v214
      %v237 = vpack.c.b16 %v236, %v235
      %v239 = vsel %vm196, %v237, 0
      %241 = vmatpush.bf16.msra.mxu0 0
      %242 = vmatpush.bf16.msra.mxu0 0
      %243 = vmatpush.bf16.msra.mxu0 0
      %244 = vmatpush.bf16.msra.mxu0 0
      %245 = vmatpush.bf16.msra.mxu0 0
      %246 = vmatpush.bf16.msra.mxu0 0
      %247 = vmatpush.bf16.msra.mxu0 %v220
      %248 = vmatpush.bf16.msra.mxu0 %v219
      %249 = vmatmul.bf16.gmra.mxu0 %v239
      %v250 = vpop.f32.mrf.mxu0
      %v251 = vadd.f32 %v226, %v250
      %v252 = vpop.f32.mrf.mxu0
      %v253 = vadd.f32 %v231, %v252
      %254 = vdwg.mxu0
      %v255 = vpack.c.bf16 %v251, %v251
      %v256 = vpack.c.bf16 %v253, %v253
      %vm257 = vcmask 257024
      %258 = vst.msk [vmem:[%s190] sm:$0xf] %vm257, %v255
      %259 = vst.msk [vmem:[%s190 + $0x4] sm:$0xf] %vm257, %v256
      %p260 = scmp.lt.s32.totalorder %s18, 3
      %s261 = scalar_select %p260, %s18, 3
      %p262 = scmp.lt.s32.totalorder %s19, 0
      %s263 = scalar_select %p262, %s19, 0
      %s264 = smul.addr %s261, 2
      %s265 = sadd.s32 %s263, %s264
      %s266 = smul.addr %s265, 4
      %s267 = scalar_lea.vmem %s3, %s266
      // Predicated region
      $region33: #{forward.24} parent=31 // pred_check
        %p268 = pneg %p114
      $region34: #{forward.24} parent=31 // pred_check_branch
        %270 = sbr.rel (%p268) target = $region36
      $region35: #{forward.24} parent=31 // pred_region
        _
      $region36: #{forward.24} parent=31 // pred_fallthru
        _
    $region32: #{forward.24} parent=5 // pred_fallthru
      _
    %p271 = scmp.le.s32.totalorder 2, %s9
    // Predicated region
    $region37: #{forward.24} parent=5 // pred_check
      %p272 = pneg %p271
    $region38: #{forward.24} parent=5 // pred_check_branch
      %274 = sbr.rel (%p272) target = $region40
    $region39: #{forward.24} parent=5 // pred_region
      %s275 = ssub.s32 %s9, 2
      // Predicated region
      $region41: #{forward.24} parent=39 // pred_check
        %p276 = pneg %p120
      $region42: #{forward.24} parent=39 // pred_check_branch
        %278 = sbr.rel (%p276) target = $region44
      $region43: #{forward.24} parent=39 // pred_region
        %p279 = scmp.lt.s32.totalorder %s20, 3
        %s280 = scalar_select %p279, %s20, 3
        %p281 = scmp.lt.s32.totalorder %s21, 0
        %s282 = scalar_select %p281, %s21, 0
        %s283 = smul.addr %s280, 2
        %s284 = sadd.s32 %s282, %s283
        %s285 = smul.addr %s284, 4
        %s286 = scalar_lea.vmem %s3, %s285
      $region44: #{forward.24} parent=39 // pred_fallthru
        _
    $region40: #{forward.24} parent=5 // pred_fallthru
      _
  $region6: #{forward.24} parent=0 // loop_footer
    %s13 = sadd.s32 1, %s9
  $region7: #{forward.24} parent=0 // loop_footer_branch
    %8 = sbr.rel target = $region3
  $region8: #{forward.24} parent=0 // loop_exit
    _

// kernel: forward.25
$region0: #{forward.25}
  #allocation0 [shape = 'u32[]', space=smem, size = 0x4, offset = 0x4, fixed_abs, tag = 'smem constant byte address 0x4 - core index']
  #allocation1 [shape = 'u32[72,128]{1,0:T(1,128)}', space=vmem, size = 0x9000, scoped, tag = 'internal scratch']
  #allocation2 [shape = 'f32[112,32]{1,0:T(8,128)}', space=vmem, size = 0xe000, scoped, tag = 'scratch operand']
  %s0 = inlined_call_operand.vmem [shape: bf16[4,16,38], index: 0, kind: input, shape index: {}]
  %s1 = inlined_call_operand.vmem [shape: bf16[8,112], index: 1, kind: input, shape index: {}]
  %s2 = inlined_call_operand.vmem [shape: f32[8,1], index: 2, kind: input, shape index: {}]
  %s3 = inlined_call_operand.vmem [shape: bf16[4,8,32], index: 3, kind: output, shape index: {}]
  %s4 = sld [smem:[#allocation0]]
  $region45: #{forward.25} parent=0
    _
  %s6 = ssub.s32 1, %s4
  %s7 = scalar_select 0, %s6, %s4
  loop: start=0, step=1, limit=6
  $region2: #{forward.25} parent=0 // loop_pre_header
    _
  $region3: #{forward.25} parent=0 // loop_header
    %s9 = sphi 0, %s13
    %p10 = scmp.ge.s32.totalorder %s9, 6
    %s16 = sphi 0, %s28
    %s17 = sphi 0, %s24
    %s18 = sphi 0, %s16
    %s19 = sphi 0, %s17
    %s20 = sphi 0, %s18
    %s21 = sphi 0, %s19
    %s31 = sphi 0, %s33
    %s34 = sphi 0, %s31
    %s35 = sphi 0, %s34
    %s51 = sphi 0, %s35
    %s55 = sphi 0, %s55
    %s57 = sphi 0, %s55
    %s58 = sphi 0, %s57
    %s72 = sphi 0, %s58
    %s76 = sphi 0, %s76
    %s78 = sphi 0, %s76
    %s79 = sphi 0, %s78
    %s93 = sphi 0, %s79
    %s101 = sphi 0, %s103
    %s104 = sphi 0, %s101
    %s105 = sphi 0, %s104
    %s121 = sphi 0, %s105
  $region4: #{forward.25} parent=0 // loop_header_branch
    %12 = sbr.rel (%p10) target = $region8
  $region5: #{forward.25} parent=0 // loop_body
    %s14 = ssub.s32 %s9, 1
    %s15 = ssub.s32 %s9, 2
    %s22 = sadd.s32 1, %s17
    %p23 = scmp.ge.s32.totalorder %s22, 1
    %s24 = scalar_select %p23, 0, %s22
    %s25 = sadd.s32 1, %s16
    %s26 = scalar_select %p23, %s25, %s16
    %p27 = scmp.ge.s32.totalorder %s26, 4
    %s28 = scalar_select %p27, 0, %s26
    %s29 = ssub.s32 %s16, %s28
    %p30 = scmp.eq.s32.totalorder %s29, 0
    %s32 = sadd.s32 %s31, 1
    %s33 = scalar_select %p30, %s31, %s32
    %p36 = pneg %p30
    %p37 = scmp.eq.s32.totalorder %s9, 3
    %p38 = por %p36, %p37
    %p39 = scmp.ne.s32.totalorder %s31, %s34
    %p40 = scmp.eq.s32.totalorder %s9, 0
    %p41 = por %p39, %p40
    %p42 = scmp.ne.s32.totalorder %s31, %s34
    %p43 = scmp.eq.s32.totalorder %s14, 3
    %p44 = por %p42, %p43
    %p45 = scmp.ne.s32.totalorder %s34, %s35
    %p46 = scmp.eq.s32.totalorder %s14, 0
    %p47 = por %p45, %p46
    %p48 = scmp.ne.s32.totalorder %s34, %s35
    %p49 = scmp.eq.s32.totalorder %s15, 3
    %p50 = por %p48, %p49
    %p52 = scmp.ne.s32.totalorder %s35, %s51
    %p53 = scmp.eq.s32.totalorder %s15, 0
    %p54 = por %p52, %p53
    %s56 = sadd.s32 %s55, 1
    %p59 = scmp.eq.s32.totalorder %s9, 3
    %p60 = scmp.ne.s32.totalorder %s55, %s57
    %p61 = scmp.eq.s32.totalorder %s9, 0
    %p62 = por %p60, %p61
    %p63 = scmp.ne.s32.totalorder %s55, %s57
    %p64 = scmp.eq.s32.totalorder %s14, 3
    %p65 = por %p63, %p64
    %p66 = scmp.ne.s32.totalorder %s57, %s58
    %p67 = scmp.eq.s32.totalorder %s14, 0
    %p68 = por %p66, %p67
    %p69 = scmp.ne.s32.totalorder %s57, %s58
    %p70 = scmp.eq.s32.totalorder %s15, 3
    %p71 = por %p69, %p70
    %p73 = scmp.ne.s32.totalorder %s58, %s72
    %p74 = scmp.eq.s32.totalorder %s15, 0
    %p75 = por %p73, %p74
    %s77 = sadd.s32 %s76, 1
    %p80 = scmp.eq.s32.totalorder %s9, 3
    %p81 = scmp.ne.s32.totalorder %s76, %s78
    %p82 = scmp.eq.s32.totalorder %s9, 0
    %p83 = por %p81, %p82
    %p84 = scmp.ne.s32.totalorder %s76, %s78
    %p85 = scmp.eq.s32.totalorder %s14, 3
    %p86 = por %p84, %p85
    %p87 = scmp.ne.s32.totalorder %s78, %s79
    %p88 = scmp.eq.s32.totalorder %s14, 0
    %p89 = por %p87, %p88
    %p90 = scmp.ne.s32.totalorder %s78, %s79
    %p91 = scmp.eq.s32.totalorder %s15, 3
    %p92 = por %p90, %p91
    %p94 = scmp.ne.s32.totalorder %s79, %s93
    %p95 = scmp.eq.s32.totalorder %s15, 0
    %p96 = por %p94, %p95
    %s97 = ssub.s32 %s16, %s28
    %s98 = ssub.s32 %s17, %s24
    %s99 = sor.u32 %s97, %s98
    %p100 = scmp.eq.s32.totalorder %s99, 0
    %s102 = sadd.s32 %s101, 1
    %s103 = scalar_select %p100, %s101, %s102
    %p106 = pneg %p100
    %p107 = scmp.eq.s32.totalorder %s9, 3
    %p108 = por %p106, %p107
    %p109 = scmp.ne.s32.totalorder %s101, %s104
    %p110 = scmp.eq.s32.totalorder %s9, 0
    %p111 = por %p109, %p110
    %p112 = scmp.ne.s32.totalorder %s101, %s104
    %p113 = scmp.eq.s32.totalorder %s14, 3
    %p114 = por %p112, %p113
    %p115 = scmp.ne.s32.totalorder %s104, %s105
    %p116 = scmp.eq.s32.totalorder %s14, 0
    %p117 = por %p115, %p116
    %p118 = scmp.ne.s32.totalorder %s104, %s105
    %p119 = scmp.eq.s32.totalorder %s15, 3
    %p120 = por %p118, %p119
    %p122 = scmp.ne.s32.totalorder %s105, %s121
    %p123 = scmp.eq.s32.totalorder %s15, 0
    %p124 = por %p122, %p123
    %p125 = scmp.le.s32.totalorder 1, %s9
    %p126 = scmp.lt.s32.totalorder %s9, 5
    %p127 = pnand %p125, %p126
    %p128 = pneg %p127
    // Predicated region
    $region9: #{forward.25} parent=5 // pred_check
      _
    $region10: #{forward.25} parent=5 // pred_check_branch
      %130 = sbr.rel (%p127) target = $region12
    $region11: #{forward.25} parent=5 // pred_region
      %s131 = ssub.s32 %s9, 1
      // Predicated region
      $region13: #{forward.25} parent=11 // pred_check
        %p132 = pneg %p68
      $region14: #{forward.25} parent=11 // pred_check_branch
        %134 = sbr.rel (%p132) target = $region16
      $region15: #{forward.25} parent=11 // pred_region
        _
      $region16: #{forward.25} parent=11 // pred_fallthru
        _
      // Predicated region
      $region17: #{forward.25} parent=11 // pred_check
        %p135 = pneg %p89
      $region18: #{forward.25} parent=11 // pred_check_branch
        %137 = sbr.rel (%p135) target = $region20
      $region19: #{forward.25} parent=11 // pred_region
        _
      $region20: #{forward.25} parent=11 // pred_fallthru
        _
    $region12: #{forward.25} parent=5 // pred_fallthru
      _
    %p138 = scmp.lt.s32.totalorder %s9, 4
    // Predicated region
    $region21: #{forward.25} parent=5 // pred_check
      %p139 = pneg %p138
    $region22: #{forward.25} parent=5 // pred_check_branch
      %141 = sbr.rel (%p139) target = $region24
    $region23: #{forward.25} parent=5 // pred_region
      // Predicated region
      $region25: #{forward.25} parent=23 // pred_check
        %p142 = pneg %p41
      $region26: #{forward.25} parent=23 // pred_check_branch
        %144 = sbr.rel (%p142) target = $region28
      $region27: #{forward.25} parent=23 // pred_region
        %p145 = scmp.lt.s32.totalorder %s16, 3
        %s146 = scalar_select %p145, %s16, 3
        %s147 = smul.addr %s146, 2
        %s148 = smul.addr %s147, 4
        %s149 = scalar_lea.vmem %s0, %s148
      $region28: #{forward.25} parent=23 // pred_fallthru
        _
    $region24: #{forward.25} parent=5 // pred_fallthru
      _
    %p150 = scmp.le.s32.totalorder 1, %s9
    %p151 = scmp.lt.s32.totalorder %s9, 5
    %p152 = pnand %p150, %p151
    %p153 = pneg %p152
    // Predicated region
    $region29: #{forward.25} parent=5 // pred_check
      _
    $region30: #{forward.25} parent=5 // pred_check_branch
      %155 = sbr.rel (%p152) target = $region32
    $region31: #{forward.25} parent=5 // pred_region
      %s156 = ssub.s32 %s9, 1
      %p157 = scmp.lt.s32.totalorder %s18, 3
      %s158 = scalar_select %p157, %s18, 3
      %s159 = smul.addr %s158, 2
      %s160 = smul.addr %s159, 4
      %s161 = scalar_lea.vmem %s0, %s160
      %p162 = pneg %p47
      %p163 = pneg %p44
      %p164 = pneg %p68
      %p165 = pneg %p65
      %p166 = pneg %p89
      %p167 = pneg %p86
      %p168 = pneg %p117
      %p169 = pneg %p114
      %p170 = scmp.lt.s32.totalorder %s18, 3
      %s171 = scalar_select %p170, %s18, 3
      %p172 = scmp.lt.s32.totalorder %s19, 0
      %s173 = scalar_select %p172, %s19, 0
      %s174 = sadd.s32 %s173, %s171
      %s175 = smul.addr %s174, 4
      %s176 = scalar_lea.vmem %s3, %s175
      %p177 = scmp.lt.s32.totalorder %s18, 3
      %s178 = scalar_select %p177, %s18, 3
      %s179 = smul.addr %s178, 2
      %s180 = smul.addr %s179, 4
      %s181 = scalar_lea.vmem %s0, %s180
      %p182 = scmp.lt.s32.totalorder %s18, 3
      %s183 = scalar_select %p182, %s18, 3
      %p184 = scmp.lt.s32.totalorder %s19, 0
      %s185 = scalar_select %p184, %s19, 0
      %s186 = sadd.s32 %s185, %s183
      %s187 = smul.addr %s186, 4
      %s188 = scalar_lea.vmem %s3, %s187
      %v190 = vld [vmem:[%s181] sm:$0xf]
      %v191 = vld [vmem:[%s181 + $0x4] sm:$0xf]
      %v192 = vunpack.c.l.bf16 %v190
      %v193 = vunpack.c.l.bf16 %v191
      %vm194 = vcmask 261120
      %195 = vst.msk [vmem:[#allocation2] sm:$0xff] %vm194, %v192
      %196 = vst.msk [vmem:[#allocation2 + $0x8] sm:$0xff] %vm194, %v193
      %v197 = vld [vmem:[%s181] sm:$0xf]
      %v198 = vld [vmem:[%s181 + $0x4] sm:$0xf]
      %v199 = vunpack.c.l.bf16 %v197
      %v200 = vunpack.c.l.bf16 %v198
      %203 = vrot.lane.b32.xlu0 %v199, 127
      %v204 = vpop.permute.xlu0 %203
      %205 = vrot.lane.b32.xlu0 %v200, 127
      %v206 = vpop.permute.xlu0 %205
      %209 = vst.msk [vmem:[#allocation2 + $0x10] sm:$0xff] %vm194, %v204
      %210 = vst.msk [vmem:[#allocation2 + $0x18] sm:$0xff] %vm194, %v206
      %v211 = vld [vmem:[%s181] sm:$0xf]
      %v212 = vld [vmem:[%s181 + $0x4] sm:$0xf]
      %v213 = vunpack.c.l.bf16 %v211
      %v214 = vunpack.c.l.bf16 %v212
      %217 = vrot.lane.b32.xlu0 %v213, 126
      %v218 = vpop.permute.xlu0 %217
      %219 = vrot.lane.b32.xlu0 %v214, 126
      %v220 = vpop.permute.xlu0 %219
      %223 = vst.msk [vmem:[#allocation2 + $0x20] sm:$0xff] %vm194, %v218
      %224 = vst.msk [vmem:[#allocation2 + $0x28] sm:$0xff] %vm194, %v220
      %v225 = vld [vmem:[%s181] sm:$0xf]
      %v226 = vld [vmem:[%s181 + $0x4] sm:$0xf]
      %v227 = vunpack.c.l.bf16 %v225
      %v228 = vunpack.c.l.bf16 %v226
      %231 = vrot.lane.b32.xlu0 %v227, 125
      %v232 = vpop.permute.xlu0 %231
      %233 = vrot.lane.b32.xlu0 %v228, 125
      %v234 = vpop.permute.xlu0 %233
      %237 = vst.msk [vmem:[#allocation2 + $0x30] sm:$0xff] %vm194, %v232
      %238 = vst.msk [vmem:[#allocation2 + $0x38] sm:$0xff] %vm194, %v234
      %v239 = vld [vmem:[%s181] sm:$0xf]
      %v240 = vld [vmem:[%s181 + $0x4] sm:$0xf]
      %v241 = vunpack.c.l.bf16 %v239
      %v242 = vunpack.c.l.bf16 %v240
      %245 = vrot.lane.b32.xlu0 %v241, 124
      %v246 = vpop.permute.xlu0 %245
      %247 = vrot.lane.b32.xlu0 %v242, 124
      %v248 = vpop.permute.xlu0 %247
      %251 = vst.msk [vmem:[#allocation2 + $0x40] sm:$0xff] %vm194, %v246
      %252 = vst.msk [vmem:[#allocation2 + $0x48] sm:$0xff] %vm194, %v248
      %v253 = vld [vmem:[%s181] sm:$0xf]
      %v254 = vld [vmem:[%s181 + $0x4] sm:$0xf]
      %v255 = vunpack.c.l.bf16 %v253
      %v256 = vunpack.c.l.bf16 %v254
      %259 = vrot.lane.b32.xlu0 %v255, 123
      %v260 = vpop.permute.xlu0 %259
      %261 = vrot.lane.b32.xlu0 %v256, 123
      %v262 = vpop.permute.xlu0 %261
      %265 = vst.msk [vmem:[#allocation2 + $0x50] sm:$0xff] %vm194, %v260
      %266 = vst.msk [vmem:[#allocation2 + $0x58] sm:$0xff] %vm194, %v262
      %v267 = vld [vmem:[%s181] sm:$0xf]
      %v268 = vld [vmem:[%s181 + $0x4] sm:$0xf]
      %v269 = vunpack.c.l.bf16 %v267
      %v270 = vunpack.c.l.bf16 %v268
      %273 = vrot.lane.b32.xlu0 %v269, 122
      %v274 = vpop.permute.xlu0 %273
      %275 = vrot.lane.b32.xlu0 %v270, 122
      %v276 = vpop.permute.xlu0 %275
      %279 = vst.msk [vmem:[#allocation2 + $0x60] sm:$0xff] %vm194, %v274
      %280 = vst.msk [vmem:[#allocation2 + $0x68] sm:$0xff] %vm194, %v276
      %v281 = vld [vmem:[%s1] sm:$0xf]
      %v282 = vld [vmem:[#allocation2] sm:$0xff]
      %v283 = vld [vmem:[#allocation2 + $0x8] sm:$0xff]
      %v284 = vld [vmem:[#allocation2 + $0x10] sm:$0xff]
      %v285 = vld [vmem:[#allocation2 + $0x18] sm:$0xff]
      %v286 = vld [vmem:[#allocation2 + $0x20] sm:$0xff]
      %v287 = vld [vmem:[#allocation2 + $0x28] sm:$0xff]
      %v288 = vld [vmem:[#allocation2 + $0x30] sm:$0xff]
      %v289 = vld [vmem:[#allocation2 + $0x38] sm:$0xff]
      %v290 = vld [vmem:[#allocation2 + $0x40] sm:$0xff]
      %v291 = vld [vmem:[#allocation2 + $0x48] sm:$0xff]
      %v292 = vld [vmem:[#allocation2 + $0x50] sm:$0xff]
      %v293 = vld [vmem:[#allocation2 + $0x58] sm:$0xff]
      %v294 = vld [vmem:[#allocation2 + $0x60] sm:$0xff]
      %v295 = vld [vmem:[#allocation2 + $0x68] sm:$0xff]
      %v296 = vpack.c.bf16 %v283, %v282
      %v297 = vpack.c.bf16 %v285, %v284
      %v298 = vpack.c.bf16 %v287, %v286
      %v299 = vpack.c.bf16 %v289, %v288
      %v300 = vpack.c.bf16 %v291, %v290
      %v301 = vpack.c.bf16 %v293, %v292
      %v302 = vpack.c.bf16 %v295, %v294
      %v303 = vld [vmem:[%s2] sm:$0xff]
      %305 = vset.pattern.permute.xlu0 0
      %306 = vperm.xlu0 %305, %v303
      %v307 = vpop.permute.xlu0 %306
      %vm309 = vcmask 916480
      %v311 = vsel %vm309, %v281, 0
      %313 = vmatpush.bf16.msra.mxu0 0
      %314 = vmatpush.bf16.msra.mxu0 %v302
      %315 = vmatpush.bf16.msra.mxu0 %v301
      %316 = vmatpush.bf16.msra.mxu0 %v300
      %317 = vmatpush.bf16.msra.mxu0 %v299
      %318 = vmatpush.bf16.msra.mxu0 %v298
      %319 = vmatpush.bf16.msra.mxu0 %v297
      %320 = vmatpush.bf16.msra.mxu0 %v296
      %321 = vmatmul.bf16.gmra.mxu0 %v311
      %v322 = vpop.f32.mrf.mxu0
      %v323 = vadd.f32 %v307, %v322
      %v324 = vpop.f32.mrf.mxu0
      %325 = vdwg.mxu0
      %v326 = vpack.c.bf16 %v323, %v323
      %vm327 = vcmask 257024
      %328 = vst.msk [vmem:[%s188] sm:$0xf] %vm327, %v326
      %p329 = scmp.lt.s32.totalorder %s18, 3
      %s330 = scalar_select %p329, %s18, 3
      %p331 = scmp.lt.s32.totalorder %s19, 0
      %s332 = scalar_select %p331, %s19, 0
      %s333 = sadd.s32 %s332, %s330
      %s334 = smul.addr %s333, 4
      %s335 = scalar_lea.vmem %s3, %s334
      // Predicated region
      $region33: #{forward.25} parent=31 // pred_check
        %p336 = pneg %p114
      $region34: #{forward.25} parent=31 // pred_check_branch
        %338 = sbr.rel (%p336) target = $region36
      $region35: #{forward.25} parent=31 // pred_region
        _
      $region36: #{forward.25} parent=31 // pred_fallthru
        _
    $region32: #{forward.25} parent=5 // pred_fallthru
      _
    %p339 = scmp.le.s32.totalorder 2, %s9
    // Predicated region
    $region37: #{forward.25} parent=5 // pred_check
      %p340 = pneg %p339
    $region38: #{forward.25} parent=5 // pred_check_branch
      %342 = sbr.rel (%p340) target = $region40
    $region39: #{forward.25} parent=5 // pred_region
      %s343 = ssub.s32 %s9, 2
      // Predicated region
      $region41: #{forward.25} parent=39 // pred_check
        %p344 = pneg %p120
      $region42: #{forward.25} parent=39 // pred_check_branch
        %346 = sbr.rel (%p344) target = $region44
      $region43: #{forward.25} parent=39 // pred_region
        %p347 = scmp.lt.s32.totalorder %s20, 3
        %s348 = scalar_select %p347, %s20, 3
        %p349 = scmp.lt.s32.totalorder %s21, 0
        %s350 = scalar_select %p349, %s21, 0
        %s351 = sadd.s32 %s350, %s348
        %s352 = smul.addr %s351, 4
        %s353 = scalar_lea.vmem %s3, %s352
      $region44: #{forward.25} parent=39 // pred_fallthru
        _
    $region40: #{forward.25} parent=5 // pred_fallthru
      _
  $region6: #{forward.25} parent=0 // loop_footer
    %s13 = sadd.s32 1, %s9
  $region7: #{forward.25} parent=0 // loop_footer_branch
    %8 = sbr.rel target = $region3
  $region8: #{forward.25} parent=0 // loop_exit
    _

// kernel: forward.26
$region0: #{forward.26}
  #allocation0 [shape = 'u32[]', space=smem, size = 0x4, offset = 0x4, fixed_abs, tag = 'smem constant byte address 0x4 - core index']
  #allocation1 [shape = 'u32[72,128]{1,0:T(1,128)}', space=vmem, size = 0x9000, scoped, tag = 'internal scratch']
  #allocation2 [shape = 'f32[8,32]{1,0:T(8,128)}', space=vmem, size = 0x1000, scoped, tag = 'scratch operand']
  %s0 = inlined_call_operand.vmem [shape: bf16[4,8,32], index: 0, kind: input, shape index: {}]
  %s1 = inlined_call_operand.vmem [shape: bf16[16,8], index: 1, kind: input, shape index: {}]
  %s2 = inlined_call_operand.vmem [shape: f32[16,1], index: 2, kind: input, shape index: {}]
  %s3 = inlined_call_operand.vmem [shape: bf16[4,16,32], index: 3, kind: input, shape index: {}]
  %s4 = inlined_call_operand.vmem [shape: bf16[16,16], index: 4, kind: input, shape index: {}]
  %s5 = inlined_call_operand.vmem [shape: bf16[4,16,32], index: 5, kind: output, shape index: {}]
  %s6 = sld [smem:[#allocation0]]
  $region53: #{forward.26} parent=0
    _
  %s8 = ssub.s32 1, %s6
  %s9 = scalar_select 0, %s8, %s6
  loop: start=0, step=1, limit=6
  $region2: #{forward.26} parent=0 // loop_pre_header
    _
  $region3: #{forward.26} parent=0 // loop_header
    %s11 = sphi 0, %s15
    %p12 = scmp.ge.s32.totalorder %s11, 6
    %s18 = sphi 0, %s30
    %s19 = sphi 0, %s26
    %s20 = sphi 0, %s18
    %s21 = sphi 0, %s19
    %s22 = sphi 0, %s20
    %s23 = sphi 0, %s21
    %s33 = sphi 0, %s35
    %s36 = sphi 0, %s33
    %s37 = sphi 0, %s36
    %s53 = sphi 0, %s37
    %s57 = sphi 0, %s57
    %s59 = sphi 0, %s57
    %s60 = sphi 0, %s59
    %s74 = sphi 0, %s60
    %s78 = sphi 0, %s78
    %s80 = sphi 0, %s78
    %s81 = sphi 0, %s80
    %s95 = sphi 0, %s81
    %s101 = sphi 0, %s103
    %s104 = sphi 0, %s101
    %s105 = sphi 0, %s104
    %s121 = sphi 0, %s105
    %s125 = sphi 0, %s125
    %s127 = sphi 0, %s125
    %s128 = sphi 0, %s127
    %s142 = sphi 0, %s128
    %s150 = sphi 0, %s152
    %s153 = sphi 0, %s150
    %s154 = sphi 0, %s153
    %s170 = sphi 0, %s154
  $region4: #{forward.26} parent=0 // loop_header_branch
    %14 = sbr.rel (%p12) target = $region8
  $region5: #{forward.26} parent=0 // loop_body
    %s16 = ssub.s32 %s11, 1
    %s17 = ssub.s32 %s11, 2
    %s24 = sadd.s32 1, %s19
    %p25 = scmp.ge.s32.totalorder %s24, 1
    %s26 = scalar_select %p25, 0, %s24
    %s27 = sadd.s32 1, %s18
    %s28 = scalar_select %p25, %s27, %s18
    %p29 = scmp.ge.s32.totalorder %s28, 4
    %s30 = scalar_select %p29, 0, %s28
    %s31 = ssub.s32 %s18, %s30
    %p32 = scmp.eq.s32.totalorder %s31, 0
    %s34 = sadd.s32 %s33, 1
    %s35 = scalar_select %p32, %s33, %s34
    %p38 = pneg %p32
    %p39 = scmp.eq.s32.totalorder %s11, 3
    %p40 = por %p38, %p39
    %p41 = scmp.ne.s32.totalorder %s33, %s36
    %p42 = scmp.eq.s32.totalorder %s11, 0
    %p43 = por %p41, %p42
    %p44 = scmp.ne.s32.totalorder %s33, %s36
    %p45 = scmp.eq.s32.totalorder %s16, 3
    %p46 = por %p44, %p45
    %p47 = scmp.ne.s32.totalorder %s36, %s37
    %p48 = scmp.eq.s32.totalorder %s16, 0
    %p49 = por %p47, %p48
    %p50 = scmp.ne.s32.totalorder %s36, %s37
    %p51 = scmp.eq.s32.totalorder %s17, 3
    %p52 = por %p50, %p51
    %p54 = scmp.ne.s32.totalorder %s37, %s53
    %p55 = scmp.eq.s32.totalorder %s17, 0
    %p56 = por %p54, %p55
    %s58 = sadd.s32 %s57, 1
    %p61 = scmp.eq.s32.totalorder %s11, 3
    %p62 = scmp.ne.s32.totalorder %s57, %s59
    %p63 = scmp.eq.s32.totalorder %s11, 0
    %p64 = por %p62, %p63
    %p65 = scmp.ne.s32.totalorder %s57, %s59
    %p66 = scmp.eq.s32.totalorder %s16, 3
    %p67 = por %p65, %p66
    %p68 = scmp.ne.s32.totalorder %s59, %s60
    %p69 = scmp.eq.s32.totalorder %s16, 0
    %p70 = por %p68, %p69
    %p71 = scmp.ne.s32.totalorder %s59, %s60
    %p72 = scmp.eq.s32.totalorder %s17, 3
    %p73 = por %p71, %p72
    %p75 = scmp.ne.s32.totalorder %s60, %s74
    %p76 = scmp.eq.s32.totalorder %s17, 0
    %p77 = por %p75, %p76
    %s79 = sadd.s32 %s78, 1
    %p82 = scmp.eq.s32.totalorder %s11, 3
    %p83 = scmp.ne.s32.totalorder %s78, %s80
    %p84 = scmp.eq.s32.totalorder %s11, 0
    %p85 = por %p83, %p84
    %p86 = scmp.ne.s32.totalorder %s78, %s80
    %p87 = scmp.eq.s32.totalorder %s16, 3
    %p88 = por %p86, %p87
    %p89 = scmp.ne.s32.totalorder %s80, %s81
    %p90 = scmp.eq.s32.totalorder %s16, 0
    %p91 = por %p89, %p90
    %p92 = scmp.ne.s32.totalorder %s80, %s81
    %p93 = scmp.eq.s32.totalorder %s17, 3
    %p94 = por %p92, %p93
    %p96 = scmp.ne.s32.totalorder %s81, %s95
    %p97 = scmp.eq.s32.totalorder %s17, 0
    %p98 = por %p96, %p97
    %s99 = ssub.s32 %s18, %s30
    %p100 = scmp.eq.s32.totalorder %s99, 0
    %s102 = sadd.s32 %s101, 1
    %s103 = scalar_select %p100, %s101, %s102
    %p106 = pneg %p100
    %p107 = scmp.eq.s32.totalorder %s11, 3
    %p108 = por %p106, %p107
    %p109 = scmp.ne.s32.totalorder %s101, %s104
    %p110 = scmp.eq.s32.totalorder %s11, 0
    %p111 = por %p109, %p110
    %p112 = scmp.ne.s32.totalorder %s101, %s104
    %p113 = scmp.eq.s32.totalorder %s16, 3
    %p114 = por %p112, %p113
    %p115 = scmp.ne.s32.totalorder %s104, %s105
    %p116 = scmp.eq.s32.totalorder %s16, 0
    %p117 = por %p115, %p116
    %p118 = scmp.ne.s32.totalorder %s104, %s105
    %p119 = scmp.eq.s32.totalorder %s17, 3
    %p120 = por %p118, %p119
    %p122 = scmp.ne.s32.totalorder %s105, %s121
    %p123 = scmp.eq.s32.totalorder %s17, 0
    %p124 = por %p122, %p123
    %s126 = sadd.s32 %s125, 1
    %p129 = scmp.eq.s32.totalorder %s11, 3
    %p130 = scmp.ne.s32.totalorder %s125, %s127
    %p131 = scmp.eq.s32.totalorder %s11, 0
    %p132 = por %p130, %p131
    %p133 = scmp.ne.s32.totalorder %s125, %s127
    %p134 = scmp.eq.s32.totalorder %s16, 3
    %p135 = por %p133, %p134
    %p136 = scmp.ne.s32.totalorder %s127, %s128
    %p137 = scmp.eq.s32.totalorder %s16, 0
    %p138 = por %p136, %p137
    %p139 = scmp.ne.s32.totalorder %s127, %s128
    %p140 = scmp.eq.s32.totalorder %s17, 3
    %p141 = por %p139, %p140
    %p143 = scmp.ne.s32.totalorder %s128, %s142
    %p144 = scmp.eq.s32.totalorder %s17, 0
    %p145 = por %p143, %p144
    %s146 = ssub.s32 %s18, %s30
    %s147 = ssub.s32 %s19, %s26
    %s148 = sor.u32 %s146, %s147
    %p149 = scmp.eq.s32.totalorder %s148, 0
    %s151 = sadd.s32 %s150, 1
    %s152 = scalar_select %p149, %s150, %s151
    %p155 = pneg %p149
    %p156 = scmp.eq.s32.totalorder %s11, 3
    %p157 = por %p155, %p156
    %p158 = scmp.ne.s32.totalorder %s150, %s153
    %p159 = scmp.eq.s32.totalorder %s11, 0
    %p160 = por %p158, %p159
    %p161 = scmp.ne.s32.totalorder %s150, %s153
    %p162 = scmp.eq.s32.totalorder %s16, 3
    %p163 = por %p161, %p162
    %p164 = scmp.ne.s32.totalorder %s153, %s154
    %p165 = scmp.eq.s32.totalorder %s16, 0
    %p166 = por %p164, %p165
    %p167 = scmp.ne.s32.totalorder %s153, %s154
    %p168 = scmp.eq.s32.totalorder %s17, 3
    %p169 = por %p167, %p168
    %p171 = scmp.ne.s32.totalorder %s154, %s170
    %p172 = scmp.eq.s32.totalorder %s17, 0
    %p173 = por %p171, %p172
    %p174 = scmp.le.s32.totalorder 1, %s11
    %p175 = scmp.lt.s32.totalorder %s11, 5
    %p176 = pnand %p174, %p175
    %p177 = pneg %p176
    // Predicated region
    $region9: #{forward.26} parent=5 // pred_check
      _
    $region10: #{forward.26} parent=5 // pred_check_branch
      %179 = sbr.rel (%p176) target = $region12
    $region11: #{forward.26} parent=5 // pred_region
      %s180 = ssub.s32 %s11, 1
      // Predicated region
      $region13: #{forward.26} parent=11 // pred_check
        %p181 = pneg %p70
      $region14: #{forward.26} parent=11 // pred_check_branch
        %183 = sbr.rel (%p181) target = $region16
      $region15: #{forward.26} parent=11 // pred_region
        _
      $region16: #{forward.26} parent=11 // pred_fallthru
        _
      // Predicated region
      $region17: #{forward.26} parent=11 // pred_check
        %p184 = pneg %p91
      $region18: #{forward.26} parent=11 // pred_check_branch
        %186 = sbr.rel (%p184) target = $region20
      $region19: #{forward.26} parent=11 // pred_region
        _
      $region20: #{forward.26} parent=11 // pred_fallthru
        _
      // Predicated region
      $region21: #{forward.26} parent=11 // pred_check
        %p187 = pneg %p138
      $region22: #{forward.26} parent=11 // pred_check_branch
        %189 = sbr.rel (%p187) target = $region24
      $region23: #{forward.26} parent=11 // pred_region
        _
      $region24: #{forward.26} parent=11 // pred_fallthru
        _
    $region12: #{forward.26} parent=5 // pred_fallthru
      _
    %p190 = scmp.lt.s32.totalorder %s11, 4
    // Predicated region
    $region25: #{forward.26} parent=5 // pred_check
      %p191 = pneg %p190
    $region26: #{forward.26} parent=5 // pred_check_branch
      %193 = sbr.rel (%p191) target = $region28
    $region27: #{forward.26} parent=5 // pred_region
      // Predicated region
      $region29: #{forward.26} parent=27 // pred_check
        %p194 = pneg %p43
      $region30: #{forward.26} parent=27 // pred_check_branch
        %196 = sbr.rel (%p194) target = $region32
      $region31: #{forward.26} parent=27 // pred_region
        %p197 = scmp.lt.s32.totalorder %s18, 3
        %s198 = scalar_select %p197, %s18, 3
        %s199 = smul.addr %s198, 4
        %s200 = scalar_lea.vmem %s0, %s199
      $region32: #{forward.26} parent=27 // pred_fallthru
        _
      // Predicated region
      $region33: #{forward.26} parent=27 // pred_check
        %p201 = pneg %p111
      $region34: #{forward.26} parent=27 // pred_check_branch
        %203 = sbr.rel (%p201) target = $region36
      $region35: #{forward.26} parent=27 // pred_region
        %p204 = scmp.lt.s32.totalorder %s18, 3
        %s205 = scalar_select %p204, %s18, 3
        %s206 = smul.addr %s205, 2
        %s207 = smul.addr %s206, 4
        %s208 = scalar_lea.vmem %s3, %s207
      $region36: #{forward.26} parent=27 // pred_fallthru
        _
    $region28: #{forward.26} parent=5 // pred_fallthru
      _
    %p209 = scmp.le.s32.totalorder 1, %s11
    %p210 = scmp.lt.s32.totalorder %s11, 5
    %p211 = pnand %p209, %p210
    %p212 = pneg %p211
    // Predicated region
    $region37: #{forward.26} parent=5 // pred_check
      _
    $region38: #{forward.26} parent=5 // pred_check_branch
      %214 = sbr.rel (%p211) target = $region40
    $region39: #{forward.26} parent=5 // pred_region
      %s215 = ssub.s32 %s11, 1
      %p216 = scmp.lt.s32.totalorder %s20, 3
      %s217 = scalar_select %p216, %s20, 3
      %s218 = smul.addr %s217, 4
      %s219 = scalar_lea.vmem %s0, %s218
      %p220 = pneg %p49
      %p221 = pneg %p46
      %p222 = pneg %p70
      %p223 = pneg %p67
      %p224 = pneg %p91
      %p225 = pneg %p88
      %p226 = scmp.lt.s32.totalorder %s20, 3
      %s227 = scalar_select %p226, %s20, 3
      %s228 = smul.addr %s227, 2
      %s229 = smul.addr %s228, 4
      %s230 = scalar_lea.vmem %s3, %s229
      %p231 = pneg %p117
      %p232 = pneg %p114
      %p233 = pneg %p138
      %p234 = pneg %p135
      %p235 = pneg %p166
      %p236 = pneg %p163
      %p237 = scmp.lt.s32.totalorder %s20, 3
      %s238 = scalar_select %p237, %s20, 3
      %p239 = scmp.lt.s32.totalorder %s21, 0
      %s240 = scalar_select %p239, %s21, 0
      %s241 = smul.addr %s238, 2
      %s242 = sadd.s32 %s240, %s241
      %s243 = smul.addr %s242, 4
      %s244 = scalar_lea.vmem %s5, %s243
      %p245 = scmp.lt.s32.totalorder %s20, 3
      %s246 = scalar_select %p245, %s20, 3
      %s247 = smul.addr %s246, 4
      %s248 = scalar_lea.vmem %s0, %s247
      %p249 = scmp.lt.s32.totalorder %s20, 3
      %s250 = scalar_select %p249, %s20, 3
      %s251 = smul.addr %s250, 2
      %s252 = smul.addr %s251, 4
      %s253 = scalar_lea.vmem %s3, %s252
      %p254 = scmp.lt.s32.totalorder %s20, 3
      %s255 = scalar_select %p254, %s20, 3
      %p256 = scmp.lt.s32.totalorder %s21, 0
      %s257 = scalar_select %p256, %s21, 0
      %s258 = smul.addr %s255, 2
      %s259 = sadd.s32 %s257, %s258
      %s260 = smul.addr %s259, 4
      %s261 = scalar_lea.vmem %s5, %s260
      %v263 = vld [vmem:[%s248] sm:$0xf]
      %v264 = vunpack.c.l.bf16 %v263
      %vm265 = vcmask 261120
      %266 = vst.msk [vmem:[#allocation2] sm:$0xff] %vm265, %v264
      %v267 = vld [vmem:[%s1] sm:$0xf]
      %v268 = vld [vmem:[%s1 + $0x4] sm:$0xf]
      %v269 = vld [vmem:[#allocation2] sm:$0xff]
      %v270 = vpack.c.bf16 %v269, %v269
      %v271 = vld [vmem:[%s253] sm:$0xf]
      %v272 = vld [vmem:[%s253 + $0x4] sm:$0xf]
      %v273 = vld [vmem:[%s4] sm:$0xf]
      %v274 = vld [vmem:[%s4 + $0x4] sm:$0xf]
      %v277 = vunpack.c.l.b16 %v273
      %v278 = vunpack.c.l.b16 %v274
      %v279 = vpack.c.b16 %v278, %v277
      %v282 = vunpack.c.l.b16 %v271
      %v283 = vunpack.c.l.b16 %v272
      %v284 = vpack.c.b16 %v283, %v282
      %vm286 = vcmask 130048
      %v288 = vsel %vm286, %v279, 0
      %290 = vmatpush.bf16.msra.mxu0 0
      %291 = vmatpush.bf16.msra.mxu0 0
      %292 = vmatpush.bf16.msra.mxu0 0
      %293 = vmatpush.bf16.msra.mxu0 0
      %294 = vmatpush.bf16.msra.mxu0 0
      %295 = vmatpush.bf16.msra.mxu0 0
      %296 = vmatpush.bf16.msra.mxu0 0
      %297 = vmatpush.bf16.msra.mxu0 %v284
      %298 = vmatmul.bf16.gmra.mxu0 %v288
      %v299 = vpop.f32.mrf.mxu0
      %v300 = vadd.f32 0.0, %v299
      %v301 = vpop.f32.mrf.mxu0
      %v302 = vadd.f32 0.0, %v301
      %303 = vdwg.mxu0
      %v306 = vunpack.c.l.b16 %v267
      %v307 = vunpack.c.l.b16 %v268
      %v308 = vpack.c.b16 %v307, %v306
      %vm309 = vcmask 64512
      %v311 = vsel %vm309, %v308, 0
      %vm313 = vcmask 1043456
      %v315 = vsel %vm313, %v270, 0
      %317 = vmatpush.bf16.msra.mxu0 0
      %318 = vmatpush.bf16.msra.mxu0 0
      %319 = vmatpush.bf16.msra.mxu0 0
      %320 = vmatpush.bf16.msra.mxu0 0
      %321 = vmatpush.bf16.msra.mxu0 0
      %322 = vmatpush.bf16.msra.mxu0 0
      %323 = vmatpush.bf16.msra.mxu0 0
      %324 = vmatpush.bf16.msra.mxu0 %v315
      %325 = vmatmul.bf16.gmra.mxu0 %v311
      %v326 = vpop.f32.mrf.mxu0
      %v327 = vadd.f32 %v300, %v326
      %v328 = vpop.f32.mrf.mxu0
      %v329 = vadd.f32 %v302, %v328
      %330 = vdwg.mxu0
      %v331 = vld [vmem:[%s2] sm:$0xff]
      %v332 = vld [vmem:[%s2 + $0x8] sm:$0xff]
      %334 = vset.pattern.permute.xlu0 0
      %335 = vperm.xlu0 %334, %v331
      %v336 = vpop.permute.xlu0 %335
      %339 = vset.pattern.permute.xlu0 0
      %340 = vperm.xlu0 %339, %v332
      %v341 = vpop.permute.xlu0 %340
      %v343 = vadd.f32 %v327, %v336
      %v344 = vadd.f32 %v329, %v341
      %v345 = vpack.c.bf16 %v343, %v343
      %v346 = vpack.c.bf16 %v344, %v344
      %vm347 = vcmask 257024
      %348 = vst.msk [vmem:[%s261] sm:$0xf] %vm347, %v345
      %349 = vst.msk [vmem:[%s261 + $0x4] sm:$0xf] %vm347, %v346
      %p350 = scmp.lt.s32.totalorder %s20, 3
      %s351 = scalar_select %p350, %s20, 3
      %p352 = scmp.lt.s32.totalorder %s21, 0
      %s353 = scalar_select %p352, %s21, 0
      %s354 = smul.addr %s351, 2
      %s355 = sadd.s32 %s353, %s354
      %s356 = smul.addr %s355, 4
      %s357 = scalar_lea.vmem %s5, %s356
      // Predicated region
      $region41: #{forward.26} parent=39 // pred_check
        %p358 = pneg %p163
      $region42: #{forward.26} parent=39 // pred_check_branch
        %360 = sbr.rel (%p358) target = $region44
      $region43: #{forward.26} parent=39 // pred_region
        _
      $region44: #{forward.26} parent=39 // pred_fallthru
        _
    $region40: #{forward.26} parent=5 // pred_fallthru
      _
    %p361 = scmp.le.s32.totalorder 2, %s11
    // Predicated region
    $region45: #{forward.26} parent=5 // pred_check
      %p362 = pneg %p361
    $region46: #{forward.26} parent=5 // pred_check_branch
      %364 = sbr.rel (%p362) target = $region48
    $region47: #{forward.26} parent=5 // pred_region
      %s365 = ssub.s32 %s11, 2
      // Predicated region
      $region49: #{forward.26} parent=47 // pred_check
        %p366 = pneg %p169
      $region50: #{forward.26} parent=47 // pred_check_branch
        %368 = sbr.rel (%p366) target = $region52
      $region51: #{forward.26} parent=47 // pred_region
        %p369 = scmp.lt.s32.totalorder %s22, 3
        %s370 = scalar_select %p369, %s22, 3
        %p371 = scmp.lt.s32.totalorder %s23, 0
        %s372 = scalar_select %p371, %s23, 0
        %s373 = smul.addr %s370, 2
        %s374 = sadd.s32 %s372, %s373
        %s375 = smul.addr %s374, 4
        %s376 = scalar_lea.vmem %s5, %s375
      $region52: #{forward.26} parent=47 // pred_fallthru
        _
    $region48: #{forward.26} parent=5 // pred_fallthru
      _
  $region6: #{forward.26} parent=0 // loop_footer
    %s15 = sadd.s32 1, %s11
  $region7: #{forward.26} parent=0 // loop_footer_branch
    %10 = sbr.rel target = $region3
  $region8: #{forward.26} parent=0 // loop_exit
    _

// kernel: forward.27
$region0: #{forward.27}
  #allocation0 [shape = 'u32[]', space=smem, size = 0x4, offset = 0x4, fixed_abs, tag = 'smem constant byte address 0x4 - core index']
  #allocation1 [shape = 'u32[72,128]{1,0:T(1,128)}', space=vmem, size = 0x9000, scoped, tag = 'internal scratch']
  #allocation2 [shape = 'f32[128,8]{1,0:T(8,128)}', space=vmem, size = 0x10000, scoped, tag = 'scratch operand']
  %s0 = inlined_call_operand.vmem [shape: bf16[4,64,9], index: 0, kind: input, shape index: {}]
  %s1 = inlined_call_operand.vmem [shape: bf16[32,128], index: 1, kind: input, shape index: {}]
  %s2 = inlined_call_operand.vmem [shape: f32[32,1], index: 2, kind: input, shape index: {}]
  %s3 = inlined_call_operand.vmem [shape: bf16[4,32,8], index: 3, kind: output, shape index: {}]
  %s4 = sld [smem:[#allocation0]]
  $region45: #{forward.27} parent=0
    _
  %s6 = ssub.s32 1, %s4
  %s7 = scalar_select 0, %s6, %s4
  loop: start=0, step=1, limit=6
  $region2: #{forward.27} parent=0 // loop_pre_header
    _
  $region3: #{forward.27} parent=0 // loop_header
    %s9 = sphi 0, %s13
    %p10 = scmp.ge.s32.totalorder %s9, 6
    %s16 = sphi 0, %s28
    %s17 = sphi 0, %s24
    %s18 = sphi 0, %s16
    %s19 = sphi 0, %s17
    %s20 = sphi 0, %s18
    %s21 = sphi 0, %s19
    %s31 = sphi 0, %s33
    %s34 = sphi 0, %s31
    %s35 = sphi 0, %s34
    %s51 = sphi 0, %s35
    %s55 = sphi 0, %s55
    %s57 = sphi 0, %s55
    %s58 = sphi 0, %s57
    %s72 = sphi 0, %s58
    %s76 = sphi 0, %s76
    %s78 = sphi 0, %s76
    %s79 = sphi 0, %s78
    %s93 = sphi 0, %s79
    %s101 = sphi 0, %s103
    %s104 = sphi 0, %s101
    %s105 = sphi 0, %s104
    %s121 = sphi 0, %s105
  $region4: #{forward.27} parent=0 // loop_header_branch
    %12 = sbr.rel (%p10) target = $region8
  $region5: #{forward.27} parent=0 // loop_body
    %s14 = ssub.s32 %s9, 1
    %s15 = ssub.s32 %s9, 2
    %s22 = sadd.s32 1, %s17
    %p23 = scmp.ge.s32.totalorder %s22, 1
    %s24 = scalar_select %p23, 0, %s22
    %s25 = sadd.s32 1, %s16
    %s26 = scalar_select %p23, %s25, %s16
    %p27 = scmp.ge.s32.totalorder %s26, 4
    %s28 = scalar_select %p27, 0, %s26
    %s29 = ssub.s32 %s16, %s28
    %p30 = scmp.eq.s32.totalorder %s29, 0
    %s32 = sadd.s32 %s31, 1
    %s33 = scalar_select %p30, %s31, %s32
    %p36 = pneg %p30
    %p37 = scmp.eq.s32.totalorder %s9, 3
    %p38 = por %p36, %p37
    %p39 = scmp.ne.s32.totalorder %s31, %s34
    %p40 = scmp.eq.s32.totalorder %s9, 0
    %p41 = por %p39, %p40
    %p42 = scmp.ne.s32.totalorder %s31, %s34
    %p43 = scmp.eq.s32.totalorder %s14, 3
    %p44 = por %p42, %p43
    %p45 = scmp.ne.s32.totalorder %s34, %s35
    %p46 = scmp.eq.s32.totalorder %s14, 0
    %p47 = por %p45, %p46
    %p48 = scmp.ne.s32.totalorder %s34, %s35
    %p49 = scmp.eq.s32.totalorder %s15, 3
    %p50 = por %p48, %p49
    %p52 = scmp.ne.s32.totalorder %s35, %s51
    %p53 = scmp.eq.s32.totalorder %s15, 0
    %p54 = por %p52, %p53
    %s56 = sadd.s32 %s55, 1
    %p59 = scmp.eq.s32.totalorder %s9, 3
    %p60 = scmp.ne.s32.totalorder %s55, %s57
    %p61 = scmp.eq.s32.totalorder %s9, 0
    %p62 = por %p60, %p61
    %p63 = scmp.ne.s32.totalorder %s55, %s57
    %p64 = scmp.eq.s32.totalorder %s14, 3
    %p65 = por %p63, %p64
    %p66 = scmp.ne.s32.totalorder %s57, %s58
    %p67 = scmp.eq.s32.totalorder %s14, 0
    %p68 = por %p66, %p67
    %p69 = scmp.ne.s32.totalorder %s57, %s58
    %p70 = scmp.eq.s32.totalorder %s15, 3
    %p71 = por %p69, %p70
    %p73 = scmp.ne.s32.totalorder %s58, %s72
    %p74 = scmp.eq.s32.totalorder %s15, 0
    %p75 = por %p73, %p74
    %s77 = sadd.s32 %s76, 1
    %p80 = scmp.eq.s32.totalorder %s9, 3
    %p81 = scmp.ne.s32.totalorder %s76, %s78
    %p82 = scmp.eq.s32.totalorder %s9, 0
    %p83 = por %p81, %p82
    %p84 = scmp.ne.s32.totalorder %s76, %s78
    %p85 = scmp.eq.s32.totalorder %s14, 3
    %p86 = por %p84, %p85
    %p87 = scmp.ne.s32.totalorder %s78, %s79
    %p88 = scmp.eq.s32.totalorder %s14, 0
    %p89 = por %p87, %p88
    %p90 = scmp.ne.s32.totalorder %s78, %s79
    %p91 = scmp.eq.s32.totalorder %s15, 3
    %p92 = por %p90, %p91
    %p94 = scmp.ne.s32.totalorder %s79, %s93
    %p95 = scmp.eq.s32.totalorder %s15, 0
    %p96 = por %p94, %p95
    %s97 = ssub.s32 %s16, %s28
    %s98 = ssub.s32 %s17, %s24
    %s99 = sor.u32 %s97, %s98
    %p100 = scmp.eq.s32.totalorder %s99, 0
    %s102 = sadd.s32 %s101, 1
    %s103 = scalar_select %p100, %s101, %s102
    %p106 = pneg %p100
    %p107 = scmp.eq.s32.totalorder %s9, 3
    %p108 = por %p106, %p107
    %p109 = scmp.ne.s32.totalorder %s101, %s104
    %p110 = scmp.eq.s32.totalorder %s9, 0
    %p111 = por %p109, %p110
    %p112 = scmp.ne.s32.totalorder %s101, %s104
    %p113 = scmp.eq.s32.totalorder %s14, 3
    %p114 = por %p112, %p113
    %p115 = scmp.ne.s32.totalorder %s104, %s105
    %p116 = scmp.eq.s32.totalorder %s14, 0
    %p117 = por %p115, %p116
    %p118 = scmp.ne.s32.totalorder %s104, %s105
    %p119 = scmp.eq.s32.totalorder %s15, 3
    %p120 = por %p118, %p119
    %p122 = scmp.ne.s32.totalorder %s105, %s121
    %p123 = scmp.eq.s32.totalorder %s15, 0
    %p124 = por %p122, %p123
    %p125 = scmp.le.s32.totalorder 1, %s9
    %p126 = scmp.lt.s32.totalorder %s9, 5
    %p127 = pnand %p125, %p126
    %p128 = pneg %p127
    // Predicated region
    $region9: #{forward.27} parent=5 // pred_check
      _
    $region10: #{forward.27} parent=5 // pred_check_branch
      %130 = sbr.rel (%p127) target = $region12
    $region11: #{forward.27} parent=5 // pred_region
      %s131 = ssub.s32 %s9, 1
      // Predicated region
      $region13: #{forward.27} parent=11 // pred_check
        %p132 = pneg %p68
      $region14: #{forward.27} parent=11 // pred_check_branch
        %134 = sbr.rel (%p132) target = $region16
      $region15: #{forward.27} parent=11 // pred_region
        _
      $region16: #{forward.27} parent=11 // pred_fallthru
        _
      // Predicated region
      $region17: #{forward.27} parent=11 // pred_check
        %p135 = pneg %p89
      $region18: #{forward.27} parent=11 // pred_check_branch
        %137 = sbr.rel (%p135) target = $region20
      $region19: #{forward.27} parent=11 // pred_region
        _
      $region20: #{forward.27} parent=11 // pred_fallthru
        _
    $region12: #{forward.27} parent=5 // pred_fallthru
      _
    %p138 = scmp.lt.s32.totalorder %s9, 4
    // Predicated region
    $region21: #{forward.27} parent=5 // pred_check
      %p139 = pneg %p138
    $region22: #{forward.27} parent=5 // pred_check_branch
      %141 = sbr.rel (%p139) target = $region24
    $region23: #{forward.27} parent=5 // pred_region
      // Predicated region
      $region25: #{forward.27} parent=23 // pred_check
        %p142 = pneg %p41
      $region26: #{forward.27} parent=23 // pred_check_branch
        %144 = sbr.rel (%p142) target = $region28
      $region27: #{forward.27} parent=23 // pred_region
        %p145 = scmp.lt.s32.totalorder %s16, 3
        %s146 = scalar_select %p145, %s16, 3
        %s147 = smul.addr %s146, 8
        %s148 = smul.addr %s147, 4
        %s149 = scalar_lea.vmem %s0, %s148
      $region28: #{forward.27} parent=23 // pred_fallthru
        _
    $region24: #{forward.27} parent=5 // pred_fallthru
      _
    %p150 = scmp.le.s32.totalorder 1, %s9
    %p151 = scmp.lt.s32.totalorder %s9, 5
    %p152 = pnand %p150, %p151
    %p153 = pneg %p152
    // Predicated region
    $region29: #{forward.27} parent=5 // pred_check
      _
    $region30: #{forward.27} parent=5 // pred_check_branch
      %155 = sbr.rel (%p152) target = $region32
    $region31: #{forward.27} parent=5 // pred_region
      %s156 = ssub.s32 %s9, 1
      %p157 = scmp.lt.s32.totalorder %s18, 3
      %s158 = scalar_select %p157, %s18, 3
      %s159 = smul.addr %s158, 8
      %s160 = smul.addr %s159, 4
      %s161 = scalar_lea.vmem %s0, %s160
      %p162 = pneg %p47
      %p163 = pneg %p44
      %p164 = pneg %p68
      %p165 = pneg %p65
      %p166 = pneg %p89
      %p167 = pneg %p86
      %p168 = pneg %p117
      %p169 = pneg %p114
      %p170 = scmp.lt.s32.totalorder %s18, 3
      %s171 = scalar_select %p170, %s18, 3
      %p172 = scmp.lt.s32.totalorder %s19, 0
      %s173 = scalar_select %p172, %s19, 0
      %s174 = smul.addr %s171, 4
      %s175 = sadd.s32 %s173, %s174
      %s176 = smul.addr %s175, 4
      %s177 = scalar_lea.vmem %s3, %s176
      %p178 = scmp.lt.s32.totalorder %s18, 3
      %s179 = scalar_select %p178, %s18, 3
      %s180 = smul.addr %s179, 8
      %s181 = smul.addr %s180, 4
      %s182 = scalar_lea.vmem %s0, %s181
      %p183 = scmp.lt.s32.totalorder %s18, 3
      %s184 = scalar_select %p183, %s18, 3
      %p185 = scmp.lt.s32.totalorder %s19, 0
      %s186 = scalar_select %p185, %s19, 0
      %s187 = smul.addr %s184, 4
      %s188 = sadd.s32 %s186, %s187
      %s189 = smul.addr %s188, 4
      %s190 = scalar_lea.vmem %s3, %s189
      %v191 = vld [vmem:[%s182] sm:$0xf]
      %v192 = vld [vmem:[%s182 + $0x4] sm:$0xf]
      %v193 = vld [vmem:[%s182 + $0x8] sm:$0xf]
      %v194 = vld [vmem:[%s182 + $0xc] sm:$0xf]
      %v195 = vld [vmem:[%s182 + $0x10] sm:$0xf]
      %v196 = vld [vmem:[%s182 + $0x14] sm:$0xf]
      %v197 = vld [vmem:[%s182 + $0x18] sm:$0xf]
      %v198 = vld [vmem:[%s182 + $0x1c] sm:$0xf]
      %v199 = vunpack.c.l.bf16 %v191
      %v200 = vunpack.c.l.bf16 %v192
      %v201 = vunpack.c.l.bf16 %v193
      %v202 = vunpack.c.l.bf16 %v194
      %v203 = vunpack.c.l.bf16 %v195
      %v204 = vunpack.c.l.bf16 %v196
      %v205 = vunpack.c.l.bf16 %v197
      %v206 = vunpack.c.l.bf16 %v198
      %vm207 = vcmask 64512
      %208 = vst.msk [vmem:[#allocation2] sm:$0xff] %vm207, %v199
      %209 = vst.msk [vmem:[#allocation2 + $0x8] sm:$0xff] %vm207, %v200
      %210 = vst.msk [vmem:[#allocation2 + $0x10] sm:$0xff] %vm207, %v201
      %211 = vst.msk [vmem:[#allocation2 + $0x18] sm:$0xff] %vm207, %v202
      %212 = vst.msk [vmem:[#allocation2 + $0x20] sm:$0xff] %vm207, %v203
      %213 = vst.msk [vmem:[#allocation2 + $0x28] sm:$0xff] %vm207, %v204
      %214 = vst.msk [vmem:[#allocation2 + $0x30] sm:$0xff] %vm207, %v205
      %215 = vst.msk [vmem:[#allocation2 + $0x38] sm:$0xff] %vm207, %v206
      %v216 = vld [vmem:[%s182] sm:$0xf]
      %v217 = vld [vmem:[%s182 + $0x4] sm:$0xf]
      %v218 = vld [vmem:[%s182 + $0x8] sm:$0xf]
      %v219 = vld [vmem:[%s182 + $0xc] sm:$0xf]
      %v220 = vld [vmem:[%s182 + $0x10] sm:$0xf]
      %v221 = vld [vmem:[%s182 + $0x14] sm:$0xf]
      %v222 = vld [vmem:[%s182 + $0x18] sm:$0xf]
      %v223 = vld [vmem:[%s182 + $0x1c] sm:$0xf]
      %v224 = vunpack.c.l.bf16 %v216
      %v225 = vunpack.c.l.bf16 %v217
      %v226 = vunpack.c.l.bf16 %v218
      %v227 = vunpack.c.l.bf16 %v219
      %v228 = vunpack.c.l.bf16 %v220
      %v229 = vunpack.c.l.bf16 %v221
      %v230 = vunpack.c.l.bf16 %v222
      %v231 = vunpack.c.l.bf16 %v223
      %240 = vrot.lane.b32.xlu0 %v224, 127
      %v241 = vpop.permute.xlu0 %240
      %242 = vrot.lane.b32.xlu0 %v225, 127
      %v243 = vpop.permute.xlu0 %242
      %244 = vrot.lane.b32.xlu0 %v226, 127
      %v245 = vpop.permute.xlu0 %244
      %246 = vrot.lane.b32.xlu0 %v227, 127
      %v247 = vpop.permute.xlu0 %246
      %248 = vrot.lane.b32.xlu0 %v228, 127
      %v249 = vpop.permute.xlu0 %248
      %250 = vrot.lane.b32.xlu0 %v229, 127
      %v251 = vpop.permute.xlu0 %250
      %252 = vrot.lane.b32.xlu0 %v230, 127
      %v253 = vpop.permute.xlu0 %252
      %254 = vrot.lane.b32.xlu0 %v231, 127
      %v255 = vpop.permute.xlu0 %254
      %264 = vst.msk [vmem:[#allocation2 + $0x40] sm:$0xff] %vm207, %v241
      %265 = vst.msk [vmem:[#allocation2 + $0x48] sm:$0xff] %vm207, %v243
      %266 = vst.msk [vmem:[#allocation2 + $0x50] sm:$0xff] %vm207, %v245
      %267 = vst.msk [vmem:[#allocation2 + $0x58] sm:$0xff] %vm207, %v247
      %268 = vst.msk [vmem:[#allocation2 + $0x60] sm:$0xff] %vm207, %v249
      %269 = vst.msk [vmem:[#allocation2 + $0x68] sm:$0xff] %vm207, %v251
      %270 = vst.msk [vmem:[#allocation2 + $0x70] sm:$0xff] %vm207, %v253
      %271 = vst.msk [vmem:[#allocation2 + $0x78] sm:$0xff] %vm207, %v255
      %v272 = vld [vmem:[%s1] sm:$0xf]
      %v273 = vld [vmem:[%s1 + $0x4] sm:$0xf]
      %v274 = vld [vmem:[%s1 + $0x8] sm:$0xf]
      %v275 = vld [vmem:[%s1 + $0xc] sm:$0xf]
      %v276 = vld [vmem:[#allocation2] sm:$0xff]
      %v277 = vld [vmem:[#allocation2 + $0x8] sm:$0xff]
      %v278 = vld [vmem:[#allocation2 + $0x10] sm:$0xff]
      %v279 = vld [vmem:[#allocation2 + $0x18] sm:$0xff]
      %v280 = vld [vmem:[#allocation2 + $0x20] sm:$0xff]
      %v281 = vld [vmem:[#allocation2 + $0x28] sm:$0xff]
      %v282 = vld [vmem:[#allocation2 + $0x30] sm:$0xff]
      %v283 = vld [vmem:[#allocation2 + $0x38] sm:$0xff]
      %v284 = vld [vmem:[#allocation2 + $0x40] sm:$0xff]
      %v285 = vld [vmem:[#allocation2 + $0x48] sm:$0xff]
      %v286 = vld [vmem:[#allocation2 + $0x50] sm:$0xff]
      %v287 = vld [vmem:[#allocation2 + $0x58] sm:$0xff]
      %v288 = vld [vmem:[#allocation2 + $0x60] sm:$0xff]
      %v289 = vld [vmem:[#allocation2 + $0x68] sm:$0xff]
      %v290 = vld [vmem:[#allocation2 + $0x70] sm:$0xff]
      %v291 = vld [vmem:[#allocation2 + $0x78] sm:$0xff]
      %v292 = vpack.c.bf16 %v277, %v276
      %v293 = vpack.c.bf16 %v279, %v278
      %v294 = vpack.c.bf16 %v281, %v280
      %v295 = vpack.c.bf16 %v283, %v282
      %v296 = vpack.c.bf16 %v285, %v284
      %v297 = vpack.c.bf16 %v287, %v286
      %v298 = vpack.c.bf16 %v289, %v288
      %v299 = vpack.c.bf16 %v291, %v290
      %v300 = vld [vmem:[%s2] sm:$0xff]
      %v301 = vld [vmem:[%s2 + $0x8] sm:$0xff]
      %v302 = vld [vmem:[%s2 + $0x10] sm:$0xff]
      %v303 = vld [vmem:[%s2 + $0x18] sm:$0xff]
      %305 = vset.pattern.permute.xlu0 0
      %306 = vperm.xlu0 %305, %v300
      %v307 = vpop.permute.xlu0 %306
      %310 = vset.pattern.permute.xlu0 0
      %311 = vperm.xlu0 %310, %v301
      %v312 = vpop.permute.xlu0 %311
      %315 = vset.pattern.permute.xlu0 0
      %316 = vperm.xlu0 %315, %v302
      %v317 = vpop.permute.xlu0 %316
      %320 = vset.pattern.permute.xlu0 0
      %321 = vperm.xlu0 %320, %v303
      %v322 = vpop.permute.xlu0 %321
      %v328 = vunpack.c.l.b16 %v272
      %v329 = vunpack.c.l.b16 %v273
      %v330 = vunpack.c.l.b16 %v274
      %v331 = vunpack.c.l.b16 %v275
      %v332 = vpack.c.b16 %v329, %v328
      %v333 = vpack.c.b16 %v331, %v330
      %336 = vmatpush.bf16.msra.mxu0 %v299
      %337 = vmatpush.bf16.msra.mxu0 %v298
      %338 = vmatpush.bf16.msra.mxu0 %v297
      %339 = vmatpush.bf16.msra.mxu0 %v296
      %340 = vmatpush.bf16.msra.mxu0 %v295
      %341 = vmatpush.bf16.msra.mxu0 %v294
      %342 = vmatpush.bf16.msra.mxu0 %v293
      %343 = vmatpush.bf16.msra.mxu0 %v292
      %344 = vmatmul.bf16.gmra.mxu0 %v332
      %v345 = vpop.f32.mrf.mxu0
      %v346 = vadd.f32 %v307, %v345
      %v347 = vpop.f32.mrf.mxu0
      %v348 = vadd.f32 %v312, %v347
      %349 = vmatmul.bf16.gmra.mxu0 %v333
      %v350 = vpop.f32.mrf.mxu0
      %v351 = vadd.f32 %v317, %v350
      %v352 = vpop.f32.mrf.mxu0
      %v353 = vadd.f32 %v322, %v352
      %354 = vdwg.mxu0
      %v355 = vpack.c.bf16 %v346, %v346
      %v356 = vpack.c.bf16 %v348, %v348
      %v357 = vpack.c.bf16 %v351, %v351
      %v358 = vpack.c.bf16 %v353, %v353
      %vm359 = vcmask 60416
      %360 = vst.msk [vmem:[%s190] sm:$0xf] %vm359, %v355
      %361 = vst.msk [vmem:[%s190 + $0x4] sm:$0xf] %vm359, %v356
      %362 = vst.msk [vmem:[%s190 + $0x8] sm:$0xf] %vm359, %v357
      %363 = vst.msk [vmem:[%s190 + $0xc] sm:$0xf] %vm359, %v358
      %p364 = scmp.lt.s32.totalorder %s18, 3
      %s365 = scalar_select %p364, %s18, 3
      %p366 = scmp.lt.s32.totalorder %s19, 0
      %s367 = scalar_select %p366, %s19, 0
      %s368 = smul.addr %s365, 4
      %s369 = sadd.s32 %s367, %s368
      %s370 = smul.addr %s369, 4
      %s371 = scalar_lea.vmem %s3, %s370
      // Predicated region
      $region33: #{forward.27} parent=31 // pred_check
        %p372 = pneg %p114
      $region34: #{forward.27} parent=31 // pred_check_branch
        %374 = sbr.rel (%p372) target = $region36
      $region35: #{forward.27} parent=31 // pred_region
        _
      $region36: #{forward.27} parent=31 // pred_fallthru
        _
    $region32: #{forward.27} parent=5 // pred_fallthru
      _
    %p375 = scmp.le.s32.totalorder 2, %s9
    // Predicated region
    $region37: #{forward.27} parent=5 // pred_check
      %p376 = pneg %p375
    $region38: #{forward.27} parent=5 // pred_check_branch
      %378 = sbr.rel (%p376) target = $region40
    $region39: #{forward.27} parent=5 // pred_region
      %s379 = ssub.s32 %s9, 2
      // Predicated region
      $region41: #{forward.27} parent=39 // pred_check
        %p380 = pneg %p120
      $region42: #{forward.27} parent=39 // pred_check_branch
        %382 = sbr.rel (%p380) target = $region44
      $region43: #{forward.27} parent=39 // pred_region
        %p383 = scmp.lt.s32.totalorder %s20, 3
        %s384 = scalar_select %p383, %s20, 3
        %p385 = scmp.lt.s32.totalorder %s21, 0
        %s386 = scalar_select %p385, %s21, 0
        %s387 = smul.addr %s384, 4
        %s388 = sadd.s32 %s386, %s387
        %s389 = smul.addr %s388, 4
        %s390 = scalar_lea.vmem %s3, %s389
      $region44: #{forward.27} parent=39 // pred_fallthru
        _
    $region40: #{forward.27} parent=5 // pred_fallthru
      _
  $region6: #{forward.27} parent=0 // loop_footer
    %s13 = sadd.s32 1, %s9
  $region7: #{forward.27} parent=0 // loop_footer_branch
    %8 = sbr.rel target = $region3
  $region8: #{forward.27} parent=0 // loop_exit
    _

// kernel: forward.28
$region0: #{forward.28}
  #allocation0 [shape = 'u32[]', space=smem, size = 0x4, offset = 0x4, fixed_abs, tag = 'smem constant byte address 0x4 - core index']
  #allocation1 [shape = 'u32[72,128]{1,0:T(1,128)}', space=vmem, size = 0x9000, scoped, tag = 'internal scratch']
  #allocation2 [shape = 'f32[32,8]{1,0:T(8,128)}', space=vmem, size = 0x4000, scoped, tag = 'scratch operand']
  %s0 = inlined_call_operand.vmem [shape: bf16[4,32,8], index: 0, kind: input, shape index: {}]
  %s1 = inlined_call_operand.vmem [shape: bf16[128,32], index: 1, kind: input, shape index: {}]
  %s2 = inlined_call_operand.vmem [shape: f32[128,1], index: 2, kind: input, shape index: {}]
  %s3 = inlined_call_operand.vmem [shape: f32[4,128,8], index: 3, kind: output, shape index: {}]
  %s4 = sld [smem:[#allocation0]]
  $region45: #{forward.28} parent=0
    _
  %s6 = ssub.s32 1, %s4
  %s7 = scalar_select 0, %s6, %s4
  loop: start=0, step=1, limit=6
  $region2: #{forward.28} parent=0 // loop_pre_header
    _
  $region3: #{forward.28} parent=0 // loop_header
    %s9 = sphi 0, %s13
    %p10 = scmp.ge.s32.totalorder %s9, 6
    %s16 = sphi 0, %s28
    %s17 = sphi 0, %s24
    %s18 = sphi 0, %s16
    %s19 = sphi 0, %s17
    %s20 = sphi 0, %s18
    %s21 = sphi 0, %s19
    %s31 = sphi 0, %s33
    %s34 = sphi 0, %s31
    %s35 = sphi 0, %s34
    %s51 = sphi 0, %s35
    %s55 = sphi 0, %s55
    %s57 = sphi 0, %s55
    %s58 = sphi 0, %s57
    %s72 = sphi 0, %s58
    %s76 = sphi 0, %s76
    %s78 = sphi 0, %s76
    %s79 = sphi 0, %s78
    %s93 = sphi 0, %s79
    %s101 = sphi 0, %s103
    %s104 = sphi 0, %s101
    %s105 = sphi 0, %s104
    %s121 = sphi 0, %s105
  $region4: #{forward.28} parent=0 // loop_header_branch
    %12 = sbr.rel (%p10) target = $region8
  $region5: #{forward.28} parent=0 // loop_body
    %s14 = ssub.s32 %s9, 1
    %s15 = ssub.s32 %s9, 2
    %s22 = sadd.s32 1, %s17
    %p23 = scmp.ge.s32.totalorder %s22, 1
    %s24 = scalar_select %p23, 0, %s22
    %s25 = sadd.s32 1, %s16
    %s26 = scalar_select %p23, %s25, %s16
    %p27 = scmp.ge.s32.totalorder %s26, 4
    %s28 = scalar_select %p27, 0, %s26
    %s29 = ssub.s32 %s16, %s28
    %p30 = scmp.eq.s32.totalorder %s29, 0
    %s32 = sadd.s32 %s31, 1
    %s33 = scalar_select %p30, %s31, %s32
    %p36 = pneg %p30
    %p37 = scmp.eq.s32.totalorder %s9, 3
    %p38 = por %p36, %p37
    %p39 = scmp.ne.s32.totalorder %s31, %s34
    %p40 = scmp.eq.s32.totalorder %s9, 0
    %p41 = por %p39, %p40
    %p42 = scmp.ne.s32.totalorder %s31, %s34
    %p43 = scmp.eq.s32.totalorder %s14, 3
    %p44 = por %p42, %p43
    %p45 = scmp.ne.s32.totalorder %s34, %s35
    %p46 = scmp.eq.s32.totalorder %s14, 0
    %p47 = por %p45, %p46
    %p48 = scmp.ne.s32.totalorder %s34, %s35
    %p49 = scmp.eq.s32.totalorder %s15, 3
    %p50 = por %p48, %p49
    %p52 = scmp.ne.s32.totalorder %s35, %s51
    %p53 = scmp.eq.s32.totalorder %s15, 0
    %p54 = por %p52, %p53
    %s56 = sadd.s32 %s55, 1
    %p59 = scmp.eq.s32.totalorder %s9, 3
    %p60 = scmp.ne.s32.totalorder %s55, %s57
    %p61 = scmp.eq.s32.totalorder %s9, 0
    %p62 = por %p60, %p61
    %p63 = scmp.ne.s32.totalorder %s55, %s57
    %p64 = scmp.eq.s32.totalorder %s14, 3
    %p65 = por %p63, %p64
    %p66 = scmp.ne.s32.totalorder %s57, %s58
    %p67 = scmp.eq.s32.totalorder %s14, 0
    %p68 = por %p66, %p67
    %p69 = scmp.ne.s32.totalorder %s57, %s58
    %p70 = scmp.eq.s32.totalorder %s15, 3
    %p71 = por %p69, %p70
    %p73 = scmp.ne.s32.totalorder %s58, %s72
    %p74 = scmp.eq.s32.totalorder %s15, 0
    %p75 = por %p73, %p74
    %s77 = sadd.s32 %s76, 1
    %p80 = scmp.eq.s32.totalorder %s9, 3
    %p81 = scmp.ne.s32.totalorder %s76, %s78
    %p82 = scmp.eq.s32.totalorder %s9, 0
    %p83 = por %p81, %p82
    %p84 = scmp.ne.s32.totalorder %s76, %s78
    %p85 = scmp.eq.s32.totalorder %s14, 3
    %p86 = por %p84, %p85
    %p87 = scmp.ne.s32.totalorder %s78, %s79
    %p88 = scmp.eq.s32.totalorder %s14, 0
    %p89 = por %p87, %p88
    %p90 = scmp.ne.s32.totalorder %s78, %s79
    %p91 = scmp.eq.s32.totalorder %s15, 3
    %p92 = por %p90, %p91
    %p94 = scmp.ne.s32.totalorder %s79, %s93
    %p95 = scmp.eq.s32.totalorder %s15, 0
    %p96 = por %p94, %p95
    %s97 = ssub.s32 %s16, %s28
    %s98 = ssub.s32 %s17, %s24
    %s99 = sor.u32 %s97, %s98
    %p100 = scmp.eq.s32.totalorder %s99, 0
    %s102 = sadd.s32 %s101, 1
    %s103 = scalar_select %p100, %s101, %s102
    %p106 = pneg %p100
    %p107 = scmp.eq.s32.totalorder %s9, 3
    %p108 = por %p106, %p107
    %p109 = scmp.ne.s32.totalorder %s101, %s104
    %p110 = scmp.eq.s32.totalorder %s9, 0
    %p111 = por %p109, %p110
    %p112 = scmp.ne.s32.totalorder %s101, %s104
    %p113 = scmp.eq.s32.totalorder %s14, 3
    %p114 = por %p112, %p113
    %p115 = scmp.ne.s32.totalorder %s104, %s105
    %p116 = scmp.eq.s32.totalorder %s14, 0
    %p117 = por %p115, %p116
    %p118 = scmp.ne.s32.totalorder %s104, %s105
    %p119 = scmp.eq.s32.totalorder %s15, 3
    %p120 = por %p118, %p119
    %p122 = scmp.ne.s32.totalorder %s105, %s121
    %p123 = scmp.eq.s32.totalorder %s15, 0
    %p124 = por %p122, %p123
    %p125 = scmp.le.s32.totalorder 1, %s9
    %p126 = scmp.lt.s32.totalorder %s9, 5
    %p127 = pnand %p125, %p126
    %p128 = pneg %p127
    // Predicated region
    $region9: #{forward.28} parent=5 // pred_check
      _
    $region10: #{forward.28} parent=5 // pred_check_branch
      %130 = sbr.rel (%p127) target = $region12
    $region11: #{forward.28} parent=5 // pred_region
      %s131 = ssub.s32 %s9, 1
      // Predicated region
      $region13: #{forward.28} parent=11 // pred_check
        %p132 = pneg %p68
      $region14: #{forward.28} parent=11 // pred_check_branch
        %134 = sbr.rel (%p132) target = $region16
      $region15: #{forward.28} parent=11 // pred_region
        _
      $region16: #{forward.28} parent=11 // pred_fallthru
        _
      // Predicated region
      $region17: #{forward.28} parent=11 // pred_check
        %p135 = pneg %p89
      $region18: #{forward.28} parent=11 // pred_check_branch
        %137 = sbr.rel (%p135) target = $region20
      $region19: #{forward.28} parent=11 // pred_region
        _
      $region20: #{forward.28} parent=11 // pred_fallthru
        _
    $region12: #{forward.28} parent=5 // pred_fallthru
      _
    %p138 = scmp.lt.s32.totalorder %s9, 4
    // Predicated region
    $region21: #{forward.28} parent=5 // pred_check
      %p139 = pneg %p138
    $region22: #{forward.28} parent=5 // pred_check_branch
      %141 = sbr.rel (%p139) target = $region24
    $region23: #{forward.28} parent=5 // pred_region
      // Predicated region
      $region25: #{forward.28} parent=23 // pred_check
        %p142 = pneg %p41
      $region26: #{forward.28} parent=23 // pred_check_branch
        %144 = sbr.rel (%p142) target = $region28
      $region27: #{forward.28} parent=23 // pred_region
        %p145 = scmp.lt.s32.totalorder %s16, 3
        %s146 = scalar_select %p145, %s16, 3
        %s147 = smul.addr %s146, 4
        %s148 = smul.addr %s147, 4
        %s149 = scalar_lea.vmem %s0, %s148
      $region28: #{forward.28} parent=23 // pred_fallthru
        _
    $region24: #{forward.28} parent=5 // pred_fallthru
      _
    %p150 = scmp.le.s32.totalorder 1, %s9
    %p151 = scmp.lt.s32.totalorder %s9, 5
    %p152 = pnand %p150, %p151
    %p153 = pneg %p152
    // Predicated region
    $region29: #{forward.28} parent=5 // pred_check
      _
    $region30: #{forward.28} parent=5 // pred_check_branch
      %155 = sbr.rel (%p152) target = $region32
    $region31: #{forward.28} parent=5 // pred_region
      %s156 = ssub.s32 %s9, 1
      %p157 = scmp.lt.s32.totalorder %s18, 3
      %s158 = scalar_select %p157, %s18, 3
      %s159 = smul.addr %s158, 4
      %s160 = smul.addr %s159, 4
      %s161 = scalar_lea.vmem %s0, %s160
      %p162 = pneg %p47
      %p163 = pneg %p44
      %p164 = pneg %p68
      %p165 = pneg %p65
      %p166 = pneg %p89
      %p167 = pneg %p86
      %p168 = pneg %p117
      %p169 = pneg %p114
      %p170 = scmp.lt.s32.totalorder %s18, 3
      %s171 = scalar_select %p170, %s18, 3
      %p172 = scmp.lt.s32.totalorder %s19, 0
      %s173 = scalar_select %p172, %s19, 0
      %s174 = smul.addr %s171, 16
      %s175 = sadd.s32 %s173, %s174
      %s176 = smul.addr %s175, 8
      %s177 = scalar_lea.vmem %s3, %s176
      %p178 = scmp.lt.s32.totalorder %s18, 3
      %s179 = scalar_select %p178, %s18, 3
      %s180 = smul.addr %s179, 4
      %s181 = smul.addr %s180, 4
      %s182 = scalar_lea.vmem %s0, %s181
      %p183 = scmp.lt.s32.totalorder %s18, 3
      %s184 = scalar_select %p183, %s18, 3
      %p185 = scmp.lt.s32.totalorder %s19, 0
      %s186 = scalar_select %p185, %s19, 0
      %s187 = smul.addr %s184, 16
      %s188 = sadd.s32 %s186, %s187
      %s189 = smul.addr %s188, 8
      %s190 = scalar_lea.vmem %s3, %s189
      %v192 = vld [vmem:[%s182] sm:$0xf]
      %v193 = vld [vmem:[%s182 + $0x4] sm:$0xf]
      %v194 = vld [vmem:[%s182 + $0x8] sm:$0xf]
      %v195 = vld [vmem:[%s182 + $0xc] sm:$0xf]
      %v196 = vunpack.c.l.bf16 %v192
      %v197 = vunpack.c.l.bf16 %v193
      %v198 = vunpack.c.l.bf16 %v194
      %v199 = vunpack.c.l.bf16 %v195
      %vm200 = vcmask 64512
      %201 = vst.msk [vmem:[#allocation2] sm:$0xff] %vm200, %v196
      %202 = vst.msk [vmem:[#allocation2 + $0x8] sm:$0xff] %vm200, %v197
      %203 = vst.msk [vmem:[#allocation2 + $0x10] sm:$0xff] %vm200, %v198
      %204 = vst.msk [vmem:[#allocation2 + $0x18] sm:$0xff] %vm200, %v199
      %v205 = vld [vmem:[%s1] sm:$0xf]
      %v206 = vld [vmem:[%s1 + $0x4] sm:$0xf]
      %v207 = vld [vmem:[%s1 + $0x8] sm:$0xf]
      %v208 = vld [vmem:[%s1 + $0xc] sm:$0xf]
      %v209 = vld [vmem:[%s1 + $0x10] sm:$0xf]
      %v210 = vld [vmem:[%s1 + $0x14] sm:$0xf]
      %v211 = vld [vmem:[%s1 + $0x18] sm:$0xf]
      %v212 = vld [vmem:[%s1 + $0x1c] sm:$0xf]
      %v213 = vld [vmem:[%s1 + $0x20] sm:$0xf]
      %v214 = vld [vmem:[%s1 + $0x24] sm:$0xf]
      %v215 = vld [vmem:[%s1 + $0x28] sm:$0xf]
      %v216 = vld [vmem:[%s1 + $0x2c] sm:$0xf]
      %v217 = vld [vmem:[%s1 + $0x30] sm:$0xf]
      %v218 = vld [vmem:[%s1 + $0x34] sm:$0xf]
      %v219 = vld [vmem:[%s1 + $0x38] sm:$0xf]
      %v220 = vld [vmem:[%s1 + $0x3c] sm:$0xf]
      %v221 = vld [vmem:[#allocation2] sm:$0xff]
      %v222 = vld [vmem:[#allocation2 + $0x8] sm:$0xff]
      %v223 = vld [vmem:[#allocation2 + $0x10] sm:$0xff]
      %v224 = vld [vmem:[#allocation2 + $0x18] sm:$0xff]
      %v225 = vpack.c.bf16 %v222, %v221
      %v226 = vpack.c.bf16 %v224, %v223
      %v227 = vld [vmem:[%s2] sm:$0xff]
      %v228 = vld [vmem:[%s2 + $0x8] sm:$0xff]
      %v229 = vld [vmem:[%s2 + $0x10] sm:$0xff]
      %v230 = vld [vmem:[%s2 + $0x18] sm:$0xff]
      %v231 = vld [vmem:[%s2 + $0x20] sm:$0xff]
      %v232 = vld [vmem:[%s2 + $0x28] sm:$0xff]
      %v233 = vld [vmem:[%s2 + $0x30] sm:$0xff]
      %v234 = vld [vmem:[%s2 + $0x38] sm:$0xff]
      %v235 = vld [vmem:[%s2 + $0x40] sm:$0xff]
      %v236 = vld [vmem:[%s2 + $0x48] sm:$0xff]
      %v237 = vld [vmem:[%s2 + $0x50] sm:$0xff]
      %v238 = vld [vmem:[%s2 + $0x58] sm:$0xff]
      %v239 = vld [vmem:[%s2 + $0x60] sm:$0xff]
      %v240 = vld [vmem:[%s2 + $0x68] sm:$0xff]
      %v241 = vld [vmem:[%s2 + $0x70] sm:$0xff]
      %v242 = vld [vmem:[%s2 + $0x78] sm:$0xff]
      %244 = vset.pattern.permute.xlu0 0
      %245 = vperm.xlu0 %244, %v227
      %v246 = vpop.permute.xlu0 %245
      %249 = vset.pattern.permute.xlu0 0
      %250 = vperm.xlu0 %249, %v228
      %v251 = vpop.permute.xlu0 %250
      %254 = vset.pattern.permute.xlu0 0
      %255 = vperm.xlu0 %254, %v229
      %v256 = vpop.permute.xlu0 %255
      %259 = vset.pattern.permute.xlu0 0
      %260 = vperm.xlu0 %259, %v230
      %v261 = vpop.permute.xlu0 %260
      %264 = vset.pattern.permute.xlu0 0
      %265 = vperm.xlu0 %264, %v231
      %v266 = vpop.permute.xlu0 %265
      %269 = vset.pattern.permute.xlu0 0
      %270 = vperm.xlu0 %269, %v232
      %v271 = vpop.permute.xlu0 %270
      %274 = vset.pattern.permute.xlu0 0
      %275 = vperm.xlu0 %274, %v233
      %v276 = vpop.permute.xlu0 %275
      %279 = vset.pattern.permute.xlu0 0
      %280 = vperm.xlu0 %279, %v234
      %v281 = vpop.permute.xlu0 %280
      %284 = vset.pattern.permute.xlu0 0
      %285 = vperm.xlu0 %284, %v235
      %v286 = vpop.permute.xlu0 %285
      %289 = vset.pattern.permute.xlu0 0
      %290 = vperm.xlu0 %289, %v236
      %v291 = vpop.permute.xlu0 %290
      %294 = vset.pattern.permute.xlu0 0
      %295 = vperm.xlu0 %294, %v237
      %v296 = vpop.permute.xlu0 %295
      %299 = vset.pattern.permute.xlu0 0
      %300 = vperm.xlu0 %299, %v238
      %v301 = vpop.permute.xlu0 %300
      %304 = vset.pattern.permute.xlu0 0
      %305 = vperm.xlu0 %304, %v239
      %v306 = vpop.permute.xlu0 %305
      %309 = vset.pattern.permute.xlu0 0
      %310 = vperm.xlu0 %309, %v240
      %v311 = vpop.permute.xlu0 %310
      %314 = vset.pattern.permute.xlu0 0
      %315 = vperm.xlu0 %314, %v241
      %v316 = vpop.permute.xlu0 %315
      %319 = vset.pattern.permute.xlu0 0
      %320 = vperm.xlu0 %319, %v242
      %v321 = vpop.permute.xlu0 %320
      %v339 = vunpack.c.l.b16 %v205
      %v340 = vunpack.c.l.b16 %v206
      %v341 = vunpack.c.l.b16 %v207
      %v342 = vunpack.c.l.b16 %v208
      %v343 = vunpack.c.l.b16 %v209
      %v344 = vunpack.c.l.b16 %v210
      %v345 = vunpack.c.l.b16 %v211
      %v346 = vunpack.c.l.b16 %v212
      %v347 = vunpack.c.l.b16 %v213
      %v348 = vunpack.c.l.b16 %v214
      %v349 = vunpack.c.l.b16 %v215
      %v350 = vunpack.c.l.b16 %v216
      %v351 = vunpack.c.l.b16 %v217
      %v352 = vunpack.c.l.b16 %v218
      %v353 = vunpack.c.l.b16 %v219
      %v354 = vunpack.c.l.b16 %v220
      %v355 = vpack.c.b16 %v340, %v339
      %v356 = vpack.c.b16 %v342, %v341
      %v357 = vpack.c.b16 %v344, %v343
      %v358 = vpack.c.b16 %v346, %v345
      %v359 = vpack.c.b16 %v348, %v347
      %v360 = vpack.c.b16 %v350, %v349
      %v361 = vpack.c.b16 %v352, %v351
      %v362 = vpack.c.b16 %v354, %v353
      %vm363 = vcmask 261120
      %v365 = vsel %vm363, %v355, 0
      %v368 = vsel %vm363, %v356, 0
      %v371 = vsel %vm363, %v357, 0
      %v374 = vsel %vm363, %v358, 0
      %v377 = vsel %vm363, %v359, 0
      %v380 = vsel %vm363, %v360, 0
      %v383 = vsel %vm363, %v361, 0
      %v386 = vsel %vm363, %v362, 0
      %388 = vmatpush.bf16.msra.mxu0 0
      %389 = vmatpush.bf16.msra.mxu0 0
      %390 = vmatpush.bf16.msra.mxu0 0
      %391 = vmatpush.bf16.msra.mxu0 0
      %392 = vmatpush.bf16.msra.mxu0 0
      %393 = vmatpush.bf16.msra.mxu0 0
      %394 = vmatpush.bf16.msra.mxu0 %v226
      %395 = vmatpush.bf16.msra.mxu0 %v225
      %396 = vmatmul.bf16.gmra.mxu0 %v365
      %v397 = vpop.f32.mrf.mxu0
      %v398 = vadd.f32 %v246, %v397
      %v399 = vpop.f32.mrf.mxu0
      %v400 = vadd.f32 %v251, %v399
      %401 = vmatmul.bf16.gmra.mxu0 %v368
      %v402 = vpop.f32.mrf.mxu0
      %v403 = vadd.f32 %v256, %v402
      %v404 = vpop.f32.mrf.mxu0
      %v405 = vadd.f32 %v261, %v404
      %406 = vmatmul.bf16.gmra.mxu0 %v371
      %v407 = vpop.f32.mrf.mxu0
      %v408 = vadd.f32 %v266, %v407
      %v409 = vpop.f32.mrf.mxu0
      %v410 = vadd.f32 %v271, %v409
      %411 = vmatmul.bf16.gmra.mxu0 %v374
      %v412 = vpop.f32.mrf.mxu0
      %v413 = vadd.f32 %v276, %v412
      %v414 = vpop.f32.mrf.mxu0
      %v415 = vadd.f32 %v281, %v414
      %416 = vmatmul.bf16.gmra.mxu0 %v377
      %v417 = vpop.f32.mrf.mxu0
      %v418 = vadd.f32 %v286, %v417
      %v419 = vpop.f32.mrf.mxu0
      %v420 = vadd.f32 %v291, %v419
      %421 = vmatmul.bf16.gmra.mxu0 %v380
      %v422 = vpop.f32.mrf.mxu0
      %v423 = vadd.f32 %v296, %v422
      %v424 = vpop.f32.mrf.mxu0
      %v425 = vadd.f32 %v301, %v424
      %426 = vmatmul.bf16.gmra.mxu0 %v383
      %v427 = vpop.f32.mrf.mxu0
      %v428 = vadd.f32 %v306, %v427
      %v429 = vpop.f32.mrf.mxu0
      %v430 = vadd.f32 %v311, %v429
      %431 = vmatmul.bf16.gmra.mxu0 %v386
      %v432 = vpop.f32.mrf.mxu0
      %v433 = vadd.f32 %v316, %v432
      %v434 = vpop.f32.mrf.mxu0
      %v435 = vadd.f32 %v321, %v434
      %436 = vdwg.mxu0
      %437 = vst.msk [vmem:[%s190] sm:$0xff] %vm200, %v398
      %438 = vst.msk [vmem:[%s190 + $0x8] sm:$0xff] %vm200, %v400
      %439 = vst.msk [vmem:[%s190 + $0x10] sm:$0xff] %vm200, %v403
      %440 = vst.msk [vmem:[%s190 + $0x18] sm:$0xff] %vm200, %v405
      %441 = vst.msk [vmem:[%s190 + $0x20] sm:$0xff] %vm200, %v408
      %442 = vst.msk [vmem:[%s190 + $0x28] sm:$0xff] %vm200, %v410
      %443 = vst.msk [vmem:[%s190 + $0x30] sm:$0xff] %vm200, %v413
      %444 = vst.msk [vmem:[%s190 + $0x38] sm:$0xff] %vm200, %v415
      %445 = vst.msk [vmem:[%s190 + $0x40] sm:$0xff] %vm200, %v418
      %446 = vst.msk [vmem:[%s190 + $0x48] sm:$0xff] %vm200, %v420
      %447 = vst.msk [vmem:[%s190 + $0x50] sm:$0xff] %vm200, %v423
      %448 = vst.msk [vmem:[%s190 + $0x58] sm:$0xff] %vm200, %v425
      %449 = vst.msk [vmem:[%s190 + $0x60] sm:$0xff] %vm200, %v428
      %450 = vst.msk [vmem:[%s190 + $0x68] sm:$0xff] %vm200, %v430
      %451 = vst.msk [vmem:[%s190 + $0x70] sm:$0xff] %vm200, %v433
      %452 = vst.msk [vmem:[%s190 + $0x78] sm:$0xff] %vm200, %v435
      %p453 = scmp.lt.s32.totalorder %s18, 3
      %s454 = scalar_select %p453, %s18, 3
      %p455 = scmp.lt.s32.totalorder %s19, 0
      %s456 = scalar_select %p455, %s19, 0
      %s457 = smul.addr %s454, 16
      %s458 = sadd.s32 %s456, %s457
      %s459 = smul.addr %s458, 8
      %s460 = scalar_lea.vmem %s3, %s459
      // Predicated region
      $region33: #{forward.28} parent=31 // pred_check
        %p461 = pneg %p114
      $region34: #{forward.28} parent=31 // pred_check_branch
        %463 = sbr.rel (%p461) target = $region36
      $region35: #{forward.28} parent=31 // pred_region
        _
      $region36: #{forward.28} parent=31 // pred_fallthru
        _
    $region32: #{forward.28} parent=5 // pred_fallthru
      _
    %p464 = scmp.le.s32.totalorder 2, %s9
    // Predicated region
    $region37: #{forward.28} parent=5 // pred_check
      %p465 = pneg %p464
    $region38: #{forward.28} parent=5 // pred_check_branch
      %467 = sbr.rel (%p465) target = $region40
    $region39: #{forward.28} parent=5 // pred_region
      %s468 = ssub.s32 %s9, 2
      // Predicated region
      $region41: #{forward.28} parent=39 // pred_check
        %p469 = pneg %p120
      $region42: #{forward.28} parent=39 // pred_check_branch
        %471 = sbr.rel (%p469) target = $region44
      $region43: #{forward.28} parent=39 // pred_region
        %p472 = scmp.lt.s32.totalorder %s20, 3
        %s473 = scalar_select %p472, %s20, 3
        %p474 = scmp.lt.s32.totalorder %s21, 0
        %s475 = scalar_select %p474, %s21, 0
        %s476 = smul.addr %s473, 16
        %s477 = sadd.s32 %s475, %s476
        %s478 = smul.addr %s477, 8
        %s479 = scalar_lea.vmem %s3, %s478
      $region44: #{forward.28} parent=39 // pred_fallthru
        _
    $region40: #{forward.28} parent=5 // pred_fallthru
      _
  $region6: #{forward.28} parent=0 // loop_footer
    %s13 = sadd.s32 1, %s9
  $region7: #{forward.28} parent=0 // loop_footer_branch
    %8 = sbr.rel target = $region3
  $region8: #{forward.28} parent=0 // loop_exit
    _

// kernel: forward.29
$region0: #{forward.29}
  #allocation0 [shape = 'u32[]', space=smem, size = 0x4, offset = 0x4, fixed_abs, tag = 'smem constant byte address 0x4 - core index']
  #allocation1 [shape = 'u32[72,128]{1,0:T(1,128)}', space=vmem, size = 0x9000, scoped, tag = 'internal scratch']
  #allocation2 [shape = 'f32[4,32]{1,0:T(4,128)}', space=vmem, size = 0x800, scoped, tag = 'scratch operand']
  #allocation3 [shape = 'f32[4,32]{1,0:T(4,128)}', space=vmem, size = 0x800, scoped, tag = 'scratch operand']
  %s0 = inlined_call_operand.vmem [shape: f32[8,4,128], index: 0, kind: input, shape index: {}]
  %s1 = inlined_call_operand.vmem [shape: f32[32,128], index: 1, kind: input, shape index: {}]
  %s2 = inlined_call_operand.vmem [shape: f32[8,4,32], index: 2, kind: output, shape index: {}]
  %s3 = sld [smem:[#allocation0]]
  $region22: #{forward.29} parent=0
    _
  %s5 = ssub.s32 1, %s3
  %s6 = scalar_select 0, %s5, %s3
  // Predicated region
  $region2: #{forward.29} parent=0 // pred_check
    _
  $region3: #{forward.29} parent=0 // pred_check_branch
    %8 = sbr.rel (0) target = $region5
  $region4: #{forward.29} parent=0 // pred_region
    _
  $region5: #{forward.29} parent=0 // pred_fallthru
    _
  // Predicated region
  $region6: #{forward.29} parent=0 // pred_check
    _
  $region7: #{forward.29} parent=0 // pred_check_branch
    %10 = sbr.rel (0) target = $region9
  $region8: #{forward.29} parent=0 // pred_region
    _
  $region9: #{forward.29} parent=0 // pred_fallthru
    _
  %p11 = scmp.eq.s32.totalorder 0, 0
  // Predicated region
  $region10: #{forward.29} parent=0 // pred_check
    %p12 = pneg %p11
  $region11: #{forward.29} parent=0 // pred_check_branch
    %14 = sbr.rel (%p12) target = $region13
  $region12: #{forward.29} parent=0 // pred_region
    %vm15 = vcmask 257024
    %16 = vst.msk [vmem:[#allocation2] sm:$0xf] %vm15, 0.0
    %17 = vst.msk [vmem:[#allocation3] sm:$0xf] %vm15, 0.0
  $region13: #{forward.29} parent=0 // pred_fallthru
    _
  %v18 = vld [vmem:[%s1] sm:$0xff]
  %v19 = vld [vmem:[%s1 + $0x8] sm:$0xff]
  %v20 = vld [vmem:[%s1 + $0x10] sm:$0xff]
  %v21 = vld [vmem:[%s1 + $0x18] sm:$0xff]
  %v22 = vld [vmem:[#allocation2] sm:$0xf]
  %v23 = vld [vmem:[#allocation3] sm:$0xf]
  %v24 = vld [vmem:[%s0] sm:$0xf]
  %vm25 = vcmask 261120
  %v27 = vsel %vm25, %v22, 0
  %29 = vmatpush.msra.mxu0 0.0
  %30 = vmatpush.msra.mxu0 0.0
  %31 = vmatpush.msra.mxu0 0.0
  %32 = vmatpush.msra.mxu0 0.0
  %33 = vmatpush.msra.mxu0 0.0
  %34 = vmatpush.msra.mxu0 0.0
  %35 = vmatpush.msra.mxu0 0.0
  %36 = vmatpush.msra.mxu0 0.0
  %37 = vmatpush.msra.mxu0 0.0
  %38 = vmatpush.msra.mxu0 0.0
  %39 = vmatpush.msra.mxu0 0.0
  %40 = vmatpush.msra.mxu0 0.0
  %41 = vmatpush.msra.mxu0 %v21
  %42 = vmatpush.msra.mxu0 %v20
  %43 = vmatpush.msra.mxu0 %v19
  %44 = vmatpush.msra.mxu0 %v18
  %45 = vmatmul.f32.gmra.mxu0 %v27
  %v46 = vpop.f32.mrf.mxu0
  %v47 = vadd.f32 0.0, %v46
  %48 = vdwg.mxu0
  %v49 = vadd.f32 %v24, %v47
  %v50 = vxor.u32 %v49, 2147483648
  %v51 = vmul.f32 %v50, 1.442695
  %v52 = vpow.pop %v51
  %v53 = vadd.f32 %v52, 1.0
  %v54 = vrcp.pop %v53
  %v55 = vmul.f32 %v53, %v54
  %v56 = vsub.f32 1.0, %v55
  %v57 = vmul.f32 %v54, %v56
  %v58 = vadd.f32 %v54, %v57
  %vm59 = vweird.f32 %v53
  %vm60 = vweird.f32 %v54
  %vm61 = vmor %vm59, %vm60
  %v62 = vsel %vm61, %v54, %v58
  %v63 = vand.u32 2147483647, %v53
  %vm64 = vcmp.eq.f32.partialorder %v63, 8.507059e+37
  %v65 = vand.u32 %v53, 2147483648
  %v66 = vor.u32 1.1754944e-38, %v65
  %v67 = vsel %vm64, %v66, %v62
  %v68 = vmul.f32 1.0, %v67
  %v69 = vtanh.pop %v49
  %71 = vrot.lane.b32.xlu0 %v23, 32
  %v72 = vpop.permute.xlu0 %71
  %v74 = vmul.f32 %v68, %v72
  %76 = vrot.lane.b32.xlu0 %v69, 64
  %v77 = vpop.permute.xlu0 %76
  %v79 = vmul.f32 %v68, %v77
  %81 = vrot.lane.b32.xlu0 %v79, 32
  %v82 = vpop.permute.xlu0 %81
  %v84 = vadd.f32 %v74, %v82
  %v85 = vtanh.pop %v84
  %87 = vrot.lane.b32.xlu0 %v85, 64
  %v88 = vpop.permute.xlu0 %87
  %v90 = vmul.f32 %v68, %v88
  %92 = vrot.lane.b32.xlu0 %v90, 32
  %v93 = vpop.permute.xlu0 %92
  %vm95 = vcmask 257024
  %96 = vst.msk [vmem:[%s2] sm:$0xf] %vm95, %v93
  %s97 = scalar_lea.vmem %s0, 4
  %v98 = vld [vmem:[%s97] sm:$0xf]
  %v99 = vsel %vm25, %v93, 0
  %101 = vmatpush.msra.mxu0 0.0
  %102 = vmatpush.msra.mxu0 0.0
  %103 = vmatpush.msra.mxu0 0.0
  %104 = vmatpush.msra.mxu0 0.0
  %105 = vmatpush.msra.mxu0 0.0
  %106 = vmatpush.msra.mxu0 0.0
  %107 = vmatpush.msra.mxu0 0.0
  %108 = vmatpush.msra.mxu0 0.0
  %109 = vmatpush.msra.mxu0 0.0
  %110 = vmatpush.msra.mxu0 0.0
  %111 = vmatpush.msra.mxu0 0.0
  %112 = vmatpush.msra.mxu0 0.0
  %113 = vmatpush.msra.mxu0 %v21
  %114 = vmatpush.msra.mxu0 %v20
  %115 = vmatpush.msra.mxu0 %v19
  %116 = vmatpush.msra.mxu0 %v18
  %117 = vmatmul.f32.gmra.mxu0 %v99
  %v118 = vpop.f32.mrf.mxu0
  %v119 = vadd.f32 0.0, %v118
  %120 = vdwg.mxu0
  %v121 = vadd.f32 %v98, %v119
  %v122 = vxor.u32 %v121, 2147483648
  %v123 = vmul.f32 %v122, 1.442695
  %v124 = vpow.pop %v123
  %v125 = vadd.f32 %v124, 1.0
  %v126 = vrcp.pop %v125
  %v127 = vmul.f32 %v125, %v126
  %v128 = vsub.f32 1.0, %v127
  %v129 = vmul.f32 %v126, %v128
  %v130 = vadd.f32 %v126, %v129
  %vm131 = vweird.f32 %v125
  %vm132 = vweird.f32 %v126
  %vm133 = vmor %vm131, %vm132
  %v134 = vsel %vm133, %v126, %v130
  %v135 = vand.u32 2147483647, %v125
  %vm136 = vcmp.eq.f32.partialorder %v135, 8.507059e+37
  %v137 = vand.u32 %v125, 2147483648
  %v138 = vor.u32 1.1754944e-38, %v137
  %v139 = vsel %vm136, %v138, %v134
  %v140 = vmul.f32 1.0, %v139
  %v141 = vtanh.pop %v121
  %v142 = vmul.f32 %v140, %v84
  %144 = vrot.lane.b32.xlu0 %v141, 64
  %v145 = vpop.permute.xlu0 %144
  %v147 = vmul.f32 %v140, %v145
  %149 = vrot.lane.b32.xlu0 %v147, 32
  %v150 = vpop.permute.xlu0 %149
  %v152 = vadd.f32 %v142, %v150
  %v153 = vtanh.pop %v152
  %155 = vrot.lane.b32.xlu0 %v153, 64
  %v156 = vpop.permute.xlu0 %155
  %v158 = vmul.f32 %v140, %v156
  %160 = vrot.lane.b32.xlu0 %v158, 32
  %v161 = vpop.permute.xlu0 %160
  %s163 = scalar_lea.vmem %s2, 4
  %164 = vst.msk [vmem:[%s163] sm:$0xf] %vm95, %v161
  %s165 = scalar_lea.vmem %s0, 8
  %v166 = vld [vmem:[%s165] sm:$0xf]
  %v167 = vsel %vm25, %v161, 0
  %169 = vmatpush.msra.mxu0 0.0
  %170 = vmatpush.msra.mxu0 0.0
  %171 = vmatpush.msra.mxu0 0.0
  %172 = vmatpush.msra.mxu0 0.0
  %173 = vmatpush.msra.mxu0 0.0
  %174 = vmatpush.msra.mxu0 0.0
  %175 = vmatpush.msra.mxu0 0.0
  %176 = vmatpush.msra.mxu0 0.0
  %177 = vmatpush.msra.mxu0 0.0
  %178 = vmatpush.msra.mxu0 0.0
  %179 = vmatpush.msra.mxu0 0.0
  %180 = vmatpush.msra.mxu0 0.0
  %181 = vmatpush.msra.mxu0 %v21
  %182 = vmatpush.msra.mxu0 %v20
  %183 = vmatpush.msra.mxu0 %v19
  %184 = vmatpush.msra.mxu0 %v18
  %185 = vmatmul.f32.gmra.mxu0 %v167
  %v186 = vpop.f32.mrf.mxu0
  %v187 = vadd.f32 0.0, %v186
  %188 = vdwg.mxu0
  %v189 = vadd.f32 %v166, %v187
  %v190 = vxor.u32 %v189, 2147483648
  %v191 = vmul.f32 %v190, 1.442695
  %v192 = vpow.pop %v191
  %v193 = vadd.f32 %v192, 1.0
  %v194 = vrcp.pop %v193
  %v195 = vmul.f32 %v193, %v194
  %v196 = vsub.f32 1.0, %v195
  %v197 = vmul.f32 %v194, %v196
  %v198 = vadd.f32 %v194, %v197
  %vm199 = vweird.f32 %v193
  %vm200 = vweird.f32 %v194
  %vm201 = vmor %vm199, %vm200
  %v202 = vsel %vm201, %v194, %v198
  %v203 = vand.u32 2147483647, %v193
  %vm204 = vcmp.eq.f32.partialorder %v203, 8.507059e+37
  %v205 = vand.u32 %v193, 2147483648
  %v206 = vor.u32 1.1754944e-38, %v205
  %v207 = vsel %vm204, %v206, %v202
  %v208 = vmul.f32 1.0, %v207
  %v209 = vtanh.pop %v189
  %v210 = vmul.f32 %v208, %v152
  %212 = vrot.lane.b32.xlu0 %v209, 64
  %v213 = vpop.permute.xlu0 %212
  %v215 = vmul.f32 %v208, %v213
  %217 = vrot.lane.b32.xlu0 %v215, 32
  %v218 = vpop.permute.xlu0 %217
  %v220 = vadd.f32 %v210, %v218
  %v221 = vtanh.pop %v220
  %223 = vrot.lane.b32.xlu0 %v221, 64
  %v224 = vpop.permute.xlu0 %223
  %v226 = vmul.f32 %v208, %v224
  %228 = vrot.lane.b32.xlu0 %v226, 32
  %v229 = vpop.permute.xlu0 %228
  %s231 = scalar_lea.vmem %s2, 8
  %232 = vst.msk [vmem:[%s231] sm:$0xf] %vm95, %v229
  %s233 = scalar_lea.vmem %s0, 12
  %v234 = vld [vmem:[%s233] sm:$0xf]
  %v235 = vsel %vm25, %v229, 0
  %237 = vmatpush.msra.mxu0 0.0
  %238 = vmatpush.msra.mxu0 0.0
  %239 = vmatpush.msra.mxu0 0.0
  %240 = vmatpush.msra.mxu0 0.0
  %241 = vmatpush.msra.mxu0 0.0
  %242 = vmatpush.msra.mxu0 0.0
  %243 = vmatpush.msra.mxu0 0.0
  %244 = vmatpush.msra.mxu0 0.0
  %245 = vmatpush.msra.mxu0 0.0
  %246 = vmatpush.msra.mxu0 0.0
  %247 = vmatpush.msra.mxu0 0.0
  %248 = vmatpush.msra.mxu0 0.0
  %249 = vmatpush.msra.mxu0 %v21
  %250 = vmatpush.msra.mxu0 %v20
  %251 = vmatpush.msra.mxu0 %v19
  %252 = vmatpush.msra.mxu0 %v18
  %253 = vmatmul.f32.gmra.mxu0 %v235
  %v254 = vpop.f32.mrf.mxu0
  %v255 = vadd.f32 0.0, %v254
  %256 = vdwg.mxu0
  %v257 = vadd.f32 %v234, %v255
  %v258 = vxor.u32 %v257, 2147483648
  %v259 = vmul.f32 %v258, 1.442695
  %v260 = vpow.pop %v259
  %v261 = vadd.f32 %v260, 1.0
  %v262 = vrcp.pop %v261
  %v263 = vmul.f32 %v261, %v262
  %v264 = vsub.f32 1.0, %v263
  %v265 = vmul.f32 %v262, %v264
  %v266 = vadd.f32 %v262, %v265
  %vm267 = vweird.f32 %v261
  %vm268 = vweird.f32 %v262
  %vm269 = vmor %vm267, %vm268
  %v270 = vsel %vm269, %v262, %v266
  %v271 = vand.u32 2147483647, %v261
  %vm272 = vcmp.eq.f32.partialorder %v271, 8.507059e+37
  %v273 = vand.u32 %v261, 2147483648
  %v274 = vor.u32 1.1754944e-38, %v273
  %v275 = vsel %vm272, %v274, %v270
  %v276 = vmul.f32 1.0, %v275
  %v277 = vtanh.pop %v257
  %v278 = vmul.f32 %v276, %v220
  %280 = vrot.lane.b32.xlu0 %v277, 64
  %v281 = vpop.permute.xlu0 %280
  %v283 = vmul.f32 %v276, %v281
  %285 = vrot.lane.b32.xlu0 %v283, 32
  %v286 = vpop.permute.xlu0 %285
  %v288 = vadd.f32 %v278, %v286
  %v289 = vtanh.pop %v288
  %291 = vrot.lane.b32.xlu0 %v289, 64
  %v292 = vpop.permute.xlu0 %291
  %v294 = vmul.f32 %v276, %v292
  %296 = vrot.lane.b32.xlu0 %v294, 32
  %v297 = vpop.permute.xlu0 %296
  %s299 = scalar_lea.vmem %s2, 12
  %300 = vst.msk [vmem:[%s299] sm:$0xf] %vm95, %v297
  %s301 = scalar_lea.vmem %s0, 16
  %v302 = vld [vmem:[%s301] sm:$0xf]
  %v303 = vsel %vm25, %v297, 0
  %305 = vmatpush.msra.mxu0 0.0
  %306 = vmatpush.msra.mxu0 0.0
  %307 = vmatpush.msra.mxu0 0.0
  %308 = vmatpush.msra.mxu0 0.0
  %309 = vmatpush.msra.mxu0 0.0
  %310 = vmatpush.msra.mxu0 0.0
  %311 = vmatpush.msra.mxu0 0.0
  %312 = vmatpush.msra.mxu0 0.0
  %313 = vmatpush.msra.mxu0 0.0
  %314 = vmatpush.msra.mxu0 0.0
  %315 = vmatpush.msra.mxu0 0.0
  %316 = vmatpush.msra.mxu0 0.0
  %317 = vmatpush.msra.mxu0 %v21
  %318 = vmatpush.msra.mxu0 %v20
  %319 = vmatpush.msra.mxu0 %v19
  %320 = vmatpush.msra.mxu0 %v18
  %321 = vmatmul.f32.gmra.mxu0 %v303
  %v322 = vpop.f32.mrf.mxu0
  %v323 = vadd.f32 0.0, %v322
  %324 = vdwg.mxu0
  %v325 = vadd.f32 %v302, %v323
  %v326 = vxor.u32 %v325, 2147483648
  %v327 = vmul.f32 %v326, 1.442695
  %v328 = vpow.pop %v327
  %v329 = vadd.f32 %v328, 1.0
  %v330 = vrcp.pop %v329
  %v331 = vmul.f32 %v329, %v330
  %v332 = vsub.f32 1.0, %v331
  %v333 = vmul.f32 %v330, %v332
  %v334 = vadd.f32 %v330, %v333
  %vm335 = vweird.f32 %v329
  %vm336 = vweird.f32 %v330
  %vm337 = vmor %vm335, %vm336
  %v338 = vsel %vm337, %v330, %v334
  %v339 = vand.u32 2147483647, %v329
  %vm340 = vcmp.eq.f32.partialorder %v339, 8.507059e+37
  %v341 = vand.u32 %v329, 2147483648
  %v342 = vor.u32 1.1754944e-38, %v341
  %v343 = vsel %vm340, %v342, %v338
  %v344 = vmul.f32 1.0, %v343
  %v345 = vtanh.pop %v325
  %v346 = vmul.f32 %v344, %v288
  %348 = vrot.lane.b32.xlu0 %v345, 64
  %v349 = vpop.permute.xlu0 %348
  %v351 = vmul.f32 %v344, %v349
  %353 = vrot.lane.b32.xlu0 %v351, 32
  %v354 = vpop.permute.xlu0 %353
  %v356 = vadd.f32 %v346, %v354
  %v357 = vtanh.pop %v356
  %359 = vrot.lane.b32.xlu0 %v357, 64
  %v360 = vpop.permute.xlu0 %359
  %v362 = vmul.f32 %v344, %v360
  %364 = vrot.lane.b32.xlu0 %v362, 32
  %v365 = vpop.permute.xlu0 %364
  %s367 = scalar_lea.vmem %s2, 16
  %368 = vst.msk [vmem:[%s367] sm:$0xf] %vm95, %v365
  %s369 = scalar_lea.vmem %s0, 20
  %v370 = vld [vmem:[%s369] sm:$0xf]
  %v371 = vsel %vm25, %v365, 0
  %373 = vmatpush.msra.mxu0 0.0
  %374 = vmatpush.msra.mxu0 0.0
  %375 = vmatpush.msra.mxu0 0.0
  %376 = vmatpush.msra.mxu0 0.0
  %377 = vmatpush.msra.mxu0 0.0
  %378 = vmatpush.msra.mxu0 0.0
  %379 = vmatpush.msra.mxu0 0.0
  %380 = vmatpush.msra.mxu0 0.0
  %381 = vmatpush.msra.mxu0 0.0
  %382 = vmatpush.msra.mxu0 0.0
  %383 = vmatpush.msra.mxu0 0.0
  %384 = vmatpush.msra.mxu0 0.0
  %385 = vmatpush.msra.mxu0 %v21
  %386 = vmatpush.msra.mxu0 %v20
  %387 = vmatpush.msra.mxu0 %v19
  %388 = vmatpush.msra.mxu0 %v18
  %389 = vmatmul.f32.gmra.mxu0 %v371
  %v390 = vpop.f32.mrf.mxu0
  %v391 = vadd.f32 0.0, %v390
  %392 = vdwg.mxu0
  %v393 = vadd.f32 %v370, %v391
  %v394 = vxor.u32 %v393, 2147483648
  %v395 = vmul.f32 %v394, 1.442695
  %v396 = vpow.pop %v395
  %v397 = vadd.f32 %v396, 1.0
  %v398 = vrcp.pop %v397
  %v399 = vmul.f32 %v397, %v398
  %v400 = vsub.f32 1.0, %v399
  %v401 = vmul.f32 %v398, %v400
  %v402 = vadd.f32 %v398, %v401
  %vm403 = vweird.f32 %v397
  %vm404 = vweird.f32 %v398
  %vm405 = vmor %vm403, %vm404
  %v406 = vsel %vm405, %v398, %v402
  %v407 = vand.u32 2147483647, %v397
  %vm408 = vcmp.eq.f32.partialorder %v407, 8.507059e+37
  %v409 = vand.u32 %v397, 2147483648
  %v410 = vor.u32 1.1754944e-38, %v409
  %v411 = vsel %vm408, %v410, %v406
  %v412 = vmul.f32 1.0, %v411
  %v413 = vtanh.pop %v393
  %v414 = vmul.f32 %v412, %v356
  %416 = vrot.lane.b32.xlu0 %v413, 64
  %v417 = vpop.permute.xlu0 %416
  %v419 = vmul.f32 %v412, %v417
  %421 = vrot.lane.b32.xlu0 %v419, 32
  %v422 = vpop.permute.xlu0 %421
  %v424 = vadd.f32 %v414, %v422
  %v425 = vtanh.pop %v424
  %427 = vrot.lane.b32.xlu0 %v425, 64
  %v428 = vpop.permute.xlu0 %427
  %v430 = vmul.f32 %v412, %v428
  %432 = vrot.lane.b32.xlu0 %v430, 32
  %v433 = vpop.permute.xlu0 %432
  %s435 = scalar_lea.vmem %s2, 20
  %436 = vst.msk [vmem:[%s435] sm:$0xf] %vm95, %v433
  %s437 = scalar_lea.vmem %s0, 24
  %v438 = vld [vmem:[%s437] sm:$0xf]
  %v439 = vsel %vm25, %v433, 0
  %441 = vmatpush.msra.mxu0 0.0
  %442 = vmatpush.msra.mxu0 0.0
  %443 = vmatpush.msra.mxu0 0.0
  %444 = vmatpush.msra.mxu0 0.0
  %445 = vmatpush.msra.mxu0 0.0
  %446 = vmatpush.msra.mxu0 0.0
  %447 = vmatpush.msra.mxu0 0.0
  %448 = vmatpush.msra.mxu0 0.0
  %449 = vmatpush.msra.mxu0 0.0
  %450 = vmatpush.msra.mxu0 0.0
  %451 = vmatpush.msra.mxu0 0.0
  %452 = vmatpush.msra.mxu0 0.0
  %453 = vmatpush.msra.mxu0 %v21
  %454 = vmatpush.msra.mxu0 %v20
  %455 = vmatpush.msra.mxu0 %v19
  %456 = vmatpush.msra.mxu0 %v18
  %457 = vmatmul.f32.gmra.mxu0 %v439
  %v458 = vpop.f32.mrf.mxu0
  %v459 = vadd.f32 0.0, %v458
  %460 = vdwg.mxu0
  %v461 = vadd.f32 %v438, %v459
  %v462 = vxor.u32 %v461, 2147483648
  %v463 = vmul.f32 %v462, 1.442695
  %v464 = vpow.pop %v463
  %v465 = vadd.f32 %v464, 1.0
  %v466 = vrcp.pop %v465
  %v467 = vmul.f32 %v465, %v466
  %v468 = vsub.f32 1.0, %v467
  %v469 = vmul.f32 %v466, %v468
  %v470 = vadd.f32 %v466, %v469
  %vm471 = vweird.f32 %v465
  %vm472 = vweird.f32 %v466
  %vm473 = vmor %vm471, %vm472
  %v474 = vsel %vm473, %v466, %v470
  %v475 = vand.u32 2147483647, %v465
  %vm476 = vcmp.eq.f32.partialorder %v475, 8.507059e+37
  %v477 = vand.u32 %v465, 2147483648
  %v478 = vor.u32 1.1754944e-38, %v477
  %v479 = vsel %vm476, %v478, %v474
  %v480 = vmul.f32 1.0, %v479
  %v481 = vtanh.pop %v461
  %v482 = vmul.f32 %v480, %v424
  %484 = vrot.lane.b32.xlu0 %v481, 64
  %v485 = vpop.permute.xlu0 %484
  %v487 = vmul.f32 %v480, %v485
  %489 = vrot.lane.b32.xlu0 %v487, 32
  %v490 = vpop.permute.xlu0 %489
  %v492 = vadd.f32 %v482, %v490
  %v493 = vtanh.pop %v492
  %495 = vrot.lane.b32.xlu0 %v493, 64
  %v496 = vpop.permute.xlu0 %495
  %v498 = vmul.f32 %v480, %v496
  %500 = vrot.lane.b32.xlu0 %v498, 32
  %v501 = vpop.permute.xlu0 %500
  %s503 = scalar_lea.vmem %s2, 24
  %504 = vst.msk [vmem:[%s503] sm:$0xf] %vm95, %v501
  %s505 = scalar_lea.vmem %s0, 28
  %v506 = vld [vmem:[%s505] sm:$0xf]
  %v507 = vsel %vm25, %v501, 0
  %509 = vmatpush.msra.mxu0 0.0
  %510 = vmatpush.msra.mxu0 0.0
  %511 = vmatpush.msra.mxu0 0.0
  %512 = vmatpush.msra.mxu0 0.0
  %513 = vmatpush.msra.mxu0 0.0
  %514 = vmatpush.msra.mxu0 0.0
  %515 = vmatpush.msra.mxu0 0.0
  %516 = vmatpush.msra.mxu0 0.0
  %517 = vmatpush.msra.mxu0 0.0
  %518 = vmatpush.msra.mxu0 0.0
  %519 = vmatpush.msra.mxu0 0.0
  %520 = vmatpush.msra.mxu0 0.0
  %521 = vmatpush.msra.mxu0 %v21
  %522 = vmatpush.msra.mxu0 %v20
  %523 = vmatpush.msra.mxu0 %v19
  %524 = vmatpush.msra.mxu0 %v18
  %525 = vmatmul.f32.gmra.mxu0 %v507
  %v526 = vpop.f32.mrf.mxu0
  %v527 = vadd.f32 0.0, %v526
  %528 = vdwg.mxu0
  %v529 = vadd.f32 %v506, %v527
  %v530 = vxor.u32 %v529, 2147483648
  %v531 = vmul.f32 %v530, 1.442695
  %v532 = vpow.pop %v531
  %v533 = vadd.f32 %v532, 1.0
  %v534 = vrcp.pop %v533
  %v535 = vmul.f32 %v533, %v534
  %v536 = vsub.f32 1.0, %v535
  %v537 = vmul.f32 %v534, %v536
  %v538 = vadd.f32 %v534, %v537
  %vm539 = vweird.f32 %v533
  %vm540 = vweird.f32 %v534
  %vm541 = vmor %vm539, %vm540
  %v542 = vsel %vm541, %v534, %v538
  %v543 = vand.u32 2147483647, %v533
  %vm544 = vcmp.eq.f32.partialorder %v543, 8.507059e+37
  %v545 = vand.u32 %v533, 2147483648
  %v546 = vor.u32 1.1754944e-38, %v545
  %v547 = vsel %vm544, %v546, %v542
  %v548 = vmul.f32 1.0, %v547
  %v549 = vtanh.pop %v529
  %v550 = vmul.f32 %v548, %v492
  %552 = vrot.lane.b32.xlu0 %v549, 64
  %v553 = vpop.permute.xlu0 %552
  %v555 = vmul.f32 %v548, %v553
  %557 = vrot.lane.b32.xlu0 %v555, 32
  %v558 = vpop.permute.xlu0 %557
  %v560 = vadd.f32 %v550, %v558
  %v561 = vtanh.pop %v560
  %563 = vrot.lane.b32.xlu0 %v561, 64
  %v564 = vpop.permute.xlu0 %563
  %v566 = vmul.f32 %v548, %v564
  %568 = vrot.lane.b32.xlu0 %v566, 32
  %v569 = vpop.permute.xlu0 %568
  %s571 = scalar_lea.vmem %s2, 28
  %572 = vst.msk [vmem:[%s571] sm:$0xf] %vm95, %v569
  %573 = vst.msk [vmem:[#allocation2] sm:$0xf] %vm95, %v569
  %575 = vrot.lane.b32.xlu0 %v560, 96
  %v576 = vpop.permute.xlu0 %575
  %578 = vst.msk [vmem:[#allocation3] sm:$0xf] %vm95, %v576
  // Predicated region
  $region14: #{forward.29} parent=0 // pred_check
    _
  $region15: #{forward.29} parent=0 // pred_check_branch
    %580 = sbr.rel (0) target = $region17
  $region16: #{forward.29} parent=0 // pred_region
    _
  $region17: #{forward.29} parent=0 // pred_fallthru
    _
  // Predicated region
  $region18: #{forward.29} parent=0 // pred_check
    _
  $region19: #{forward.29} parent=0 // pred_check_branch
    %582 = sbr.rel (0) target = $region21
  $region20: #{forward.29} parent=0 // pred_region
    _
  $region21: #{forward.29} parent=0 // pred_fallthru
    _

// kernel: tile.10
$region0: #{tile.10}
  #allocation0 [shape = 's32[1]{0}', space=sflag, size = 0x4, scoped, tag = 'scoped memory for tile.10']
  %s0 = inlined_call_operand.vmem [shape: f32[16], index: 0, kind: input, shape index: {}]
  %s1 = inlined_call_operand.vmem [shape: f32[4,16], index: 1, kind: output, shape index: {}]
  // Predicated region
  $region2: #{tile.10} parent=0 // pred_check
    _
  $region3: #{tile.10} parent=0 // pred_check_branch
    %3 = sbr.rel (0) target = $region5
  $region4: #{tile.10} parent=0 // pred_region
    _
  $region5: #{tile.10} parent=0 // pred_fallthru
    _
  %v4 = vld [vmem:[%s0] ss:$0 sm:$0xff]
  %5 = vst [vmem:[%s1] sm:$0xf] %v4

// kernel: tile.0
$region0: #{tile.0}
  %s0 = inlined_call_operand.vmem [shape: f32[4,16], index: 0, kind: input, shape index: {}]
  %s1 = inlined_call_operand.vmem [shape: f32[64,1], index: 1, kind: output, shape index: {}]
  $region1: #{tile.0} parent=0
    #allocation0 [shape = 'u8[4096]{0}', space=vmem, size = 0x1000, scoped, tag = 'scoped mem for input reshape']
    %s3 = ssub.s32 16, 1
    %v4 = vld [vmem:[%s0] sm:%s3]
    %5 = vst [vmem:[#allocation0] sm:%s3] %v4
    %v6 = vld [vmem:[#allocation0] sm:$0xf]
    %vm7 = vcmask 7168
    %8 = vst.msk [vmem:[%s1] ss:$16 sm:$0x3] %vm7, %v6
    %9 = vst.msk [vmem:[%s1] ss:$16 sm:$0xc] %vm7, %v6
    %v10 = vld [vmem:[#allocation0] sm:$0xf]
    %11 = vrot.lane.b32.xlu0 %v10, 127
    %v12 = vpop.permute.xlu0 %11
    %vm13 = vcmask 7168
    %s14 = scalar_lea.vmem %s1, 1
    %15 = vst.msk [vmem:[%s14] ss:$16 sm:$0x3] %vm13, %v12
    %s16 = scalar_lea.vmem %s1, 1
    %17 = vst.msk [vmem:[%s16] ss:$16 sm:$0xc] %vm13, %v12
    %v18 = vld [vmem:[#allocation0] sm:$0xf]
    %19 = vrot.lane.b32.xlu0 %v18, 126
    %v20 = vpop.permute.xlu0 %19
    %vm21 = vcmask 7168
    %s22 = scalar_lea.vmem %s1, 2
    %23 = vst.msk [vmem:[%s22] ss:$16 sm:$0x3] %vm21, %v20
    %s24 = scalar_lea.vmem %s1, 2
    %25 = vst.msk [vmem:[%s24] ss:$16 sm:$0xc] %vm21, %v20
    %v26 = vld [vmem:[#allocation0] sm:$0xf]
    %27 = vrot.lane.b32.xlu0 %v26, 125
    %v28 = vpop.permute.xlu0 %27
    %vm29 = vcmask 7168
    %s30 = scalar_lea.vmem %s1, 3
    %31 = vst.msk [vmem:[%s30] ss:$16 sm:$0x3] %vm29, %v28
    %s32 = scalar_lea.vmem %s1, 3
    %33 = vst.msk [vmem:[%s32] ss:$16 sm:$0xc] %vm29, %v28
    %v34 = vld [vmem:[#allocation0] sm:$0xf]
    %35 = vrot.lane.b32.xlu0 %v34, 124
    %v36 = vpop.permute.xlu0 %35
    %vm37 = vcmask 7168
    %s38 = scalar_lea.vmem %s1, 4
    %39 = vst.msk [vmem:[%s38] ss:$16 sm:$0x3] %vm37, %v36
    %s40 = scalar_lea.vmem %s1, 4
    %41 = vst.msk [vmem:[%s40] ss:$16 sm:$0xc] %vm37, %v36
    %v42 = vld [vmem:[#allocation0] sm:$0xf]
    %43 = vrot.lane.b32.xlu0 %v42, 123
    %v44 = vpop.permute.xlu0 %43
    %vm45 = vcmask 7168
    %s46 = scalar_lea.vmem %s1, 5
    %47 = vst.msk [vmem:[%s46] ss:$16 sm:$0x3] %vm45, %v44
    %s48 = scalar_lea.vmem %s1, 5
    %49 = vst.msk [vmem:[%s48] ss:$16 sm:$0xc] %vm45, %v44
    %v50 = vld [vmem:[#allocation0] sm:$0xf]
    %51 = vrot.lane.b32.xlu0 %v50, 122
    %v52 = vpop.permute.xlu0 %51
    %vm53 = vcmask 7168
    %s54 = scalar_lea.vmem %s1, 6
    %55 = vst.msk [vmem:[%s54] ss:$16 sm:$0x3] %vm53, %v52
    %s56 = scalar_lea.vmem %s1, 6
    %57 = vst.msk [vmem:[%s56] ss:$16 sm:$0xc] %vm53, %v52
    %v58 = vld [vmem:[#allocation0] sm:$0xf]
    %59 = vrot.lane.b32.xlu0 %v58, 121
    %v60 = vpop.permute.xlu0 %59
    %vm61 = vcmask 7168
    %s62 = scalar_lea.vmem %s1, 7
    %63 = vst.msk [vmem:[%s62] ss:$16 sm:$0x3] %vm61, %v60
    %s64 = scalar_lea.vmem %s1, 7
    %65 = vst.msk [vmem:[%s64] ss:$16 sm:$0xc] %vm61, %v60
    %v66 = vld [vmem:[#allocation0] sm:$0xf]
    %67 = vrot.lane.b32.xlu0 %v66, 120
    %v68 = vpop.permute.xlu0 %67
    %vm69 = vcmask 7168
    %s70 = scalar_lea.vmem %s1, 8
    %71 = vst.msk [vmem:[%s70] ss:$16 sm:$0x3] %vm69, %v68
    %s72 = scalar_lea.vmem %s1, 8
    %73 = vst.msk [vmem:[%s72] ss:$16 sm:$0xc] %vm69, %v68
    %v74 = vld [vmem:[#allocation0] sm:$0xf]
    %75 = vrot.lane.b32.xlu0 %v74, 119
    %v76 = vpop.permute.xlu0 %75
    %vm77 = vcmask 7168
    %s78 = scalar_lea.vmem %s1, 9
    %79 = vst.msk [vmem:[%s78] ss:$16 sm:$0x3] %vm77, %v76
    %s80 = scalar_lea.vmem %s1, 9
    %81 = vst.msk [vmem:[%s80] ss:$16 sm:$0xc] %vm77, %v76
    %v82 = vld [vmem:[#allocation0] sm:$0xf]
    %83 = vrot.lane.b32.xlu0 %v82, 118
    %v84 = vpop.permute.xlu0 %83
    %vm85 = vcmask 7168
    %s86 = scalar_lea.vmem %s1, 10
    %87 = vst.msk [vmem:[%s86] ss:$16 sm:$0x3] %vm85, %v84
    %s88 = scalar_lea.vmem %s1, 10
    %89 = vst.msk [vmem:[%s88] ss:$16 sm:$0xc] %vm85, %v84
    %v90 = vld [vmem:[#allocation0] sm:$0xf]
    %91 = vrot.lane.b32.xlu0 %v90, 117
    %v92 = vpop.permute.xlu0 %91
    %vm93 = vcmask 7168
    %s94 = scalar_lea.vmem %s1, 11
    %95 = vst.msk [vmem:[%s94] ss:$16 sm:$0x3] %vm93, %v92
    %s96 = scalar_lea.vmem %s1, 11
    %97 = vst.msk [vmem:[%s96] ss:$16 sm:$0xc] %vm93, %v92
    %v98 = vld [vmem:[#allocation0] sm:$0xf]
    %99 = vrot.lane.b32.xlu0 %v98, 116
    %v100 = vpop.permute.xlu0 %99
    %vm101 = vcmask 7168
    %s102 = scalar_lea.vmem %s1, 12
    %103 = vst.msk [vmem:[%s102] ss:$16 sm:$0x3] %vm101, %v100
    %s104 = scalar_lea.vmem %s1, 12
    %105 = vst.msk [vmem:[%s104] ss:$16 sm:$0xc] %vm101, %v100
    %v106 = vld [vmem:[#allocation0] sm:$0xf]
    %107 = vrot.lane.b32.xlu0 %v106, 115
    %v108 = vpop.permute.xlu0 %107
    %vm109 = vcmask 7168
    %s110 = scalar_lea.vmem %s1, 13
    %111 = vst.msk [vmem:[%s110] ss:$16 sm:$0x3] %vm109, %v108
    %s112 = scalar_lea.vmem %s1, 13
    %113 = vst.msk [vmem:[%s112] ss:$16 sm:$0xc] %vm109, %v108
    %v114 = vld [vmem:[#allocation0] sm:$0xf]
    %115 = vrot.lane.b32.xlu0 %v114, 114
    %v116 = vpop.permute.xlu0 %115
    %vm117 = vcmask 7168
    %s118 = scalar_lea.vmem %s1, 14
    %119 = vst.msk [vmem:[%s118] ss:$16 sm:$0x3] %vm117, %v116
    %s120 = scalar_lea.vmem %s1, 14
    %121 = vst.msk [vmem:[%s120] ss:$16 sm:$0xc] %vm117, %v116
    %v122 = vld [vmem:[#allocation0] sm:$0xf]
    %123 = vrot.lane.b32.xlu0 %v122, 113
    %v124 = vpop.permute.xlu0 %123
    %vm125 = vcmask 7168
    %s126 = scalar_lea.vmem %s1, 15
    %127 = vst.msk [vmem:[%s126] ss:$16 sm:$0x3] %vm125, %v124
    %s128 = scalar_lea.vmem %s1, 15
    %129 = vst.msk [vmem:[%s128] ss:$16 sm:$0xc] %vm125, %v124

// kernel: forward.30
$region0: #{forward.30}
  #allocation0 [shape = 'u32[]', space=smem, size = 0x4, offset = 0x4, fixed_abs, tag = 'smem constant byte address 0x4 - core index']
  #allocation1 [shape = 'u32[72,128]{1,0:T(1,128)}', space=vmem, size = 0x9000, scoped, tag = 'internal scratch']
  #allocation2 [shape = 'f32[224,8]{1,0:T(8,128)}', space=vmem, size = 0x1c000, scoped, tag = 'scratch operand']
  %s0 = inlined_call_operand.vmem [shape: bf16[4,32,14], index: 0, kind: input, shape index: {}]
  %s1 = inlined_call_operand.vmem [shape: bf16[32,224], index: 1, kind: input, shape index: {}]
  %s2 = inlined_call_operand.vmem [shape: f32[32,1], index: 2, kind: input, shape index: {}]
  %s3 = inlined_call_operand.vmem [shape: bf16[4,32,8], index: 3, kind: output, shape index: {}]
  %s4 = sld [smem:[#allocation0]]
  $region45: #{forward.30} parent=0
    _
  %s6 = ssub.s32 1, %s4
  %s7 = scalar_select 0, %s6, %s4
  loop: start=0, step=1, limit=6
  $region2: #{forward.30} parent=0 // loop_pre_header
    _
  $region3: #{forward.30} parent=0 // loop_header
    %s9 = sphi 0, %s13
    %p10 = scmp.ge.s32.totalorder %s9, 6
    %s16 = sphi 0, %s28
    %s17 = sphi 0, %s24
    %s18 = sphi 0, %s16
    %s19 = sphi 0, %s17
    %s20 = sphi 0, %s18
    %s21 = sphi 0, %s19
    %s31 = sphi 0, %s33
    %s34 = sphi 0, %s31
    %s35 = sphi 0, %s34
    %s51 = sphi 0, %s35
    %s55 = sphi 0, %s55
    %s57 = sphi 0, %s55
    %s58 = sphi 0, %s57
    %s72 = sphi 0, %s58
    %s76 = sphi 0, %s76
    %s78 = sphi 0, %s76
    %s79 = sphi 0, %s78
    %s93 = sphi 0, %s79
    %s101 = sphi 0, %s103
    %s104 = sphi 0, %s101
    %s105 = sphi 0, %s104
    %s121 = sphi 0, %s105
  $region4: #{forward.30} parent=0 // loop_header_branch
    %12 = sbr.rel (%p10) target = $region8
  $region5: #{forward.30} parent=0 // loop_body
    %s14 = ssub.s32 %s9, 1
    %s15 = ssub.s32 %s9, 2
    %s22 = sadd.s32 1, %s17
    %p23 = scmp.ge.s32.totalorder %s22, 1
    %s24 = scalar_select %p23, 0, %s22
    %s25 = sadd.s32 1, %s16
    %s26 = scalar_select %p23, %s25, %s16
    %p27 = scmp.ge.s32.totalorder %s26, 4
    %s28 = scalar_select %p27, 0, %s26
    %s29 = ssub.s32 %s16, %s28
    %p30 = scmp.eq.s32.totalorder %s29, 0
    %s32 = sadd.s32 %s31, 1
    %s33 = scalar_select %p30, %s31, %s32
    %p36 = pneg %p30
    %p37 = scmp.eq.s32.totalorder %s9, 3
    %p38 = por %p36, %p37
    %p39 = scmp.ne.s32.totalorder %s31, %s34
    %p40 = scmp.eq.s32.totalorder %s9, 0
    %p41 = por %p39, %p40
    %p42 = scmp.ne.s32.totalorder %s31, %s34
    %p43 = scmp.eq.s32.totalorder %s14, 3
    %p44 = por %p42, %p43
    %p45 = scmp.ne.s32.totalorder %s34, %s35
    %p46 = scmp.eq.s32.totalorder %s14, 0
    %p47 = por %p45, %p46
    %p48 = scmp.ne.s32.totalorder %s34, %s35
    %p49 = scmp.eq.s32.totalorder %s15, 3
    %p50 = por %p48, %p49
    %p52 = scmp.ne.s32.totalorder %s35, %s51
    %p53 = scmp.eq.s32.totalorder %s15, 0
    %p54 = por %p52, %p53
    %s56 = sadd.s32 %s55, 1
    %p59 = scmp.eq.s32.totalorder %s9, 3
    %p60 = scmp.ne.s32.totalorder %s55, %s57
    %p61 = scmp.eq.s32.totalorder %s9, 0
    %p62 = por %p60, %p61
    %p63 = scmp.ne.s32.totalorder %s55, %s57
    %p64 = scmp.eq.s32.totalorder %s14, 3
    %p65 = por %p63, %p64
    %p66 = scmp.ne.s32.totalorder %s57, %s58
    %p67 = scmp.eq.s32.totalorder %s14, 0
    %p68 = por %p66, %p67
    %p69 = scmp.ne.s32.totalorder %s57, %s58
    %p70 = scmp.eq.s32.totalorder %s15, 3
    %p71 = por %p69, %p70
    %p73 = scmp.ne.s32.totalorder %s58, %s72
    %p74 = scmp.eq.s32.totalorder %s15, 0
    %p75 = por %p73, %p74
    %s77 = sadd.s32 %s76, 1
    %p80 = scmp.eq.s32.totalorder %s9, 3
    %p81 = scmp.ne.s32.totalorder %s76, %s78
    %p82 = scmp.eq.s32.totalorder %s9, 0
    %p83 = por %p81, %p82
    %p84 = scmp.ne.s32.totalorder %s76, %s78
    %p85 = scmp.eq.s32.totalorder %s14, 3
    %p86 = por %p84, %p85
    %p87 = scmp.ne.s32.totalorder %s78, %s79
    %p88 = scmp.eq.s32.totalorder %s14, 0
    %p89 = por %p87, %p88
    %p90 = scmp.ne.s32.totalorder %s78, %s79
    %p91 = scmp.eq.s32.totalorder %s15, 3
    %p92 = por %p90, %p91
    %p94 = scmp.ne.s32.totalorder %s79, %s93
    %p95 = scmp.eq.s32.totalorder %s15, 0
    %p96 = por %p94, %p95
    %s97 = ssub.s32 %s16, %s28
    %s98 = ssub.s32 %s17, %s24
    %s99 = sor.u32 %s97, %s98
    %p100 = scmp.eq.s32.totalorder %s99, 0
    %s102 = sadd.s32 %s101, 1
    %s103 = scalar_select %p100, %s101, %s102
    %p106 = pneg %p100
    %p107 = scmp.eq.s32.totalorder %s9, 3
    %p108 = por %p106, %p107
    %p109 = scmp.ne.s32.totalorder %s101, %s104
    %p110 = scmp.eq.s32.totalorder %s9, 0
    %p111 = por %p109, %p110
    %p112 = scmp.ne.s32.totalorder %s101, %s104
    %p113 = scmp.eq.s32.totalorder %s14, 3
    %p114 = por %p112, %p113
    %p115 = scmp.ne.s32.totalorder %s104, %s105
    %p116 = scmp.eq.s32.totalorder %s14, 0
    %p117 = por %p115, %p116
    %p118 = scmp.ne.s32.totalorder %s104, %s105
    %p119 = scmp.eq.s32.totalorder %s15, 3
    %p120 = por %p118, %p119
    %p122 = scmp.ne.s32.totalorder %s105, %s121
    %p123 = scmp.eq.s32.totalorder %s15, 0
    %p124 = por %p122, %p123
    %p125 = scmp.le.s32.totalorder 1, %s9
    %p126 = scmp.lt.s32.totalorder %s9, 5
    %p127 = pnand %p125, %p126
    %p128 = pneg %p127
    // Predicated region
    $region9: #{forward.30} parent=5 // pred_check
      _
    $region10: #{forward.30} parent=5 // pred_check_branch
      %130 = sbr.rel (%p127) target = $region12
    $region11: #{forward.30} parent=5 // pred_region
      %s131 = ssub.s32 %s9, 1
      // Predicated region
      $region13: #{forward.30} parent=11 // pred_check
        %p132 = pneg %p68
      $region14: #{forward.30} parent=11 // pred_check_branch
        %134 = sbr.rel (%p132) target = $region16
      $region15: #{forward.30} parent=11 // pred_region
        _
      $region16: #{forward.30} parent=11 // pred_fallthru
        _
      // Predicated region
      $region17: #{forward.30} parent=11 // pred_check
        %p135 = pneg %p89
      $region18: #{forward.30} parent=11 // pred_check_branch
        %137 = sbr.rel (%p135) target = $region20
      $region19: #{forward.30} parent=11 // pred_region
        _
      $region20: #{forward.30} parent=11 // pred_fallthru
        _
    $region12: #{forward.30} parent=5 // pred_fallthru
      _
    %p138 = scmp.lt.s32.totalorder %s9, 4
    // Predicated region
    $region21: #{forward.30} parent=5 // pred_check
      %p139 = pneg %p138
    $region22: #{forward.30} parent=5 // pred_check_branch
      %141 = sbr.rel (%p139) target = $region24
    $region23: #{forward.30} parent=5 // pred_region
      // Predicated region
      $region25: #{forward.30} parent=23 // pred_check
        %p142 = pneg %p41
      $region26: #{forward.30} parent=23 // pred_check_branch
        %144 = sbr.rel (%p142) target = $region28
      $region27: #{forward.30} parent=23 // pred_region
        %p145 = scmp.lt.s32.totalorder %s16, 3
        %s146 = scalar_select %p145, %s16, 3
        %s147 = smul.addr %s146, 4
        %s148 = smul.addr %s147, 4
        %s149 = scalar_lea.vmem %s0, %s148
      $region28: #{forward.30} parent=23 // pred_fallthru
        _
    $region24: #{forward.30} parent=5 // pred_fallthru
      _
    %p150 = scmp.le.s32.totalorder 1, %s9
    %p151 = scmp.lt.s32.totalorder %s9, 5
    %p152 = pnand %p150, %p151
    %p153 = pneg %p152
    // Predicated region
    $region29: #{forward.30} parent=5 // pred_check
      _
    $region30: #{forward.30} parent=5 // pred_check_branch
      %155 = sbr.rel (%p152) target = $region32
    $region31: #{forward.30} parent=5 // pred_region
      %s156 = ssub.s32 %s9, 1
      %p157 = scmp.lt.s32.totalorder %s18, 3
      %s158 = scalar_select %p157, %s18, 3
      %s159 = smul.addr %s158, 4
      %s160 = smul.addr %s159, 4
      %s161 = scalar_lea.vmem %s0, %s160
      %p162 = pneg %p47
      %p163 = pneg %p44
      %p164 = pneg %p68
      %p165 = pneg %p65
      %p166 = pneg %p89
      %p167 = pneg %p86
      %p168 = pneg %p117
      %p169 = pneg %p114
      %p170 = scmp.lt.s32.totalorder %s18, 3
      %s171 = scalar_select %p170, %s18, 3
      %p172 = scmp.lt.s32.totalorder %s19, 0
      %s173 = scalar_select %p172, %s19, 0
      %s174 = smul.addr %s171, 4
      %s175 = sadd.s32 %s173, %s174
      %s176 = smul.addr %s175, 4
      %s177 = scalar_lea.vmem %s3, %s176
      %p178 = scmp.lt.s32.totalorder %s18, 3
      %s179 = scalar_select %p178, %s18, 3
      %s180 = smul.addr %s179, 4
      %s181 = smul.addr %s180, 4
      %s182 = scalar_lea.vmem %s0, %s181
      %p183 = scmp.lt.s32.totalorder %s18, 3
      %s184 = scalar_select %p183, %s18, 3
      %p185 = scmp.lt.s32.totalorder %s19, 0
      %s186 = scalar_select %p185, %s19, 0
      %s187 = smul.addr %s184, 4
      %s188 = sadd.s32 %s186, %s187
      %s189 = smul.addr %s188, 4
      %s190 = scalar_lea.vmem %s3, %s189
      %v192 = vld [vmem:[%s182] sm:$0xf]
      %v193 = vld [vmem:[%s182 + $0x4] sm:$0xf]
      %v194 = vld [vmem:[%s182 + $0x8] sm:$0xf]
      %v195 = vld [vmem:[%s182 + $0xc] sm:$0xf]
      %v196 = vunpack.c.l.bf16 %v192
      %v197 = vunpack.c.l.bf16 %v193
      %v198 = vunpack.c.l.bf16 %v194
      %v199 = vunpack.c.l.bf16 %v195
      %vm200 = vcmask 64512
      %201 = vst.msk [vmem:[#allocation2] sm:$0xff] %vm200, %v196
      %202 = vst.msk [vmem:[#allocation2 + $0x8] sm:$0xff] %vm200, %v197
      %203 = vst.msk [vmem:[#allocation2 + $0x10] sm:$0xff] %vm200, %v198
      %204 = vst.msk [vmem:[#allocation2 + $0x18] sm:$0xff] %vm200, %v199
      %v205 = vld [vmem:[%s182] sm:$0xf]
      %v206 = vld [vmem:[%s182 + $0x4] sm:$0xf]
      %v207 = vld [vmem:[%s182 + $0x8] sm:$0xf]
      %v208 = vld [vmem:[%s182 + $0xc] sm:$0xf]
      %v209 = vunpack.c.l.bf16 %v205
      %v210 = vunpack.c.l.bf16 %v206
      %v211 = vunpack.c.l.bf16 %v207
      %v212 = vunpack.c.l.bf16 %v208
      %217 = vrot.lane.b32.xlu0 %v209, 127
      %v218 = vpop.permute.xlu0 %217
      %219 = vrot.lane.b32.xlu0 %v210, 127
      %v220 = vpop.permute.xlu0 %219
      %221 = vrot.lane.b32.xlu0 %v211, 127
      %v222 = vpop.permute.xlu0 %221
      %223 = vrot.lane.b32.xlu0 %v212, 127
      %v224 = vpop.permute.xlu0 %223
      %229 = vst.msk [vmem:[#allocation2 + $0x20] sm:$0xff] %vm200, %v218
      %230 = vst.msk [vmem:[#allocation2 + $0x28] sm:$0xff] %vm200, %v220
      %231 = vst.msk [vmem:[#allocation2 + $0x30] sm:$0xff] %vm200, %v222
      %232 = vst.msk [vmem:[#allocation2 + $0x38] sm:$0xff] %vm200, %v224
      %v233 = vld [vmem:[%s182] sm:$0xf]
      %v234 = vld [vmem:[%s182 + $0x4] sm:$0xf]
      %v235 = vld [vmem:[%s182 + $0x8] sm:$0xf]
      %v236 = vld [vmem:[%s182 + $0xc] sm:$0xf]
      %v237 = vunpack.c.l.bf16 %v233
      %v238 = vunpack.c.l.bf16 %v234
      %v239 = vunpack.c.l.bf16 %v235
      %v240 = vunpack.c.l.bf16 %v236
      %245 = vrot.lane.b32.xlu0 %v237, 126
      %v246 = vpop.permute.xlu0 %245
      %247 = vrot.lane.b32.xlu0 %v238, 126
      %v248 = vpop.permute.xlu0 %247
      %249 = vrot.lane.b32.xlu0 %v239, 126
      %v250 = vpop.permute.xlu0 %249
      %251 = vrot.lane.b32.xlu0 %v240, 126
      %v252 = vpop.permute.xlu0 %251
      %257 = vst.msk [vmem:[#allocation2 + $0x40] sm:$0xff] %vm200, %v246
      %258 = vst.msk [vmem:[#allocation2 + $0x48] sm:$0xff] %vm200, %v248
      %259 = vst.msk [vmem:[#allocation2 + $0x50] sm:$0xff] %vm200, %v250
      %260 = vst.msk [vmem:[#allocation2 + $0x58] sm:$0xff] %vm200, %v252
      %v261 = vld [vmem:[%s182] sm:$0xf]
      %v262 = vld [vmem:[%s182 + $0x4] sm:$0xf]
      %v263 = vld [vmem:[%s182 + $0x8] sm:$0xf]
      %v264 = vld [vmem:[%s182 + $0xc] sm:$0xf]
      %v265 = vunpack.c.l.bf16 %v261
      %v266 = vunpack.c.l.bf16 %v262
      %v267 = vunpack.c.l.bf16 %v263
      %v268 = vunpack.c.l.bf16 %v264
      %273 = vrot.lane.b32.xlu0 %v265, 125
      %v274 = vpop.permute.xlu0 %273
      %275 = vrot.lane.b32.xlu0 %v266, 125
      %v276 = vpop.permute.xlu0 %275
      %277 = vrot.lane.b32.xlu0 %v267, 125
      %v278 = vpop.permute.xlu0 %277
      %279 = vrot.lane.b32.xlu0 %v268, 125
      %v280 = vpop.permute.xlu0 %279
      %285 = vst.msk [vmem:[#allocation2 + $0x60] sm:$0xff] %vm200, %v274
      %286 = vst.msk [vmem:[#allocation2 + $0x68] sm:$0xff] %vm200, %v276
      %287 = vst.msk [vmem:[#allocation2 + $0x70] sm:$0xff] %vm200, %v278
      %288 = vst.msk [vmem:[#allocation2 + $0x78] sm:$0xff] %vm200, %v280
      %v289 = vld [vmem:[%s182] sm:$0xf]
      %v290 = vld [vmem:[%s182 + $0x4] sm:$0xf]
      %v291 = vld [vmem:[%s182 + $0x8] sm:$0xf]
      %v292 = vld [vmem:[%s182 + $0xc] sm:$0xf]
      %v293 = vunpack.c.l.bf16 %v289
      %v294 = vunpack.c.l.bf16 %v290
      %v295 = vunpack.c.l.bf16 %v291
      %v296 = vunpack.c.l.bf16 %v292
      %301 = vrot.lane.b32.xlu0 %v293, 124
      %v302 = vpop.permute.xlu0 %301
      %303 = vrot.lane.b32.xlu0 %v294, 124
      %v304 = vpop.permute.xlu0 %303
      %305 = vrot.lane.b32.xlu0 %v295, 124
      %v306 = vpop.permute.xlu0 %305
      %307 = vrot.lane.b32.xlu0 %v296, 124
      %v308 = vpop.permute.xlu0 %307
      %313 = vst.msk [vmem:[#allocation2 + $0x80] sm:$0xff] %vm200, %v302
      %314 = vst.msk [vmem:[#allocation2 + $0x88] sm:$0xff] %vm200, %v304
      %315 = vst.msk [vmem:[#allocation2 + $0x90] sm:$0xff] %vm200, %v306
      %316 = vst.msk [vmem:[#allocation2 + $0x98] sm:$0xff] %vm200, %v308
      %v317 = vld [vmem:[%s182] sm:$0xf]
      %v318 = vld [vmem:[%s182 + $0x4] sm:$0xf]
      %v319 = vld [vmem:[%s182 + $0x8] sm:$0xf]
      %v320 = vld [vmem:[%s182 + $0xc] sm:$0xf]
      %v321 = vunpack.c.l.bf16 %v317
      %v322 = vunpack.c.l.bf16 %v318
      %v323 = vunpack.c.l.bf16 %v319
      %v324 = vunpack.c.l.bf16 %v320
      %329 = vrot.lane.b32.xlu0 %v321, 123
      %v330 = vpop.permute.xlu0 %329
      %331 = vrot.lane.b32.xlu0 %v322, 123
      %v332 = vpop.permute.xlu0 %331
      %333 = vrot.lane.b32.xlu0 %v323, 123
      %v334 = vpop.permute.xlu0 %333
      %335 = vrot.lane.b32.xlu0 %v324, 123
      %v336 = vpop.permute.xlu0 %335
      %341 = vst.msk [vmem:[#allocation2 + $0xa0] sm:$0xff] %vm200, %v330
      %342 = vst.msk [vmem:[#allocation2 + $0xa8] sm:$0xff] %vm200, %v332
      %343 = vst.msk [vmem:[#allocation2 + $0xb0] sm:$0xff] %vm200, %v334
      %344 = vst.msk [vmem:[#allocation2 + $0xb8] sm:$0xff] %vm200, %v336
      %v345 = vld [vmem:[%s182] sm:$0xf]
      %v346 = vld [vmem:[%s182 + $0x4] sm:$0xf]
      %v347 = vld [vmem:[%s182 + $0x8] sm:$0xf]
      %v348 = vld [vmem:[%s182 + $0xc] sm:$0xf]
      %v349 = vunpack.c.l.bf16 %v345
      %v350 = vunpack.c.l.bf16 %v346
      %v351 = vunpack.c.l.bf16 %v347
      %v352 = vunpack.c.l.bf16 %v348
      %357 = vrot.lane.b32.xlu0 %v349, 122
      %v358 = vpop.permute.xlu0 %357
      %359 = vrot.lane.b32.xlu0 %v350, 122
      %v360 = vpop.permute.xlu0 %359
      %361 = vrot.lane.b32.xlu0 %v351, 122
      %v362 = vpop.permute.xlu0 %361
      %363 = vrot.lane.b32.xlu0 %v352, 122
      %v364 = vpop.permute.xlu0 %363
      %369 = vst.msk [vmem:[#allocation2 + $0xc0] sm:$0xff] %vm200, %v358
      %370 = vst.msk [vmem:[#allocation2 + $0xc8] sm:$0xff] %vm200, %v360
      %371 = vst.msk [vmem:[#allocation2 + $0xd0] sm:$0xff] %vm200, %v362
      %372 = vst.msk [vmem:[#allocation2 + $0xd8] sm:$0xff] %vm200, %v364
      %v373 = vld [vmem:[%s1] sm:$0xff]
      %v374 = vld [vmem:[%s1 + $0x8] sm:$0xff]
      %v375 = vld [vmem:[%s1 + $0x10] sm:$0xff]
      %v376 = vld [vmem:[%s1 + $0x18] sm:$0xff]
      %v377 = vld [vmem:[#allocation2] sm:$0xff]
      %v378 = vld [vmem:[#allocation2 + $0x8] sm:$0xff]
      %v379 = vld [vmem:[#allocation2 + $0x10] sm:$0xff]
      %v380 = vld [vmem:[#allocation2 + $0x18] sm:$0xff]
      %v381 = vld [vmem:[#allocation2 + $0x20] sm:$0xff]
      %v382 = vld [vmem:[#allocation2 + $0x28] sm:$0xff]
      %v383 = vld [vmem:[#allocation2 + $0x30] sm:$0xff]
      %v384 = vld [vmem:[#allocation2 + $0x38] sm:$0xff]
      %v385 = vld [vmem:[#allocation2 + $0x40] sm:$0xff]
      %v386 = vld [vmem:[#allocation2 + $0x48] sm:$0xff]
      %v387 = vld [vmem:[#allocation2 + $0x50] sm:$0xff]
      %v388 = vld [vmem:[#allocation2 + $0x58] sm:$0xff]
      %v389 = vld [vmem:[#allocation2 + $0x60] sm:$0xff]
      %v390 = vld [vmem:[#allocation2 + $0x68] sm:$0xff]
      %v391 = vld [vmem:[#allocation2 + $0x70] sm:$0xff]
      %v392 = vld [vmem:[#allocation2 + $0x78] sm:$0xff]
      %v393 = vld [vmem:[#allocation2 + $0x80] sm:$0xff]
      %v394 = vld [vmem:[#allocation2 + $0x88] sm:$0xff]
      %v395 = vld [vmem:[#allocation2 + $0x90] sm:$0xff]
      %v396 = vld [vmem:[#allocation2 + $0x98] sm:$0xff]
      %v397 = vld [vmem:[#allocation2 + $0xa0] sm:$0xff]
      %v398 = vld [vmem:[#allocation2 + $0xa8] sm:$0xff]
      %v399 = vld [vmem:[#allocation2 + $0xb0] sm:$0xff]
      %v400 = vld [vmem:[#allocation2 + $0xb8] sm:$0xff]
      %v401 = vld [vmem:[#allocation2 + $0xc0] sm:$0xff]
      %v402 = vld [vmem:[#allocation2 + $0xc8] sm:$0xff]
      %v403 = vld [vmem:[#allocation2 + $0xd0] sm:$0xff]
      %v404 = vld [vmem:[#allocation2 + $0xd8] sm:$0xff]
      %v405 = vpack.c.bf16 %v378, %v377
      %v406 = vpack.c.bf16 %v380, %v379
      %v407 = vpack.c.bf16 %v382, %v381
      %v408 = vpack.c.bf16 %v384, %v383
      %v409 = vpack.c.bf16 %v386, %v385
      %v410 = vpack.c.bf16 %v388, %v387
      %v411 = vpack.c.bf16 %v390, %v389
      %v412 = vpack.c.bf16 %v392, %v391
      %v413 = vpack.c.bf16 %v394, %v393
      %v414 = vpack.c.bf16 %v396, %v395
      %v415 = vpack.c.bf16 %v398, %v397
      %v416 = vpack.c.bf16 %v400, %v399
      %v417 = vpack.c.bf16 %v402, %v401
      %v418 = vpack.c.bf16 %v404, %v403
      %v419 = vld [vmem:[%s2] sm:$0xff]
      %v420 = vld [vmem:[%s2 + $0x8] sm:$0xff]
      %v421 = vld [vmem:[%s2 + $0x10] sm:$0xff]
      %v422 = vld [vmem:[%s2 + $0x18] sm:$0xff]
      %424 = vset.pattern.permute.xlu0 0
      %425 = vperm.xlu0 %424, %v419
      %v426 = vpop.permute.xlu0 %425
      %429 = vset.pattern.permute.xlu0 0
      %430 = vperm.xlu0 %429, %v420
      %v431 = vpop.permute.xlu0 %430
      %434 = vset.pattern.permute.xlu0 0
      %435 = vperm.xlu0 %434, %v421
      %v436 = vpop.permute.xlu0 %435
      %439 = vset.pattern.permute.xlu0 0
      %440 = vperm.xlu0 %439, %v422
      %v441 = vpop.permute.xlu0 %440
      %v447 = vunpack.c.l.b16 %v373
      %v448 = vunpack.c.h.b16 %v373
      %v449 = vunpack.c.l.b16 %v374
      %v450 = vunpack.c.h.b16 %v374
      %v451 = vunpack.c.l.b16 %v375
      %v452 = vunpack.c.h.b16 %v375
      %v453 = vunpack.c.l.b16 %v376
      %v454 = vunpack.c.h.b16 %v376
      %v455 = vpack.c.b16 %v449, %v447
      %v456 = vpack.c.b16 %v450, %v448
      %v457 = vpack.c.b16 %v453, %v451
      %v458 = vpack.c.b16 %v454, %v452
      %vm461 = vcmask 785408
      %v463 = vsel %vm461, %v456, 0
      %v466 = vsel %vm461, %v458, 0
      %468 = vmatpush.bf16.msra.mxu0 %v412
      %469 = vmatpush.bf16.msra.mxu0 %v411
      %470 = vmatpush.bf16.msra.mxu0 %v410
      %471 = vmatpush.bf16.msra.mxu0 %v409
      %472 = vmatpush.bf16.msra.mxu0 %v408
      %473 = vmatpush.bf16.msra.mxu0 %v407
      %474 = vmatpush.bf16.msra.mxu0 %v406
      %475 = vmatpush.bf16.msra.mxu0 %v405
      %476 = vmatmul.bf16.gmra.mxu0 %v455
      %v477 = vpop.f32.mrf.mxu0
      %v478 = vadd.f32 %v426, %v477
      %v479 = vpop.f32.mrf.mxu0
      %v480 = vadd.f32 %v431, %v479
      %481 = vmatmul.bf16.gmra.mxu0 %v457
      %v482 = vpop.f32.mrf.mxu0
      %v483 = vadd.f32 %v436, %v482
      %v484 = vpop.f32.mrf.mxu0
      %v485 = vadd.f32 %v441, %v484
      %486 = vdwg.mxu0
      %487 = vmatpush.bf16.msra.mxu0 0
      %488 = vmatpush.bf16.msra.mxu0 0
      %489 = vmatpush.bf16.msra.mxu0 %v418
      %490 = vmatpush.bf16.msra.mxu0 %v417
      %491 = vmatpush.bf16.msra.mxu0 %v416
      %492 = vmatpush.bf16.msra.mxu0 %v415
      %493 = vmatpush.bf16.msra.mxu0 %v414
      %494 = vmatpush.bf16.msra.mxu0 %v413
      %495 = vmatmul.bf16.gmra.mxu0 %v463
      %v496 = vpop.f32.mrf.mxu0
      %v497 = vadd.f32 %v478, %v496
      %v498 = vpop.f32.mrf.mxu0
      %v499 = vadd.f32 %v480, %v498
      %500 = vmatmul.bf16.gmra.mxu0 %v466
      %v501 = vpop.f32.mrf.mxu0
      %v502 = vadd.f32 %v483, %v501
      %v503 = vpop.f32.mrf.mxu0
      %v504 = vadd.f32 %v485, %v503
      %505 = vdwg.mxu0
      %v506 = vpack.c.bf16 %v497, %v497
      %v507 = vpack.c.bf16 %v499, %v499
      %v508 = vpack.c.bf16 %v502, %v502
      %v509 = vpack.c.bf16 %v504, %v504
      %vm510 = vcmask 60416
      %511 = vst.msk [vmem:[%s190] sm:$0xf] %vm510, %v506
      %512 = vst.msk [vmem:[%s190 + $0x4] sm:$0xf] %vm510, %v507
      %513 = vst.msk [vmem:[%s190 + $0x8] sm:$0xf] %vm510, %v508
      %514 = vst.msk [vmem:[%s190 + $0xc] sm:$0xf] %vm510, %v509
      %p515 = scmp.lt.s32.totalorder %s18, 3
      %s516 = scalar_select %p515, %s18, 3
      %p517 = scmp.lt.s32.totalorder %s19, 0
      %s518 = scalar_select %p517, %s19, 0
      %s519 = smul.addr %s516, 4
      %s520 = sadd.s32 %s518, %s519
      %s521 = smul.addr %s520, 4
      %s522 = scalar_lea.vmem %s3, %s521
      // Predicated region
      $region33: #{forward.30} parent=31 // pred_check
        %p523 = pneg %p114
      $region34: #{forward.30} parent=31 // pred_check_branch
        %525 = sbr.rel (%p523) target = $region36
      $region35: #{forward.30} parent=31 // pred_region
        _
      $region36: #{forward.30} parent=31 // pred_fallthru
        _
    $region32: #{forward.30} parent=5 // pred_fallthru
      _
    %p526 = scmp.le.s32.totalorder 2, %s9
    // Predicated region
    $region37: #{forward.30} parent=5 // pred_check
      %p527 = pneg %p526
    $region38: #{forward.30} parent=5 // pred_check_branch
      %529 = sbr.rel (%p527) target = $region40
    $region39: #{forward.30} parent=5 // pred_region
      %s530 = ssub.s32 %s9, 2
      // Predicated region
      $region41: #{forward.30} parent=39 // pred_check
        %p531 = pneg %p120
      $region42: #{forward.30} parent=39 // pred_check_branch
        %533 = sbr.rel (%p531) target = $region44
      $region43: #{forward.30} parent=39 // pred_region
        %p534 = scmp.lt.s32.totalorder %s20, 3
        %s535 = scalar_select %p534, %s20, 3
        %p536 = scmp.lt.s32.totalorder %s21, 0
        %s537 = scalar_select %p536, %s21, 0
        %s538 = smul.addr %s535, 4
        %s539 = sadd.s32 %s537, %s538
        %s540 = smul.addr %s539, 4
        %s541 = scalar_lea.vmem %s3, %s540
      $region44: #{forward.30} parent=39 // pred_fallthru
        _
    $region40: #{forward.30} parent=5 // pred_fallthru
      _
  $region6: #{forward.30} parent=0 // loop_footer
    %s13 = sadd.s32 1, %s9
  $region7: #{forward.30} parent=0 // loop_footer_branch
    %8 = sbr.rel target = $region3
  $region8: #{forward.30} parent=0 // loop_exit
    _

// kernel: tile.14
$region0: #{tile.14}
  #allocation0 [shape = 's32[1]{0}', space=sflag, size = 0x4, scoped, tag = 'scoped memory for tile.14']
  %s0 = inlined_call_operand.vmem [shape: f32[8], index: 0, kind: input, shape index: {}]
  %s1 = inlined_call_operand.vmem [shape: f32[2,8], index: 1, kind: output, shape index: {}]
  // Predicated region
  $region2: #{tile.14} parent=0 // pred_check
    _
  $region3: #{tile.14} parent=0 // pred_check_branch
    %3 = sbr.rel (0) target = $region5
  $region4: #{tile.14} parent=0 // pred_region
    _
  $region5: #{tile.14} parent=0 // pred_fallthru
    _
  %v4 = vld [vmem:[%s0] ss:$0 sm:$0xff]
  %5 = vst [vmem:[%s1] sm:$0x3] %v4

// kernel: tile.1
$region0: #{tile.1}
  %s0 = inlined_call_operand.vmem [shape: f32[2,8], index: 0, kind: input, shape index: {}]
  %s1 = inlined_call_operand.vmem [shape: f32[16,1], index: 1, kind: output, shape index: {}]
  $region1: #{tile.1} parent=0
    #allocation0 [shape = 'u8[4096]{0}', space=vmem, size = 0x1000, scoped, tag = 'scoped mem for input reshape']
    %s3 = ssub.s32 4, 1
    %v4 = vld [vmem:[%s0] sm:%s3]
    %5 = vst [vmem:[#allocation0] sm:%s3] %v4
    %v6 = vld [vmem:[#allocation0] sm:$0x3]
    %vm7 = vcmask 7168
    %8 = vst.msk [vmem:[%s1] ss:$8 sm:$0x3] %vm7, %v6
    %v9 = vld [vmem:[#allocation0] sm:$0x3]
    %10 = vrot.lane.b32.xlu0 %v9, 127
    %v11 = vpop.permute.xlu0 %10
    %vm12 = vcmask 7168
    %s13 = scalar_lea.vmem %s1, 1
    %14 = vst.msk [vmem:[%s13] ss:$8 sm:$0x3] %vm12, %v11
    %v15 = vld [vmem:[#allocation0] sm:$0x3]
    %16 = vrot.lane.b32.xlu0 %v15, 126
    %v17 = vpop.permute.xlu0 %16
    %vm18 = vcmask 7168
    %s19 = scalar_lea.vmem %s1, 2
    %20 = vst.msk [vmem:[%s19] ss:$8 sm:$0x3] %vm18, %v17
    %v21 = vld [vmem:[#allocation0] sm:$0x3]
    %22 = vrot.lane.b32.xlu0 %v21, 125
    %v23 = vpop.permute.xlu0 %22
    %vm24 = vcmask 7168
    %s25 = scalar_lea.vmem %s1, 3
    %26 = vst.msk [vmem:[%s25] ss:$8 sm:$0x3] %vm24, %v23
    %v27 = vld [vmem:[#allocation0] sm:$0x3]
    %28 = vrot.lane.b32.xlu0 %v27, 124
    %v29 = vpop.permute.xlu0 %28
    %vm30 = vcmask 7168
    %s31 = scalar_lea.vmem %s1, 4
    %32 = vst.msk [vmem:[%s31] ss:$8 sm:$0x3] %vm30, %v29
    %v33 = vld [vmem:[#allocation0] sm:$0x3]
    %34 = vrot.lane.b32.xlu0 %v33, 123
    %v35 = vpop.permute.xlu0 %34
    %vm36 = vcmask 7168
    %s37 = scalar_lea.vmem %s1, 5
    %38 = vst.msk [vmem:[%s37] ss:$8 sm:$0x3] %vm36, %v35
    %v39 = vld [vmem:[#allocation0] sm:$0x3]
    %40 = vrot.lane.b32.xlu0 %v39, 122
    %v41 = vpop.permute.xlu0 %40
    %vm42 = vcmask 7168
    %s43 = scalar_lea.vmem %s1, 6
    %44 = vst.msk [vmem:[%s43] ss:$8 sm:$0x3] %vm42, %v41
    %v45 = vld [vmem:[#allocation0] sm:$0x3]
    %46 = vrot.lane.b32.xlu0 %v45, 121
    %v47 = vpop.permute.xlu0 %46
    %vm48 = vcmask 7168
    %s49 = scalar_lea.vmem %s1, 7
    %50 = vst.msk [vmem:[%s49] ss:$8 sm:$0x3] %vm48, %v47

// kernel: forward.34
$region0: #{forward.34}
  #allocation0 [shape = 'u32[]', space=smem, size = 0x4, offset = 0x4, fixed_abs, tag = 'smem constant byte address 0x4 - core index']
  #allocation1 [shape = 'u32[72,128]{1,0:T(1,128)}', space=vmem, size = 0x9000, scoped, tag = 'internal scratch']
  #allocation2 [shape = 'f32[64,9]{1,0:T(8,128)}', space=vmem, size = 0x8000, scoped, tag = 'scratch operand']
  %s0 = inlined_call_operand.vmem [shape: bf16[4,32,10], index: 0, kind: input, shape index: {}]
  %s1 = inlined_call_operand.vmem [shape: bf16[64,64], index: 1, kind: input, shape index: {}]
  %s2 = inlined_call_operand.vmem [shape: f32[64,1], index: 2, kind: input, shape index: {}]
  %s3 = inlined_call_operand.vmem [shape: bf16[4,64,9], index: 3, kind: output, shape index: {}]
  %s4 = sld [smem:[#allocation0]]
  $region45: #{forward.34} parent=0
    _
  %s6 = ssub.s32 1, %s4
  %s7 = scalar_select 0, %s6, %s4
  loop: start=0, step=1, limit=6
  $region2: #{forward.34} parent=0 // loop_pre_header
    _
  $region3: #{forward.34} parent=0 // loop_header
    %s9 = sphi 0, %s13
    %p10 = scmp.ge.s32.totalorder %s9, 6
    %s16 = sphi 0, %s28
    %s17 = sphi 0, %s24
    %s18 = sphi 0, %s16
    %s19 = sphi 0, %s17
    %s20 = sphi 0, %s18
    %s21 = sphi 0, %s19
    %s31 = sphi 0, %s33
    %s34 = sphi 0, %s31
    %s35 = sphi 0, %s34
    %s51 = sphi 0, %s35
    %s55 = sphi 0, %s55
    %s57 = sphi 0, %s55
    %s58 = sphi 0, %s57
    %s72 = sphi 0, %s58
    %s76 = sphi 0, %s76
    %s78 = sphi 0, %s76
    %s79 = sphi 0, %s78
    %s93 = sphi 0, %s79
    %s101 = sphi 0, %s103
    %s104 = sphi 0, %s101
    %s105 = sphi 0, %s104
    %s121 = sphi 0, %s105
  $region4: #{forward.34} parent=0 // loop_header_branch
    %12 = sbr.rel (%p10) target = $region8
  $region5: #{forward.34} parent=0 // loop_body
    %s14 = ssub.s32 %s9, 1
    %s15 = ssub.s32 %s9, 2
    %s22 = sadd.s32 1, %s17
    %p23 = scmp.ge.s32.totalorder %s22, 1
    %s24 = scalar_select %p23, 0, %s22
    %s25 = sadd.s32 1, %s16
    %s26 = scalar_select %p23, %s25, %s16
    %p27 = scmp.ge.s32.totalorder %s26, 4
    %s28 = scalar_select %p27, 0, %s26
    %s29 = ssub.s32 %s16, %s28
    %p30 = scmp.eq.s32.totalorder %s29, 0
    %s32 = sadd.s32 %s31, 1
    %s33 = scalar_select %p30, %s31, %s32
    %p36 = pneg %p30
    %p37 = scmp.eq.s32.totalorder %s9, 3
    %p38 = por %p36, %p37
    %p39 = scmp.ne.s32.totalorder %s31, %s34
    %p40 = scmp.eq.s32.totalorder %s9, 0
    %p41 = por %p39, %p40
    %p42 = scmp.ne.s32.totalorder %s31, %s34
    %p43 = scmp.eq.s32.totalorder %s14, 3
    %p44 = por %p42, %p43
    %p45 = scmp.ne.s32.totalorder %s34, %s35
    %p46 = scmp.eq.s32.totalorder %s14, 0
    %p47 = por %p45, %p46
    %p48 = scmp.ne.s32.totalorder %s34, %s35
    %p49 = scmp.eq.s32.totalorder %s15, 3
    %p50 = por %p48, %p49
    %p52 = scmp.ne.s32.totalorder %s35, %s51
    %p53 = scmp.eq.s32.totalorder %s15, 0
    %p54 = por %p52, %p53
    %s56 = sadd.s32 %s55, 1
    %p59 = scmp.eq.s32.totalorder %s9, 3
    %p60 = scmp.ne.s32.totalorder %s55, %s57
    %p61 = scmp.eq.s32.totalorder %s9, 0
    %p62 = por %p60, %p61
    %p63 = scmp.ne.s32.totalorder %s55, %s57
    %p64 = scmp.eq.s32.totalorder %s14, 3
    %p65 = por %p63, %p64
    %p66 = scmp.ne.s32.totalorder %s57, %s58
    %p67 = scmp.eq.s32.totalorder %s14, 0
    %p68 = por %p66, %p67
    %p69 = scmp.ne.s32.totalorder %s57, %s58
    %p70 = scmp.eq.s32.totalorder %s15, 3
    %p71 = por %p69, %p70
    %p73 = scmp.ne.s32.totalorder %s58, %s72
    %p74 = scmp.eq.s32.totalorder %s15, 0
    %p75 = por %p73, %p74
    %s77 = sadd.s32 %s76, 1
    %p80 = scmp.eq.s32.totalorder %s9, 3
    %p81 = scmp.ne.s32.totalorder %s76, %s78
    %p82 = scmp.eq.s32.totalorder %s9, 0
    %p83 = por %p81, %p82
    %p84 = scmp.ne.s32.totalorder %s76, %s78
    %p85 = scmp.eq.s32.totalorder %s14, 3
    %p86 = por %p84, %p85
    %p87 = scmp.ne.s32.totalorder %s78, %s79
    %p88 = scmp.eq.s32.totalorder %s14, 0
    %p89 = por %p87, %p88
    %p90 = scmp.ne.s32.totalorder %s78, %s79
    %p91 = scmp.eq.s32.totalorder %s15, 3
    %p92 = por %p90, %p91
    %p94 = scmp.ne.s32.totalorder %s79, %s93
    %p95 = scmp.eq.s32.totalorder %s15, 0
    %p96 = por %p94, %p95
    %s97 = ssub.s32 %s16, %s28
    %s98 = ssub.s32 %s17, %s24
    %s99 = sor.u32 %s97, %s98
    %p100 = scmp.eq.s32.totalorder %s99, 0
    %s102 = sadd.s32 %s101, 1
    %s103 = scalar_select %p100, %s101, %s102
    %p106 = pneg %p100
    %p107 = scmp.eq.s32.totalorder %s9, 3
    %p108 = por %p106, %p107
    %p109 = scmp.ne.s32.totalorder %s101, %s104
    %p110 = scmp.eq.s32.totalorder %s9, 0
    %p111 = por %p109, %p110
    %p112 = scmp.ne.s32.totalorder %s101, %s104
    %p113 = scmp.eq.s32.totalorder %s14, 3
    %p114 = por %p112, %p113
    %p115 = scmp.ne.s32.totalorder %s104, %s105
    %p116 = scmp.eq.s32.totalorder %s14, 0
    %p117 = por %p115, %p116
    %p118 = scmp.ne.s32.totalorder %s104, %s105
    %p119 = scmp.eq.s32.totalorder %s15, 3
    %p120 = por %p118, %p119
    %p122 = scmp.ne.s32.totalorder %s105, %s121
    %p123 = scmp.eq.s32.totalorder %s15, 0
    %p124 = por %p122, %p123
    %p125 = scmp.le.s32.totalorder 1, %s9
    %p126 = scmp.lt.s32.totalorder %s9, 5
    %p127 = pnand %p125, %p126
    %p128 = pneg %p127
    // Predicated region
    $region9: #{forward.34} parent=5 // pred_check
      _
    $region10: #{forward.34} parent=5 // pred_check_branch
      %130 = sbr.rel (%p127) target = $region12
    $region11: #{forward.34} parent=5 // pred_region
      %s131 = ssub.s32 %s9, 1
      // Predicated region
      $region13: #{forward.34} parent=11 // pred_check
        %p132 = pneg %p68
      $region14: #{forward.34} parent=11 // pred_check_branch
        %134 = sbr.rel (%p132) target = $region16
      $region15: #{forward.34} parent=11 // pred_region
        _
      $region16: #{forward.34} parent=11 // pred_fallthru
        _
      // Predicated region
      $region17: #{forward.34} parent=11 // pred_check
        %p135 = pneg %p89
      $region18: #{forward.34} parent=11 // pred_check_branch
        %137 = sbr.rel (%p135) target = $region20
      $region19: #{forward.34} parent=11 // pred_region
        _
      $region20: #{forward.34} parent=11 // pred_fallthru
        _
    $region12: #{forward.34} parent=5 // pred_fallthru
      _
    %p138 = scmp.lt.s32.totalorder %s9, 4
    // Predicated region
    $region21: #{forward.34} parent=5 // pred_check
      %p139 = pneg %p138
    $region22: #{forward.34} parent=5 // pred_check_branch
      %141 = sbr.rel (%p139) target = $region24
    $region23: #{forward.34} parent=5 // pred_region
      // Predicated region
      $region25: #{forward.34} parent=23 // pred_check
        %p142 = pneg %p41
      $region26: #{forward.34} parent=23 // pred_check_branch
        %144 = sbr.rel (%p142) target = $region28
      $region27: #{forward.34} parent=23 // pred_region
        %p145 = scmp.lt.s32.totalorder %s16, 3
        %s146 = scalar_select %p145, %s16, 3
        %s147 = smul.addr %s146, 4
        %s148 = smul.addr %s147, 4
        %s149 = scalar_lea.vmem %s0, %s148
      $region28: #{forward.34} parent=23 // pred_fallthru
        _
    $region24: #{forward.34} parent=5 // pred_fallthru
      _
    %p150 = scmp.le.s32.totalorder 1, %s9
    %p151 = scmp.lt.s32.totalorder %s9, 5
    %p152 = pnand %p150, %p151
    %p153 = pneg %p152
    // Predicated region
    $region29: #{forward.34} parent=5 // pred_check
      _
    $region30: #{forward.34} parent=5 // pred_check_branch
      %155 = sbr.rel (%p152) target = $region32
    $region31: #{forward.34} parent=5 // pred_region
      %s156 = ssub.s32 %s9, 1
      %p157 = scmp.lt.s32.totalorder %s18, 3
      %s158 = scalar_select %p157, %s18, 3
      %s159 = smul.addr %s158, 4
      %s160 = smul.addr %s159, 4
      %s161 = scalar_lea.vmem %s0, %s160
      %p162 = pneg %p47
      %p163 = pneg %p44
      %p164 = pneg %p68
      %p165 = pneg %p65
      %p166 = pneg %p89
      %p167 = pneg %p86
      %p168 = pneg %p117
      %p169 = pneg %p114
      %p170 = scmp.lt.s32.totalorder %s18, 3
      %s171 = scalar_select %p170, %s18, 3
      %p172 = scmp.lt.s32.totalorder %s19, 0
      %s173 = scalar_select %p172, %s19, 0
      %s174 = smul.addr %s171, 8
      %s175 = sadd.s32 %s173, %s174
      %s176 = smul.addr %s175, 4
      %s177 = scalar_lea.vmem %s3, %s176
      %p178 = scmp.lt.s32.totalorder %s18, 3
      %s179 = scalar_select %p178, %s18, 3
      %s180 = smul.addr %s179, 4
      %s181 = smul.addr %s180, 4
      %s182 = scalar_lea.vmem %s0, %s181
      %p183 = scmp.lt.s32.totalorder %s18, 3
      %s184 = scalar_select %p183, %s18, 3
      %p185 = scmp.lt.s32.totalorder %s19, 0
      %s186 = scalar_select %p185, %s19, 0
      %s187 = smul.addr %s184, 8
      %s188 = sadd.s32 %s186, %s187
      %s189 = smul.addr %s188, 4
      %s190 = scalar_lea.vmem %s3, %s189
      %v192 = vld [vmem:[%s182] sm:$0xf]
      %v193 = vld [vmem:[%s182 + $0x4] sm:$0xf]
      %v194 = vld [vmem:[%s182 + $0x8] sm:$0xf]
      %v195 = vld [vmem:[%s182 + $0xc] sm:$0xf]
      %v196 = vunpack.c.l.bf16 %v192
      %v197 = vunpack.c.l.bf16 %v193
      %v198 = vunpack.c.l.bf16 %v194
      %v199 = vunpack.c.l.bf16 %v195
      %vm200 = vcmask 72704
      %201 = vst.msk [vmem:[#allocation2] sm:$0xff] %vm200, %v196
      %202 = vst.msk [vmem:[#allocation2 + $0x8] sm:$0xff] %vm200, %v197
      %203 = vst.msk [vmem:[#allocation2 + $0x10] sm:$0xff] %vm200, %v198
      %204 = vst.msk [vmem:[#allocation2 + $0x18] sm:$0xff] %vm200, %v199
      %v205 = vld [vmem:[%s182] sm:$0xf]
      %v206 = vld [vmem:[%s182 + $0x4] sm:$0xf]
      %v207 = vld [vmem:[%s182 + $0x8] sm:$0xf]
      %v208 = vld [vmem:[%s182 + $0xc] sm:$0xf]
      %v209 = vunpack.c.l.bf16 %v205
      %v210 = vunpack.c.l.bf16 %v206
      %v211 = vunpack.c.l.bf16 %v207
      %v212 = vunpack.c.l.bf16 %v208
      %217 = vrot.lane.b32.xlu0 %v209, 127
      %v218 = vpop.permute.xlu0 %217
      %219 = vrot.lane.b32.xlu0 %v210, 127
      %v220 = vpop.permute.xlu0 %219
      %221 = vrot.lane.b32.xlu0 %v211, 127
      %v222 = vpop.permute.xlu0 %221
      %223 = vrot.lane.b32.xlu0 %v212, 127
      %v224 = vpop.permute.xlu0 %223
      %229 = vst.msk [vmem:[#allocation2 + $0x20] sm:$0xff] %vm200, %v218
      %230 = vst.msk [vmem:[#allocation2 + $0x28] sm:$0xff] %vm200, %v220
      %231 = vst.msk [vmem:[#allocation2 + $0x30] sm:$0xff] %vm200, %v222
      %232 = vst.msk [vmem:[#allocation2 + $0x38] sm:$0xff] %vm200, %v224
      %v233 = vld [vmem:[%s1] sm:$0xf]
      %v234 = vld [vmem:[%s1 + $0x4] sm:$0xf]
      %v235 = vld [vmem:[%s1 + $0x8] sm:$0xf]
      %v236 = vld [vmem:[%s1 + $0xc] sm:$0xf]
      %v237 = vld [vmem:[%s1 + $0x10] sm:$0xf]
      %v238 = vld [vmem:[%s1 + $0x14] sm:$0xf]
      %v239 = vld [vmem:[%s1 + $0x18] sm:$0xf]
      %v240 = vld [vmem:[%s1 + $0x1c] sm:$0xf]
      %v241 = vld [vmem:[#allocation2] sm:$0xff]
      %v242 = vld [vmem:[#allocation2 + $0x8] sm:$0xff]
      %v243 = vld [vmem:[#allocation2 + $0x10] sm:$0xff]
      %v244 = vld [vmem:[#allocation2 + $0x18] sm:$0xff]
      %v245 = vld [vmem:[#allocation2 + $0x20] sm:$0xff]
      %v246 = vld [vmem:[#allocation2 + $0x28] sm:$0xff]
      %v247 = vld [vmem:[#allocation2 + $0x30] sm:$0xff]
      %v248 = vld [vmem:[#allocation2 + $0x38] sm:$0xff]
      %v249 = vpack.c.bf16 %v242, %v241
      %v250 = vpack.c.bf16 %v244, %v243
      %v251 = vpack.c.bf16 %v246, %v245
      %v252 = vpack.c.bf16 %v248, %v247
      %v253 = vld [vmem:[%s2] sm:$0xff]
      %v254 = vld [vmem:[%s2 + $0x8] sm:$0xff]
      %v255 = vld [vmem:[%s2 + $0x10] sm:$0xff]
      %v256 = vld [vmem:[%s2 + $0x18] sm:$0xff]
      %v257 = vld [vmem:[%s2 + $0x20] sm:$0xff]
      %v258 = vld [vmem:[%s2 + $0x28] sm:$0xff]
      %v259 = vld [vmem:[%s2 + $0x30] sm:$0xff]
      %v260 = vld [vmem:[%s2 + $0x38] sm:$0xff]
      %262 = vset.pattern.permute.xlu0 0
      %263 = vperm.xlu0 %262, %v253
      %v264 = vpop.permute.xlu0 %263
      %267 = vset.pattern.permute.xlu0 0
      %268 = vperm.xlu0 %267, %v254
      %v269 = vpop.permute.xlu0 %268
      %272 = vset.pattern.permute.xlu0 0
      %273 = vperm.xlu0 %272, %v255
      %v274 = vpop.permute.xlu0 %273
      %277 = vset.pattern.permute.xlu0 0
      %278 = vperm.xlu0 %277, %v256
      %v279 = vpop.permute.xlu0 %278
      %282 = vset.pattern.permute.xlu0 0
      %283 = vperm.xlu0 %282, %v257
      %v284 = vpop.permute.xlu0 %283
      %287 = vset.pattern.permute.xlu0 0
      %288 = vperm.xlu0 %287, %v258
      %v289 = vpop.permute.xlu0 %288
      %292 = vset.pattern.permute.xlu0 0
      %293 = vperm.xlu0 %292, %v259
      %v294 = vpop.permute.xlu0 %293
      %297 = vset.pattern.permute.xlu0 0
      %298 = vperm.xlu0 %297, %v260
      %v299 = vpop.permute.xlu0 %298
      %v309 = vunpack.c.l.b16 %v233
      %v310 = vunpack.c.l.b16 %v234
      %v311 = vunpack.c.l.b16 %v235
      %v312 = vunpack.c.l.b16 %v236
      %v313 = vunpack.c.l.b16 %v237
      %v314 = vunpack.c.l.b16 %v238
      %v315 = vunpack.c.l.b16 %v239
      %v316 = vunpack.c.l.b16 %v240
      %v317 = vpack.c.b16 %v310, %v309
      %v318 = vpack.c.b16 %v312, %v311
      %v319 = vpack.c.b16 %v314, %v313
      %v320 = vpack.c.b16 %v316, %v315
      %vm321 = vcmask 523264
      %v323 = vsel %vm321, %v317, 0
      %v326 = vsel %vm321, %v318, 0
      %v329 = vsel %vm321, %v319, 0
      %v332 = vsel %vm321, %v320, 0
      %334 = vmatpush.bf16.msra.mxu0 0
      %335 = vmatpush.bf16.msra.mxu0 0
      %336 = vmatpush.bf16.msra.mxu0 0
      %337 = vmatpush.bf16.msra.mxu0 0
      %338 = vmatpush.bf16.msra.mxu0 %v252
      %339 = vmatpush.bf16.msra.mxu0 %v251
      %340 = vmatpush.bf16.msra.mxu0 %v250
      %341 = vmatpush.bf16.msra.mxu0 %v249
      %342 = vmatmul.bf16.gmra.mxu0 %v323
      %v343 = vpop.f32.mrf.mxu0
      %v344 = vadd.f32 %v264, %v343
      %v345 = vpop.f32.mrf.mxu0
      %v346 = vadd.f32 %v269, %v345
      %347 = vmatmul.bf16.gmra.mxu0 %v326
      %v348 = vpop.f32.mrf.mxu0
      %v349 = vadd.f32 %v274, %v348
      %v350 = vpop.f32.mrf.mxu0
      %v351 = vadd.f32 %v279, %v350
      %352 = vmatmul.bf16.gmra.mxu0 %v329
      %v353 = vpop.f32.mrf.mxu0
      %v354 = vadd.f32 %v284, %v353
      %v355 = vpop.f32.mrf.mxu0
      %v356 = vadd.f32 %v289, %v355
      %357 = vmatmul.bf16.gmra.mxu0 %v332
      %v358 = vpop.f32.mrf.mxu0
      %v359 = vadd.f32 %v294, %v358
      %v360 = vpop.f32.mrf.mxu0
      %v361 = vadd.f32 %v299, %v360
      %362 = vdwg.mxu0
      %v363 = vpack.c.bf16 %v344, %v344
      %v364 = vpack.c.bf16 %v346, %v346
      %v365 = vpack.c.bf16 %v349, %v349
      %v366 = vpack.c.bf16 %v351, %v351
      %v367 = vpack.c.bf16 %v354, %v354
      %v368 = vpack.c.bf16 %v356, %v356
      %v369 = vpack.c.bf16 %v359, %v359
      %v370 = vpack.c.bf16 %v361, %v361
      %vm371 = vcmask 68608
      %372 = vst.msk [vmem:[%s190] sm:$0xf] %vm371, %v363
      %373 = vst.msk [vmem:[%s190 + $0x4] sm:$0xf] %vm371, %v364
      %374 = vst.msk [vmem:[%s190 + $0x8] sm:$0xf] %vm371, %v365
      %375 = vst.msk [vmem:[%s190 + $0xc] sm:$0xf] %vm371, %v366
      %376 = vst.msk [vmem:[%s190 + $0x10] sm:$0xf] %vm371, %v367
      %377 = vst.msk [vmem:[%s190 + $0x14] sm:$0xf] %vm371, %v368
      %378 = vst.msk [vmem:[%s190 + $0x18] sm:$0xf] %vm371, %v369
      %379 = vst.msk [vmem:[%s190 + $0x1c] sm:$0xf] %vm371, %v370
      %p380 = scmp.lt.s32.totalorder %s18, 3
      %s381 = scalar_select %p380, %s18, 3
      %p382 = scmp.lt.s32.totalorder %s19, 0
      %s383 = scalar_select %p382, %s19, 0
      %s384 = smul.addr %s381, 8
      %s385 = sadd.s32 %s383, %s384
      %s386 = smul.addr %s385, 4
      %s387 = scalar_lea.vmem %s3, %s386
      // Predicated region
      $region33: #{forward.34} parent=31 // pred_check
        %p388 = pneg %p114
      $region34: #{forward.34} parent=31 // pred_check_branch
        %390 = sbr.rel (%p388) target = $region36
      $region35: #{forward.34} parent=31 // pred_region
        _
      $region36: #{forward.34} parent=31 // pred_fallthru
        _
    $region32: #{forward.34} parent=5 // pred_fallthru
      _
    %p391 = scmp.le.s32.totalorder 2, %s9
    // Predicated region
    $region37: #{forward.34} parent=5 // pred_check
      %p392 = pneg %p391
    $region38: #{forward.34} parent=5 // pred_check_branch
      %394 = sbr.rel (%p392) target = $region40
    $region39: #{forward.34} parent=5 // pred_region
      %s395 = ssub.s32 %s9, 2
      // Predicated region
      $region41: #{forward.34} parent=39 // pred_check
        %p396 = pneg %p120
      $region42: #{forward.34} parent=39 // pred_check_branch
        %398 = sbr.rel (%p396) target = $region44
      $region43: #{forward.34} parent=39 // pred_region
        %p399 = scmp.lt.s32.totalorder %s20, 3
        %s400 = scalar_select %p399, %s20, 3
        %p401 = scmp.lt.s32.totalorder %s21, 0
        %s402 = scalar_select %p401, %s21, 0
        %s403 = smul.addr %s400, 8
        %s404 = sadd.s32 %s402, %s403
        %s405 = smul.addr %s404, 4
        %s406 = scalar_lea.vmem %s3, %s405
      $region44: #{forward.34} parent=39 // pred_fallthru
        _
    $region40: #{forward.34} parent=5 // pred_fallthru
      _
  $region6: #{forward.34} parent=0 // loop_footer
    %s13 = sadd.s32 1, %s9
  $region7: #{forward.34} parent=0 // loop_footer_branch
    %8 = sbr.rel target = $region3
  $region8: #{forward.34} parent=0 // loop_exit
    _

// kernel: forward.37
$region0: #{forward.37}
  #allocation0 [shape = 'u32[]', space=smem, size = 0x4, offset = 0x4, fixed_abs, tag = 'smem constant byte address 0x4 - core index']
  #allocation1 [shape = 'u32[72,128]{1,0:T(1,128)}', space=vmem, size = 0x9000, scoped, tag = 'internal scratch']
  #allocation2 [shape = 'f32[32,33]{1,0:T(8,128)}', space=vmem, size = 0x4000, scoped, tag = 'scratch operand']
  %s0 = inlined_call_operand.vmem [shape: bf16[4,16,34], index: 0, kind: input, shape index: {}]
  %s1 = inlined_call_operand.vmem [shape: bf16[16,32], index: 1, kind: input, shape index: {}]
  %s2 = inlined_call_operand.vmem [shape: f32[16,1], index: 2, kind: input, shape index: {}]
  %s3 = inlined_call_operand.vmem [shape: bf16[4,16,33], index: 3, kind: output, shape index: {}]
  %s4 = sld [smem:[#allocation0]]
  $region45: #{forward.37} parent=0
    _
  %s6 = ssub.s32 1, %s4
  %s7 = scalar_select 0, %s6, %s4
  loop: start=0, step=1, limit=6
  $region2: #{forward.37} parent=0 // loop_pre_header
    _
  $region3: #{forward.37} parent=0 // loop_header
    %s9 = sphi 0, %s13
    %p10 = scmp.ge.s32.totalorder %s9, 6
    %s16 = sphi 0, %s28
    %s17 = sphi 0, %s24
    %s18 = sphi 0, %s16
    %s19 = sphi 0, %s17
    %s20 = sphi 0, %s18
    %s21 = sphi 0, %s19
    %s31 = sphi 0, %s33
    %s34 = sphi 0, %s31
    %s35 = sphi 0, %s34
    %s51 = sphi 0, %s35
    %s55 = sphi 0, %s55
    %s57 = sphi 0, %s55
    %s58 = sphi 0, %s57
    %s72 = sphi 0, %s58
    %s76 = sphi 0, %s76
    %s78 = sphi 0, %s76
    %s79 = sphi 0, %s78
    %s93 = sphi 0, %s79
    %s101 = sphi 0, %s103
    %s104 = sphi 0, %s101
    %s105 = sphi 0, %s104
    %s121 = sphi 0, %s105
  $region4: #{forward.37} parent=0 // loop_header_branch
    %12 = sbr.rel (%p10) target = $region8
  $region5: #{forward.37} parent=0 // loop_body
    %s14 = ssub.s32 %s9, 1
    %s15 = ssub.s32 %s9, 2
    %s22 = sadd.s32 1, %s17
    %p23 = scmp.ge.s32.totalorder %s22, 1
    %s24 = scalar_select %p23, 0, %s22
    %s25 = sadd.s32 1, %s16
    %s26 = scalar_select %p23, %s25, %s16
    %p27 = scmp.ge.s32.totalorder %s26, 4
    %s28 = scalar_select %p27, 0, %s26
    %s29 = ssub.s32 %s16, %s28
    %p30 = scmp.eq.s32.totalorder %s29, 0
    %s32 = sadd.s32 %s31, 1
    %s33 = scalar_select %p30, %s31, %s32
    %p36 = pneg %p30
    %p37 = scmp.eq.s32.totalorder %s9, 3
    %p38 = por %p36, %p37
    %p39 = scmp.ne.s32.totalorder %s31, %s34
    %p40 = scmp.eq.s32.totalorder %s9, 0
    %p41 = por %p39, %p40
    %p42 = scmp.ne.s32.totalorder %s31, %s34
    %p43 = scmp.eq.s32.totalorder %s14, 3
    %p44 = por %p42, %p43
    %p45 = scmp.ne.s32.totalorder %s34, %s35
    %p46 = scmp.eq.s32.totalorder %s14, 0
    %p47 = por %p45, %p46
    %p48 = scmp.ne.s32.totalorder %s34, %s35
    %p49 = scmp.eq.s32.totalorder %s15, 3
    %p50 = por %p48, %p49
    %p52 = scmp.ne.s32.totalorder %s35, %s51
    %p53 = scmp.eq.s32.totalorder %s15, 0
    %p54 = por %p52, %p53
    %s56 = sadd.s32 %s55, 1
    %p59 = scmp.eq.s32.totalorder %s9, 3
    %p60 = scmp.ne.s32.totalorder %s55, %s57
    %p61 = scmp.eq.s32.totalorder %s9, 0
    %p62 = por %p60, %p61
    %p63 = scmp.ne.s32.totalorder %s55, %s57
    %p64 = scmp.eq.s32.totalorder %s14, 3
    %p65 = por %p63, %p64
    %p66 = scmp.ne.s32.totalorder %s57, %s58
    %p67 = scmp.eq.s32.totalorder %s14, 0
    %p68 = por %p66, %p67
    %p69 = scmp.ne.s32.totalorder %s57, %s58
    %p70 = scmp.eq.s32.totalorder %s15, 3
    %p71 = por %p69, %p70
    %p73 = scmp.ne.s32.totalorder %s58, %s72
    %p74 = scmp.eq.s32.totalorder %s15, 0
    %p75 = por %p73, %p74
    %s77 = sadd.s32 %s76, 1
    %p80 = scmp.eq.s32.totalorder %s9, 3
    %p81 = scmp.ne.s32.totalorder %s76, %s78
    %p82 = scmp.eq.s32.totalorder %s9, 0
    %p83 = por %p81, %p82
    %p84 = scmp.ne.s32.totalorder %s76, %s78
    %p85 = scmp.eq.s32.totalorder %s14, 3
    %p86 = por %p84, %p85
    %p87 = scmp.ne.s32.totalorder %s78, %s79
    %p88 = scmp.eq.s32.totalorder %s14, 0
    %p89 = por %p87, %p88
    %p90 = scmp.ne.s32.totalorder %s78, %s79
    %p91 = scmp.eq.s32.totalorder %s15, 3
    %p92 = por %p90, %p91
    %p94 = scmp.ne.s32.totalorder %s79, %s93
    %p95 = scmp.eq.s32.totalorder %s15, 0
    %p96 = por %p94, %p95
    %s97 = ssub.s32 %s16, %s28
    %s98 = ssub.s32 %s17, %s24
    %s99 = sor.u32 %s97, %s98
    %p100 = scmp.eq.s32.totalorder %s99, 0
    %s102 = sadd.s32 %s101, 1
    %s103 = scalar_select %p100, %s101, %s102
    %p106 = pneg %p100
    %p107 = scmp.eq.s32.totalorder %s9, 3
    %p108 = por %p106, %p107
    %p109 = scmp.ne.s32.totalorder %s101, %s104
    %p110 = scmp.eq.s32.totalorder %s9, 0
    %p111 = por %p109, %p110
    %p112 = scmp.ne.s32.totalorder %s101, %s104
    %p113 = scmp.eq.s32.totalorder %s14, 3
    %p114 = por %p112, %p113
    %p115 = scmp.ne.s32.totalorder %s104, %s105
    %p116 = scmp.eq.s32.totalorder %s14, 0
    %p117 = por %p115, %p116
    %p118 = scmp.ne.s32.totalorder %s104, %s105
    %p119 = scmp.eq.s32.totalorder %s15, 3
    %p120 = por %p118, %p119
    %p122 = scmp.ne.s32.totalorder %s105, %s121
    %p123 = scmp.eq.s32.totalorder %s15, 0
    %p124 = por %p122, %p123
    %p125 = scmp.le.s32.totalorder 1, %s9
    %p126 = scmp.lt.s32.totalorder %s9, 5
    %p127 = pnand %p125, %p126
    %p128 = pneg %p127
    // Predicated region
    $region9: #{forward.37} parent=5 // pred_check
      _
    $region10: #{forward.37} parent=5 // pred_check_branch
      %130 = sbr.rel (%p127) target = $region12
    $region11: #{forward.37} parent=5 // pred_region
      %s131 = ssub.s32 %s9, 1
      // Predicated region
      $region13: #{forward.37} parent=11 // pred_check
        %p132 = pneg %p68
      $region14: #{forward.37} parent=11 // pred_check_branch
        %134 = sbr.rel (%p132) target = $region16
      $region15: #{forward.37} parent=11 // pred_region
        _
      $region16: #{forward.37} parent=11 // pred_fallthru
        _
      // Predicated region
      $region17: #{forward.37} parent=11 // pred_check
        %p135 = pneg %p89
      $region18: #{forward.37} parent=11 // pred_check_branch
        %137 = sbr.rel (%p135) target = $region20
      $region19: #{forward.37} parent=11 // pred_region
        _
      $region20: #{forward.37} parent=11 // pred_fallthru
        _
    $region12: #{forward.37} parent=5 // pred_fallthru
      _
    %p138 = scmp.lt.s32.totalorder %s9, 4
    // Predicated region
    $region21: #{forward.37} parent=5 // pred_check
      %p139 = pneg %p138
    $region22: #{forward.37} parent=5 // pred_check_branch
      %141 = sbr.rel (%p139) target = $region24
    $region23: #{forward.37} parent=5 // pred_region
      // Predicated region
      $region25: #{forward.37} parent=23 // pred_check
        %p142 = pneg %p41
      $region26: #{forward.37} parent=23 // pred_check_branch
        %144 = sbr.rel (%p142) target = $region28
      $region27: #{forward.37} parent=23 // pred_region
        %p145 = scmp.lt.s32.totalorder %s16, 3
        %s146 = scalar_select %p145, %s16, 3
        %s147 = smul.addr %s146, 2
        %s148 = smul.addr %s147, 4
        %s149 = scalar_lea.vmem %s0, %s148
      $region28: #{forward.37} parent=23 // pred_fallthru
        _
    $region24: #{forward.37} parent=5 // pred_fallthru
      _
    %p150 = scmp.le.s32.totalorder 1, %s9
    %p151 = scmp.lt.s32.totalorder %s9, 5
    %p152 = pnand %p150, %p151
    %p153 = pneg %p152
    // Predicated region
    $region29: #{forward.37} parent=5 // pred_check
      _
    $region30: #{forward.37} parent=5 // pred_check_branch
      %155 = sbr.rel (%p152) target = $region32
    $region31: #{forward.37} parent=5 // pred_region
      %s156 = ssub.s32 %s9, 1
      %p157 = scmp.lt.s32.totalorder %s18, 3
      %s158 = scalar_select %p157, %s18, 3
      %s159 = smul.addr %s158, 2
      %s160 = smul.addr %s159, 4
      %s161 = scalar_lea.vmem %s0, %s160
      %p162 = pneg %p47
      %p163 = pneg %p44
      %p164 = pneg %p68
      %p165 = pneg %p65
      %p166 = pneg %p89
      %p167 = pneg %p86
      %p168 = pneg %p117
      %p169 = pneg %p114
      %p170 = scmp.lt.s32.totalorder %s18, 3
      %s171 = scalar_select %p170, %s18, 3
      %p172 = scmp.lt.s32.totalorder %s19, 0
      %s173 = scalar_select %p172, %s19, 0
      %s174 = smul.addr %s171, 2
      %s175 = sadd.s32 %s173, %s174
      %s176 = smul.addr %s175, 4
      %s177 = scalar_lea.vmem %s3, %s176
      %p178 = scmp.lt.s32.totalorder %s18, 3
      %s179 = scalar_select %p178, %s18, 3
      %s180 = smul.addr %s179, 2
      %s181 = smul.addr %s180, 4
      %s182 = scalar_lea.vmem %s0, %s181
      %p183 = scmp.lt.s32.totalorder %s18, 3
      %s184 = scalar_select %p183, %s18, 3
      %p185 = scmp.lt.s32.totalorder %s19, 0
      %s186 = scalar_select %p185, %s19, 0
      %s187 = smul.addr %s184, 2
      %s188 = sadd.s32 %s186, %s187
      %s189 = smul.addr %s188, 4
      %s190 = scalar_lea.vmem %s3, %s189
      %v192 = vld [vmem:[%s182] sm:$0xf]
      %v193 = vld [vmem:[%s182 + $0x4] sm:$0xf]
      %v194 = vunpack.c.l.bf16 %v192
      %v195 = vunpack.c.l.bf16 %v193
      %vm196 = vcmask 269312
      %197 = vst.msk [vmem:[#allocation2] sm:$0xff] %vm196, %v194
      %198 = vst.msk [vmem:[#allocation2 + $0x8] sm:$0xff] %vm196, %v195
      %v199 = vld [vmem:[%s182] sm:$0xf]
      %v200 = vld [vmem:[%s182 + $0x4] sm:$0xf]
      %v201 = vunpack.c.l.bf16 %v199
      %v202 = vunpack.c.l.bf16 %v200
      %205 = vrot.lane.b32.xlu0 %v201, 127
      %v206 = vpop.permute.xlu0 %205
      %207 = vrot.lane.b32.xlu0 %v202, 127
      %v208 = vpop.permute.xlu0 %207
      %211 = vst.msk [vmem:[#allocation2 + $0x10] sm:$0xff] %vm196, %v206
      %212 = vst.msk [vmem:[#allocation2 + $0x18] sm:$0xff] %vm196, %v208
      %v213 = vld [vmem:[%s1] sm:$0xf]
      %v214 = vld [vmem:[%s1 + $0x4] sm:$0xf]
      %v215 = vld [vmem:[#allocation2] sm:$0xff]
      %v216 = vld [vmem:[#allocation2 + $0x8] sm:$0xff]
      %v217 = vld [vmem:[#allocation2 + $0x10] sm:$0xff]
      %v218 = vld [vmem:[#allocation2 + $0x18] sm:$0xff]
      %v219 = vpack.c.bf16 %v216, %v215
      %v220 = vpack.c.bf16 %v218, %v217
      %v221 = vld [vmem:[%s2] sm:$0xff]
      %v222 = vld [vmem:[%s2 + $0x8] sm:$0xff]
      %224 = vset.pattern.permute.xlu0 0
      %225 = vperm.xlu0 %224, %v221
      %v226 = vpop.permute.xlu0 %225
      %229 = vset.pattern.permute.xlu0 0
      %230 = vperm.xlu0 %229, %v222
      %v231 = vpop.permute.xlu0 %230
      %v235 = vunpack.c.l.b16 %v213
      %v236 = vunpack.c.l.b16 %v214
      %v237 = vpack.c.b16 %v236, %v235
      %vm238 = vcmask 261120
      %v240 = vsel %vm238, %v237, 0
      %242 = vmatpush.bf16.msra.mxu0 0
      %243 = vmatpush.bf16.msra.mxu0 0
      %244 = vmatpush.bf16.msra.mxu0 0
      %245 = vmatpush.bf16.msra.mxu0 0
      %246 = vmatpush.bf16.msra.mxu0 0
      %247 = vmatpush.bf16.msra.mxu0 0
      %248 = vmatpush.bf16.msra.mxu0 %v220
      %249 = vmatpush.bf16.msra.mxu0 %v219
      %250 = vmatmul.bf16.gmra.mxu0 %v240
      %v251 = vpop.f32.mrf.mxu0
      %v252 = vadd.f32 %v226, %v251
      %v253 = vpop.f32.mrf.mxu0
      %v254 = vadd.f32 %v231, %v253
      %255 = vdwg.mxu0
      %v256 = vpack.c.bf16 %v252, %v252
      %v257 = vpack.c.bf16 %v254, %v254
      %vm258 = vcmask 265216
      %259 = vst.msk [vmem:[%s190] sm:$0xf] %vm258, %v256
      %260 = vst.msk [vmem:[%s190 + $0x4] sm:$0xf] %vm258, %v257
      %p261 = scmp.lt.s32.totalorder %s18, 3
      %s262 = scalar_select %p261, %s18, 3
      %p263 = scmp.lt.s32.totalorder %s19, 0
      %s264 = scalar_select %p263, %s19, 0
      %s265 = smul.addr %s262, 2
      %s266 = sadd.s32 %s264, %s265
      %s267 = smul.addr %s266, 4
      %s268 = scalar_lea.vmem %s3, %s267
      // Predicated region
      $region33: #{forward.37} parent=31 // pred_check
        %p269 = pneg %p114
      $region34: #{forward.37} parent=31 // pred_check_branch
        %271 = sbr.rel (%p269) target = $region36
      $region35: #{forward.37} parent=31 // pred_region
        _
      $region36: #{forward.37} parent=31 // pred_fallthru
        _
    $region32: #{forward.37} parent=5 // pred_fallthru
      _
    %p272 = scmp.le.s32.totalorder 2, %s9
    // Predicated region
    $region37: #{forward.37} parent=5 // pred_check
      %p273 = pneg %p272
    $region38: #{forward.37} parent=5 // pred_check_branch
      %275 = sbr.rel (%p273) target = $region40
    $region39: #{forward.37} parent=5 // pred_region
      %s276 = ssub.s32 %s9, 2
      // Predicated region
      $region41: #{forward.37} parent=39 // pred_check
        %p277 = pneg %p120
      $region42: #{forward.37} parent=39 // pred_check_branch
        %279 = sbr.rel (%p277) target = $region44
      $region43: #{forward.37} parent=39 // pred_region
        %p280 = scmp.lt.s32.totalorder %s20, 3
        %s281 = scalar_select %p280, %s20, 3
        %p282 = scmp.lt.s32.totalorder %s21, 0
        %s283 = scalar_select %p282, %s21, 0
        %s284 = smul.addr %s281, 2
        %s285 = sadd.s32 %s283, %s284
        %s286 = smul.addr %s285, 4
        %s287 = scalar_lea.vmem %s3, %s286
      $region44: #{forward.37} parent=39 // pred_fallthru
        _
    $region40: #{forward.37} parent=5 // pred_fallthru
      _
  $region6: #{forward.37} parent=0 // loop_footer
    %s13 = sadd.s32 1, %s9
  $region7: #{forward.37} parent=0 // loop_footer_branch
    %8 = sbr.rel target = $region3
  $region8: #{forward.37} parent=0 // loop_exit
    _

// kernel: forward.41
$region0: #{forward.41}
  #allocation0 [shape = 'u32[]', space=smem, size = 0x4, offset = 0x4, fixed_abs, tag = 'smem constant byte address 0x4 - core index']
  #allocation1 [shape = 'u32[72,128]{1,0:T(1,128)}', space=vmem, size = 0x9000, scoped, tag = 'internal scratch']
  %s0 = inlined_call_operand.vmem [shape: f32[2,2,64], index: 0, kind: input, shape index: {}]
  %s1 = inlined_call_operand.hbm [shape: f32[2,64], index: 1, kind: output, shape index: {}]
  %s2 = sld [smem:[#allocation0]]
  $region14: #{forward.41} parent=0
    _
  %s4 = ssub.s32 1, %s2
  %s5 = scalar_select 0, %s4, %s2
  $region1: #{forward.41} parent=0
    #allocation2 [shape = 'u8[1024]{0}', space=vmem, size = 0x400, scoped, tag = 'output window, operand 0, single buffered']
    #allocation3 [shape = 's32[1]{0}', space=sflag, size = 0x4, scoped, tag = 'scoped memory for forward.41']
    %6 = vsyncpa [#allocation3], 0
    // Predicated region
    $region2: #{forward.41} parent=1 // pred_check
      _
    $region3: #{forward.41} parent=1 // pred_check_branch
      %8 = sbr.rel (0) target = $region5
    $region4: #{forward.41} parent=1 // pred_region
      _
    $region5: #{forward.41} parent=1 // pred_fallthru
      _
    %v9 = vld [vmem:[%s0] sm:$0x3]
    %v10 = vld [vmem:[%s0 + $0x2] sm:$0x3]
    %vm11 = vcmask 517120
    %v12 = vsel %vm11, %v9, 0.0
    %v13 = vrot.slane %v12, 4
    %v14 = vadd.f32 %v12, %v13
    %v15 = vrot.slane %v14, 2
    %v16 = vadd.f32 %v14, %v15
    %v17 = vrot.slane %v16, 1
    %v18 = vadd.f32 %v16, %v17
    %v19 = vsel %vm11, %v10, 0.0
    %v20 = vrot.slane %v19, 4
    %v21 = vadd.f32 %v19, %v20
    %v22 = vrot.slane %v21, 2
    %v23 = vadd.f32 %v21, %v22
    %v24 = vrot.slane %v23, 1
    %v25 = vadd.f32 %v23, %v24
    %vm28 = vcmask 1041409
    %v29 = vsel %vm28, %v25, %v18
    %31 = vst.msk [vmem:[#allocation2] sm:$0x3] %vm11, %v29
    // Predicated region
    $region6: #{forward.41} parent=1 // pred_check
      _
    $region7: #{forward.41} parent=1 // pred_check_branch
      %33 = sbr.rel (0) target = $region9
    $region8: #{forward.41} parent=1 // pred_region
      %35 = vsyncadd [#allocation3], 0
      %s37 = sshll.u32 [#allocation2], 4
      %s38 = int_to_ptr.vmem [resolvable:$true] %s37
      %s39 = sshll.u32 %s1, 4
      %s40 = int_to_ptr.hbm [resolvable:$true] %s39
      %42 = dma.vmem_to_hbm [thread:$0]  %s38, 32, %s40, [#allocation3]
    $region9: #{forward.41} parent=1 // pred_fallthru
      _
    // Predicated region
    $region10: #{forward.41} parent=1 // pred_check
      _
    $region11: #{forward.41} parent=1 // pred_check_branch
      %44 = sbr.rel (0) target = $region13
    $region12: #{forward.41} parent=1 // pred_region
      %46 = dma.done [#allocation3], 32
    $region13: #{forward.41} parent=1 // pred_fallthru
      _
    %47 = vsyncpa [#allocation3], 1

// kernel: forward.40
$region0: #{forward.40}
  #allocation0 [shape = 'u32[]', space=smem, size = 0x4, offset = 0x4, fixed_abs, tag = 'smem constant byte address 0x4 - core index']
  #allocation1 [shape = 'u32[72,128]{1,0:T(1,128)}', space=vmem, size = 0x9000, scoped, tag = 'internal scratch']
  #allocation2 [shape = 'f32[56,64]{1,0:T(8,128)}', space=vmem, size = 0x7000, scoped, tag = 'scratch operand']
  #allocation3 [shape = 'f32[1,1]{1,0:T(1,128)S(1)}', space=vmem, size = 0x200, scoped, tag = 'scoped memory for forward.40']
  %s0 = inlined_call_operand.vmem [shape: bf16[4,8,70], index: 0, kind: input, shape index: {}]
  %s1 = inlined_call_operand.vmem [shape: bf16[1,56], index: 1, kind: input, shape index: {}]
  %s2 = inlined_call_operand.<no memory space> [shape: f32[1,1], index: 2, kind: input, shape index: {}]
  %s3 = inlined_call_operand.vmem [shape: bf16[4,1,64], index: 3, kind: output, shape index: {}]
  %s4 = sld [smem:[#allocation0]]
  $region45: #{forward.40} parent=0
    _
  %s6 = ssub.s32 1, %s4
  %s7 = scalar_select 0, %s6, %s4
  %v8 = vstv %s2
  %9 = vst [vmem:[#allocation3] sm:$0x1] %v8
  loop: start=0, step=1, limit=6
  $region2: #{forward.40} parent=0 // loop_pre_header
    _
  $region3: #{forward.40} parent=0 // loop_header
    %s11 = sphi 0, %s15
    %p12 = scmp.ge.s32.totalorder %s11, 6
    %s18 = sphi 0, %s30
    %s19 = sphi 0, %s26
    %s20 = sphi 0, %s18
    %s21 = sphi 0, %s19
    %s22 = sphi 0, %s20
    %s23 = sphi 0, %s21
    %s33 = sphi 0, %s35
    %s36 = sphi 0, %s33
    %s37 = sphi 0, %s36
    %s53 = sphi 0, %s37
    %s57 = sphi 0, %s57
    %s59 = sphi 0, %s57
    %s60 = sphi 0, %s59
    %s74 = sphi 0, %s60
    %s78 = sphi 0, %s78
    %s80 = sphi 0, %s78
    %s81 = sphi 0, %s80
    %s95 = sphi 0, %s81
    %s103 = sphi 0, %s105
    %s106 = sphi 0, %s103
    %s107 = sphi 0, %s106
    %s123 = sphi 0, %s107
  $region4: #{forward.40} parent=0 // loop_header_branch
    %14 = sbr.rel (%p12) target = $region8
  $region5: #{forward.40} parent=0 // loop_body
    %s16 = ssub.s32 %s11, 1
    %s17 = ssub.s32 %s11, 2
    %s24 = sadd.s32 1, %s19
    %p25 = scmp.ge.s32.totalorder %s24, 1
    %s26 = scalar_select %p25, 0, %s24
    %s27 = sadd.s32 1, %s18
    %s28 = scalar_select %p25, %s27, %s18
    %p29 = scmp.ge.s32.totalorder %s28, 4
    %s30 = scalar_select %p29, 0, %s28
    %s31 = ssub.s32 %s18, %s30
    %p32 = scmp.eq.s32.totalorder %s31, 0
    %s34 = sadd.s32 %s33, 1
    %s35 = scalar_select %p32, %s33, %s34
    %p38 = pneg %p32
    %p39 = scmp.eq.s32.totalorder %s11, 3
    %p40 = por %p38, %p39
    %p41 = scmp.ne.s32.totalorder %s33, %s36
    %p42 = scmp.eq.s32.totalorder %s11, 0
    %p43 = por %p41, %p42
    %p44 = scmp.ne.s32.totalorder %s33, %s36
    %p45 = scmp.eq.s32.totalorder %s16, 3
    %p46 = por %p44, %p45
    %p47 = scmp.ne.s32.totalorder %s36, %s37
    %p48 = scmp.eq.s32.totalorder %s16, 0
    %p49 = por %p47, %p48
    %p50 = scmp.ne.s32.totalorder %s36, %s37
    %p51 = scmp.eq.s32.totalorder %s17, 3
    %p52 = por %p50, %p51
    %p54 = scmp.ne.s32.totalorder %s37, %s53
    %p55 = scmp.eq.s32.totalorder %s17, 0
    %p56 = por %p54, %p55
    %s58 = sadd.s32 %s57, 1
    %p61 = scmp.eq.s32.totalorder %s11, 3
    %p62 = scmp.ne.s32.totalorder %s57, %s59
    %p63 = scmp.eq.s32.totalorder %s11, 0
    %p64 = por %p62, %p63
    %p65 = scmp.ne.s32.totalorder %s57, %s59
    %p66 = scmp.eq.s32.totalorder %s16, 3
    %p67 = por %p65, %p66
    %p68 = scmp.ne.s32.totalorder %s59, %s60
    %p69 = scmp.eq.s32.totalorder %s16, 0
    %p70 = por %p68, %p69
    %p71 = scmp.ne.s32.totalorder %s59, %s60
    %p72 = scmp.eq.s32.totalorder %s17, 3
    %p73 = por %p71, %p72
    %p75 = scmp.ne.s32.totalorder %s60, %s74
    %p76 = scmp.eq.s32.totalorder %s17, 0
    %p77 = por %p75, %p76
    %s79 = sadd.s32 %s78, 1
    %p82 = scmp.eq.s32.totalorder %s11, 3
    %p83 = scmp.ne.s32.totalorder %s78, %s80
    %p84 = scmp.eq.s32.totalorder %s11, 0
    %p85 = por %p83, %p84
    %p86 = scmp.ne.s32.totalorder %s78, %s80
    %p87 = scmp.eq.s32.totalorder %s16, 3
    %p88 = por %p86, %p87
    %p89 = scmp.ne.s32.totalorder %s80, %s81
    %p90 = scmp.eq.s32.totalorder %s16, 0
    %p91 = por %p89, %p90
    %p92 = scmp.ne.s32.totalorder %s80, %s81
    %p93 = scmp.eq.s32.totalorder %s17, 3
    %p94 = por %p92, %p93
    %p96 = scmp.ne.s32.totalorder %s81, %s95
    %p97 = scmp.eq.s32.totalorder %s17, 0
    %p98 = por %p96, %p97
    %s99 = ssub.s32 %s18, %s30
    %s100 = ssub.s32 %s19, %s26
    %s101 = sor.u32 %s99, %s100
    %p102 = scmp.eq.s32.totalorder %s101, 0
    %s104 = sadd.s32 %s103, 1
    %s105 = scalar_select %p102, %s103, %s104
    %p108 = pneg %p102
    %p109 = scmp.eq.s32.totalorder %s11, 3
    %p110 = por %p108, %p109
    %p111 = scmp.ne.s32.totalorder %s103, %s106
    %p112 = scmp.eq.s32.totalorder %s11, 0
    %p113 = por %p111, %p112
    %p114 = scmp.ne.s32.totalorder %s103, %s106
    %p115 = scmp.eq.s32.totalorder %s16, 3
    %p116 = por %p114, %p115
    %p117 = scmp.ne.s32.totalorder %s106, %s107
    %p118 = scmp.eq.s32.totalorder %s16, 0
    %p119 = por %p117, %p118
    %p120 = scmp.ne.s32.totalorder %s106, %s107
    %p121 = scmp.eq.s32.totalorder %s17, 3
    %p122 = por %p120, %p121
    %p124 = scmp.ne.s32.totalorder %s107, %s123
    %p125 = scmp.eq.s32.totalorder %s17, 0
    %p126 = por %p124, %p125
    %p127 = scmp.le.s32.totalorder 1, %s11
    %p128 = scmp.lt.s32.totalorder %s11, 5
    %p129 = pnand %p127, %p128
    %p130 = pneg %p129
    // Predicated region
    $region9: #{forward.40} parent=5 // pred_check
      _
    $region10: #{forward.40} parent=5 // pred_check_branch
      %132 = sbr.rel (%p129) target = $region12
    $region11: #{forward.40} parent=5 // pred_region
      %s133 = ssub.s32 %s11, 1
      // Predicated region
      $region13: #{forward.40} parent=11 // pred_check
        %p134 = pneg %p70
      $region14: #{forward.40} parent=11 // pred_check_branch
        %136 = sbr.rel (%p134) target = $region16
      $region15: #{forward.40} parent=11 // pred_region
        _
      $region16: #{forward.40} parent=11 // pred_fallthru
        _
      // Predicated region
      $region17: #{forward.40} parent=11 // pred_check
        %p137 = pneg %p91
      $region18: #{forward.40} parent=11 // pred_check_branch
        %139 = sbr.rel (%p137) target = $region20
      $region19: #{forward.40} parent=11 // pred_region
        _
      $region20: #{forward.40} parent=11 // pred_fallthru
        _
    $region12: #{forward.40} parent=5 // pred_fallthru
      _
    %p140 = scmp.lt.s32.totalorder %s11, 4
    // Predicated region
    $region21: #{forward.40} parent=5 // pred_check
      %p141 = pneg %p140
    $region22: #{forward.40} parent=5 // pred_check_branch
      %143 = sbr.rel (%p141) target = $region24
    $region23: #{forward.40} parent=5 // pred_region
      // Predicated region
      $region25: #{forward.40} parent=23 // pred_check
        %p144 = pneg %p43
      $region26: #{forward.40} parent=23 // pred_check_branch
        %146 = sbr.rel (%p144) target = $region28
      $region27: #{forward.40} parent=23 // pred_region
        %p147 = scmp.lt.s32.totalorder %s18, 3
        %s148 = scalar_select %p147, %s18, 3
        %s149 = smul.addr %s148, 4
        %s150 = scalar_lea.vmem %s0, %s149
      $region28: #{forward.40} parent=23 // pred_fallthru
        _
    $region24: #{forward.40} parent=5 // pred_fallthru
      _
    %p151 = scmp.le.s32.totalorder 1, %s11
    %p152 = scmp.lt.s32.totalorder %s11, 5
    %p153 = pnand %p151, %p152
    %p154 = pneg %p153
    // Predicated region
    $region29: #{forward.40} parent=5 // pred_check
      _
    $region30: #{forward.40} parent=5 // pred_check_branch
      %156 = sbr.rel (%p153) target = $region32
    $region31: #{forward.40} parent=5 // pred_region
      %s157 = ssub.s32 %s11, 1
      %p158 = scmp.lt.s32.totalorder %s20, 3
      %s159 = scalar_select %p158, %s20, 3
      %s160 = smul.addr %s159, 4
      %s161 = scalar_lea.vmem %s0, %s160
      %p162 = pneg %p49
      %p163 = pneg %p46
      %p164 = pneg %p70
      %p165 = pneg %p67
      %p166 = pneg %p91
      %p167 = pneg %p88
      %p168 = pneg %p119
      %p169 = pneg %p116
      %p170 = scmp.lt.s32.totalorder %s20, 3
      %s171 = scalar_select %p170, %s20, 3
      %p172 = scmp.lt.s32.totalorder %s21, 0
      %s173 = scalar_select %p172, %s21, 0
      %s174 = sadd.s32 %s173, %s171
      %s175 = scalar_lea.vmem %s3, %s174
      %p176 = scmp.lt.s32.totalorder %s20, 3
      %s177 = scalar_select %p176, %s20, 3
      %s178 = smul.addr %s177, 4
      %s179 = scalar_lea.vmem %s0, %s178
      %p180 = scmp.lt.s32.totalorder %s20, 3
      %s181 = scalar_select %p180, %s20, 3
      %p182 = scmp.lt.s32.totalorder %s21, 0
      %s183 = scalar_select %p182, %s21, 0
      %s184 = sadd.s32 %s183, %s181
      %s185 = scalar_lea.vmem %s3, %s184
      %v187 = vld [vmem:[%s179] sm:$0xf]
      %v188 = vunpack.c.l.bf16 %v187
      %vm189 = vcmask 523264
      %190 = vst.msk [vmem:[#allocation2] sm:$0xff] %vm189, %v188
      %v191 = vld [vmem:[%s179] sm:$0xf]
      %v192 = vunpack.c.l.bf16 %v191
      %194 = vrot.lane.b32.xlu0 %v192, 127
      %v195 = vpop.permute.xlu0 %194
      %197 = vst.msk [vmem:[#allocation2 + $0x8] sm:$0xff] %vm189, %v195
      %v198 = vld [vmem:[%s179] sm:$0xf]
      %v199 = vunpack.c.l.bf16 %v198
      %201 = vrot.lane.b32.xlu0 %v199, 126
      %v202 = vpop.permute.xlu0 %201
      %204 = vst.msk [vmem:[#allocation2 + $0x10] sm:$0xff] %vm189, %v202
      %v205 = vld [vmem:[%s179] sm:$0xf]
      %v206 = vunpack.c.l.bf16 %v205
      %208 = vrot.lane.b32.xlu0 %v206, 125
      %v209 = vpop.permute.xlu0 %208
      %211 = vst.msk [vmem:[#allocation2 + $0x18] sm:$0xff] %vm189, %v209
      %v212 = vld [vmem:[%s179] sm:$0xf]
      %v213 = vunpack.c.l.bf16 %v212
      %215 = vrot.lane.b32.xlu0 %v213, 124
      %v216 = vpop.permute.xlu0 %215
      %218 = vst.msk [vmem:[#allocation2 + $0x20] sm:$0xff] %vm189, %v216
      %v219 = vld [vmem:[%s179] sm:$0xf]
      %v220 = vunpack.c.l.bf16 %v219
      %222 = vrot.lane.b32.xlu0 %v220, 123
      %v223 = vpop.permute.xlu0 %222
      %225 = vst.msk [vmem:[#allocation2 + $0x28] sm:$0xff] %vm189, %v223
      %v226 = vld [vmem:[%s179] sm:$0xf]
      %v227 = vunpack.c.l.bf16 %v226
      %229 = vrot.lane.b32.xlu0 %v227, 122
      %v230 = vpop.permute.xlu0 %229
      %232 = vst.msk [vmem:[#allocation2 + $0x30] sm:$0xff] %vm189, %v230
      %v233 = vld [vmem:[%s1] sm:$0x1]
      %v234 = vld [vmem:[#allocation2] sm:$0xff]
      %v235 = vld [vmem:[#allocation2 + $0x8] sm:$0xff]
      %v236 = vld [vmem:[#allocation2 + $0x10] sm:$0xff]
      %v237 = vld [vmem:[#allocation2 + $0x18] sm:$0xff]
      %v238 = vld [vmem:[#allocation2 + $0x20] sm:$0xff]
      %v239 = vld [vmem:[#allocation2 + $0x28] sm:$0xff]
      %v240 = vld [vmem:[#allocation2 + $0x30] sm:$0xff]
      %v241 = vpack.c.bf16 %v235, %v234
      %v242 = vpack.c.bf16 %v237, %v236
      %v243 = vpack.c.bf16 %v239, %v238
      %v244 = vpack.c.bf16 %v240, %v240
      %v245 = vld [vmem:[#allocation3] sm:$0x1]
      %247 = vset.pattern.permute.xlu0 0
      %248 = vperm.xlu0 %247, %v245
      %v249 = vpop.permute.xlu0 %248
      %v251 = vperm.slane %v249, 0
      %vm252 = vcmask 457728
      %v254 = vsel %vm252, %v233, 0
      %vm256 = vcmask 1043456
      %v258 = vsel %vm256, %v244, 0
      %260 = vmatpush.bf16.msra.mxu0 0
      %261 = vmatpush.bf16.msra.mxu0 0
      %262 = vmatpush.bf16.msra.mxu0 0
      %263 = vmatpush.bf16.msra.mxu0 0
      %264 = vmatpush.bf16.msra.mxu0 %v258
      %265 = vmatpush.bf16.msra.mxu0 %v243
      %266 = vmatpush.bf16.msra.mxu0 %v242
      %267 = vmatpush.bf16.msra.mxu0 %v241
      %268 = vmatmul.bf16.gmra.mxu0 %v254
      %v269 = vpop.f32.mrf.mxu0
      %v270 = vadd.f32 %v251, %v269
      %v271 = vpop.f32.mrf.mxu0
      %272 = vdwg.mxu0
      %v273 = vpack.c.bf16 %v270, %v270
      %vm274 = vcmask 516096
      %vm275 = vsmask.f32 256
      %vm276 = vmand %vm274, %vm275
      %v277 = vld [vmem:[%s185] sm:$0x1]
      %v278 = vsel %vm276, %v273, %v277
      %279 = vst [vmem:[%s185] sm:$0x1] %v278
      %p280 = scmp.lt.s32.totalorder %s20, 3
      %s281 = scalar_select %p280, %s20, 3
      %p282 = scmp.lt.s32.totalorder %s21, 0
      %s283 = scalar_select %p282, %s21, 0
      %s284 = sadd.s32 %s283, %s281
      %s285 = scalar_lea.vmem %s3, %s284
      // Predicated region
      $region33: #{forward.40} parent=31 // pred_check
        %p286 = pneg %p116
      $region34: #{forward.40} parent=31 // pred_check_branch
        %288 = sbr.rel (%p286) target = $region36
      $region35: #{forward.40} parent=31 // pred_region
        _
      $region36: #{forward.40} parent=31 // pred_fallthru
        _
    $region32: #{forward.40} parent=5 // pred_fallthru
      _
    %p289 = scmp.le.s32.totalorder 2, %s11
    // Predicated region
    $region37: #{forward.40} parent=5 // pred_check
      %p290 = pneg %p289
    $region38: #{forward.40} parent=5 // pred_check_branch
      %292 = sbr.rel (%p290) target = $region40
    $region39: #{forward.40} parent=5 // pred_region
      %s293 = ssub.s32 %s11, 2
      // Predicated region
      $region41: #{forward.40} parent=39 // pred_check
        %p294 = pneg %p122
      $region42: #{forward.40} parent=39 // pred_check_branch
        %296 = sbr.rel (%p294) target = $region44
      $region43: #{forward.40} parent=39 // pred_region
        %p297 = scmp.lt.s32.totalorder %s22, 3
        %s298 = scalar_select %p297, %s22, 3
        %p299 = scmp.lt.s32.totalorder %s23, 0
        %s300 = scalar_select %p299, %s23, 0
        %s301 = sadd.s32 %s300, %s298
        %s302 = scalar_lea.vmem %s3, %s301
      $region44: #{forward.40} parent=39 // pred_fallthru
        _
    $region40: #{forward.40} parent=5 // pred_fallthru
      _
  $region6: #{forward.40} parent=0 // loop_footer
    %s15 = sadd.s32 1, %s11
  $region7: #{forward.40} parent=0 // loop_footer_branch
    %10 = sbr.rel target = $region3
  $region8: #{forward.40} parent=0 // loop_exit
    _

</llo_original>
